<compile_context>
chip_gen: v7x
topology: tpu7x:2x2x1
jax: 0.10.0
libtpu: 0.0.40
codegen_flags: <defaults>
</compile_context>

<pallas_src>
import jax
import jax.numpy as jnp
from jax import lax
from jax.experimental import pallas as pl
from jax.experimental.pallas import tpu as pltpu
import numpy as np


def residual_block_kernel(x_ref, w1_ref, w2_ref, s1_ref, b1_ref, s2_ref,
                          b2_ref, o_ref, pad_ref):
  """Whole residual block in one invocation.

  x_ref   : (B, H, W, C)       unpadded NHWC input
  w1_ref  : (9*C, C)           conv1 weights, rows ordered (dy, dx, cin)
  w2_ref  : (9*C, C)           conv2 weights, same ordering
  s*/b*   : (1, C)             folded eval-mode BN scale / bias
  o_ref   : (B, H, W, C)       output
  pad_ref : (B, H+2, W+2, C)   VMEM scratch reused for both padded activations
  """
  B, H, W, C = o_ref.shape
  M = B * H * W

  # Zero the halo once (single grid step); the interior is always overwritten
  # before being read, and the border stays zero for both convs.
  pad_ref[...] = jnp.zeros_like(pad_ref)
  pad_ref[:, 1:H + 1, 1:W + 1, :] = x_ref[...]

  def conv3x3(w_ref):
    # Partial im2col: build the (M, 9*C) patch slab once and do a single
    # MXU matmul against the (9*C, C) reshaped weights.
    cols = []
    for dy in range(3):
      for dx in range(3):
        cols.append(pad_ref[:, dy:dy + H, dx:dx + W, :].reshape(M, C))
    patches = jnp.concatenate(cols, axis=-1)              # (M, 9*C)
    return jnp.dot(patches, w_ref[...],
                   preferred_element_type=jnp.float32)    # (M, C)

  # ---- conv1 -> bn1 -> relu ------------------------------------------------
  out1 = jnp.maximum(conv3x3(w1_ref) * s1_ref[...] + b1_ref[...], 0.0)

  # Reuse the padded scratch for conv2's input (border is still zero).
  pad_ref[:, 1:H + 1, 1:W + 1, :] = out1.reshape(B, H, W, C)

  # ---- conv2 -> bn2 -> +residual -> relu ------------------------------------
  out2 = conv3x3(w2_ref) * s2_ref[...] + b2_ref[...]
  out2 = jnp.maximum(out2 + x_ref[...].reshape(M, C), 0.0)

  o_ref[...] = out2.reshape(B, H, W, C).astype(o_ref.dtype)


@jax.jit
def residual_block(x_nchw, w1, w2, s1, b1, s2, b2):
  """ResidualBlock forward. x_nchw: (B, C, H, W) float32, NCHW like PyTorch."""
  B, Cin, H, W = x_nchw.shape
  Cout = w1.shape[-1]
  assert Cin == Cout, "identity residual -> in/out channels must match"

  x = jnp.transpose(x_nchw, (0, 2, 3, 1)).astype(jnp.float32)       # NHWC
  w1r = w1.reshape(9 * Cin, Cout).astype(jnp.float32)   # rows = (dy, dx, cin)
  w2r = w2.reshape(9 * Cout, Cout).astype(jnp.float32)
  s1_ = s1.reshape(1, Cout).astype(jnp.float32)
  b1_ = b1.reshape(1, Cout).astype(jnp.float32)
  s2_ = s2.reshape(1, Cout).astype(jnp.float32)
  b2_ = b2.reshape(1, Cout).astype(jnp.float32)

  out_nhwc = pl.pallas_call(
      residual_block_kernel,
      out_shape=jax.ShapeDtypeStruct((B, H, W, Cout), jnp.float32),
      grid=(1,),
      in_specs=[
          pl.BlockSpec((B, H, W, Cin), lambda i: (0, 0, 0, 0)),
          pl.BlockSpec((9 * Cin, Cout), lambda i: (0, 0)),
          pl.BlockSpec((9 * Cout, Cout), lambda i: (0, 0)),
          pl.BlockSpec((1, Cout), lambda i: (0, 0)),
          pl.BlockSpec((1, Cout), lambda i: (0, 0)),
          pl.BlockSpec((1, Cout), lambda i: (0, 0)),
          pl.BlockSpec((1, Cout), lambda i: (0, 0)),
      ],
      out_specs=pl.BlockSpec((B, H, W, Cout), lambda i: (0, 0, 0, 0)),
      scratch_shapes=[pltpu.VMEM((B, H + 2, W + 2, Cout), jnp.float32)],
      compiler_params=pltpu.CompilerParams(
          dimension_semantics=("arbitrary",)),
  )(x, w1r, w2r, s1_, b1_, s2_, b2_)

  return jnp.transpose(out_nhwc, (0, 3, 1, 2))                      # NCHW


def residual_block_ref(x_nchw, w1, w2, s1, b1, s2, b2):
  """Pure-JAX reference (lax conv) for correctness checking."""
  dn = ("NHWC", "HWIO", "NHWC")
  x = jnp.transpose(x_nchw, (0, 2, 3, 1))
  o = lax.conv_general_dilated(x, w1, (1, 1), "SAME", dimension_numbers=dn)
  o = jnp.maximum(o * s1 + b1, 0.0)
  o = lax.conv_general_dilated(o, w2, (1, 1), "SAME", dimension_numbers=dn)
  o = o * s2 + b2
  o = jnp.maximum(o + x, 0.0)
  return jnp.transpose(o, (0, 3, 1, 2))


if __name__ == "__main__":
  # Small shapes consistent with the module: batch=2, channels=4, spatial=16.
  B, C, H, W = 2, 4, 16, 16
  eps = 1e-5

  key = jax.random.PRNGKey(0)
  kx, kw1, kw2 = jax.random.split(key, 3)

  x = jax.random.normal(kx, (B, C, H, W), dtype=jnp.float32)

  # Conv weights (HWIO). PyTorch stores (Cout, Cin, 3, 3); layout here is
  # equivalent since weights are generated in-script.
  w1 = jax.random.normal(kw1, (3, 3, C, C), dtype=jnp.float32) * 0.1
  w2 = jax.random.normal(kw2, (3, 3, C, C), dtype=jnp.float32) * 0.1

  # Deterministic BatchNorm parameters (gamma, beta, running mean/var).
  ch = jnp.arange(C, dtype=jnp.float32)
  gamma1, beta1 = 1.0 + 0.10 * ch, 0.05 * ch
  mean1, var1 = 0.02 * ch, 1.0 + 0.03 * ch
  gamma2, beta2 = 1.0 - 0.05 * ch, -0.02 * ch
  mean2, var2 = -0.01 * ch, 1.0 + 0.05 * ch

  # Fold BN (eval mode) into per-channel scale/bias.
  s1 = gamma1 / jnp.sqrt(var1 + eps)
  b1 = beta1 - mean1 * s1
  s2 = gamma2 / jnp.sqrt(var2 + eps)
  b2 = beta2 - mean2 * s2

  out = residual_block(x, w1, w2, s1, b1, s2, b2)
  out = jax.block_until_ready(out)

  ref = residual_block_ref(x, w1, w2, s1, b1, s2, b2)
  np.testing.assert_allclose(np.asarray(out), np.asarray(ref),
                             rtol=1e-4, atol=1e-4)

  print("KERNEL_OK")
</pallas_src>

<mosaic_0001>
module attributes {stable_mosaic.version = 11 : i64} {
  func.func @residual_block_kernel(%arg0: i32, %arg1: memref<2x16x16x4xf32, #tpu.memory_space<vmem>>, %arg2: memref<36x4xf32, #tpu.memory_space<vmem>>, %arg3: memref<36x4xf32, #tpu.memory_space<vmem>>, %arg4: memref<1x4xf32, #tpu.memory_space<vmem>>, %arg5: memref<1x4xf32, #tpu.memory_space<vmem>>, %arg6: memref<1x4xf32, #tpu.memory_space<vmem>>, %arg7: memref<1x4xf32, #tpu.memory_space<vmem>>, %arg8: memref<2x16x16x4xf32, #tpu.memory_space<vmem>>, %arg9: memref<2x18x18x4xf32, #tpu.memory_space<vmem>>) attributes {dimension_semantics = [#tpu.dimension_semantics<arbitrary>], iteration_bounds = array<i64: 1>, scalar_prefetch = 0 : i64, scratch_operands = 1 : i64, tpu.core_type = #tpu.core_type<tc>, window_params = [{pipeline_mode = #tpu.pipeline_mode<synchronous>, transform_indices = @transform_0, window_bounds = array<i64: 2, 16, 16, 4>}, {pipeline_mode = #tpu.pipeline_mode<synchronous>, transform_indices = @transform_1, window_bounds = array<i64: 36, 4>}, {pipeline_mode = #tpu.pipeline_mode<synchronous>, transform_indices = @transform_2, window_bounds = array<i64: 36, 4>}, {pipeline_mode = #tpu.pipeline_mode<synchronous>, transform_indices = @transform_3, window_bounds = array<i64: 1, 4>}, {pipeline_mode = #tpu.pipeline_mode<synchronous>, transform_indices = @transform_4, window_bounds = array<i64: 1, 4>}, {pipeline_mode = #tpu.pipeline_mode<synchronous>, transform_indices = @transform_5, window_bounds = array<i64: 1, 4>}, {pipeline_mode = #tpu.pipeline_mode<synchronous>, transform_indices = @transform_6, window_bounds = array<i64: 1, 4>}, {pipeline_mode = #tpu.pipeline_mode<synchronous>, transform_indices = @transform_7, window_bounds = array<i64: 2, 16, 16, 4>}]} {
    %cst = arith.constant 0.000000e+00 : f32
    %0 = vector.broadcast %cst : f32 to vector<2x18x18x4xf32>
    %c0 = arith.constant 0 : index
    %c0_0 = arith.constant 0 : index
    %c0_1 = arith.constant 0 : index
    %c0_2 = arith.constant 0 : index
    %1 = vector.load %arg9[%c0, %c0_0, %c0_1, %c0_2] : memref<2x18x18x4xf32, #tpu.memory_space<vmem>>, vector<2x18x18x4xf32>
    tpu.vector_store %arg9[%c0, %c0_0, %c0_1, %c0_2], %0 {strides = array<i32>} : memref<2x18x18x4xf32, #tpu.memory_space<vmem>>, vector<2x18x18x4xf32>,
    %c0_3 = arith.constant 0 : index
    %c0_4 = arith.constant 0 : index
    %c0_5 = arith.constant 0 : index
    %c0_6 = arith.constant 0 : index
    %2 = vector.load %arg1[%c0_3, %c0_4, %c0_5, %c0_6] : memref<2x16x16x4xf32, #tpu.memory_space<vmem>>, vector<2x16x16x4xf32>
    %c0_7 = arith.constant 0 : index
    %c1 = arith.constant 1 : index
    %c1_8 = arith.constant 1 : index
    %c0_9 = arith.constant 0 : index
    %3 = vector.load %arg9[%c0_7, %c1, %c1_8, %c0_9] : memref<2x18x18x4xf32, #tpu.memory_space<vmem>>, vector<2x16x16x4xf32>
    tpu.vector_store %arg9[%c0_7, %c1, %c1_8, %c0_9], %2 {strides = array<i32>} : memref<2x18x18x4xf32, #tpu.memory_space<vmem>>, vector<2x16x16x4xf32>,
    %c0_10 = arith.constant 0 : index
    %c0_11 = arith.constant 0 : index
    %c0_12 = arith.constant 0 : index
    %c0_13 = arith.constant 0 : index
    %4 = vector.load %arg9[%c0_10, %c0_11, %c0_12, %c0_13] : memref<2x18x18x4xf32, #tpu.memory_space<vmem>>, vector<2x16x16x4xf32>
    %5 = vector.shape_cast %4 : vector<2x16x16x4xf32> to vector<512x4xf32>
    %c0_14 = arith.constant 0 : index
    %c0_15 = arith.constant 0 : index
    %c1_16 = arith.constant 1 : index
    %c0_17 = arith.constant 0 : index
    %6 = vector.load %arg9[%c0_14, %c0_15, %c1_16, %c0_17] : memref<2x18x18x4xf32, #tpu.memory_space<vmem>>, vector<2x16x16x4xf32>
    %7 = vector.shape_cast %6 : vector<2x16x16x4xf32> to vector<512x4xf32>
    %c0_18 = arith.constant 0 : index
    %c0_19 = arith.constant 0 : index
    %c2 = arith.constant 2 : index
    %c0_20 = arith.constant 0 : index
    %8 = vector.load %arg9[%c0_18, %c0_19, %c2, %c0_20] : memref<2x18x18x4xf32, #tpu.memory_space<vmem>>, vector<2x16x16x4xf32>
    %9 = vector.shape_cast %8 : vector<2x16x16x4xf32> to vector<512x4xf32>
    %c0_21 = arith.constant 0 : index
    %c1_22 = arith.constant 1 : index
    %c0_23 = arith.constant 0 : index
    %c0_24 = arith.constant 0 : index
    %10 = vector.load %arg9[%c0_21, %c1_22, %c0_23, %c0_24] : memref<2x18x18x4xf32, #tpu.memory_space<vmem>>, vector<2x16x16x4xf32>
    %11 = vector.shape_cast %10 : vector<2x16x16x4xf32> to vector<512x4xf32>
    %c0_25 = arith.constant 0 : index
    %c1_26 = arith.constant 1 : index
    %c1_27 = arith.constant 1 : index
    %c0_28 = arith.constant 0 : index
    %12 = vector.load %arg9[%c0_25, %c1_26, %c1_27, %c0_28] : memref<2x18x18x4xf32, #tpu.memory_space<vmem>>, vector<2x16x16x4xf32>
    %13 = vector.shape_cast %12 : vector<2x16x16x4xf32> to vector<512x4xf32>
    %c0_29 = arith.constant 0 : index
    %c1_30 = arith.constant 1 : index
    %c2_31 = arith.constant 2 : index
    %c0_32 = arith.constant 0 : index
    %14 = vector.load %arg9[%c0_29, %c1_30, %c2_31, %c0_32] : memref<2x18x18x4xf32, #tpu.memory_space<vmem>>, vector<2x16x16x4xf32>
    %15 = vector.shape_cast %14 : vector<2x16x16x4xf32> to vector<512x4xf32>
    %c0_33 = arith.constant 0 : index
    %c2_34 = arith.constant 2 : index
    %c0_35 = arith.constant 0 : index
    %c0_36 = arith.constant 0 : index
    %16 = vector.load %arg9[%c0_33, %c2_34, %c0_35, %c0_36] : memref<2x18x18x4xf32, #tpu.memory_space<vmem>>, vector<2x16x16x4xf32>
    %17 = vector.shape_cast %16 : vector<2x16x16x4xf32> to vector<512x4xf32>
    %c0_37 = arith.constant 0 : index
    %c2_38 = arith.constant 2 : index
    %c1_39 = arith.constant 1 : index
    %c0_40 = arith.constant 0 : index
    %18 = vector.load %arg9[%c0_37, %c2_38, %c1_39, %c0_40] : memref<2x18x18x4xf32, #tpu.memory_space<vmem>>, vector<2x16x16x4xf32>
    %19 = vector.shape_cast %18 : vector<2x16x16x4xf32> to vector<512x4xf32>
    %c0_41 = arith.constant 0 : index
    %c2_42 = arith.constant 2 : index
    %c2_43 = arith.constant 2 : index
    %c0_44 = arith.constant 0 : index
    %20 = vector.load %arg9[%c0_41, %c2_42, %c2_43, %c0_44] : memref<2x18x18x4xf32, #tpu.memory_space<vmem>>, vector<2x16x16x4xf32>
    %21 = vector.shape_cast %20 : vector<2x16x16x4xf32> to vector<512x4xf32>
    %22 = tpu.concatenate %5, %7, %9, %11, %13, %15, %17, %19, %21 in 1 : vector<512x4xf32>, vector<512x4xf32>, vector<512x4xf32>, vector<512x4xf32>, vector<512x4xf32>, vector<512x4xf32>, vector<512x4xf32>, vector<512x4xf32>, vector<512x4xf32> -> vector<512x36xf32>
    %c0_45 = arith.constant 0 : index
    %c0_46 = arith.constant 0 : index
    %23 = vector.load %arg2[%c0_45, %c0_46] : memref<36x4xf32, #tpu.memory_space<vmem>>, vector<36x4xf32>
    %cst_47 = arith.constant dense<0.000000e+00> : vector<512x4xf32>
    %24 = tpu.matmul %22, %23, %cst_47 {dimension_numbers = #tpu.dot_dimension_numbers<[1], [0], [0], [1], [0, 0, 1, 1], [], []>} : vector<512x36xf32>, vector<36x4xf32>, vector<512x4xf32> -> vector<512x4xf32>
    %c0_48 = arith.constant 0 : index
    %c0_49 = arith.constant 0 : index
    %25 = vector.load %arg4[%c0_48, %c0_49] : memref<1x4xf32, #tpu.memory_space<vmem>>, vector<1x4xf32>
    %26 = vector.broadcast %25 : vector<1x4xf32> to vector<512x4xf32>
    %27 = arith.mulf %24, %26 : vector<512x4xf32>
    %c0_50 = arith.constant 0 : index
    %c0_51 = arith.constant 0 : index
    %28 = vector.load %arg5[%c0_50, %c0_51] : memref<1x4xf32, #tpu.memory_space<vmem>>, vector<1x4xf32>
    %29 = vector.broadcast %28 : vector<1x4xf32> to vector<512x4xf32>
    %30 = arith.addf %27, %29 : vector<512x4xf32>
    %cst_52 = arith.constant 0.000000e+00 : f32
    %31 = vector.broadcast %cst_52 : f32 to vector<512x4xf32>
    %32 = arith.maximumf %30, %31 : vector<512x4xf32>
    %33 = vector.shape_cast %32 : vector<512x4xf32> to vector<2x16x16x4xf32>
    %c0_53 = arith.constant 0 : index
    %c1_54 = arith.constant 1 : index
    %c1_55 = arith.constant 1 : index
    %c0_56 = arith.constant 0 : index
    %34 = vector.load %arg9[%c0_53, %c1_54, %c1_55, %c0_56] : memref<2x18x18x4xf32, #tpu.memory_space<vmem>>, vector<2x16x16x4xf32>
    tpu.vector_store %arg9[%c0_53, %c1_54, %c1_55, %c0_56], %33 {strides = array<i32>} : memref<2x18x18x4xf32, #tpu.memory_space<vmem>>, vector<2x16x16x4xf32>,
    %c0_57 = arith.constant 0 : index
    %c0_58 = arith.constant 0 : index
    %c0_59 = arith.constant 0 : index
    %c0_60 = arith.constant 0 : index
    %35 = vector.load %arg9[%c0_57, %c0_58, %c0_59, %c0_60] : memref<2x18x18x4xf32, #tpu.memory_space<vmem>>, vector<2x16x16x4xf32>
    %36 = vector.shape_cast %35 : vector<2x16x16x4xf32> to vector<512x4xf32>
    %c0_61 = arith.constant 0 : index
    %c0_62 = arith.constant 0 : index
    %c1_63 = arith.constant 1 : index
    %c0_64 = arith.constant 0 : index
    %37 = vector.load %arg9[%c0_61, %c0_62, %c1_63, %c0_64] : memref<2x18x18x4xf32, #tpu.memory_space<vmem>>, vector<2x16x16x4xf32>
    %38 = vector.shape_cast %37 : vector<2x16x16x4xf32> to vector<512x4xf32>
    %c0_65 = arith.constant 0 : index
    %c0_66 = arith.constant 0 : index
    %c2_67 = arith.constant 2 : index
    %c0_68 = arith.constant 0 : index
    %39 = vector.load %arg9[%c0_65, %c0_66, %c2_67, %c0_68] : memref<2x18x18x4xf32, #tpu.memory_space<vmem>>, vector<2x16x16x4xf32>
    %40 = vector.shape_cast %39 : vector<2x16x16x4xf32> to vector<512x4xf32>
    %c0_69 = arith.constant 0 : index
    %c1_70 = arith.constant 1 : index
    %c0_71 = arith.constant 0 : index
    %c0_72 = arith.constant 0 : index
    %41 = vector.load %arg9[%c0_69, %c1_70, %c0_71, %c0_72] : memref<2x18x18x4xf32, #tpu.memory_space<vmem>>, vector<2x16x16x4xf32>
    %42 = vector.shape_cast %41 : vector<2x16x16x4xf32> to vector<512x4xf32>
    %c0_73 = arith.constant 0 : index
    %c1_74 = arith.constant 1 : index
    %c1_75 = arith.constant 1 : index
    %c0_76 = arith.constant 0 : index
    %43 = vector.load %arg9[%c0_73, %c1_74, %c1_75, %c0_76] : memref<2x18x18x4xf32, #tpu.memory_space<vmem>>, vector<2x16x16x4xf32>
    %44 = vector.shape_cast %43 : vector<2x16x16x4xf32> to vector<512x4xf32>
    %c0_77 = arith.constant 0 : index
    %c1_78 = arith.constant 1 : index
    %c2_79 = arith.constant 2 : index
    %c0_80 = arith.constant 0 : index
    %45 = vector.load %arg9[%c0_77, %c1_78, %c2_79, %c0_80] : memref<2x18x18x4xf32, #tpu.memory_space<vmem>>, vector<2x16x16x4xf32>
    %46 = vector.shape_cast %45 : vector<2x16x16x4xf32> to vector<512x4xf32>
    %c0_81 = arith.constant 0 : index
    %c2_82 = arith.constant 2 : index
    %c0_83 = arith.constant 0 : index
    %c0_84 = arith.constant 0 : index
    %47 = vector.load %arg9[%c0_81, %c2_82, %c0_83, %c0_84] : memref<2x18x18x4xf32, #tpu.memory_space<vmem>>, vector<2x16x16x4xf32>
    %48 = vector.shape_cast %47 : vector<2x16x16x4xf32> to vector<512x4xf32>
    %c0_85 = arith.constant 0 : index
    %c2_86 = arith.constant 2 : index
    %c1_87 = arith.constant 1 : index
    %c0_88 = arith.constant 0 : index
    %49 = vector.load %arg9[%c0_85, %c2_86, %c1_87, %c0_88] : memref<2x18x18x4xf32, #tpu.memory_space<vmem>>, vector<2x16x16x4xf32>
    %50 = vector.shape_cast %49 : vector<2x16x16x4xf32> to vector<512x4xf32>
    %c0_89 = arith.constant 0 : index
    %c2_90 = arith.constant 2 : index
    %c2_91 = arith.constant 2 : index
    %c0_92 = arith.constant 0 : index
    %51 = vector.load %arg9[%c0_89, %c2_90, %c2_91, %c0_92] : memref<2x18x18x4xf32, #tpu.memory_space<vmem>>, vector<2x16x16x4xf32>
    %52 = vector.shape_cast %51 : vector<2x16x16x4xf32> to vector<512x4xf32>
    %53 = tpu.concatenate %36, %38, %40, %42, %44, %46, %48, %50, %52 in 1 : vector<512x4xf32>, vector<512x4xf32>, vector<512x4xf32>, vector<512x4xf32>, vector<512x4xf32>, vector<512x4xf32>, vector<512x4xf32>, vector<512x4xf32>, vector<512x4xf32> -> vector<512x36xf32>
    %c0_93 = arith.constant 0 : index
    %c0_94 = arith.constant 0 : index
    %54 = vector.load %arg3[%c0_93, %c0_94] : memref<36x4xf32, #tpu.memory_space<vmem>>, vector<36x4xf32>
    %cst_95 = arith.constant dense<0.000000e+00> : vector<512x4xf32>
    %55 = tpu.matmul %53, %54, %cst_95 {dimension_numbers = #tpu.dot_dimension_numbers<[1], [0], [0], [1], [0, 0, 1, 1], [], []>} : vector<512x36xf32>, vector<36x4xf32>, vector<512x4xf32> -> vector<512x4xf32>
    %c0_96 = arith.constant 0 : index
    %c0_97 = arith.constant 0 : index
    %56 = vector.load %arg6[%c0_96, %c0_97] : memref<1x4xf32, #tpu.memory_space<vmem>>, vector<1x4xf32>
    %57 = vector.broadcast %56 : vector<1x4xf32> to vector<512x4xf32>
    %58 = arith.mulf %55, %57 : vector<512x4xf32>
    %c0_98 = arith.constant 0 : index
    %c0_99 = arith.constant 0 : index
    %59 = vector.load %arg7[%c0_98, %c0_99] : memref<1x4xf32, #tpu.memory_space<vmem>>, vector<1x4xf32>
    %60 = vector.broadcast %59 : vector<1x4xf32> to vector<512x4xf32>
    %61 = arith.addf %58, %60 : vector<512x4xf32>
    %c0_100 = arith.constant 0 : index
    %c0_101 = arith.constant 0 : index
    %c0_102 = arith.constant 0 : index
    %c0_103 = arith.constant 0 : index
    %62 = vector.load %arg1[%c0_100, %c0_101, %c0_102, %c0_103] : memref<2x16x16x4xf32, #tpu.memory_space<vmem>>, vector<2x16x16x4xf32>
    %63 = vector.shape_cast %62 : vector<2x16x16x4xf32> to vector<512x4xf32>
    %64 = arith.addf %61, %63 : vector<512x4xf32>
    %cst_104 = arith.constant 0.000000e+00 : f32
    %65 = vector.broadcast %cst_104 : f32 to vector<512x4xf32>
    %66 = arith.maximumf %64, %65 : vector<512x4xf32>
    %67 = vector.shape_cast %66 : vector<512x4xf32> to vector<2x16x16x4xf32>
    %c0_105 = arith.constant 0 : index
    %c0_106 = arith.constant 0 : index
    %c0_107 = arith.constant 0 : index
    %c0_108 = arith.constant 0 : index
    %68 = vector.load %arg8[%c0_105, %c0_106, %c0_107, %c0_108] : memref<2x16x16x4xf32, #tpu.memory_space<vmem>>, vector<2x16x16x4xf32>
    tpu.vector_store %arg8[%c0_105, %c0_106, %c0_107, %c0_108], %67 {strides = array<i32>} : memref<2x16x16x4xf32, #tpu.memory_space<vmem>>, vector<2x16x16x4xf32>,
    return
  }
  func.func @transform_0(%arg0: i32) -> (i32, i32, i32, i32) {
    %c0_i32 = arith.constant 0 : i32
    %c0_i32_0 = arith.constant 0 : i32
    %c0_i32_1 = arith.constant 0 : i32
    %c0_i32_2 = arith.constant 0 : i32
    %c0_i32_3 = arith.constant 0 : i32
    return %c0_i32, %c0_i32_0, %c0_i32_1, %c0_i32_2 : i32, i32, i32, i32
  }
  func.func @transform_1(%arg0: i32) -> (i32, i32) {
    %c0_i32 = arith.constant 0 : i32
    %c0_i32_0 = arith.constant 0 : i32
    %c0_i32_1 = arith.constant 0 : i32
    return %c0_i32, %c0_i32_0 : i32, i32
  }
  func.func @transform_2(%arg0: i32) -> (i32, i32) {
    %c0_i32 = arith.constant 0 : i32
    %c0_i32_0 = arith.constant 0 : i32
    %c0_i32_1 = arith.constant 0 : i32
    return %c0_i32, %c0_i32_0 : i32, i32
  }
  func.func @transform_3(%arg0: i32) -> (i32, i32) {
    %c0_i32 = arith.constant 0 : i32
    %c0_i32_0 = arith.constant 0 : i32
    %c0_i32_1 = arith.constant 0 : i32
    return %c0_i32, %c0_i32_0 : i32, i32
  }
  func.func @transform_4(%arg0: i32) -> (i32, i32) {
    %c0_i32 = arith.constant 0 : i32
    %c0_i32_0 = arith.constant 0 : i32
    %c0_i32_1 = arith.constant 0 : i32
    return %c0_i32, %c0_i32_0 : i32, i32
  }
  func.func @transform_5(%arg0: i32) -> (i32, i32) {
    %c0_i32 = arith.constant 0 : i32
    %c0_i32_0 = arith.constant 0 : i32
    %c0_i32_1 = arith.constant 0 : i32
    return %c0_i32, %c0_i32_0 : i32, i32
  }
  func.func @transform_6(%arg0: i32) -> (i32, i32) {
    %c0_i32 = arith.constant 0 : i32
    %c0_i32_0 = arith.constant 0 : i32
    %c0_i32_1 = arith.constant 0 : i32
    return %c0_i32, %c0_i32_0 : i32, i32
  }
  func.func @transform_7(%arg0: i32) -> (i32, i32, i32, i32) {
    %c0_i32 = arith.constant 0 : i32
    %c0_i32_0 = arith.constant 0 : i32
    %c0_i32_1 = arith.constant 0 : i32
    %c0_i32_2 = arith.constant 0 : i32
    %c0_i32_3 = arith.constant 0 : i32
    return %c0_i32, %c0_i32_0, %c0_i32_1, %c0_i32_2 : i32, i32, i32, i32
  }
}

</mosaic_0001>

<llo_original>
// kernel: residual_block.1
$region0: #{residual_block.1}
  #allocation0 [shape = 'u32[]', space=smem, size = 0x4, offset = 0x4, fixed_abs, tag = 'smem constant byte address 0x4 - core index']
  #allocation1 [shape = 'u32[144,128]{1,0:T(1,128)}', space=vmem, size = 0x12000, scoped, tag = 'internal scratch']
  #allocation2 [shape = 'f32[2,18,18,4]{3,2,1,0:T(8,128)}', space=vmem, size = 0x6c000, scoped, tag = 'scratch operand']
  %s0 = inlined_call_operand.vmem [shape: f32[2,16,16,4], index: 0, kind: input, shape index: {}]
  %s1 = inlined_call_operand.vmem [shape: f32[36,4], index: 1, kind: input, shape index: {}]
  %s2 = inlined_call_operand.vmem [shape: f32[36,4], index: 2, kind: input, shape index: {}]
  %s3 = inlined_call_operand.vmem [shape: f32[1,4], index: 3, kind: input, shape index: {}]
  %s4 = inlined_call_operand.vmem [shape: f32[1,4], index: 4, kind: input, shape index: {}]
  %s5 = inlined_call_operand.vmem [shape: f32[1,4], index: 5, kind: input, shape index: {}]
  %s6 = inlined_call_operand.vmem [shape: f32[1,4], index: 6, kind: input, shape index: {}]
  %s7 = inlined_call_operand.vmem [shape: f32[2,16,16,4], index: 7, kind: output, shape index: {}]
  %s8 = sld [smem:[#allocation0]]
  $region38: #{residual_block.1} parent=0
    _
  %s10 = ssub.s32 1, %s8
  %s11 = scalar_select 0, %s10, %s8
  // Predicated region
  $region2: #{residual_block.1} parent=0 // pred_check
    _
  $region3: #{residual_block.1} parent=0 // pred_check_branch
    %13 = sbr.rel (0) target = $region5
  $region4: #{residual_block.1} parent=0 // pred_region
    _
  $region5: #{residual_block.1} parent=0 // pred_fallthru
    _
  // Predicated region
  $region6: #{residual_block.1} parent=0 // pred_check
    _
  $region7: #{residual_block.1} parent=0 // pred_check_branch
    %15 = sbr.rel (0) target = $region9
  $region8: #{residual_block.1} parent=0 // pred_region
    _
  $region9: #{residual_block.1} parent=0 // pred_fallthru
    _
  // Predicated region
  $region10: #{residual_block.1} parent=0 // pred_check
    _
  $region11: #{residual_block.1} parent=0 // pred_check_branch
    %17 = sbr.rel (0) target = $region13
  $region12: #{residual_block.1} parent=0 // pred_region
    _
  $region13: #{residual_block.1} parent=0 // pred_fallthru
    _
  // Predicated region
  $region14: #{residual_block.1} parent=0 // pred_check
    _
  $region15: #{residual_block.1} parent=0 // pred_check_branch
    %19 = sbr.rel (0) target = $region17
  $region16: #{residual_block.1} parent=0 // pred_region
    _
  $region17: #{residual_block.1} parent=0 // pred_fallthru
    _
  // Predicated region
  $region18: #{residual_block.1} parent=0 // pred_check
    _
  $region19: #{residual_block.1} parent=0 // pred_check_branch
    %21 = sbr.rel (0) target = $region21
  $region20: #{residual_block.1} parent=0 // pred_region
    _
  $region21: #{residual_block.1} parent=0 // pred_fallthru
    _
  // Predicated region
  $region22: #{residual_block.1} parent=0 // pred_check
    _
  $region23: #{residual_block.1} parent=0 // pred_check_branch
    %23 = sbr.rel (0) target = $region25
  $region24: #{residual_block.1} parent=0 // pred_region
    _
  $region25: #{residual_block.1} parent=0 // pred_fallthru
    _
  // Predicated region
  $region26: #{residual_block.1} parent=0 // pred_check
    _
  $region27: #{residual_block.1} parent=0 // pred_check_branch
    %25 = sbr.rel (0) target = $region29
  $region28: #{residual_block.1} parent=0 // pred_region
    _
  $region29: #{residual_block.1} parent=0 // pred_fallthru
    _
  %vm26 = vcmask 31744
  %27 = vst.msk [vmem:[#allocation2] sm:$0xff] %vm26, 0.0
  %28 = vst.msk [vmem:[#allocation2 + $0x8] sm:$0xff] %vm26, 0.0
  %vm29 = vcmask 25600
  %30 = vst.msk [vmem:[#allocation2 + $0x10] sm:$0x3] %vm29, 0.0
  %31 = vst.msk [vmem:[#allocation2 + $0x18] sm:$0xff] %vm26, 0.0
  %32 = vst.msk [vmem:[#allocation2 + $0x20] sm:$0xff] %vm26, 0.0
  %33 = vst.msk [vmem:[#allocation2 + $0x28] sm:$0x3] %vm29, 0.0
  %34 = vst.msk [vmem:[#allocation2 + $0x30] sm:$0xff] %vm26, 0.0
  %35 = vst.msk [vmem:[#allocation2 + $0x38] sm:$0xff] %vm26, 0.0
  %36 = vst.msk [vmem:[#allocation2 + $0x40] sm:$0x3] %vm29, 0.0
  %37 = vst.msk [vmem:[#allocation2 + $0x48] sm:$0xff] %vm26, 0.0
  %38 = vst.msk [vmem:[#allocation2 + $0x50] sm:$0xff] %vm26, 0.0
  %39 = vst.msk [vmem:[#allocation2 + $0x58] sm:$0x3] %vm29, 0.0
  %40 = vst.msk [vmem:[#allocation2 + $0x60] sm:$0xff] %vm26, 0.0
  %41 = vst.msk [vmem:[#allocation2 + $0x68] sm:$0xff] %vm26, 0.0
  %42 = vst.msk [vmem:[#allocation2 + $0x70] sm:$0x3] %vm29, 0.0
  %43 = vst.msk [vmem:[#allocation2 + $0x78] sm:$0xff] %vm26, 0.0
  %44 = vst.msk [vmem:[#allocation2 + $0x80] sm:$0xff] %vm26, 0.0
  %45 = vst.msk [vmem:[#allocation2 + $0x88] sm:$0x3] %vm29, 0.0
  %46 = vst.msk [vmem:[#allocation2 + $0x90] sm:$0xff] %vm26, 0.0
  %47 = vst.msk [vmem:[#allocation2 + $0x98] sm:$0xff] %vm26, 0.0
  %48 = vst.msk [vmem:[#allocation2 + $0xa0] sm:$0x3] %vm29, 0.0
  %49 = vst.msk [vmem:[#allocation2 + $0xa8] sm:$0xff] %vm26, 0.0
  %50 = vst.msk [vmem:[#allocation2 + $0xb0] sm:$0xff] %vm26, 0.0
  %51 = vst.msk [vmem:[#allocation2 + $0xb8] sm:$0x3] %vm29, 0.0
  %52 = vst.msk [vmem:[#allocation2 + $0xc0] sm:$0xff] %vm26, 0.0
  %53 = vst.msk [vmem:[#allocation2 + $0xc8] sm:$0xff] %vm26, 0.0
  %54 = vst.msk [vmem:[#allocation2 + $0xd0] sm:$0x3] %vm29, 0.0
  %55 = vst.msk [vmem:[#allocation2 + $0xd8] sm:$0xff] %vm26, 0.0
  %56 = vst.msk [vmem:[#allocation2 + $0xe0] sm:$0xff] %vm26, 0.0
  %57 = vst.msk [vmem:[#allocation2 + $0xe8] sm:$0x3] %vm29, 0.0
  %58 = vst.msk [vmem:[#allocation2 + $0xf0] sm:$0xff] %vm26, 0.0
  %59 = vst.msk [vmem:[#allocation2 + $0xf8] sm:$0xff] %vm26, 0.0
  %60 = vst.msk [vmem:[#allocation2 + $0x100] sm:$0x3] %vm29, 0.0
  %61 = vst.msk [vmem:[#allocation2 + $0x108] sm:$0xff] %vm26, 0.0
  %62 = vst.msk [vmem:[#allocation2 + $0x110] sm:$0xff] %vm26, 0.0
  %63 = vst.msk [vmem:[#allocation2 + $0x118] sm:$0x3] %vm29, 0.0
  %64 = vst.msk [vmem:[#allocation2 + $0x120] sm:$0xff] %vm26, 0.0
  %65 = vst.msk [vmem:[#allocation2 + $0x128] sm:$0xff] %vm26, 0.0
  %66 = vst.msk [vmem:[#allocation2 + $0x130] sm:$0x3] %vm29, 0.0
  %67 = vst.msk [vmem:[#allocation2 + $0x138] sm:$0xff] %vm26, 0.0
  %68 = vst.msk [vmem:[#allocation2 + $0x140] sm:$0xff] %vm26, 0.0
  %69 = vst.msk [vmem:[#allocation2 + $0x148] sm:$0x3] %vm29, 0.0
  %70 = vst.msk [vmem:[#allocation2 + $0x150] sm:$0xff] %vm26, 0.0
  %71 = vst.msk [vmem:[#allocation2 + $0x158] sm:$0xff] %vm26, 0.0
  %72 = vst.msk [vmem:[#allocation2 + $0x160] sm:$0x3] %vm29, 0.0
  %73 = vst.msk [vmem:[#allocation2 + $0x168] sm:$0xff] %vm26, 0.0
  %74 = vst.msk [vmem:[#allocation2 + $0x170] sm:$0xff] %vm26, 0.0
  %75 = vst.msk [vmem:[#allocation2 + $0x178] sm:$0x3] %vm29, 0.0
  %76 = vst.msk [vmem:[#allocation2 + $0x180] sm:$0xff] %vm26, 0.0
  %77 = vst.msk [vmem:[#allocation2 + $0x188] sm:$0xff] %vm26, 0.0
  %78 = vst.msk [vmem:[#allocation2 + $0x190] sm:$0x3] %vm29, 0.0
  %79 = vst.msk [vmem:[#allocation2 + $0x198] sm:$0xff] %vm26, 0.0
  %80 = vst.msk [vmem:[#allocation2 + $0x1a0] sm:$0xff] %vm26, 0.0
  %81 = vst.msk [vmem:[#allocation2 + $0x1a8] sm:$0x3] %vm29, 0.0
  %82 = vst.msk [vmem:[#allocation2 + $0x1b0] sm:$0xff] %vm26, 0.0
  %83 = vst.msk [vmem:[#allocation2 + $0x1b8] sm:$0xff] %vm26, 0.0
  %84 = vst.msk [vmem:[#allocation2 + $0x1c0] sm:$0x3] %vm29, 0.0
  %85 = vst.msk [vmem:[#allocation2 + $0x1c8] sm:$0xff] %vm26, 0.0
  %86 = vst.msk [vmem:[#allocation2 + $0x1d0] sm:$0xff] %vm26, 0.0
  %87 = vst.msk [vmem:[#allocation2 + $0x1d8] sm:$0x3] %vm29, 0.0
  %88 = vst.msk [vmem:[#allocation2 + $0x1e0] sm:$0xff] %vm26, 0.0
  %89 = vst.msk [vmem:[#allocation2 + $0x1e8] sm:$0xff] %vm26, 0.0
  %90 = vst.msk [vmem:[#allocation2 + $0x1f0] sm:$0x3] %vm29, 0.0
  %91 = vst.msk [vmem:[#allocation2 + $0x1f8] sm:$0xff] %vm26, 0.0
  %92 = vst.msk [vmem:[#allocation2 + $0x200] sm:$0xff] %vm26, 0.0
  %93 = vst.msk [vmem:[#allocation2 + $0x208] sm:$0x3] %vm29, 0.0
  %94 = vst.msk [vmem:[#allocation2 + $0x210] sm:$0xff] %vm26, 0.0
  %95 = vst.msk [vmem:[#allocation2 + $0x218] sm:$0xff] %vm26, 0.0
  %96 = vst.msk [vmem:[#allocation2 + $0x220] sm:$0x3] %vm29, 0.0
  %97 = vst.msk [vmem:[#allocation2 + $0x228] sm:$0xff] %vm26, 0.0
  %98 = vst.msk [vmem:[#allocation2 + $0x230] sm:$0xff] %vm26, 0.0
  %99 = vst.msk [vmem:[#allocation2 + $0x238] sm:$0x3] %vm29, 0.0
  %100 = vst.msk [vmem:[#allocation2 + $0x240] sm:$0xff] %vm26, 0.0
  %101 = vst.msk [vmem:[#allocation2 + $0x248] sm:$0xff] %vm26, 0.0
  %102 = vst.msk [vmem:[#allocation2 + $0x250] sm:$0x3] %vm29, 0.0
  %103 = vst.msk [vmem:[#allocation2 + $0x258] sm:$0xff] %vm26, 0.0
  %104 = vst.msk [vmem:[#allocation2 + $0x260] sm:$0xff] %vm26, 0.0
  %105 = vst.msk [vmem:[#allocation2 + $0x268] sm:$0x3] %vm29, 0.0
  %106 = vst.msk [vmem:[#allocation2 + $0x270] sm:$0xff] %vm26, 0.0
  %107 = vst.msk [vmem:[#allocation2 + $0x278] sm:$0xff] %vm26, 0.0
  %108 = vst.msk [vmem:[#allocation2 + $0x280] sm:$0x3] %vm29, 0.0
  %109 = vst.msk [vmem:[#allocation2 + $0x288] sm:$0xff] %vm26, 0.0
  %110 = vst.msk [vmem:[#allocation2 + $0x290] sm:$0xff] %vm26, 0.0
  %111 = vst.msk [vmem:[#allocation2 + $0x298] sm:$0x3] %vm29, 0.0
  %112 = vst.msk [vmem:[#allocation2 + $0x2a0] sm:$0xff] %vm26, 0.0
  %113 = vst.msk [vmem:[#allocation2 + $0x2a8] sm:$0xff] %vm26, 0.0
  %114 = vst.msk [vmem:[#allocation2 + $0x2b0] sm:$0x3] %vm29, 0.0
  %115 = vst.msk [vmem:[#allocation2 + $0x2b8] sm:$0xff] %vm26, 0.0
  %116 = vst.msk [vmem:[#allocation2 + $0x2c0] sm:$0xff] %vm26, 0.0
  %117 = vst.msk [vmem:[#allocation2 + $0x2c8] sm:$0x3] %vm29, 0.0
  %118 = vst.msk [vmem:[#allocation2 + $0x2d0] sm:$0xff] %vm26, 0.0
  %119 = vst.msk [vmem:[#allocation2 + $0x2d8] sm:$0xff] %vm26, 0.0
  %120 = vst.msk [vmem:[#allocation2 + $0x2e0] sm:$0x3] %vm29, 0.0
  %121 = vst.msk [vmem:[#allocation2 + $0x2e8] sm:$0xff] %vm26, 0.0
  %122 = vst.msk [vmem:[#allocation2 + $0x2f0] sm:$0xff] %vm26, 0.0
  %123 = vst.msk [vmem:[#allocation2 + $0x2f8] sm:$0x3] %vm29, 0.0
  %124 = vst.msk [vmem:[#allocation2 + $0x300] sm:$0xff] %vm26, 0.0
  %125 = vst.msk [vmem:[#allocation2 + $0x308] sm:$0xff] %vm26, 0.0
  %126 = vst.msk [vmem:[#allocation2 + $0x310] sm:$0x3] %vm29, 0.0
  %127 = vst.msk [vmem:[#allocation2 + $0x318] sm:$0xff] %vm26, 0.0
  %128 = vst.msk [vmem:[#allocation2 + $0x320] sm:$0xff] %vm26, 0.0
  %129 = vst.msk [vmem:[#allocation2 + $0x328] sm:$0x3] %vm29, 0.0
  %130 = vst.msk [vmem:[#allocation2 + $0x330] sm:$0xff] %vm26, 0.0
  %131 = vst.msk [vmem:[#allocation2 + $0x338] sm:$0xff] %vm26, 0.0
  %132 = vst.msk [vmem:[#allocation2 + $0x340] sm:$0x3] %vm29, 0.0
  %133 = vst.msk [vmem:[#allocation2 + $0x348] sm:$0xff] %vm26, 0.0
  %134 = vst.msk [vmem:[#allocation2 + $0x350] sm:$0xff] %vm26, 0.0
  %135 = vst.msk [vmem:[#allocation2 + $0x358] sm:$0x3] %vm29, 0.0
  %v136 = vld [vmem:[%s0] sm:$0xff]
  %v137 = vld [vmem:[%s0 + $0x8] sm:$0xff]
  %v138 = vld [vmem:[%s0 + $0x10] sm:$0xff]
  %v139 = vld [vmem:[%s0 + $0x18] sm:$0xff]
  %v140 = vld [vmem:[%s0 + $0x20] sm:$0xff]
  %v141 = vld [vmem:[%s0 + $0x28] sm:$0xff]
  %v142 = vld [vmem:[%s0 + $0x30] sm:$0xff]
  %v143 = vld [vmem:[%s0 + $0x38] sm:$0xff]
  %v144 = vld [vmem:[%s0 + $0x40] sm:$0xff]
  %v145 = vld [vmem:[%s0 + $0x48] sm:$0xff]
  %v146 = vld [vmem:[%s0 + $0x50] sm:$0xff]
  %v147 = vld [vmem:[%s0 + $0x58] sm:$0xff]
  %v148 = vld [vmem:[%s0 + $0x60] sm:$0xff]
  %v149 = vld [vmem:[%s0 + $0x68] sm:$0xff]
  %v150 = vld [vmem:[%s0 + $0x70] sm:$0xff]
  %v151 = vld [vmem:[%s0 + $0x78] sm:$0xff]
  %v152 = vld [vmem:[%s0 + $0x80] sm:$0xff]
  %v153 = vld [vmem:[%s0 + $0x88] sm:$0xff]
  %v154 = vld [vmem:[%s0 + $0x90] sm:$0xff]
  %v155 = vld [vmem:[%s0 + $0x98] sm:$0xff]
  %v156 = vld [vmem:[%s0 + $0xa0] sm:$0xff]
  %v157 = vld [vmem:[%s0 + $0xa8] sm:$0xff]
  %v158 = vld [vmem:[%s0 + $0xb0] sm:$0xff]
  %v159 = vld [vmem:[%s0 + $0xb8] sm:$0xff]
  %v160 = vld [vmem:[%s0 + $0xc0] sm:$0xff]
  %v161 = vld [vmem:[%s0 + $0xc8] sm:$0xff]
  %v162 = vld [vmem:[%s0 + $0xd0] sm:$0xff]
  %v163 = vld [vmem:[%s0 + $0xd8] sm:$0xff]
  %v164 = vld [vmem:[%s0 + $0xe0] sm:$0xff]
  %v165 = vld [vmem:[%s0 + $0xe8] sm:$0xff]
  %v166 = vld [vmem:[%s0 + $0xf0] sm:$0xff]
  %v167 = vld [vmem:[%s0 + $0xf8] sm:$0xff]
  %v168 = vld [vmem:[%s0 + $0x100] sm:$0xff]
  %v169 = vld [vmem:[%s0 + $0x108] sm:$0xff]
  %v170 = vld [vmem:[%s0 + $0x110] sm:$0xff]
  %v171 = vld [vmem:[%s0 + $0x118] sm:$0xff]
  %v172 = vld [vmem:[%s0 + $0x120] sm:$0xff]
  %v173 = vld [vmem:[%s0 + $0x128] sm:$0xff]
  %v174 = vld [vmem:[%s0 + $0x130] sm:$0xff]
  %v175 = vld [vmem:[%s0 + $0x138] sm:$0xff]
  %v176 = vld [vmem:[%s0 + $0x140] sm:$0xff]
  %v177 = vld [vmem:[%s0 + $0x148] sm:$0xff]
  %v178 = vld [vmem:[%s0 + $0x150] sm:$0xff]
  %v179 = vld [vmem:[%s0 + $0x158] sm:$0xff]
  %v180 = vld [vmem:[%s0 + $0x160] sm:$0xff]
  %v181 = vld [vmem:[%s0 + $0x168] sm:$0xff]
  %v182 = vld [vmem:[%s0 + $0x170] sm:$0xff]
  %v183 = vld [vmem:[%s0 + $0x178] sm:$0xff]
  %v184 = vld [vmem:[%s0 + $0x180] sm:$0xff]
  %v185 = vld [vmem:[%s0 + $0x188] sm:$0xff]
  %v186 = vld [vmem:[%s0 + $0x190] sm:$0xff]
  %v187 = vld [vmem:[%s0 + $0x198] sm:$0xff]
  %v188 = vld [vmem:[%s0 + $0x1a0] sm:$0xff]
  %v189 = vld [vmem:[%s0 + $0x1a8] sm:$0xff]
  %v190 = vld [vmem:[%s0 + $0x1b0] sm:$0xff]
  %v191 = vld [vmem:[%s0 + $0x1b8] sm:$0xff]
  %v192 = vld [vmem:[%s0 + $0x1c0] sm:$0xff]
  %v193 = vld [vmem:[%s0 + $0x1c8] sm:$0xff]
  %v194 = vld [vmem:[%s0 + $0x1d0] sm:$0xff]
  %v195 = vld [vmem:[%s0 + $0x1d8] sm:$0xff]
  %v196 = vld [vmem:[%s0 + $0x1e0] sm:$0xff]
  %v197 = vld [vmem:[%s0 + $0x1e8] sm:$0xff]
  %v198 = vld [vmem:[%s0 + $0x1f0] sm:$0xff]
  %v199 = vld [vmem:[%s0 + $0x1f8] sm:$0xff]
  %s200 = scalar_lea.vmem [#allocation2], 24
  %201 = vst.msk [vmem:[%s200 + $0x1] sm:$0xff] %vm26, %v136
  %202 = vst.msk [vmem:[%s200 + $0x9] sm:$0xff] %vm26, %v137
  %203 = vst.msk [vmem:[%s200 + $0x19] sm:$0xff] %vm26, %v138
  %204 = vst.msk [vmem:[%s200 + $0x21] sm:$0xff] %vm26, %v139
  %205 = vst.msk [vmem:[%s200 + $0x31] sm:$0xff] %vm26, %v140
  %206 = vst.msk [vmem:[%s200 + $0x39] sm:$0xff] %vm26, %v141
  %207 = vst.msk [vmem:[%s200 + $0x49] sm:$0xff] %vm26, %v142
  %208 = vst.msk [vmem:[%s200 + $0x51] sm:$0xff] %vm26, %v143
  %209 = vst.msk [vmem:[%s200 + $0x61] sm:$0xff] %vm26, %v144
  %210 = vst.msk [vmem:[%s200 + $0x69] sm:$0xff] %vm26, %v145
  %211 = vst.msk [vmem:[%s200 + $0x79] sm:$0xff] %vm26, %v146
  %212 = vst.msk [vmem:[%s200 + $0x81] sm:$0xff] %vm26, %v147
  %213 = vst.msk [vmem:[%s200 + $0x91] sm:$0xff] %vm26, %v148
  %214 = vst.msk [vmem:[%s200 + $0x99] sm:$0xff] %vm26, %v149
  %215 = vst.msk [vmem:[%s200 + $0xa9] sm:$0xff] %vm26, %v150
  %216 = vst.msk [vmem:[%s200 + $0xb1] sm:$0xff] %vm26, %v151
  %217 = vst.msk [vmem:[%s200 + $0xc1] sm:$0xff] %vm26, %v152
  %218 = vst.msk [vmem:[%s200 + $0xc9] sm:$0xff] %vm26, %v153
  %219 = vst.msk [vmem:[%s200 + $0xd9] sm:$0xff] %vm26, %v154
  %220 = vst.msk [vmem:[%s200 + $0xe1] sm:$0xff] %vm26, %v155
  %221 = vst.msk [vmem:[%s200 + $0xf1] sm:$0xff] %vm26, %v156
  %222 = vst.msk [vmem:[%s200 + $0xf9] sm:$0xff] %vm26, %v157
  %223 = vst.msk [vmem:[%s200 + $0x109] sm:$0xff] %vm26, %v158
  %224 = vst.msk [vmem:[%s200 + $0x111] sm:$0xff] %vm26, %v159
  %225 = vst.msk [vmem:[%s200 + $0x121] sm:$0xff] %vm26, %v160
  %226 = vst.msk [vmem:[%s200 + $0x129] sm:$0xff] %vm26, %v161
  %227 = vst.msk [vmem:[%s200 + $0x139] sm:$0xff] %vm26, %v162
  %228 = vst.msk [vmem:[%s200 + $0x141] sm:$0xff] %vm26, %v163
  %229 = vst.msk [vmem:[%s200 + $0x151] sm:$0xff] %vm26, %v164
  %230 = vst.msk [vmem:[%s200 + $0x159] sm:$0xff] %vm26, %v165
  %231 = vst.msk [vmem:[%s200 + $0x169] sm:$0xff] %vm26, %v166
  %232 = vst.msk [vmem:[%s200 + $0x171] sm:$0xff] %vm26, %v167
  %233 = vst.msk [vmem:[%s200 + $0x1b1] sm:$0xff] %vm26, %v168
  %234 = vst.msk [vmem:[%s200 + $0x1b9] sm:$0xff] %vm26, %v169
  %235 = vst.msk [vmem:[%s200 + $0x1c9] sm:$0xff] %vm26, %v170
  %236 = vst.msk [vmem:[%s200 + $0x1d1] sm:$0xff] %vm26, %v171
  %237 = vst.msk [vmem:[%s200 + $0x1e1] sm:$0xff] %vm26, %v172
  %238 = vst.msk [vmem:[%s200 + $0x1e9] sm:$0xff] %vm26, %v173
  %239 = vst.msk [vmem:[%s200 + $0x1f9] sm:$0xff] %vm26, %v174
  %240 = vst.msk [vmem:[%s200 + $0x201] sm:$0xff] %vm26, %v175
  %241 = vst.msk [vmem:[%s200 + $0x211] sm:$0xff] %vm26, %v176
  %242 = vst.msk [vmem:[%s200 + $0x219] sm:$0xff] %vm26, %v177
  %243 = vst.msk [vmem:[%s200 + $0x229] sm:$0xff] %vm26, %v178
  %244 = vst.msk [vmem:[%s200 + $0x231] sm:$0xff] %vm26, %v179
  %245 = vst.msk [vmem:[%s200 + $0x241] sm:$0xff] %vm26, %v180
  %246 = vst.msk [vmem:[%s200 + $0x249] sm:$0xff] %vm26, %v181
  %247 = vst.msk [vmem:[%s200 + $0x259] sm:$0xff] %vm26, %v182
  %248 = vst.msk [vmem:[%s200 + $0x261] sm:$0xff] %vm26, %v183
  %249 = vst.msk [vmem:[%s200 + $0x271] sm:$0xff] %vm26, %v184
  %250 = vst.msk [vmem:[%s200 + $0x279] sm:$0xff] %vm26, %v185
  %251 = vst.msk [vmem:[%s200 + $0x289] sm:$0xff] %vm26, %v186
  %252 = vst.msk [vmem:[%s200 + $0x291] sm:$0xff] %vm26, %v187
  %253 = vst.msk [vmem:[%s200 + $0x2a1] sm:$0xff] %vm26, %v188
  %254 = vst.msk [vmem:[%s200 + $0x2a9] sm:$0xff] %vm26, %v189
  %255 = vst.msk [vmem:[%s200 + $0x2b9] sm:$0xff] %vm26, %v190
  %256 = vst.msk [vmem:[%s200 + $0x2c1] sm:$0xff] %vm26, %v191
  %257 = vst.msk [vmem:[%s200 + $0x2d1] sm:$0xff] %vm26, %v192
  %258 = vst.msk [vmem:[%s200 + $0x2d9] sm:$0xff] %vm26, %v193
  %259 = vst.msk [vmem:[%s200 + $0x2e9] sm:$0xff] %vm26, %v194
  %260 = vst.msk [vmem:[%s200 + $0x2f1] sm:$0xff] %vm26, %v195
  %261 = vst.msk [vmem:[%s200 + $0x301] sm:$0xff] %vm26, %v196
  %262 = vst.msk [vmem:[%s200 + $0x309] sm:$0xff] %vm26, %v197
  %263 = vst.msk [vmem:[%s200 + $0x319] sm:$0xff] %vm26, %v198
  %264 = vst.msk [vmem:[%s200 + $0x321] sm:$0xff] %vm26, %v199
  %v265 = vld [vmem:[#allocation2] sm:$0xff]
  %v266 = vld [vmem:[#allocation2 + $0x8] sm:$0xff]
  %v267 = vld [vmem:[#allocation2 + $0x18] sm:$0xff]
  %v268 = vld [vmem:[#allocation2 + $0x20] sm:$0xff]
  %v269 = vld [vmem:[#allocation2 + $0x30] sm:$0xff]
  %v270 = vld [vmem:[#allocation2 + $0x38] sm:$0xff]
  %v271 = vld [vmem:[#allocation2 + $0x48] sm:$0xff]
  %v272 = vld [vmem:[#allocation2 + $0x50] sm:$0xff]
  %v273 = vld [vmem:[#allocation2 + $0x60] sm:$0xff]
  %v274 = vld [vmem:[#allocation2 + $0x68] sm:$0xff]
  %v275 = vld [vmem:[#allocation2 + $0x78] sm:$0xff]
  %v276 = vld [vmem:[#allocation2 + $0x80] sm:$0xff]
  %v277 = vld [vmem:[#allocation2 + $0x90] sm:$0xff]
  %v278 = vld [vmem:[#allocation2 + $0x98] sm:$0xff]
  %v279 = vld [vmem:[#allocation2 + $0xa8] sm:$0xff]
  %v280 = vld [vmem:[#allocation2 + $0xb0] sm:$0xff]
  %v281 = vld [vmem:[#allocation2 + $0xc0] sm:$0xff]
  %v282 = vld [vmem:[#allocation2 + $0xc8] sm:$0xff]
  %v283 = vld [vmem:[#allocation2 + $0xd8] sm:$0xff]
  %v284 = vld [vmem:[#allocation2 + $0xe0] sm:$0xff]
  %v285 = vld [vmem:[#allocation2 + $0xf0] sm:$0xff]
  %v286 = vld [vmem:[#allocation2 + $0xf8] sm:$0xff]
  %v287 = vld [vmem:[#allocation2 + $0x108] sm:$0xff]
  %v288 = vld [vmem:[#allocation2 + $0x110] sm:$0xff]
  %v289 = vld [vmem:[#allocation2 + $0x120] sm:$0xff]
  %v290 = vld [vmem:[#allocation2 + $0x128] sm:$0xff]
  %v291 = vld [vmem:[#allocation2 + $0x138] sm:$0xff]
  %v292 = vld [vmem:[#allocation2 + $0x140] sm:$0xff]
  %v293 = vld [vmem:[#allocation2 + $0x150] sm:$0xff]
  %v294 = vld [vmem:[#allocation2 + $0x158] sm:$0xff]
  %v295 = vld [vmem:[#allocation2 + $0x168] sm:$0xff]
  %v296 = vld [vmem:[#allocation2 + $0x170] sm:$0xff]
  %v297 = vld [vmem:[#allocation2 + $0x1b0] sm:$0xff]
  %v298 = vld [vmem:[#allocation2 + $0x1b8] sm:$0xff]
  %v299 = vld [vmem:[#allocation2 + $0x1c8] sm:$0xff]
  %v300 = vld [vmem:[#allocation2 + $0x1d0] sm:$0xff]
  %v301 = vld [vmem:[#allocation2 + $0x1e0] sm:$0xff]
  %v302 = vld [vmem:[#allocation2 + $0x1e8] sm:$0xff]
  %v303 = vld [vmem:[#allocation2 + $0x1f8] sm:$0xff]
  %v304 = vld [vmem:[#allocation2 + $0x200] sm:$0xff]
  %v305 = vld [vmem:[#allocation2 + $0x210] sm:$0xff]
  %v306 = vld [vmem:[#allocation2 + $0x218] sm:$0xff]
  %v307 = vld [vmem:[#allocation2 + $0x228] sm:$0xff]
  %v308 = vld [vmem:[#allocation2 + $0x230] sm:$0xff]
  %v309 = vld [vmem:[#allocation2 + $0x240] sm:$0xff]
  %v310 = vld [vmem:[#allocation2 + $0x248] sm:$0xff]
  %v311 = vld [vmem:[#allocation2 + $0x258] sm:$0xff]
  %v312 = vld [vmem:[#allocation2 + $0x260] sm:$0xff]
  %v313 = vld [vmem:[#allocation2 + $0x270] sm:$0xff]
  %v314 = vld [vmem:[#allocation2 + $0x278] sm:$0xff]
  %v315 = vld [vmem:[#allocation2 + $0x288] sm:$0xff]
  %v316 = vld [vmem:[#allocation2 + $0x290] sm:$0xff]
  %v317 = vld [vmem:[#allocation2 + $0x2a0] sm:$0xff]
  %v318 = vld [vmem:[#allocation2 + $0x2a8] sm:$0xff]
  %v319 = vld [vmem:[#allocation2 + $0x2b8] sm:$0xff]
  %v320 = vld [vmem:[#allocation2 + $0x2c0] sm:$0xff]
  %v321 = vld [vmem:[#allocation2 + $0x2d0] sm:$0xff]
  %v322 = vld [vmem:[#allocation2 + $0x2d8] sm:$0xff]
  %v323 = vld [vmem:[#allocation2 + $0x2e8] sm:$0xff]
  %v324 = vld [vmem:[#allocation2 + $0x2f0] sm:$0xff]
  %v325 = vld [vmem:[#allocation2 + $0x300] sm:$0xff]
  %v326 = vld [vmem:[#allocation2 + $0x308] sm:$0xff]
  %v327 = vld [vmem:[#allocation2 + $0x318] sm:$0xff]
  %v328 = vld [vmem:[#allocation2 + $0x320] sm:$0xff]
  %v329 = vld [vmem:[#allocation2 + $0x1] sm:$0xff]
  %v330 = vld [vmem:[#allocation2 + $0x9] sm:$0xff]
  %v331 = vld [vmem:[#allocation2 + $0x19] sm:$0xff]
  %v332 = vld [vmem:[#allocation2 + $0x21] sm:$0xff]
  %v333 = vld [vmem:[#allocation2 + $0x31] sm:$0xff]
  %v334 = vld [vmem:[#allocation2 + $0x39] sm:$0xff]
  %v335 = vld [vmem:[#allocation2 + $0x49] sm:$0xff]
  %v336 = vld [vmem:[#allocation2 + $0x51] sm:$0xff]
  %v337 = vld [vmem:[#allocation2 + $0x61] sm:$0xff]
  %v338 = vld [vmem:[#allocation2 + $0x69] sm:$0xff]
  %v339 = vld [vmem:[#allocation2 + $0x79] sm:$0xff]
  %v340 = vld [vmem:[#allocation2 + $0x81] sm:$0xff]
  %v341 = vld [vmem:[#allocation2 + $0x91] sm:$0xff]
  %v342 = vld [vmem:[#allocation2 + $0x99] sm:$0xff]
  %v343 = vld [vmem:[#allocation2 + $0xa9] sm:$0xff]
  %v344 = vld [vmem:[#allocation2 + $0xb1] sm:$0xff]
  %v345 = vld [vmem:[#allocation2 + $0xc1] sm:$0xff]
  %v346 = vld [vmem:[#allocation2 + $0xc9] sm:$0xff]
  %v347 = vld [vmem:[#allocation2 + $0xd9] sm:$0xff]
  %v348 = vld [vmem:[#allocation2 + $0xe1] sm:$0xff]
  %v349 = vld [vmem:[#allocation2 + $0xf1] sm:$0xff]
  %v350 = vld [vmem:[#allocation2 + $0xf9] sm:$0xff]
  %v351 = vld [vmem:[#allocation2 + $0x109] sm:$0xff]
  %v352 = vld [vmem:[#allocation2 + $0x111] sm:$0xff]
  %v353 = vld [vmem:[#allocation2 + $0x121] sm:$0xff]
  %v354 = vld [vmem:[#allocation2 + $0x129] sm:$0xff]
  %v355 = vld [vmem:[#allocation2 + $0x139] sm:$0xff]
  %v356 = vld [vmem:[#allocation2 + $0x141] sm:$0xff]
  %v357 = vld [vmem:[#allocation2 + $0x151] sm:$0xff]
  %v358 = vld [vmem:[#allocation2 + $0x159] sm:$0xff]
  %v359 = vld [vmem:[#allocation2 + $0x169] sm:$0xff]
  %v360 = vld [vmem:[#allocation2 + $0x171] sm:$0xff]
  %v361 = vld [vmem:[#allocation2 + $0x1b1] sm:$0xff]
  %v362 = vld [vmem:[#allocation2 + $0x1b9] sm:$0xff]
  %v363 = vld [vmem:[#allocation2 + $0x1c9] sm:$0xff]
  %v364 = vld [vmem:[#allocation2 + $0x1d1] sm:$0xff]
  %v365 = vld [vmem:[#allocation2 + $0x1e1] sm:$0xff]
  %v366 = vld [vmem:[#allocation2 + $0x1e9] sm:$0xff]
  %v367 = vld [vmem:[#allocation2 + $0x1f9] sm:$0xff]
  %v368 = vld [vmem:[#allocation2 + $0x201] sm:$0xff]
  %v369 = vld [vmem:[#allocation2 + $0x211] sm:$0xff]
  %v370 = vld [vmem:[#allocation2 + $0x219] sm:$0xff]
  %v371 = vld [vmem:[#allocation2 + $0x229] sm:$0xff]
  %v372 = vld [vmem:[#allocation2 + $0x231] sm:$0xff]
  %v373 = vld [vmem:[#allocation2 + $0x241] sm:$0xff]
  %v374 = vld [vmem:[#allocation2 + $0x249] sm:$0xff]
  %v375 = vld [vmem:[#allocation2 + $0x259] sm:$0xff]
  %v376 = vld [vmem:[#allocation2 + $0x261] sm:$0xff]
  %v377 = vld [vmem:[#allocation2 + $0x271] sm:$0xff]
  %v378 = vld [vmem:[#allocation2 + $0x279] sm:$0xff]
  %v379 = vld [vmem:[#allocation2 + $0x289] sm:$0xff]
  %v380 = vld [vmem:[#allocation2 + $0x291] sm:$0xff]
  %v381 = vld [vmem:[#allocation2 + $0x2a1] sm:$0xff]
  %v382 = vld [vmem:[#allocation2 + $0x2a9] sm:$0xff]
  %v383 = vld [vmem:[#allocation2 + $0x2b9] sm:$0xff]
  %v384 = vld [vmem:[#allocation2 + $0x2c1] sm:$0xff]
  %v385 = vld [vmem:[#allocation2 + $0x2d1] sm:$0xff]
  %v386 = vld [vmem:[#allocation2 + $0x2d9] sm:$0xff]
  %v387 = vld [vmem:[#allocation2 + $0x2e9] sm:$0xff]
  %v388 = vld [vmem:[#allocation2 + $0x2f1] sm:$0xff]
  %v389 = vld [vmem:[#allocation2 + $0x301] sm:$0xff]
  %v390 = vld [vmem:[#allocation2 + $0x309] sm:$0xff]
  %v391 = vld [vmem:[#allocation2 + $0x319] sm:$0xff]
  %v392 = vld [vmem:[#allocation2 + $0x321] sm:$0xff]
  %v393 = vld [vmem:[#allocation2 + $0x2] sm:$0xff]
  %v394 = vld [vmem:[#allocation2 + $0xa] sm:$0xff]
  %v395 = vld [vmem:[#allocation2 + $0x1a] sm:$0xff]
  %v396 = vld [vmem:[#allocation2 + $0x22] sm:$0xff]
  %v397 = vld [vmem:[#allocation2 + $0x32] sm:$0xff]
  %v398 = vld [vmem:[#allocation2 + $0x3a] sm:$0xff]
  %v399 = vld [vmem:[#allocation2 + $0x4a] sm:$0xff]
  %v400 = vld [vmem:[#allocation2 + $0x52] sm:$0xff]
  %v401 = vld [vmem:[#allocation2 + $0x62] sm:$0xff]
  %v402 = vld [vmem:[#allocation2 + $0x6a] sm:$0xff]
  %v403 = vld [vmem:[#allocation2 + $0x7a] sm:$0xff]
  %v404 = vld [vmem:[#allocation2 + $0x82] sm:$0xff]
  %v405 = vld [vmem:[#allocation2 + $0x92] sm:$0xff]
  %v406 = vld [vmem:[#allocation2 + $0x9a] sm:$0xff]
  %v407 = vld [vmem:[#allocation2 + $0xaa] sm:$0xff]
  %v408 = vld [vmem:[#allocation2 + $0xb2] sm:$0xff]
  %v409 = vld [vmem:[#allocation2 + $0xc2] sm:$0xff]
  %v410 = vld [vmem:[#allocation2 + $0xca] sm:$0xff]
  %v411 = vld [vmem:[#allocation2 + $0xda] sm:$0xff]
  %v412 = vld [vmem:[#allocation2 + $0xe2] sm:$0xff]
  %v413 = vld [vmem:[#allocation2 + $0xf2] sm:$0xff]
  %v414 = vld [vmem:[#allocation2 + $0xfa] sm:$0xff]
  %v415 = vld [vmem:[#allocation2 + $0x10a] sm:$0xff]
  %v416 = vld [vmem:[#allocation2 + $0x112] sm:$0xff]
  %v417 = vld [vmem:[#allocation2 + $0x122] sm:$0xff]
  %v418 = vld [vmem:[#allocation2 + $0x12a] sm:$0xff]
  %v419 = vld [vmem:[#allocation2 + $0x13a] sm:$0xff]
  %v420 = vld [vmem:[#allocation2 + $0x142] sm:$0xff]
  %v421 = vld [vmem:[#allocation2 + $0x152] sm:$0xff]
  %v422 = vld [vmem:[#allocation2 + $0x15a] sm:$0xff]
  %v423 = vld [vmem:[#allocation2 + $0x16a] sm:$0xff]
  %v424 = vld [vmem:[#allocation2 + $0x172] sm:$0xff]
  %v425 = vld [vmem:[#allocation2 + $0x1b2] sm:$0xff]
  %v426 = vld [vmem:[#allocation2 + $0x1ba] sm:$0xff]
  %v427 = vld [vmem:[#allocation2 + $0x1ca] sm:$0xff]
  %v428 = vld [vmem:[#allocation2 + $0x1d2] sm:$0xff]
  %v429 = vld [vmem:[#allocation2 + $0x1e2] sm:$0xff]
  %v430 = vld [vmem:[#allocation2 + $0x1ea] sm:$0xff]
  %v431 = vld [vmem:[#allocation2 + $0x1fa] sm:$0xff]
  %v432 = vld [vmem:[#allocation2 + $0x202] sm:$0xff]
  %v433 = vld [vmem:[#allocation2 + $0x212] sm:$0xff]
  %v434 = vld [vmem:[#allocation2 + $0x21a] sm:$0xff]
  %v435 = vld [vmem:[#allocation2 + $0x22a] sm:$0xff]
  %v436 = vld [vmem:[#allocation2 + $0x232] sm:$0xff]
  %v437 = vld [vmem:[#allocation2 + $0x242] sm:$0xff]
  %v438 = vld [vmem:[#allocation2 + $0x24a] sm:$0xff]
  %v439 = vld [vmem:[#allocation2 + $0x25a] sm:$0xff]
  %v440 = vld [vmem:[#allocation2 + $0x262] sm:$0xff]
  %v441 = vld [vmem:[#allocation2 + $0x272] sm:$0xff]
  %v442 = vld [vmem:[#allocation2 + $0x27a] sm:$0xff]
  %v443 = vld [vmem:[#allocation2 + $0x28a] sm:$0xff]
  %v444 = vld [vmem:[#allocation2 + $0x292] sm:$0xff]
  %v445 = vld [vmem:[#allocation2 + $0x2a2] sm:$0xff]
  %v446 = vld [vmem:[#allocation2 + $0x2aa] sm:$0xff]
  %v447 = vld [vmem:[#allocation2 + $0x2ba] sm:$0xff]
  %v448 = vld [vmem:[#allocation2 + $0x2c2] sm:$0xff]
  %v449 = vld [vmem:[#allocation2 + $0x2d2] sm:$0xff]
  %v450 = vld [vmem:[#allocation2 + $0x2da] sm:$0xff]
  %v451 = vld [vmem:[#allocation2 + $0x2ea] sm:$0xff]
  %v452 = vld [vmem:[#allocation2 + $0x2f2] sm:$0xff]
  %v453 = vld [vmem:[#allocation2 + $0x302] sm:$0xff]
  %v454 = vld [vmem:[#allocation2 + $0x30a] sm:$0xff]
  %v455 = vld [vmem:[#allocation2 + $0x31a] sm:$0xff]
  %v456 = vld [vmem:[#allocation2 + $0x322] sm:$0xff]
  %v457 = vld [vmem:[%s200] sm:$0xff]
  %v458 = vld [vmem:[%s200 + $0x8] sm:$0xff]
  %v459 = vld [vmem:[%s200 + $0x18] sm:$0xff]
  %v460 = vld [vmem:[%s200 + $0x20] sm:$0xff]
  %v461 = vld [vmem:[%s200 + $0x30] sm:$0xff]
  %v462 = vld [vmem:[%s200 + $0x38] sm:$0xff]
  %v463 = vld [vmem:[%s200 + $0x48] sm:$0xff]
  %v464 = vld [vmem:[%s200 + $0x50] sm:$0xff]
  %v465 = vld [vmem:[%s200 + $0x60] sm:$0xff]
  %v466 = vld [vmem:[%s200 + $0x68] sm:$0xff]
  %v467 = vld [vmem:[%s200 + $0x78] sm:$0xff]
  %v468 = vld [vmem:[%s200 + $0x80] sm:$0xff]
  %v469 = vld [vmem:[%s200 + $0x90] sm:$0xff]
  %v470 = vld [vmem:[%s200 + $0x98] sm:$0xff]
  %v471 = vld [vmem:[%s200 + $0xa8] sm:$0xff]
  %v472 = vld [vmem:[%s200 + $0xb0] sm:$0xff]
  %v473 = vld [vmem:[%s200 + $0xc0] sm:$0xff]
  %v474 = vld [vmem:[%s200 + $0xc8] sm:$0xff]
  %v475 = vld [vmem:[%s200 + $0xd8] sm:$0xff]
  %v476 = vld [vmem:[%s200 + $0xe0] sm:$0xff]
  %v477 = vld [vmem:[%s200 + $0xf0] sm:$0xff]
  %v478 = vld [vmem:[%s200 + $0xf8] sm:$0xff]
  %v479 = vld [vmem:[%s200 + $0x108] sm:$0xff]
  %v480 = vld [vmem:[%s200 + $0x110] sm:$0xff]
  %v481 = vld [vmem:[%s200 + $0x120] sm:$0xff]
  %v482 = vld [vmem:[%s200 + $0x128] sm:$0xff]
  %v483 = vld [vmem:[%s200 + $0x138] sm:$0xff]
  %v484 = vld [vmem:[%s200 + $0x140] sm:$0xff]
  %v485 = vld [vmem:[%s200 + $0x150] sm:$0xff]
  %v486 = vld [vmem:[%s200 + $0x158] sm:$0xff]
  %v487 = vld [vmem:[%s200 + $0x168] sm:$0xff]
  %v488 = vld [vmem:[%s200 + $0x170] sm:$0xff]
  %v489 = vld [vmem:[%s200 + $0x1b0] sm:$0xff]
  %v490 = vld [vmem:[%s200 + $0x1b8] sm:$0xff]
  %v491 = vld [vmem:[%s200 + $0x1c8] sm:$0xff]
  %v492 = vld [vmem:[%s200 + $0x1d0] sm:$0xff]
  %v493 = vld [vmem:[%s200 + $0x1e0] sm:$0xff]
  %v494 = vld [vmem:[%s200 + $0x1e8] sm:$0xff]
  %v495 = vld [vmem:[%s200 + $0x1f8] sm:$0xff]
  %v496 = vld [vmem:[%s200 + $0x200] sm:$0xff]
  %v497 = vld [vmem:[%s200 + $0x210] sm:$0xff]
  %v498 = vld [vmem:[%s200 + $0x218] sm:$0xff]
  %v499 = vld [vmem:[%s200 + $0x228] sm:$0xff]
  %v500 = vld [vmem:[%s200 + $0x230] sm:$0xff]
  %v501 = vld [vmem:[%s200 + $0x240] sm:$0xff]
  %v502 = vld [vmem:[%s200 + $0x248] sm:$0xff]
  %v503 = vld [vmem:[%s200 + $0x258] sm:$0xff]
  %v504 = vld [vmem:[%s200 + $0x260] sm:$0xff]
  %v505 = vld [vmem:[%s200 + $0x270] sm:$0xff]
  %v506 = vld [vmem:[%s200 + $0x278] sm:$0xff]
  %v507 = vld [vmem:[%s200 + $0x288] sm:$0xff]
  %v508 = vld [vmem:[%s200 + $0x290] sm:$0xff]
  %v509 = vld [vmem:[%s200 + $0x2a0] sm:$0xff]
  %v510 = vld [vmem:[%s200 + $0x2a8] sm:$0xff]
  %v511 = vld [vmem:[%s200 + $0x2b8] sm:$0xff]
  %v512 = vld [vmem:[%s200 + $0x2c0] sm:$0xff]
  %v513 = vld [vmem:[%s200 + $0x2d0] sm:$0xff]
  %v514 = vld [vmem:[%s200 + $0x2d8] sm:$0xff]
  %v515 = vld [vmem:[%s200 + $0x2e8] sm:$0xff]
  %v516 = vld [vmem:[%s200 + $0x2f0] sm:$0xff]
  %v517 = vld [vmem:[%s200 + $0x300] sm:$0xff]
  %v518 = vld [vmem:[%s200 + $0x308] sm:$0xff]
  %v519 = vld [vmem:[%s200 + $0x318] sm:$0xff]
  %v520 = vld [vmem:[%s200 + $0x320] sm:$0xff]
  %v521 = vld [vmem:[%s200 + $0x1] sm:$0xff]
  %v522 = vld [vmem:[%s200 + $0x9] sm:$0xff]
  %v523 = vld [vmem:[%s200 + $0x19] sm:$0xff]
  %v524 = vld [vmem:[%s200 + $0x21] sm:$0xff]
  %v525 = vld [vmem:[%s200 + $0x31] sm:$0xff]
  %v526 = vld [vmem:[%s200 + $0x39] sm:$0xff]
  %v527 = vld [vmem:[%s200 + $0x49] sm:$0xff]
  %v528 = vld [vmem:[%s200 + $0x51] sm:$0xff]
  %v529 = vld [vmem:[%s200 + $0x61] sm:$0xff]
  %v530 = vld [vmem:[%s200 + $0x69] sm:$0xff]
  %v531 = vld [vmem:[%s200 + $0x79] sm:$0xff]
  %v532 = vld [vmem:[%s200 + $0x81] sm:$0xff]
  %v533 = vld [vmem:[%s200 + $0x91] sm:$0xff]
  %v534 = vld [vmem:[%s200 + $0x99] sm:$0xff]
  %v535 = vld [vmem:[%s200 + $0xa9] sm:$0xff]
  %v536 = vld [vmem:[%s200 + $0xb1] sm:$0xff]
  %v537 = vld [vmem:[%s200 + $0xc1] sm:$0xff]
  %v538 = vld [vmem:[%s200 + $0xc9] sm:$0xff]
  %v539 = vld [vmem:[%s200 + $0xd9] sm:$0xff]
  %v540 = vld [vmem:[%s200 + $0xe1] sm:$0xff]
  %v541 = vld [vmem:[%s200 + $0xf1] sm:$0xff]
  %v542 = vld [vmem:[%s200 + $0xf9] sm:$0xff]
  %v543 = vld [vmem:[%s200 + $0x109] sm:$0xff]
  %v544 = vld [vmem:[%s200 + $0x111] sm:$0xff]
  %v545 = vld [vmem:[%s200 + $0x121] sm:$0xff]
  %v546 = vld [vmem:[%s200 + $0x129] sm:$0xff]
  %v547 = vld [vmem:[%s200 + $0x139] sm:$0xff]
  %v548 = vld [vmem:[%s200 + $0x141] sm:$0xff]
  %v549 = vld [vmem:[%s200 + $0x151] sm:$0xff]
  %v550 = vld [vmem:[%s200 + $0x159] sm:$0xff]
  %v551 = vld [vmem:[%s200 + $0x169] sm:$0xff]
  %v552 = vld [vmem:[%s200 + $0x171] sm:$0xff]
  %v553 = vld [vmem:[%s200 + $0x1b1] sm:$0xff]
  %v554 = vld [vmem:[%s200 + $0x1b9] sm:$0xff]
  %v555 = vld [vmem:[%s200 + $0x1c9] sm:$0xff]
  %v556 = vld [vmem:[%s200 + $0x1d1] sm:$0xff]
  %v557 = vld [vmem:[%s200 + $0x1e1] sm:$0xff]
  %v558 = vld [vmem:[%s200 + $0x1e9] sm:$0xff]
  %v559 = vld [vmem:[%s200 + $0x1f9] sm:$0xff]
  %v560 = vld [vmem:[%s200 + $0x201] sm:$0xff]
  %v561 = vld [vmem:[%s200 + $0x211] sm:$0xff]
  %v562 = vld [vmem:[%s200 + $0x219] sm:$0xff]
  %v563 = vld [vmem:[%s200 + $0x229] sm:$0xff]
  %v564 = vld [vmem:[%s200 + $0x231] sm:$0xff]
  %v565 = vld [vmem:[%s200 + $0x241] sm:$0xff]
  %v566 = vld [vmem:[%s200 + $0x249] sm:$0xff]
  %v567 = vld [vmem:[%s200 + $0x259] sm:$0xff]
  %v568 = vld [vmem:[%s200 + $0x261] sm:$0xff]
  %v569 = vld [vmem:[%s200 + $0x271] sm:$0xff]
  %v570 = vld [vmem:[%s200 + $0x279] sm:$0xff]
  %v571 = vld [vmem:[%s200 + $0x289] sm:$0xff]
  %v572 = vld [vmem:[%s200 + $0x291] sm:$0xff]
  %v573 = vld [vmem:[%s200 + $0x2a1] sm:$0xff]
  %v574 = vld [vmem:[%s200 + $0x2a9] sm:$0xff]
  %v575 = vld [vmem:[%s200 + $0x2b9] sm:$0xff]
  %v576 = vld [vmem:[%s200 + $0x2c1] sm:$0xff]
  %v577 = vld [vmem:[%s200 + $0x2d1] sm:$0xff]
  %v578 = vld [vmem:[%s200 + $0x2d9] sm:$0xff]
  %v579 = vld [vmem:[%s200 + $0x2e9] sm:$0xff]
  %v580 = vld [vmem:[%s200 + $0x2f1] sm:$0xff]
  %v581 = vld [vmem:[%s200 + $0x301] sm:$0xff]
  %v582 = vld [vmem:[%s200 + $0x309] sm:$0xff]
  %v583 = vld [vmem:[%s200 + $0x319] sm:$0xff]
  %v584 = vld [vmem:[%s200 + $0x321] sm:$0xff]
  %v585 = vld [vmem:[%s200 + $0x2] sm:$0xff]
  %v586 = vld [vmem:[%s200 + $0xa] sm:$0xff]
  %v587 = vld [vmem:[%s200 + $0x1a] sm:$0xff]
  %v588 = vld [vmem:[%s200 + $0x22] sm:$0xff]
  %v589 = vld [vmem:[%s200 + $0x32] sm:$0xff]
  %v590 = vld [vmem:[%s200 + $0x3a] sm:$0xff]
  %v591 = vld [vmem:[%s200 + $0x4a] sm:$0xff]
  %v592 = vld [vmem:[%s200 + $0x52] sm:$0xff]
  %v593 = vld [vmem:[%s200 + $0x62] sm:$0xff]
  %v594 = vld [vmem:[%s200 + $0x6a] sm:$0xff]
  %v595 = vld [vmem:[%s200 + $0x7a] sm:$0xff]
  %v596 = vld [vmem:[%s200 + $0x82] sm:$0xff]
  %v597 = vld [vmem:[%s200 + $0x92] sm:$0xff]
  %v598 = vld [vmem:[%s200 + $0x9a] sm:$0xff]
  %v599 = vld [vmem:[%s200 + $0xaa] sm:$0xff]
  %v600 = vld [vmem:[%s200 + $0xb2] sm:$0xff]
  %v601 = vld [vmem:[%s200 + $0xc2] sm:$0xff]
  %v602 = vld [vmem:[%s200 + $0xca] sm:$0xff]
  %v603 = vld [vmem:[%s200 + $0xda] sm:$0xff]
  %v604 = vld [vmem:[%s200 + $0xe2] sm:$0xff]
  %v605 = vld [vmem:[%s200 + $0xf2] sm:$0xff]
  %v606 = vld [vmem:[%s200 + $0xfa] sm:$0xff]
  %v607 = vld [vmem:[%s200 + $0x10a] sm:$0xff]
  %v608 = vld [vmem:[%s200 + $0x112] sm:$0xff]
  %v609 = vld [vmem:[%s200 + $0x122] sm:$0xff]
  %v610 = vld [vmem:[%s200 + $0x12a] sm:$0xff]
  %v611 = vld [vmem:[%s200 + $0x13a] sm:$0xff]
  %v612 = vld [vmem:[%s200 + $0x142] sm:$0xff]
  %v613 = vld [vmem:[%s200 + $0x152] sm:$0xff]
  %v614 = vld [vmem:[%s200 + $0x15a] sm:$0xff]
  %v615 = vld [vmem:[%s200 + $0x16a] sm:$0xff]
  %v616 = vld [vmem:[%s200 + $0x172] sm:$0xff]
  %v617 = vld [vmem:[%s200 + $0x1b2] sm:$0xff]
  %v618 = vld [vmem:[%s200 + $0x1ba] sm:$0xff]
  %v619 = vld [vmem:[%s200 + $0x1ca] sm:$0xff]
  %v620 = vld [vmem:[%s200 + $0x1d2] sm:$0xff]
  %v621 = vld [vmem:[%s200 + $0x1e2] sm:$0xff]
  %v622 = vld [vmem:[%s200 + $0x1ea] sm:$0xff]
  %v623 = vld [vmem:[%s200 + $0x1fa] sm:$0xff]
  %v624 = vld [vmem:[%s200 + $0x202] sm:$0xff]
  %v625 = vld [vmem:[%s200 + $0x212] sm:$0xff]
  %v626 = vld [vmem:[%s200 + $0x21a] sm:$0xff]
  %v627 = vld [vmem:[%s200 + $0x22a] sm:$0xff]
  %v628 = vld [vmem:[%s200 + $0x232] sm:$0xff]
  %v629 = vld [vmem:[%s200 + $0x242] sm:$0xff]
  %v630 = vld [vmem:[%s200 + $0x24a] sm:$0xff]
  %v631 = vld [vmem:[%s200 + $0x25a] sm:$0xff]
  %v632 = vld [vmem:[%s200 + $0x262] sm:$0xff]
  %v633 = vld [vmem:[%s200 + $0x272] sm:$0xff]
  %v634 = vld [vmem:[%s200 + $0x27a] sm:$0xff]
  %v635 = vld [vmem:[%s200 + $0x28a] sm:$0xff]
  %v636 = vld [vmem:[%s200 + $0x292] sm:$0xff]
  %v637 = vld [vmem:[%s200 + $0x2a2] sm:$0xff]
  %v638 = vld [vmem:[%s200 + $0x2aa] sm:$0xff]
  %v639 = vld [vmem:[%s200 + $0x2ba] sm:$0xff]
  %v640 = vld [vmem:[%s200 + $0x2c2] sm:$0xff]
  %v641 = vld [vmem:[%s200 + $0x2d2] sm:$0xff]
  %v642 = vld [vmem:[%s200 + $0x2da] sm:$0xff]
  %v643 = vld [vmem:[%s200 + $0x2ea] sm:$0xff]
  %v644 = vld [vmem:[%s200 + $0x2f2] sm:$0xff]
  %v645 = vld [vmem:[%s200 + $0x302] sm:$0xff]
  %v646 = vld [vmem:[%s200 + $0x30a] sm:$0xff]
  %v647 = vld [vmem:[%s200 + $0x31a] sm:$0xff]
  %v648 = vld [vmem:[%s200 + $0x322] sm:$0xff]
  %s649 = scalar_lea.vmem [#allocation2], 48
  %v650 = vld [vmem:[%s649] sm:$0xff]
  %v651 = vld [vmem:[%s649 + $0x8] sm:$0xff]
  %v652 = vld [vmem:[%s649 + $0x18] sm:$0xff]
  %v653 = vld [vmem:[%s649 + $0x20] sm:$0xff]
  %v654 = vld [vmem:[%s649 + $0x30] sm:$0xff]
  %v655 = vld [vmem:[%s649 + $0x38] sm:$0xff]
  %v656 = vld [vmem:[%s649 + $0x48] sm:$0xff]
  %v657 = vld [vmem:[%s649 + $0x50] sm:$0xff]
  %v658 = vld [vmem:[%s649 + $0x60] sm:$0xff]
  %v659 = vld [vmem:[%s649 + $0x68] sm:$0xff]
  %v660 = vld [vmem:[%s649 + $0x78] sm:$0xff]
  %v661 = vld [vmem:[%s649 + $0x80] sm:$0xff]
  %v662 = vld [vmem:[%s649 + $0x90] sm:$0xff]
  %v663 = vld [vmem:[%s649 + $0x98] sm:$0xff]
  %v664 = vld [vmem:[%s649 + $0xa8] sm:$0xff]
  %v665 = vld [vmem:[%s649 + $0xb0] sm:$0xff]
  %v666 = vld [vmem:[%s649 + $0xc0] sm:$0xff]
  %v667 = vld [vmem:[%s649 + $0xc8] sm:$0xff]
  %v668 = vld [vmem:[%s649 + $0xd8] sm:$0xff]
  %v669 = vld [vmem:[%s649 + $0xe0] sm:$0xff]
  %v670 = vld [vmem:[%s649 + $0xf0] sm:$0xff]
  %v671 = vld [vmem:[%s649 + $0xf8] sm:$0xff]
  %v672 = vld [vmem:[%s649 + $0x108] sm:$0xff]
  %v673 = vld [vmem:[%s649 + $0x110] sm:$0xff]
  %v674 = vld [vmem:[%s649 + $0x120] sm:$0xff]
  %v675 = vld [vmem:[%s649 + $0x128] sm:$0xff]
  %v676 = vld [vmem:[%s649 + $0x138] sm:$0xff]
  %v677 = vld [vmem:[%s649 + $0x140] sm:$0xff]
  %v678 = vld [vmem:[%s649 + $0x150] sm:$0xff]
  %v679 = vld [vmem:[%s649 + $0x158] sm:$0xff]
  %v680 = vld [vmem:[%s649 + $0x168] sm:$0xff]
  %v681 = vld [vmem:[%s649 + $0x170] sm:$0xff]
  %v682 = vld [vmem:[%s649 + $0x1b0] sm:$0xff]
  %v683 = vld [vmem:[%s649 + $0x1b8] sm:$0xff]
  %v684 = vld [vmem:[%s649 + $0x1c8] sm:$0xff]
  %v685 = vld [vmem:[%s649 + $0x1d0] sm:$0xff]
  %v686 = vld [vmem:[%s649 + $0x1e0] sm:$0xff]
  %v687 = vld [vmem:[%s649 + $0x1e8] sm:$0xff]
  %v688 = vld [vmem:[%s649 + $0x1f8] sm:$0xff]
  %v689 = vld [vmem:[%s649 + $0x200] sm:$0xff]
  %v690 = vld [vmem:[%s649 + $0x210] sm:$0xff]
  %v691 = vld [vmem:[%s649 + $0x218] sm:$0xff]
  %v692 = vld [vmem:[%s649 + $0x228] sm:$0xff]
  %v693 = vld [vmem:[%s649 + $0x230] sm:$0xff]
  %v694 = vld [vmem:[%s649 + $0x240] sm:$0xff]
  %v695 = vld [vmem:[%s649 + $0x248] sm:$0xff]
  %v696 = vld [vmem:[%s649 + $0x258] sm:$0xff]
  %v697 = vld [vmem:[%s649 + $0x260] sm:$0xff]
  %v698 = vld [vmem:[%s649 + $0x270] sm:$0xff]
  %v699 = vld [vmem:[%s649 + $0x278] sm:$0xff]
  %v700 = vld [vmem:[%s649 + $0x288] sm:$0xff]
  %v701 = vld [vmem:[%s649 + $0x290] sm:$0xff]
  %v702 = vld [vmem:[%s649 + $0x2a0] sm:$0xff]
  %v703 = vld [vmem:[%s649 + $0x2a8] sm:$0xff]
  %v704 = vld [vmem:[%s649 + $0x2b8] sm:$0xff]
  %v705 = vld [vmem:[%s649 + $0x2c0] sm:$0xff]
  %v706 = vld [vmem:[%s649 + $0x2d0] sm:$0xff]
  %v707 = vld [vmem:[%s649 + $0x2d8] sm:$0xff]
  %v708 = vld [vmem:[%s649 + $0x2e8] sm:$0xff]
  %v709 = vld [vmem:[%s649 + $0x2f0] sm:$0xff]
  %v710 = vld [vmem:[%s649 + $0x300] sm:$0xff]
  %v711 = vld [vmem:[%s649 + $0x308] sm:$0xff]
  %v712 = vld [vmem:[%s649 + $0x318] sm:$0xff]
  %v713 = vld [vmem:[%s649 + $0x320] sm:$0xff]
  %v714 = vld [vmem:[%s649 + $0x1] sm:$0xff]
  %v715 = vld [vmem:[%s649 + $0x9] sm:$0xff]
  %v716 = vld [vmem:[%s649 + $0x19] sm:$0xff]
  %v717 = vld [vmem:[%s649 + $0x21] sm:$0xff]
  %v718 = vld [vmem:[%s649 + $0x31] sm:$0xff]
  %v719 = vld [vmem:[%s649 + $0x39] sm:$0xff]
  %v720 = vld [vmem:[%s649 + $0x49] sm:$0xff]
  %v721 = vld [vmem:[%s649 + $0x51] sm:$0xff]
  %v722 = vld [vmem:[%s649 + $0x61] sm:$0xff]
  %v723 = vld [vmem:[%s649 + $0x69] sm:$0xff]
  %v724 = vld [vmem:[%s649 + $0x79] sm:$0xff]
  %v725 = vld [vmem:[%s649 + $0x81] sm:$0xff]
  %v726 = vld [vmem:[%s649 + $0x91] sm:$0xff]
  %v727 = vld [vmem:[%s649 + $0x99] sm:$0xff]
  %v728 = vld [vmem:[%s649 + $0xa9] sm:$0xff]
  %v729 = vld [vmem:[%s649 + $0xb1] sm:$0xff]
  %v730 = vld [vmem:[%s649 + $0xc1] sm:$0xff]
  %v731 = vld [vmem:[%s649 + $0xc9] sm:$0xff]
  %v732 = vld [vmem:[%s649 + $0xd9] sm:$0xff]
  %v733 = vld [vmem:[%s649 + $0xe1] sm:$0xff]
  %v734 = vld [vmem:[%s649 + $0xf1] sm:$0xff]
  %v735 = vld [vmem:[%s649 + $0xf9] sm:$0xff]
  %v736 = vld [vmem:[%s649 + $0x109] sm:$0xff]
  %v737 = vld [vmem:[%s649 + $0x111] sm:$0xff]
  %v738 = vld [vmem:[%s649 + $0x121] sm:$0xff]
  %v739 = vld [vmem:[%s649 + $0x129] sm:$0xff]
  %v740 = vld [vmem:[%s649 + $0x139] sm:$0xff]
  %v741 = vld [vmem:[%s649 + $0x141] sm:$0xff]
  %v742 = vld [vmem:[%s649 + $0x151] sm:$0xff]
  %v743 = vld [vmem:[%s649 + $0x159] sm:$0xff]
  %v744 = vld [vmem:[%s649 + $0x169] sm:$0xff]
  %v745 = vld [vmem:[%s649 + $0x171] sm:$0xff]
  %v746 = vld [vmem:[%s649 + $0x1b1] sm:$0xff]
  %v747 = vld [vmem:[%s649 + $0x1b9] sm:$0xff]
  %v748 = vld [vmem:[%s649 + $0x1c9] sm:$0xff]
  %v749 = vld [vmem:[%s649 + $0x1d1] sm:$0xff]
  %v750 = vld [vmem:[%s649 + $0x1e1] sm:$0xff]
  %v751 = vld [vmem:[%s649 + $0x1e9] sm:$0xff]
  %v752 = vld [vmem:[%s649 + $0x1f9] sm:$0xff]
  %v753 = vld [vmem:[%s649 + $0x201] sm:$0xff]
  %v754 = vld [vmem:[%s649 + $0x211] sm:$0xff]
  %v755 = vld [vmem:[%s649 + $0x219] sm:$0xff]
  %v756 = vld [vmem:[%s649 + $0x229] sm:$0xff]
  %v757 = vld [vmem:[%s649 + $0x231] sm:$0xff]
  %v758 = vld [vmem:[%s649 + $0x241] sm:$0xff]
  %v759 = vld [vmem:[%s649 + $0x249] sm:$0xff]
  %v760 = vld [vmem:[%s649 + $0x259] sm:$0xff]
  %v761 = vld [vmem:[%s649 + $0x261] sm:$0xff]
  %v762 = vld [vmem:[%s649 + $0x271] sm:$0xff]
  %v763 = vld [vmem:[%s649 + $0x279] sm:$0xff]
  %v764 = vld [vmem:[%s649 + $0x289] sm:$0xff]
  %v765 = vld [vmem:[%s649 + $0x291] sm:$0xff]
  %v766 = vld [vmem:[%s649 + $0x2a1] sm:$0xff]
  %v767 = vld [vmem:[%s649 + $0x2a9] sm:$0xff]
  %v768 = vld [vmem:[%s649 + $0x2b9] sm:$0xff]
  %v769 = vld [vmem:[%s649 + $0x2c1] sm:$0xff]
  %v770 = vld [vmem:[%s649 + $0x2d1] sm:$0xff]
  %v771 = vld [vmem:[%s649 + $0x2d9] sm:$0xff]
  %v772 = vld [vmem:[%s649 + $0x2e9] sm:$0xff]
  %v773 = vld [vmem:[%s649 + $0x2f1] sm:$0xff]
  %v774 = vld [vmem:[%s649 + $0x301] sm:$0xff]
  %v775 = vld [vmem:[%s649 + $0x309] sm:$0xff]
  %v776 = vld [vmem:[%s649 + $0x319] sm:$0xff]
  %v777 = vld [vmem:[%s649 + $0x321] sm:$0xff]
  %v778 = vld [vmem:[%s649 + $0x2] sm:$0xff]
  %v779 = vld [vmem:[%s649 + $0xa] sm:$0xff]
  %v780 = vld [vmem:[%s649 + $0x1a] sm:$0xff]
  %v781 = vld [vmem:[%s649 + $0x22] sm:$0xff]
  %v782 = vld [vmem:[%s649 + $0x32] sm:$0xff]
  %v783 = vld [vmem:[%s649 + $0x3a] sm:$0xff]
  %v784 = vld [vmem:[%s649 + $0x4a] sm:$0xff]
  %v785 = vld [vmem:[%s649 + $0x52] sm:$0xff]
  %v786 = vld [vmem:[%s649 + $0x62] sm:$0xff]
  %v787 = vld [vmem:[%s649 + $0x6a] sm:$0xff]
  %v788 = vld [vmem:[%s649 + $0x7a] sm:$0xff]
  %v789 = vld [vmem:[%s649 + $0x82] sm:$0xff]
  %v790 = vld [vmem:[%s649 + $0x92] sm:$0xff]
  %v791 = vld [vmem:[%s649 + $0x9a] sm:$0xff]
  %v792 = vld [vmem:[%s649 + $0xaa] sm:$0xff]
  %v793 = vld [vmem:[%s649 + $0xb2] sm:$0xff]
  %v794 = vld [vmem:[%s649 + $0xc2] sm:$0xff]
  %v795 = vld [vmem:[%s649 + $0xca] sm:$0xff]
  %v796 = vld [vmem:[%s649 + $0xda] sm:$0xff]
  %v797 = vld [vmem:[%s649 + $0xe2] sm:$0xff]
  %v798 = vld [vmem:[%s649 + $0xf2] sm:$0xff]
  %v799 = vld [vmem:[%s649 + $0xfa] sm:$0xff]
  %v800 = vld [vmem:[%s649 + $0x10a] sm:$0xff]
  %v801 = vld [vmem:[%s649 + $0x112] sm:$0xff]
  %v802 = vld [vmem:[%s649 + $0x122] sm:$0xff]
  %v803 = vld [vmem:[%s649 + $0x12a] sm:$0xff]
  %v804 = vld [vmem:[%s649 + $0x13a] sm:$0xff]
  %v805 = vld [vmem:[%s649 + $0x142] sm:$0xff]
  %v806 = vld [vmem:[%s649 + $0x152] sm:$0xff]
  %v807 = vld [vmem:[%s649 + $0x15a] sm:$0xff]
  %v808 = vld [vmem:[%s649 + $0x16a] sm:$0xff]
  %v809 = vld [vmem:[%s649 + $0x172] sm:$0xff]
  %v810 = vld [vmem:[%s649 + $0x1b2] sm:$0xff]
  %v811 = vld [vmem:[%s649 + $0x1ba] sm:$0xff]
  %v812 = vld [vmem:[%s649 + $0x1ca] sm:$0xff]
  %v813 = vld [vmem:[%s649 + $0x1d2] sm:$0xff]
  %v814 = vld [vmem:[%s649 + $0x1e2] sm:$0xff]
  %v815 = vld [vmem:[%s649 + $0x1ea] sm:$0xff]
  %v816 = vld [vmem:[%s649 + $0x1fa] sm:$0xff]
  %v817 = vld [vmem:[%s649 + $0x202] sm:$0xff]
  %v818 = vld [vmem:[%s649 + $0x212] sm:$0xff]
  %v819 = vld [vmem:[%s649 + $0x21a] sm:$0xff]
  %v820 = vld [vmem:[%s649 + $0x22a] sm:$0xff]
  %v821 = vld [vmem:[%s649 + $0x232] sm:$0xff]
  %v822 = vld [vmem:[%s649 + $0x242] sm:$0xff]
  %v823 = vld [vmem:[%s649 + $0x24a] sm:$0xff]
  %v824 = vld [vmem:[%s649 + $0x25a] sm:$0xff]
  %v825 = vld [vmem:[%s649 + $0x262] sm:$0xff]
  %v826 = vld [vmem:[%s649 + $0x272] sm:$0xff]
  %v827 = vld [vmem:[%s649 + $0x27a] sm:$0xff]
  %v828 = vld [vmem:[%s649 + $0x28a] sm:$0xff]
  %v829 = vld [vmem:[%s649 + $0x292] sm:$0xff]
  %v830 = vld [vmem:[%s649 + $0x2a2] sm:$0xff]
  %v831 = vld [vmem:[%s649 + $0x2aa] sm:$0xff]
  %v832 = vld [vmem:[%s649 + $0x2ba] sm:$0xff]
  %v833 = vld [vmem:[%s649 + $0x2c2] sm:$0xff]
  %v834 = vld [vmem:[%s649 + $0x2d2] sm:$0xff]
  %v835 = vld [vmem:[%s649 + $0x2da] sm:$0xff]
  %v836 = vld [vmem:[%s649 + $0x2ea] sm:$0xff]
  %v837 = vld [vmem:[%s649 + $0x2f2] sm:$0xff]
  %v838 = vld [vmem:[%s649 + $0x302] sm:$0xff]
  %v839 = vld [vmem:[%s649 + $0x30a] sm:$0xff]
  %v840 = vld [vmem:[%s649 + $0x31a] sm:$0xff]
  %v841 = vld [vmem:[%s649 + $0x322] sm:$0xff]
  %906 = vrot.lane.b32.xlu0 %v329, 4
  %v907 = vpop.permute.xlu0 %906
  %908 = vrot.lane.b32.xlu0 %v330, 4
  %v909 = vpop.permute.xlu0 %908
  %910 = vrot.lane.b32.xlu0 %v331, 4
  %v911 = vpop.permute.xlu0 %910
  %912 = vrot.lane.b32.xlu0 %v332, 4
  %v913 = vpop.permute.xlu0 %912
  %914 = vrot.lane.b32.xlu0 %v333, 4
  %v915 = vpop.permute.xlu0 %914
  %916 = vrot.lane.b32.xlu0 %v334, 4
  %v917 = vpop.permute.xlu0 %916
  %918 = vrot.lane.b32.xlu0 %v335, 4
  %v919 = vpop.permute.xlu0 %918
  %920 = vrot.lane.b32.xlu0 %v336, 4
  %v921 = vpop.permute.xlu0 %920
  %922 = vrot.lane.b32.xlu0 %v337, 4
  %v923 = vpop.permute.xlu0 %922
  %924 = vrot.lane.b32.xlu0 %v338, 4
  %v925 = vpop.permute.xlu0 %924
  %926 = vrot.lane.b32.xlu0 %v339, 4
  %v927 = vpop.permute.xlu0 %926
  %928 = vrot.lane.b32.xlu0 %v340, 4
  %v929 = vpop.permute.xlu0 %928
  %930 = vrot.lane.b32.xlu0 %v341, 4
  %v931 = vpop.permute.xlu0 %930
  %932 = vrot.lane.b32.xlu0 %v342, 4
  %v933 = vpop.permute.xlu0 %932
  %934 = vrot.lane.b32.xlu0 %v343, 4
  %v935 = vpop.permute.xlu0 %934
  %936 = vrot.lane.b32.xlu0 %v344, 4
  %v937 = vpop.permute.xlu0 %936
  %938 = vrot.lane.b32.xlu0 %v345, 4
  %v939 = vpop.permute.xlu0 %938
  %940 = vrot.lane.b32.xlu0 %v346, 4
  %v941 = vpop.permute.xlu0 %940
  %942 = vrot.lane.b32.xlu0 %v347, 4
  %v943 = vpop.permute.xlu0 %942
  %944 = vrot.lane.b32.xlu0 %v348, 4
  %v945 = vpop.permute.xlu0 %944
  %946 = vrot.lane.b32.xlu0 %v349, 4
  %v947 = vpop.permute.xlu0 %946
  %948 = vrot.lane.b32.xlu0 %v350, 4
  %v949 = vpop.permute.xlu0 %948
  %950 = vrot.lane.b32.xlu0 %v351, 4
  %v951 = vpop.permute.xlu0 %950
  %952 = vrot.lane.b32.xlu0 %v352, 4
  %v953 = vpop.permute.xlu0 %952
  %954 = vrot.lane.b32.xlu0 %v353, 4
  %v955 = vpop.permute.xlu0 %954
  %956 = vrot.lane.b32.xlu0 %v354, 4
  %v957 = vpop.permute.xlu0 %956
  %958 = vrot.lane.b32.xlu0 %v355, 4
  %v959 = vpop.permute.xlu0 %958
  %960 = vrot.lane.b32.xlu0 %v356, 4
  %v961 = vpop.permute.xlu0 %960
  %962 = vrot.lane.b32.xlu0 %v357, 4
  %v963 = vpop.permute.xlu0 %962
  %964 = vrot.lane.b32.xlu0 %v358, 4
  %v965 = vpop.permute.xlu0 %964
  %966 = vrot.lane.b32.xlu0 %v359, 4
  %v967 = vpop.permute.xlu0 %966
  %968 = vrot.lane.b32.xlu0 %v360, 4
  %v969 = vpop.permute.xlu0 %968
  %970 = vrot.lane.b32.xlu0 %v361, 4
  %v971 = vpop.permute.xlu0 %970
  %972 = vrot.lane.b32.xlu0 %v362, 4
  %v973 = vpop.permute.xlu0 %972
  %974 = vrot.lane.b32.xlu0 %v363, 4
  %v975 = vpop.permute.xlu0 %974
  %976 = vrot.lane.b32.xlu0 %v364, 4
  %v977 = vpop.permute.xlu0 %976
  %978 = vrot.lane.b32.xlu0 %v365, 4
  %v979 = vpop.permute.xlu0 %978
  %980 = vrot.lane.b32.xlu0 %v366, 4
  %v981 = vpop.permute.xlu0 %980
  %982 = vrot.lane.b32.xlu0 %v367, 4
  %v983 = vpop.permute.xlu0 %982
  %984 = vrot.lane.b32.xlu0 %v368, 4
  %v985 = vpop.permute.xlu0 %984
  %986 = vrot.lane.b32.xlu0 %v369, 4
  %v987 = vpop.permute.xlu0 %986
  %988 = vrot.lane.b32.xlu0 %v370, 4
  %v989 = vpop.permute.xlu0 %988
  %990 = vrot.lane.b32.xlu0 %v371, 4
  %v991 = vpop.permute.xlu0 %990
  %992 = vrot.lane.b32.xlu0 %v372, 4
  %v993 = vpop.permute.xlu0 %992
  %994 = vrot.lane.b32.xlu0 %v373, 4
  %v995 = vpop.permute.xlu0 %994
  %996 = vrot.lane.b32.xlu0 %v374, 4
  %v997 = vpop.permute.xlu0 %996
  %998 = vrot.lane.b32.xlu0 %v375, 4
  %v999 = vpop.permute.xlu0 %998
  %1000 = vrot.lane.b32.xlu0 %v376, 4
  %v1001 = vpop.permute.xlu0 %1000
  %1002 = vrot.lane.b32.xlu0 %v377, 4
  %v1003 = vpop.permute.xlu0 %1002
  %1004 = vrot.lane.b32.xlu0 %v378, 4
  %v1005 = vpop.permute.xlu0 %1004
  %1006 = vrot.lane.b32.xlu0 %v379, 4
  %v1007 = vpop.permute.xlu0 %1006
  %1008 = vrot.lane.b32.xlu0 %v380, 4
  %v1009 = vpop.permute.xlu0 %1008
  %1010 = vrot.lane.b32.xlu0 %v381, 4
  %v1011 = vpop.permute.xlu0 %1010
  %1012 = vrot.lane.b32.xlu0 %v382, 4
  %v1013 = vpop.permute.xlu0 %1012
  %1014 = vrot.lane.b32.xlu0 %v383, 4
  %v1015 = vpop.permute.xlu0 %1014
  %1016 = vrot.lane.b32.xlu0 %v384, 4
  %v1017 = vpop.permute.xlu0 %1016
  %1018 = vrot.lane.b32.xlu0 %v385, 4
  %v1019 = vpop.permute.xlu0 %1018
  %1020 = vrot.lane.b32.xlu0 %v386, 4
  %v1021 = vpop.permute.xlu0 %1020
  %1022 = vrot.lane.b32.xlu0 %v387, 4
  %v1023 = vpop.permute.xlu0 %1022
  %1024 = vrot.lane.b32.xlu0 %v388, 4
  %v1025 = vpop.permute.xlu0 %1024
  %1026 = vrot.lane.b32.xlu0 %v389, 4
  %v1027 = vpop.permute.xlu0 %1026
  %1028 = vrot.lane.b32.xlu0 %v390, 4
  %v1029 = vpop.permute.xlu0 %1028
  %1030 = vrot.lane.b32.xlu0 %v391, 4
  %v1031 = vpop.permute.xlu0 %1030
  %1032 = vrot.lane.b32.xlu0 %v392, 4
  %v1033 = vpop.permute.xlu0 %1032
  %1162 = vrot.lane.b32.xlu0 %v393, 8
  %v1163 = vpop.permute.xlu0 %1162
  %1164 = vrot.lane.b32.xlu0 %v394, 8
  %v1165 = vpop.permute.xlu0 %1164
  %1166 = vrot.lane.b32.xlu0 %v395, 8
  %v1167 = vpop.permute.xlu0 %1166
  %1168 = vrot.lane.b32.xlu0 %v396, 8
  %v1169 = vpop.permute.xlu0 %1168
  %1170 = vrot.lane.b32.xlu0 %v397, 8
  %v1171 = vpop.permute.xlu0 %1170
  %1172 = vrot.lane.b32.xlu0 %v398, 8
  %v1173 = vpop.permute.xlu0 %1172
  %1174 = vrot.lane.b32.xlu0 %v399, 8
  %v1175 = vpop.permute.xlu0 %1174
  %1176 = vrot.lane.b32.xlu0 %v400, 8
  %v1177 = vpop.permute.xlu0 %1176
  %1178 = vrot.lane.b32.xlu0 %v401, 8
  %v1179 = vpop.permute.xlu0 %1178
  %1180 = vrot.lane.b32.xlu0 %v402, 8
  %v1181 = vpop.permute.xlu0 %1180
  %1182 = vrot.lane.b32.xlu0 %v403, 8
  %v1183 = vpop.permute.xlu0 %1182
  %1184 = vrot.lane.b32.xlu0 %v404, 8
  %v1185 = vpop.permute.xlu0 %1184
  %1186 = vrot.lane.b32.xlu0 %v405, 8
  %v1187 = vpop.permute.xlu0 %1186
  %1188 = vrot.lane.b32.xlu0 %v406, 8
  %v1189 = vpop.permute.xlu0 %1188
  %1190 = vrot.lane.b32.xlu0 %v407, 8
  %v1191 = vpop.permute.xlu0 %1190
  %1192 = vrot.lane.b32.xlu0 %v408, 8
  %v1193 = vpop.permute.xlu0 %1192
  %1194 = vrot.lane.b32.xlu0 %v409, 8
  %v1195 = vpop.permute.xlu0 %1194
  %1196 = vrot.lane.b32.xlu0 %v410, 8
  %v1197 = vpop.permute.xlu0 %1196
  %1198 = vrot.lane.b32.xlu0 %v411, 8
  %v1199 = vpop.permute.xlu0 %1198
  %1200 = vrot.lane.b32.xlu0 %v412, 8
  %v1201 = vpop.permute.xlu0 %1200
  %1202 = vrot.lane.b32.xlu0 %v413, 8
  %v1203 = vpop.permute.xlu0 %1202
  %1204 = vrot.lane.b32.xlu0 %v414, 8
  %v1205 = vpop.permute.xlu0 %1204
  %1206 = vrot.lane.b32.xlu0 %v415, 8
  %v1207 = vpop.permute.xlu0 %1206
  %1208 = vrot.lane.b32.xlu0 %v416, 8
  %v1209 = vpop.permute.xlu0 %1208
  %1210 = vrot.lane.b32.xlu0 %v417, 8
  %v1211 = vpop.permute.xlu0 %1210
  %1212 = vrot.lane.b32.xlu0 %v418, 8
  %v1213 = vpop.permute.xlu0 %1212
  %1214 = vrot.lane.b32.xlu0 %v419, 8
  %v1215 = vpop.permute.xlu0 %1214
  %1216 = vrot.lane.b32.xlu0 %v420, 8
  %v1217 = vpop.permute.xlu0 %1216
  %1218 = vrot.lane.b32.xlu0 %v421, 8
  %v1219 = vpop.permute.xlu0 %1218
  %1220 = vrot.lane.b32.xlu0 %v422, 8
  %v1221 = vpop.permute.xlu0 %1220
  %1222 = vrot.lane.b32.xlu0 %v423, 8
  %v1223 = vpop.permute.xlu0 %1222
  %1224 = vrot.lane.b32.xlu0 %v424, 8
  %v1225 = vpop.permute.xlu0 %1224
  %1226 = vrot.lane.b32.xlu0 %v425, 8
  %v1227 = vpop.permute.xlu0 %1226
  %1228 = vrot.lane.b32.xlu0 %v426, 8
  %v1229 = vpop.permute.xlu0 %1228
  %1230 = vrot.lane.b32.xlu0 %v427, 8
  %v1231 = vpop.permute.xlu0 %1230
  %1232 = vrot.lane.b32.xlu0 %v428, 8
  %v1233 = vpop.permute.xlu0 %1232
  %1234 = vrot.lane.b32.xlu0 %v429, 8
  %v1235 = vpop.permute.xlu0 %1234
  %1236 = vrot.lane.b32.xlu0 %v430, 8
  %v1237 = vpop.permute.xlu0 %1236
  %1238 = vrot.lane.b32.xlu0 %v431, 8
  %v1239 = vpop.permute.xlu0 %1238
  %1240 = vrot.lane.b32.xlu0 %v432, 8
  %v1241 = vpop.permute.xlu0 %1240
  %1242 = vrot.lane.b32.xlu0 %v433, 8
  %v1243 = vpop.permute.xlu0 %1242
  %1244 = vrot.lane.b32.xlu0 %v434, 8
  %v1245 = vpop.permute.xlu0 %1244
  %1246 = vrot.lane.b32.xlu0 %v435, 8
  %v1247 = vpop.permute.xlu0 %1246
  %1248 = vrot.lane.b32.xlu0 %v436, 8
  %v1249 = vpop.permute.xlu0 %1248
  %1250 = vrot.lane.b32.xlu0 %v437, 8
  %v1251 = vpop.permute.xlu0 %1250
  %1252 = vrot.lane.b32.xlu0 %v438, 8
  %v1253 = vpop.permute.xlu0 %1252
  %1254 = vrot.lane.b32.xlu0 %v439, 8
  %v1255 = vpop.permute.xlu0 %1254
  %1256 = vrot.lane.b32.xlu0 %v440, 8
  %v1257 = vpop.permute.xlu0 %1256
  %1258 = vrot.lane.b32.xlu0 %v441, 8
  %v1259 = vpop.permute.xlu0 %1258
  %1260 = vrot.lane.b32.xlu0 %v442, 8
  %v1261 = vpop.permute.xlu0 %1260
  %1262 = vrot.lane.b32.xlu0 %v443, 8
  %v1263 = vpop.permute.xlu0 %1262
  %1264 = vrot.lane.b32.xlu0 %v444, 8
  %v1265 = vpop.permute.xlu0 %1264
  %1266 = vrot.lane.b32.xlu0 %v445, 8
  %v1267 = vpop.permute.xlu0 %1266
  %1268 = vrot.lane.b32.xlu0 %v446, 8
  %v1269 = vpop.permute.xlu0 %1268
  %1270 = vrot.lane.b32.xlu0 %v447, 8
  %v1271 = vpop.permute.xlu0 %1270
  %1272 = vrot.lane.b32.xlu0 %v448, 8
  %v1273 = vpop.permute.xlu0 %1272
  %1274 = vrot.lane.b32.xlu0 %v449, 8
  %v1275 = vpop.permute.xlu0 %1274
  %1276 = vrot.lane.b32.xlu0 %v450, 8
  %v1277 = vpop.permute.xlu0 %1276
  %1278 = vrot.lane.b32.xlu0 %v451, 8
  %v1279 = vpop.permute.xlu0 %1278
  %1280 = vrot.lane.b32.xlu0 %v452, 8
  %v1281 = vpop.permute.xlu0 %1280
  %1282 = vrot.lane.b32.xlu0 %v453, 8
  %v1283 = vpop.permute.xlu0 %1282
  %1284 = vrot.lane.b32.xlu0 %v454, 8
  %v1285 = vpop.permute.xlu0 %1284
  %1286 = vrot.lane.b32.xlu0 %v455, 8
  %v1287 = vpop.permute.xlu0 %1286
  %1288 = vrot.lane.b32.xlu0 %v456, 8
  %v1289 = vpop.permute.xlu0 %1288
  %1418 = vrot.lane.b32.xlu0 %v457, 12
  %v1419 = vpop.permute.xlu0 %1418
  %1420 = vrot.lane.b32.xlu0 %v458, 12
  %v1421 = vpop.permute.xlu0 %1420
  %1422 = vrot.lane.b32.xlu0 %v459, 12
  %v1423 = vpop.permute.xlu0 %1422
  %1424 = vrot.lane.b32.xlu0 %v460, 12
  %v1425 = vpop.permute.xlu0 %1424
  %1426 = vrot.lane.b32.xlu0 %v461, 12
  %v1427 = vpop.permute.xlu0 %1426
  %1428 = vrot.lane.b32.xlu0 %v462, 12
  %v1429 = vpop.permute.xlu0 %1428
  %1430 = vrot.lane.b32.xlu0 %v463, 12
  %v1431 = vpop.permute.xlu0 %1430
  %1432 = vrot.lane.b32.xlu0 %v464, 12
  %v1433 = vpop.permute.xlu0 %1432
  %1434 = vrot.lane.b32.xlu0 %v465, 12
  %v1435 = vpop.permute.xlu0 %1434
  %1436 = vrot.lane.b32.xlu0 %v466, 12
  %v1437 = vpop.permute.xlu0 %1436
  %1438 = vrot.lane.b32.xlu0 %v467, 12
  %v1439 = vpop.permute.xlu0 %1438
  %1440 = vrot.lane.b32.xlu0 %v468, 12
  %v1441 = vpop.permute.xlu0 %1440
  %1442 = vrot.lane.b32.xlu0 %v469, 12
  %v1443 = vpop.permute.xlu0 %1442
  %1444 = vrot.lane.b32.xlu0 %v470, 12
  %v1445 = vpop.permute.xlu0 %1444
  %1446 = vrot.lane.b32.xlu0 %v471, 12
  %v1447 = vpop.permute.xlu0 %1446
  %1448 = vrot.lane.b32.xlu0 %v472, 12
  %v1449 = vpop.permute.xlu0 %1448
  %1450 = vrot.lane.b32.xlu0 %v473, 12
  %v1451 = vpop.permute.xlu0 %1450
  %1452 = vrot.lane.b32.xlu0 %v474, 12
  %v1453 = vpop.permute.xlu0 %1452
  %1454 = vrot.lane.b32.xlu0 %v475, 12
  %v1455 = vpop.permute.xlu0 %1454
  %1456 = vrot.lane.b32.xlu0 %v476, 12
  %v1457 = vpop.permute.xlu0 %1456
  %1458 = vrot.lane.b32.xlu0 %v477, 12
  %v1459 = vpop.permute.xlu0 %1458
  %1460 = vrot.lane.b32.xlu0 %v478, 12
  %v1461 = vpop.permute.xlu0 %1460
  %1462 = vrot.lane.b32.xlu0 %v479, 12
  %v1463 = vpop.permute.xlu0 %1462
  %1464 = vrot.lane.b32.xlu0 %v480, 12
  %v1465 = vpop.permute.xlu0 %1464
  %1466 = vrot.lane.b32.xlu0 %v481, 12
  %v1467 = vpop.permute.xlu0 %1466
  %1468 = vrot.lane.b32.xlu0 %v482, 12
  %v1469 = vpop.permute.xlu0 %1468
  %1470 = vrot.lane.b32.xlu0 %v483, 12
  %v1471 = vpop.permute.xlu0 %1470
  %1472 = vrot.lane.b32.xlu0 %v484, 12
  %v1473 = vpop.permute.xlu0 %1472
  %1474 = vrot.lane.b32.xlu0 %v485, 12
  %v1475 = vpop.permute.xlu0 %1474
  %1476 = vrot.lane.b32.xlu0 %v486, 12
  %v1477 = vpop.permute.xlu0 %1476
  %1478 = vrot.lane.b32.xlu0 %v487, 12
  %v1479 = vpop.permute.xlu0 %1478
  %1480 = vrot.lane.b32.xlu0 %v488, 12
  %v1481 = vpop.permute.xlu0 %1480
  %1482 = vrot.lane.b32.xlu0 %v489, 12
  %v1483 = vpop.permute.xlu0 %1482
  %1484 = vrot.lane.b32.xlu0 %v490, 12
  %v1485 = vpop.permute.xlu0 %1484
  %1486 = vrot.lane.b32.xlu0 %v491, 12
  %v1487 = vpop.permute.xlu0 %1486
  %1488 = vrot.lane.b32.xlu0 %v492, 12
  %v1489 = vpop.permute.xlu0 %1488
  %1490 = vrot.lane.b32.xlu0 %v493, 12
  %v1491 = vpop.permute.xlu0 %1490
  %1492 = vrot.lane.b32.xlu0 %v494, 12
  %v1493 = vpop.permute.xlu0 %1492
  %1494 = vrot.lane.b32.xlu0 %v495, 12
  %v1495 = vpop.permute.xlu0 %1494
  %1496 = vrot.lane.b32.xlu0 %v496, 12
  %v1497 = vpop.permute.xlu0 %1496
  %1498 = vrot.lane.b32.xlu0 %v497, 12
  %v1499 = vpop.permute.xlu0 %1498
  %1500 = vrot.lane.b32.xlu0 %v498, 12
  %v1501 = vpop.permute.xlu0 %1500
  %1502 = vrot.lane.b32.xlu0 %v499, 12
  %v1503 = vpop.permute.xlu0 %1502
  %1504 = vrot.lane.b32.xlu0 %v500, 12
  %v1505 = vpop.permute.xlu0 %1504
  %1506 = vrot.lane.b32.xlu0 %v501, 12
  %v1507 = vpop.permute.xlu0 %1506
  %1508 = vrot.lane.b32.xlu0 %v502, 12
  %v1509 = vpop.permute.xlu0 %1508
  %1510 = vrot.lane.b32.xlu0 %v503, 12
  %v1511 = vpop.permute.xlu0 %1510
  %1512 = vrot.lane.b32.xlu0 %v504, 12
  %v1513 = vpop.permute.xlu0 %1512
  %1514 = vrot.lane.b32.xlu0 %v505, 12
  %v1515 = vpop.permute.xlu0 %1514
  %1516 = vrot.lane.b32.xlu0 %v506, 12
  %v1517 = vpop.permute.xlu0 %1516
  %1518 = vrot.lane.b32.xlu0 %v507, 12
  %v1519 = vpop.permute.xlu0 %1518
  %1520 = vrot.lane.b32.xlu0 %v508, 12
  %v1521 = vpop.permute.xlu0 %1520
  %1522 = vrot.lane.b32.xlu0 %v509, 12
  %v1523 = vpop.permute.xlu0 %1522
  %1524 = vrot.lane.b32.xlu0 %v510, 12
  %v1525 = vpop.permute.xlu0 %1524
  %1526 = vrot.lane.b32.xlu0 %v511, 12
  %v1527 = vpop.permute.xlu0 %1526
  %1528 = vrot.lane.b32.xlu0 %v512, 12
  %v1529 = vpop.permute.xlu0 %1528
  %1530 = vrot.lane.b32.xlu0 %v513, 12
  %v1531 = vpop.permute.xlu0 %1530
  %1532 = vrot.lane.b32.xlu0 %v514, 12
  %v1533 = vpop.permute.xlu0 %1532
  %1534 = vrot.lane.b32.xlu0 %v515, 12
  %v1535 = vpop.permute.xlu0 %1534
  %1536 = vrot.lane.b32.xlu0 %v516, 12
  %v1537 = vpop.permute.xlu0 %1536
  %1538 = vrot.lane.b32.xlu0 %v517, 12
  %v1539 = vpop.permute.xlu0 %1538
  %1540 = vrot.lane.b32.xlu0 %v518, 12
  %v1541 = vpop.permute.xlu0 %1540
  %1542 = vrot.lane.b32.xlu0 %v519, 12
  %v1543 = vpop.permute.xlu0 %1542
  %1544 = vrot.lane.b32.xlu0 %v520, 12
  %v1545 = vpop.permute.xlu0 %1544
  %1674 = vrot.lane.b32.xlu0 %v521, 16
  %v1675 = vpop.permute.xlu0 %1674
  %1676 = vrot.lane.b32.xlu0 %v522, 16
  %v1677 = vpop.permute.xlu0 %1676
  %1678 = vrot.lane.b32.xlu0 %v523, 16
  %v1679 = vpop.permute.xlu0 %1678
  %1680 = vrot.lane.b32.xlu0 %v524, 16
  %v1681 = vpop.permute.xlu0 %1680
  %1682 = vrot.lane.b32.xlu0 %v525, 16
  %v1683 = vpop.permute.xlu0 %1682
  %1684 = vrot.lane.b32.xlu0 %v526, 16
  %v1685 = vpop.permute.xlu0 %1684
  %1686 = vrot.lane.b32.xlu0 %v527, 16
  %v1687 = vpop.permute.xlu0 %1686
  %1688 = vrot.lane.b32.xlu0 %v528, 16
  %v1689 = vpop.permute.xlu0 %1688
  %1690 = vrot.lane.b32.xlu0 %v529, 16
  %v1691 = vpop.permute.xlu0 %1690
  %1692 = vrot.lane.b32.xlu0 %v530, 16
  %v1693 = vpop.permute.xlu0 %1692
  %1694 = vrot.lane.b32.xlu0 %v531, 16
  %v1695 = vpop.permute.xlu0 %1694
  %1696 = vrot.lane.b32.xlu0 %v532, 16
  %v1697 = vpop.permute.xlu0 %1696
  %1698 = vrot.lane.b32.xlu0 %v533, 16
  %v1699 = vpop.permute.xlu0 %1698
  %1700 = vrot.lane.b32.xlu0 %v534, 16
  %v1701 = vpop.permute.xlu0 %1700
  %1702 = vrot.lane.b32.xlu0 %v535, 16
  %v1703 = vpop.permute.xlu0 %1702
  %1704 = vrot.lane.b32.xlu0 %v536, 16
  %v1705 = vpop.permute.xlu0 %1704
  %1706 = vrot.lane.b32.xlu0 %v537, 16
  %v1707 = vpop.permute.xlu0 %1706
  %1708 = vrot.lane.b32.xlu0 %v538, 16
  %v1709 = vpop.permute.xlu0 %1708
  %1710 = vrot.lane.b32.xlu0 %v539, 16
  %v1711 = vpop.permute.xlu0 %1710
  %1712 = vrot.lane.b32.xlu0 %v540, 16
  %v1713 = vpop.permute.xlu0 %1712
  %1714 = vrot.lane.b32.xlu0 %v541, 16
  %v1715 = vpop.permute.xlu0 %1714
  %1716 = vrot.lane.b32.xlu0 %v542, 16
  %v1717 = vpop.permute.xlu0 %1716
  %1718 = vrot.lane.b32.xlu0 %v543, 16
  %v1719 = vpop.permute.xlu0 %1718
  %1720 = vrot.lane.b32.xlu0 %v544, 16
  %v1721 = vpop.permute.xlu0 %1720
  %1722 = vrot.lane.b32.xlu0 %v545, 16
  %v1723 = vpop.permute.xlu0 %1722
  %1724 = vrot.lane.b32.xlu0 %v546, 16
  %v1725 = vpop.permute.xlu0 %1724
  %1726 = vrot.lane.b32.xlu0 %v547, 16
  %v1727 = vpop.permute.xlu0 %1726
  %1728 = vrot.lane.b32.xlu0 %v548, 16
  %v1729 = vpop.permute.xlu0 %1728
  %1730 = vrot.lane.b32.xlu0 %v549, 16
  %v1731 = vpop.permute.xlu0 %1730
  %1732 = vrot.lane.b32.xlu0 %v550, 16
  %v1733 = vpop.permute.xlu0 %1732
  %1734 = vrot.lane.b32.xlu0 %v551, 16
  %v1735 = vpop.permute.xlu0 %1734
  %1736 = vrot.lane.b32.xlu0 %v552, 16
  %v1737 = vpop.permute.xlu0 %1736
  %1738 = vrot.lane.b32.xlu0 %v553, 16
  %v1739 = vpop.permute.xlu0 %1738
  %1740 = vrot.lane.b32.xlu0 %v554, 16
  %v1741 = vpop.permute.xlu0 %1740
  %1742 = vrot.lane.b32.xlu0 %v555, 16
  %v1743 = vpop.permute.xlu0 %1742
  %1744 = vrot.lane.b32.xlu0 %v556, 16
  %v1745 = vpop.permute.xlu0 %1744
  %1746 = vrot.lane.b32.xlu0 %v557, 16
  %v1747 = vpop.permute.xlu0 %1746
  %1748 = vrot.lane.b32.xlu0 %v558, 16
  %v1749 = vpop.permute.xlu0 %1748
  %1750 = vrot.lane.b32.xlu0 %v559, 16
  %v1751 = vpop.permute.xlu0 %1750
  %1752 = vrot.lane.b32.xlu0 %v560, 16
  %v1753 = vpop.permute.xlu0 %1752
  %1754 = vrot.lane.b32.xlu0 %v561, 16
  %v1755 = vpop.permute.xlu0 %1754
  %1756 = vrot.lane.b32.xlu0 %v562, 16
  %v1757 = vpop.permute.xlu0 %1756
  %1758 = vrot.lane.b32.xlu0 %v563, 16
  %v1759 = vpop.permute.xlu0 %1758
  %1760 = vrot.lane.b32.xlu0 %v564, 16
  %v1761 = vpop.permute.xlu0 %1760
  %1762 = vrot.lane.b32.xlu0 %v565, 16
  %v1763 = vpop.permute.xlu0 %1762
  %1764 = vrot.lane.b32.xlu0 %v566, 16
  %v1765 = vpop.permute.xlu0 %1764
  %1766 = vrot.lane.b32.xlu0 %v567, 16
  %v1767 = vpop.permute.xlu0 %1766
  %1768 = vrot.lane.b32.xlu0 %v568, 16
  %v1769 = vpop.permute.xlu0 %1768
  %1770 = vrot.lane.b32.xlu0 %v569, 16
  %v1771 = vpop.permute.xlu0 %1770
  %1772 = vrot.lane.b32.xlu0 %v570, 16
  %v1773 = vpop.permute.xlu0 %1772
  %1774 = vrot.lane.b32.xlu0 %v571, 16
  %v1775 = vpop.permute.xlu0 %1774
  %1776 = vrot.lane.b32.xlu0 %v572, 16
  %v1777 = vpop.permute.xlu0 %1776
  %1778 = vrot.lane.b32.xlu0 %v573, 16
  %v1779 = vpop.permute.xlu0 %1778
  %1780 = vrot.lane.b32.xlu0 %v574, 16
  %v1781 = vpop.permute.xlu0 %1780
  %1782 = vrot.lane.b32.xlu0 %v575, 16
  %v1783 = vpop.permute.xlu0 %1782
  %1784 = vrot.lane.b32.xlu0 %v576, 16
  %v1785 = vpop.permute.xlu0 %1784
  %1786 = vrot.lane.b32.xlu0 %v577, 16
  %v1787 = vpop.permute.xlu0 %1786
  %1788 = vrot.lane.b32.xlu0 %v578, 16
  %v1789 = vpop.permute.xlu0 %1788
  %1790 = vrot.lane.b32.xlu0 %v579, 16
  %v1791 = vpop.permute.xlu0 %1790
  %1792 = vrot.lane.b32.xlu0 %v580, 16
  %v1793 = vpop.permute.xlu0 %1792
  %1794 = vrot.lane.b32.xlu0 %v581, 16
  %v1795 = vpop.permute.xlu0 %1794
  %1796 = vrot.lane.b32.xlu0 %v582, 16
  %v1797 = vpop.permute.xlu0 %1796
  %1798 = vrot.lane.b32.xlu0 %v583, 16
  %v1799 = vpop.permute.xlu0 %1798
  %1800 = vrot.lane.b32.xlu0 %v584, 16
  %v1801 = vpop.permute.xlu0 %1800
  %1930 = vrot.lane.b32.xlu0 %v585, 20
  %v1931 = vpop.permute.xlu0 %1930
  %1932 = vrot.lane.b32.xlu0 %v586, 20
  %v1933 = vpop.permute.xlu0 %1932
  %1934 = vrot.lane.b32.xlu0 %v587, 20
  %v1935 = vpop.permute.xlu0 %1934
  %1936 = vrot.lane.b32.xlu0 %v588, 20
  %v1937 = vpop.permute.xlu0 %1936
  %1938 = vrot.lane.b32.xlu0 %v589, 20
  %v1939 = vpop.permute.xlu0 %1938
  %1940 = vrot.lane.b32.xlu0 %v590, 20
  %v1941 = vpop.permute.xlu0 %1940
  %1942 = vrot.lane.b32.xlu0 %v591, 20
  %v1943 = vpop.permute.xlu0 %1942
  %1944 = vrot.lane.b32.xlu0 %v592, 20
  %v1945 = vpop.permute.xlu0 %1944
  %1946 = vrot.lane.b32.xlu0 %v593, 20
  %v1947 = vpop.permute.xlu0 %1946
  %1948 = vrot.lane.b32.xlu0 %v594, 20
  %v1949 = vpop.permute.xlu0 %1948
  %1950 = vrot.lane.b32.xlu0 %v595, 20
  %v1951 = vpop.permute.xlu0 %1950
  %1952 = vrot.lane.b32.xlu0 %v596, 20
  %v1953 = vpop.permute.xlu0 %1952
  %1954 = vrot.lane.b32.xlu0 %v597, 20
  %v1955 = vpop.permute.xlu0 %1954
  %1956 = vrot.lane.b32.xlu0 %v598, 20
  %v1957 = vpop.permute.xlu0 %1956
  %1958 = vrot.lane.b32.xlu0 %v599, 20
  %v1959 = vpop.permute.xlu0 %1958
  %1960 = vrot.lane.b32.xlu0 %v600, 20
  %v1961 = vpop.permute.xlu0 %1960
  %1962 = vrot.lane.b32.xlu0 %v601, 20
  %v1963 = vpop.permute.xlu0 %1962
  %1964 = vrot.lane.b32.xlu0 %v602, 20
  %v1965 = vpop.permute.xlu0 %1964
  %1966 = vrot.lane.b32.xlu0 %v603, 20
  %v1967 = vpop.permute.xlu0 %1966
  %1968 = vrot.lane.b32.xlu0 %v604, 20
  %v1969 = vpop.permute.xlu0 %1968
  %1970 = vrot.lane.b32.xlu0 %v605, 20
  %v1971 = vpop.permute.xlu0 %1970
  %1972 = vrot.lane.b32.xlu0 %v606, 20
  %v1973 = vpop.permute.xlu0 %1972
  %1974 = vrot.lane.b32.xlu0 %v607, 20
  %v1975 = vpop.permute.xlu0 %1974
  %1976 = vrot.lane.b32.xlu0 %v608, 20
  %v1977 = vpop.permute.xlu0 %1976
  %1978 = vrot.lane.b32.xlu0 %v609, 20
  %v1979 = vpop.permute.xlu0 %1978
  %1980 = vrot.lane.b32.xlu0 %v610, 20
  %v1981 = vpop.permute.xlu0 %1980
  %1982 = vrot.lane.b32.xlu0 %v611, 20
  %v1983 = vpop.permute.xlu0 %1982
  %1984 = vrot.lane.b32.xlu0 %v612, 20
  %v1985 = vpop.permute.xlu0 %1984
  %1986 = vrot.lane.b32.xlu0 %v613, 20
  %v1987 = vpop.permute.xlu0 %1986
  %1988 = vrot.lane.b32.xlu0 %v614, 20
  %v1989 = vpop.permute.xlu0 %1988
  %1990 = vrot.lane.b32.xlu0 %v615, 20
  %v1991 = vpop.permute.xlu0 %1990
  %1992 = vrot.lane.b32.xlu0 %v616, 20
  %v1993 = vpop.permute.xlu0 %1992
  %1994 = vrot.lane.b32.xlu0 %v617, 20
  %v1995 = vpop.permute.xlu0 %1994
  %1996 = vrot.lane.b32.xlu0 %v618, 20
  %v1997 = vpop.permute.xlu0 %1996
  %1998 = vrot.lane.b32.xlu0 %v619, 20
  %v1999 = vpop.permute.xlu0 %1998
  %2000 = vrot.lane.b32.xlu0 %v620, 20
  %v2001 = vpop.permute.xlu0 %2000
  %2002 = vrot.lane.b32.xlu0 %v621, 20
  %v2003 = vpop.permute.xlu0 %2002
  %2004 = vrot.lane.b32.xlu0 %v622, 20
  %v2005 = vpop.permute.xlu0 %2004
  %2006 = vrot.lane.b32.xlu0 %v623, 20
  %v2007 = vpop.permute.xlu0 %2006
  %2008 = vrot.lane.b32.xlu0 %v624, 20
  %v2009 = vpop.permute.xlu0 %2008
  %2010 = vrot.lane.b32.xlu0 %v625, 20
  %v2011 = vpop.permute.xlu0 %2010
  %2012 = vrot.lane.b32.xlu0 %v626, 20
  %v2013 = vpop.permute.xlu0 %2012
  %2014 = vrot.lane.b32.xlu0 %v627, 20
  %v2015 = vpop.permute.xlu0 %2014
  %2016 = vrot.lane.b32.xlu0 %v628, 20
  %v2017 = vpop.permute.xlu0 %2016
  %2018 = vrot.lane.b32.xlu0 %v629, 20
  %v2019 = vpop.permute.xlu0 %2018
  %2020 = vrot.lane.b32.xlu0 %v630, 20
  %v2021 = vpop.permute.xlu0 %2020
  %2022 = vrot.lane.b32.xlu0 %v631, 20
  %v2023 = vpop.permute.xlu0 %2022
  %2024 = vrot.lane.b32.xlu0 %v632, 20
  %v2025 = vpop.permute.xlu0 %2024
  %2026 = vrot.lane.b32.xlu0 %v633, 20
  %v2027 = vpop.permute.xlu0 %2026
  %2028 = vrot.lane.b32.xlu0 %v634, 20
  %v2029 = vpop.permute.xlu0 %2028
  %2030 = vrot.lane.b32.xlu0 %v635, 20
  %v2031 = vpop.permute.xlu0 %2030
  %2032 = vrot.lane.b32.xlu0 %v636, 20
  %v2033 = vpop.permute.xlu0 %2032
  %2034 = vrot.lane.b32.xlu0 %v637, 20
  %v2035 = vpop.permute.xlu0 %2034
  %2036 = vrot.lane.b32.xlu0 %v638, 20
  %v2037 = vpop.permute.xlu0 %2036
  %2038 = vrot.lane.b32.xlu0 %v639, 20
  %v2039 = vpop.permute.xlu0 %2038
  %2040 = vrot.lane.b32.xlu0 %v640, 20
  %v2041 = vpop.permute.xlu0 %2040
  %2042 = vrot.lane.b32.xlu0 %v641, 20
  %v2043 = vpop.permute.xlu0 %2042
  %2044 = vrot.lane.b32.xlu0 %v642, 20
  %v2045 = vpop.permute.xlu0 %2044
  %2046 = vrot.lane.b32.xlu0 %v643, 20
  %v2047 = vpop.permute.xlu0 %2046
  %2048 = vrot.lane.b32.xlu0 %v644, 20
  %v2049 = vpop.permute.xlu0 %2048
  %2050 = vrot.lane.b32.xlu0 %v645, 20
  %v2051 = vpop.permute.xlu0 %2050
  %2052 = vrot.lane.b32.xlu0 %v646, 20
  %v2053 = vpop.permute.xlu0 %2052
  %2054 = vrot.lane.b32.xlu0 %v647, 20
  %v2055 = vpop.permute.xlu0 %2054
  %2056 = vrot.lane.b32.xlu0 %v648, 20
  %v2057 = vpop.permute.xlu0 %2056
  %2186 = vrot.lane.b32.xlu0 %v650, 24
  %v2187 = vpop.permute.xlu0 %2186
  %2188 = vrot.lane.b32.xlu0 %v651, 24
  %v2189 = vpop.permute.xlu0 %2188
  %2190 = vrot.lane.b32.xlu0 %v652, 24
  %v2191 = vpop.permute.xlu0 %2190
  %2192 = vrot.lane.b32.xlu0 %v653, 24
  %v2193 = vpop.permute.xlu0 %2192
  %2194 = vrot.lane.b32.xlu0 %v654, 24
  %v2195 = vpop.permute.xlu0 %2194
  %2196 = vrot.lane.b32.xlu0 %v655, 24
  %v2197 = vpop.permute.xlu0 %2196
  %2198 = vrot.lane.b32.xlu0 %v656, 24
  %v2199 = vpop.permute.xlu0 %2198
  %2200 = vrot.lane.b32.xlu0 %v657, 24
  %v2201 = vpop.permute.xlu0 %2200
  %2202 = vrot.lane.b32.xlu0 %v658, 24
  %v2203 = vpop.permute.xlu0 %2202
  %2204 = vrot.lane.b32.xlu0 %v659, 24
  %v2205 = vpop.permute.xlu0 %2204
  %2206 = vrot.lane.b32.xlu0 %v660, 24
  %v2207 = vpop.permute.xlu0 %2206
  %2208 = vrot.lane.b32.xlu0 %v661, 24
  %v2209 = vpop.permute.xlu0 %2208
  %2210 = vrot.lane.b32.xlu0 %v662, 24
  %v2211 = vpop.permute.xlu0 %2210
  %2212 = vrot.lane.b32.xlu0 %v663, 24
  %v2213 = vpop.permute.xlu0 %2212
  %2214 = vrot.lane.b32.xlu0 %v664, 24
  %v2215 = vpop.permute.xlu0 %2214
  %2216 = vrot.lane.b32.xlu0 %v665, 24
  %v2217 = vpop.permute.xlu0 %2216
  %2218 = vrot.lane.b32.xlu0 %v666, 24
  %v2219 = vpop.permute.xlu0 %2218
  %2220 = vrot.lane.b32.xlu0 %v667, 24
  %v2221 = vpop.permute.xlu0 %2220
  %2222 = vrot.lane.b32.xlu0 %v668, 24
  %v2223 = vpop.permute.xlu0 %2222
  %2224 = vrot.lane.b32.xlu0 %v669, 24
  %v2225 = vpop.permute.xlu0 %2224
  %2226 = vrot.lane.b32.xlu0 %v670, 24
  %v2227 = vpop.permute.xlu0 %2226
  %2228 = vrot.lane.b32.xlu0 %v671, 24
  %v2229 = vpop.permute.xlu0 %2228
  %2230 = vrot.lane.b32.xlu0 %v672, 24
  %v2231 = vpop.permute.xlu0 %2230
  %2232 = vrot.lane.b32.xlu0 %v673, 24
  %v2233 = vpop.permute.xlu0 %2232
  %2234 = vrot.lane.b32.xlu0 %v674, 24
  %v2235 = vpop.permute.xlu0 %2234
  %2236 = vrot.lane.b32.xlu0 %v675, 24
  %v2237 = vpop.permute.xlu0 %2236
  %2238 = vrot.lane.b32.xlu0 %v676, 24
  %v2239 = vpop.permute.xlu0 %2238
  %2240 = vrot.lane.b32.xlu0 %v677, 24
  %v2241 = vpop.permute.xlu0 %2240
  %2242 = vrot.lane.b32.xlu0 %v678, 24
  %v2243 = vpop.permute.xlu0 %2242
  %2244 = vrot.lane.b32.xlu0 %v679, 24
  %v2245 = vpop.permute.xlu0 %2244
  %2246 = vrot.lane.b32.xlu0 %v680, 24
  %v2247 = vpop.permute.xlu0 %2246
  %2248 = vrot.lane.b32.xlu0 %v681, 24
  %v2249 = vpop.permute.xlu0 %2248
  %2250 = vrot.lane.b32.xlu0 %v682, 24
  %v2251 = vpop.permute.xlu0 %2250
  %2252 = vrot.lane.b32.xlu0 %v683, 24
  %v2253 = vpop.permute.xlu0 %2252
  %2254 = vrot.lane.b32.xlu0 %v684, 24
  %v2255 = vpop.permute.xlu0 %2254
  %2256 = vrot.lane.b32.xlu0 %v685, 24
  %v2257 = vpop.permute.xlu0 %2256
  %2258 = vrot.lane.b32.xlu0 %v686, 24
  %v2259 = vpop.permute.xlu0 %2258
  %2260 = vrot.lane.b32.xlu0 %v687, 24
  %v2261 = vpop.permute.xlu0 %2260
  %2262 = vrot.lane.b32.xlu0 %v688, 24
  %v2263 = vpop.permute.xlu0 %2262
  %2264 = vrot.lane.b32.xlu0 %v689, 24
  %v2265 = vpop.permute.xlu0 %2264
  %2266 = vrot.lane.b32.xlu0 %v690, 24
  %v2267 = vpop.permute.xlu0 %2266
  %2268 = vrot.lane.b32.xlu0 %v691, 24
  %v2269 = vpop.permute.xlu0 %2268
  %2270 = vrot.lane.b32.xlu0 %v692, 24
  %v2271 = vpop.permute.xlu0 %2270
  %2272 = vrot.lane.b32.xlu0 %v693, 24
  %v2273 = vpop.permute.xlu0 %2272
  %2274 = vrot.lane.b32.xlu0 %v694, 24
  %v2275 = vpop.permute.xlu0 %2274
  %2276 = vrot.lane.b32.xlu0 %v695, 24
  %v2277 = vpop.permute.xlu0 %2276
  %2278 = vrot.lane.b32.xlu0 %v696, 24
  %v2279 = vpop.permute.xlu0 %2278
  %2280 = vrot.lane.b32.xlu0 %v697, 24
  %v2281 = vpop.permute.xlu0 %2280
  %2282 = vrot.lane.b32.xlu0 %v698, 24
  %v2283 = vpop.permute.xlu0 %2282
  %2284 = vrot.lane.b32.xlu0 %v699, 24
  %v2285 = vpop.permute.xlu0 %2284
  %2286 = vrot.lane.b32.xlu0 %v700, 24
  %v2287 = vpop.permute.xlu0 %2286
  %2288 = vrot.lane.b32.xlu0 %v701, 24
  %v2289 = vpop.permute.xlu0 %2288
  %2290 = vrot.lane.b32.xlu0 %v702, 24
  %v2291 = vpop.permute.xlu0 %2290
  %2292 = vrot.lane.b32.xlu0 %v703, 24
  %v2293 = vpop.permute.xlu0 %2292
  %2294 = vrot.lane.b32.xlu0 %v704, 24
  %v2295 = vpop.permute.xlu0 %2294
  %2296 = vrot.lane.b32.xlu0 %v705, 24
  %v2297 = vpop.permute.xlu0 %2296
  %2298 = vrot.lane.b32.xlu0 %v706, 24
  %v2299 = vpop.permute.xlu0 %2298
  %2300 = vrot.lane.b32.xlu0 %v707, 24
  %v2301 = vpop.permute.xlu0 %2300
  %2302 = vrot.lane.b32.xlu0 %v708, 24
  %v2303 = vpop.permute.xlu0 %2302
  %2304 = vrot.lane.b32.xlu0 %v709, 24
  %v2305 = vpop.permute.xlu0 %2304
  %2306 = vrot.lane.b32.xlu0 %v710, 24
  %v2307 = vpop.permute.xlu0 %2306
  %2308 = vrot.lane.b32.xlu0 %v711, 24
  %v2309 = vpop.permute.xlu0 %2308
  %2310 = vrot.lane.b32.xlu0 %v712, 24
  %v2311 = vpop.permute.xlu0 %2310
  %2312 = vrot.lane.b32.xlu0 %v713, 24
  %v2313 = vpop.permute.xlu0 %2312
  %2442 = vrot.lane.b32.xlu0 %v714, 28
  %v2443 = vpop.permute.xlu0 %2442
  %2444 = vrot.lane.b32.xlu0 %v715, 28
  %v2445 = vpop.permute.xlu0 %2444
  %2446 = vrot.lane.b32.xlu0 %v716, 28
  %v2447 = vpop.permute.xlu0 %2446
  %2448 = vrot.lane.b32.xlu0 %v717, 28
  %v2449 = vpop.permute.xlu0 %2448
  %2450 = vrot.lane.b32.xlu0 %v718, 28
  %v2451 = vpop.permute.xlu0 %2450
  %2452 = vrot.lane.b32.xlu0 %v719, 28
  %v2453 = vpop.permute.xlu0 %2452
  %2454 = vrot.lane.b32.xlu0 %v720, 28
  %v2455 = vpop.permute.xlu0 %2454
  %2456 = vrot.lane.b32.xlu0 %v721, 28
  %v2457 = vpop.permute.xlu0 %2456
  %2458 = vrot.lane.b32.xlu0 %v722, 28
  %v2459 = vpop.permute.xlu0 %2458
  %2460 = vrot.lane.b32.xlu0 %v723, 28
  %v2461 = vpop.permute.xlu0 %2460
  %2462 = vrot.lane.b32.xlu0 %v724, 28
  %v2463 = vpop.permute.xlu0 %2462
  %2464 = vrot.lane.b32.xlu0 %v725, 28
  %v2465 = vpop.permute.xlu0 %2464
  %2466 = vrot.lane.b32.xlu0 %v726, 28
  %v2467 = vpop.permute.xlu0 %2466
  %2468 = vrot.lane.b32.xlu0 %v727, 28
  %v2469 = vpop.permute.xlu0 %2468
  %2470 = vrot.lane.b32.xlu0 %v728, 28
  %v2471 = vpop.permute.xlu0 %2470
  %2472 = vrot.lane.b32.xlu0 %v729, 28
  %v2473 = vpop.permute.xlu0 %2472
  %2474 = vrot.lane.b32.xlu0 %v730, 28
  %v2475 = vpop.permute.xlu0 %2474
  %2476 = vrot.lane.b32.xlu0 %v731, 28
  %v2477 = vpop.permute.xlu0 %2476
  %2478 = vrot.lane.b32.xlu0 %v732, 28
  %v2479 = vpop.permute.xlu0 %2478
  %2480 = vrot.lane.b32.xlu0 %v733, 28
  %v2481 = vpop.permute.xlu0 %2480
  %2482 = vrot.lane.b32.xlu0 %v734, 28
  %v2483 = vpop.permute.xlu0 %2482
  %2484 = vrot.lane.b32.xlu0 %v735, 28
  %v2485 = vpop.permute.xlu0 %2484
  %2486 = vrot.lane.b32.xlu0 %v736, 28
  %v2487 = vpop.permute.xlu0 %2486
  %2488 = vrot.lane.b32.xlu0 %v737, 28
  %v2489 = vpop.permute.xlu0 %2488
  %2490 = vrot.lane.b32.xlu0 %v738, 28
  %v2491 = vpop.permute.xlu0 %2490
  %2492 = vrot.lane.b32.xlu0 %v739, 28
  %v2493 = vpop.permute.xlu0 %2492
  %2494 = vrot.lane.b32.xlu0 %v740, 28
  %v2495 = vpop.permute.xlu0 %2494
  %2496 = vrot.lane.b32.xlu0 %v741, 28
  %v2497 = vpop.permute.xlu0 %2496
  %2498 = vrot.lane.b32.xlu0 %v742, 28
  %v2499 = vpop.permute.xlu0 %2498
  %2500 = vrot.lane.b32.xlu0 %v743, 28
  %v2501 = vpop.permute.xlu0 %2500
  %2502 = vrot.lane.b32.xlu0 %v744, 28
  %v2503 = vpop.permute.xlu0 %2502
  %2504 = vrot.lane.b32.xlu0 %v745, 28
  %v2505 = vpop.permute.xlu0 %2504
  %2506 = vrot.lane.b32.xlu0 %v746, 28
  %v2507 = vpop.permute.xlu0 %2506
  %2508 = vrot.lane.b32.xlu0 %v747, 28
  %v2509 = vpop.permute.xlu0 %2508
  %2510 = vrot.lane.b32.xlu0 %v748, 28
  %v2511 = vpop.permute.xlu0 %2510
  %2512 = vrot.lane.b32.xlu0 %v749, 28
  %v2513 = vpop.permute.xlu0 %2512
  %2514 = vrot.lane.b32.xlu0 %v750, 28
  %v2515 = vpop.permute.xlu0 %2514
  %2516 = vrot.lane.b32.xlu0 %v751, 28
  %v2517 = vpop.permute.xlu0 %2516
  %2518 = vrot.lane.b32.xlu0 %v752, 28
  %v2519 = vpop.permute.xlu0 %2518
  %2520 = vrot.lane.b32.xlu0 %v753, 28
  %v2521 = vpop.permute.xlu0 %2520
  %2522 = vrot.lane.b32.xlu0 %v754, 28
  %v2523 = vpop.permute.xlu0 %2522
  %2524 = vrot.lane.b32.xlu0 %v755, 28
  %v2525 = vpop.permute.xlu0 %2524
  %2526 = vrot.lane.b32.xlu0 %v756, 28
  %v2527 = vpop.permute.xlu0 %2526
  %2528 = vrot.lane.b32.xlu0 %v757, 28
  %v2529 = vpop.permute.xlu0 %2528
  %2530 = vrot.lane.b32.xlu0 %v758, 28
  %v2531 = vpop.permute.xlu0 %2530
  %2532 = vrot.lane.b32.xlu0 %v759, 28
  %v2533 = vpop.permute.xlu0 %2532
  %2534 = vrot.lane.b32.xlu0 %v760, 28
  %v2535 = vpop.permute.xlu0 %2534
  %2536 = vrot.lane.b32.xlu0 %v761, 28
  %v2537 = vpop.permute.xlu0 %2536
  %2538 = vrot.lane.b32.xlu0 %v762, 28
  %v2539 = vpop.permute.xlu0 %2538
  %2540 = vrot.lane.b32.xlu0 %v763, 28
  %v2541 = vpop.permute.xlu0 %2540
  %2542 = vrot.lane.b32.xlu0 %v764, 28
  %v2543 = vpop.permute.xlu0 %2542
  %2544 = vrot.lane.b32.xlu0 %v765, 28
  %v2545 = vpop.permute.xlu0 %2544
  %2546 = vrot.lane.b32.xlu0 %v766, 28
  %v2547 = vpop.permute.xlu0 %2546
  %2548 = vrot.lane.b32.xlu0 %v767, 28
  %v2549 = vpop.permute.xlu0 %2548
  %2550 = vrot.lane.b32.xlu0 %v768, 28
  %v2551 = vpop.permute.xlu0 %2550
  %2552 = vrot.lane.b32.xlu0 %v769, 28
  %v2553 = vpop.permute.xlu0 %2552
  %2554 = vrot.lane.b32.xlu0 %v770, 28
  %v2555 = vpop.permute.xlu0 %2554
  %2556 = vrot.lane.b32.xlu0 %v771, 28
  %v2557 = vpop.permute.xlu0 %2556
  %2558 = vrot.lane.b32.xlu0 %v772, 28
  %v2559 = vpop.permute.xlu0 %2558
  %2560 = vrot.lane.b32.xlu0 %v773, 28
  %v2561 = vpop.permute.xlu0 %2560
  %2562 = vrot.lane.b32.xlu0 %v774, 28
  %v2563 = vpop.permute.xlu0 %2562
  %2564 = vrot.lane.b32.xlu0 %v775, 28
  %v2565 = vpop.permute.xlu0 %2564
  %2566 = vrot.lane.b32.xlu0 %v776, 28
  %v2567 = vpop.permute.xlu0 %2566
  %2568 = vrot.lane.b32.xlu0 %v777, 28
  %v2569 = vpop.permute.xlu0 %2568
  %2698 = vrot.lane.b32.xlu0 %v778, 32
  %v2699 = vpop.permute.xlu0 %2698
  %2700 = vrot.lane.b32.xlu0 %v779, 32
  %v2701 = vpop.permute.xlu0 %2700
  %2702 = vrot.lane.b32.xlu0 %v780, 32
  %v2703 = vpop.permute.xlu0 %2702
  %2704 = vrot.lane.b32.xlu0 %v781, 32
  %v2705 = vpop.permute.xlu0 %2704
  %2706 = vrot.lane.b32.xlu0 %v782, 32
  %v2707 = vpop.permute.xlu0 %2706
  %2708 = vrot.lane.b32.xlu0 %v783, 32
  %v2709 = vpop.permute.xlu0 %2708
  %2710 = vrot.lane.b32.xlu0 %v784, 32
  %v2711 = vpop.permute.xlu0 %2710
  %2712 = vrot.lane.b32.xlu0 %v785, 32
  %v2713 = vpop.permute.xlu0 %2712
  %2714 = vrot.lane.b32.xlu0 %v786, 32
  %v2715 = vpop.permute.xlu0 %2714
  %2716 = vrot.lane.b32.xlu0 %v787, 32
  %v2717 = vpop.permute.xlu0 %2716
  %2718 = vrot.lane.b32.xlu0 %v788, 32
  %v2719 = vpop.permute.xlu0 %2718
  %2720 = vrot.lane.b32.xlu0 %v789, 32
  %v2721 = vpop.permute.xlu0 %2720
  %2722 = vrot.lane.b32.xlu0 %v790, 32
  %v2723 = vpop.permute.xlu0 %2722
  %2724 = vrot.lane.b32.xlu0 %v791, 32
  %v2725 = vpop.permute.xlu0 %2724
  %2726 = vrot.lane.b32.xlu0 %v792, 32
  %v2727 = vpop.permute.xlu0 %2726
  %2728 = vrot.lane.b32.xlu0 %v793, 32
  %v2729 = vpop.permute.xlu0 %2728
  %2730 = vrot.lane.b32.xlu0 %v794, 32
  %v2731 = vpop.permute.xlu0 %2730
  %2732 = vrot.lane.b32.xlu0 %v795, 32
  %v2733 = vpop.permute.xlu0 %2732
  %2734 = vrot.lane.b32.xlu0 %v796, 32
  %v2735 = vpop.permute.xlu0 %2734
  %2736 = vrot.lane.b32.xlu0 %v797, 32
  %v2737 = vpop.permute.xlu0 %2736
  %2738 = vrot.lane.b32.xlu0 %v798, 32
  %v2739 = vpop.permute.xlu0 %2738
  %2740 = vrot.lane.b32.xlu0 %v799, 32
  %v2741 = vpop.permute.xlu0 %2740
  %2742 = vrot.lane.b32.xlu0 %v800, 32
  %v2743 = vpop.permute.xlu0 %2742
  %2744 = vrot.lane.b32.xlu0 %v801, 32
  %v2745 = vpop.permute.xlu0 %2744
  %2746 = vrot.lane.b32.xlu0 %v802, 32
  %v2747 = vpop.permute.xlu0 %2746
  %2748 = vrot.lane.b32.xlu0 %v803, 32
  %v2749 = vpop.permute.xlu0 %2748
  %2750 = vrot.lane.b32.xlu0 %v804, 32
  %v2751 = vpop.permute.xlu0 %2750
  %2752 = vrot.lane.b32.xlu0 %v805, 32
  %v2753 = vpop.permute.xlu0 %2752
  %2754 = vrot.lane.b32.xlu0 %v806, 32
  %v2755 = vpop.permute.xlu0 %2754
  %2756 = vrot.lane.b32.xlu0 %v807, 32
  %v2757 = vpop.permute.xlu0 %2756
  %2758 = vrot.lane.b32.xlu0 %v808, 32
  %v2759 = vpop.permute.xlu0 %2758
  %2760 = vrot.lane.b32.xlu0 %v809, 32
  %v2761 = vpop.permute.xlu0 %2760
  %2762 = vrot.lane.b32.xlu0 %v810, 32
  %v2763 = vpop.permute.xlu0 %2762
  %2764 = vrot.lane.b32.xlu0 %v811, 32
  %v2765 = vpop.permute.xlu0 %2764
  %2766 = vrot.lane.b32.xlu0 %v812, 32
  %v2767 = vpop.permute.xlu0 %2766
  %2768 = vrot.lane.b32.xlu0 %v813, 32
  %v2769 = vpop.permute.xlu0 %2768
  %2770 = vrot.lane.b32.xlu0 %v814, 32
  %v2771 = vpop.permute.xlu0 %2770
  %2772 = vrot.lane.b32.xlu0 %v815, 32
  %v2773 = vpop.permute.xlu0 %2772
  %2774 = vrot.lane.b32.xlu0 %v816, 32
  %v2775 = vpop.permute.xlu0 %2774
  %2776 = vrot.lane.b32.xlu0 %v817, 32
  %v2777 = vpop.permute.xlu0 %2776
  %2778 = vrot.lane.b32.xlu0 %v818, 32
  %v2779 = vpop.permute.xlu0 %2778
  %2780 = vrot.lane.b32.xlu0 %v819, 32
  %v2781 = vpop.permute.xlu0 %2780
  %2782 = vrot.lane.b32.xlu0 %v820, 32
  %v2783 = vpop.permute.xlu0 %2782
  %2784 = vrot.lane.b32.xlu0 %v821, 32
  %v2785 = vpop.permute.xlu0 %2784
  %2786 = vrot.lane.b32.xlu0 %v822, 32
  %v2787 = vpop.permute.xlu0 %2786
  %2788 = vrot.lane.b32.xlu0 %v823, 32
  %v2789 = vpop.permute.xlu0 %2788
  %2790 = vrot.lane.b32.xlu0 %v824, 32
  %v2791 = vpop.permute.xlu0 %2790
  %2792 = vrot.lane.b32.xlu0 %v825, 32
  %v2793 = vpop.permute.xlu0 %2792
  %2794 = vrot.lane.b32.xlu0 %v826, 32
  %v2795 = vpop.permute.xlu0 %2794
  %2796 = vrot.lane.b32.xlu0 %v827, 32
  %v2797 = vpop.permute.xlu0 %2796
  %2798 = vrot.lane.b32.xlu0 %v828, 32
  %v2799 = vpop.permute.xlu0 %2798
  %2800 = vrot.lane.b32.xlu0 %v829, 32
  %v2801 = vpop.permute.xlu0 %2800
  %2802 = vrot.lane.b32.xlu0 %v830, 32
  %v2803 = vpop.permute.xlu0 %2802
  %2804 = vrot.lane.b32.xlu0 %v831, 32
  %v2805 = vpop.permute.xlu0 %2804
  %2806 = vrot.lane.b32.xlu0 %v832, 32
  %v2807 = vpop.permute.xlu0 %2806
  %2808 = vrot.lane.b32.xlu0 %v833, 32
  %v2809 = vpop.permute.xlu0 %2808
  %2810 = vrot.lane.b32.xlu0 %v834, 32
  %v2811 = vpop.permute.xlu0 %2810
  %2812 = vrot.lane.b32.xlu0 %v835, 32
  %v2813 = vpop.permute.xlu0 %2812
  %2814 = vrot.lane.b32.xlu0 %v836, 32
  %v2815 = vpop.permute.xlu0 %2814
  %2816 = vrot.lane.b32.xlu0 %v837, 32
  %v2817 = vpop.permute.xlu0 %2816
  %2818 = vrot.lane.b32.xlu0 %v838, 32
  %v2819 = vpop.permute.xlu0 %2818
  %2820 = vrot.lane.b32.xlu0 %v839, 32
  %v2821 = vpop.permute.xlu0 %2820
  %2822 = vrot.lane.b32.xlu0 %v840, 32
  %v2823 = vpop.permute.xlu0 %2822
  %2824 = vrot.lane.b32.xlu0 %v841, 32
  %v2825 = vpop.permute.xlu0 %2824
  %v2890 = vsel %vm26, %v265, %v907
  %v2891 = vsel %vm26, %v266, %v909
  %v2892 = vsel %vm26, %v267, %v911
  %v2893 = vsel %vm26, %v268, %v913
  %v2894 = vsel %vm26, %v269, %v915
  %v2895 = vsel %vm26, %v270, %v917
  %v2896 = vsel %vm26, %v271, %v919
  %v2897 = vsel %vm26, %v272, %v921
  %v2898 = vsel %vm26, %v273, %v923
  %v2899 = vsel %vm26, %v274, %v925
  %v2900 = vsel %vm26, %v275, %v927
  %v2901 = vsel %vm26, %v276, %v929
  %v2902 = vsel %vm26, %v277, %v931
  %v2903 = vsel %vm26, %v278, %v933
  %v2904 = vsel %vm26, %v279, %v935
  %v2905 = vsel %vm26, %v280, %v937
  %v2906 = vsel %vm26, %v281, %v939
  %v2907 = vsel %vm26, %v282, %v941
  %v2908 = vsel %vm26, %v283, %v943
  %v2909 = vsel %vm26, %v284, %v945
  %v2910 = vsel %vm26, %v285, %v947
  %v2911 = vsel %vm26, %v286, %v949
  %v2912 = vsel %vm26, %v287, %v951
  %v2913 = vsel %vm26, %v288, %v953
  %v2914 = vsel %vm26, %v289, %v955
  %v2915 = vsel %vm26, %v290, %v957
  %v2916 = vsel %vm26, %v291, %v959
  %v2917 = vsel %vm26, %v292, %v961
  %v2918 = vsel %vm26, %v293, %v963
  %v2919 = vsel %vm26, %v294, %v965
  %v2920 = vsel %vm26, %v295, %v967
  %v2921 = vsel %vm26, %v296, %v969
  %v2922 = vsel %vm26, %v297, %v971
  %v2923 = vsel %vm26, %v298, %v973
  %v2924 = vsel %vm26, %v299, %v975
  %v2925 = vsel %vm26, %v300, %v977
  %v2926 = vsel %vm26, %v301, %v979
  %v2927 = vsel %vm26, %v302, %v981
  %v2928 = vsel %vm26, %v303, %v983
  %v2929 = vsel %vm26, %v304, %v985
  %v2930 = vsel %vm26, %v305, %v987
  %v2931 = vsel %vm26, %v306, %v989
  %v2932 = vsel %vm26, %v307, %v991
  %v2933 = vsel %vm26, %v308, %v993
  %v2934 = vsel %vm26, %v309, %v995
  %v2935 = vsel %vm26, %v310, %v997
  %v2936 = vsel %vm26, %v311, %v999
  %v2937 = vsel %vm26, %v312, %v1001
  %v2938 = vsel %vm26, %v313, %v1003
  %v2939 = vsel %vm26, %v314, %v1005
  %v2940 = vsel %vm26, %v315, %v1007
  %v2941 = vsel %vm26, %v316, %v1009
  %v2942 = vsel %vm26, %v317, %v1011
  %v2943 = vsel %vm26, %v318, %v1013
  %v2944 = vsel %vm26, %v319, %v1015
  %v2945 = vsel %vm26, %v320, %v1017
  %v2946 = vsel %vm26, %v321, %v1019
  %v2947 = vsel %vm26, %v322, %v1021
  %v2948 = vsel %vm26, %v323, %v1023
  %v2949 = vsel %vm26, %v324, %v1025
  %v2950 = vsel %vm26, %v325, %v1027
  %v2951 = vsel %vm26, %v326, %v1029
  %v2952 = vsel %vm26, %v327, %v1031
  %v2953 = vsel %vm26, %v328, %v1033
  %vm2954 = vcmask 64512
  %v2955 = vsel %vm2954, %v2890, %v1163
  %v2956 = vsel %vm2954, %v2891, %v1165
  %v2957 = vsel %vm2954, %v2892, %v1167
  %v2958 = vsel %vm2954, %v2893, %v1169
  %v2959 = vsel %vm2954, %v2894, %v1171
  %v2960 = vsel %vm2954, %v2895, %v1173
  %v2961 = vsel %vm2954, %v2896, %v1175
  %v2962 = vsel %vm2954, %v2897, %v1177
  %v2963 = vsel %vm2954, %v2898, %v1179
  %v2964 = vsel %vm2954, %v2899, %v1181
  %v2965 = vsel %vm2954, %v2900, %v1183
  %v2966 = vsel %vm2954, %v2901, %v1185
  %v2967 = vsel %vm2954, %v2902, %v1187
  %v2968 = vsel %vm2954, %v2903, %v1189
  %v2969 = vsel %vm2954, %v2904, %v1191
  %v2970 = vsel %vm2954, %v2905, %v1193
  %v2971 = vsel %vm2954, %v2906, %v1195
  %v2972 = vsel %vm2954, %v2907, %v1197
  %v2973 = vsel %vm2954, %v2908, %v1199
  %v2974 = vsel %vm2954, %v2909, %v1201
  %v2975 = vsel %vm2954, %v2910, %v1203
  %v2976 = vsel %vm2954, %v2911, %v1205
  %v2977 = vsel %vm2954, %v2912, %v1207
  %v2978 = vsel %vm2954, %v2913, %v1209
  %v2979 = vsel %vm2954, %v2914, %v1211
  %v2980 = vsel %vm2954, %v2915, %v1213
  %v2981 = vsel %vm2954, %v2916, %v1215
  %v2982 = vsel %vm2954, %v2917, %v1217
  %v2983 = vsel %vm2954, %v2918, %v1219
  %v2984 = vsel %vm2954, %v2919, %v1221
  %v2985 = vsel %vm2954, %v2920, %v1223
  %v2986 = vsel %vm2954, %v2921, %v1225
  %v2987 = vsel %vm2954, %v2922, %v1227
  %v2988 = vsel %vm2954, %v2923, %v1229
  %v2989 = vsel %vm2954, %v2924, %v1231
  %v2990 = vsel %vm2954, %v2925, %v1233
  %v2991 = vsel %vm2954, %v2926, %v1235
  %v2992 = vsel %vm2954, %v2927, %v1237
  %v2993 = vsel %vm2954, %v2928, %v1239
  %v2994 = vsel %vm2954, %v2929, %v1241
  %v2995 = vsel %vm2954, %v2930, %v1243
  %v2996 = vsel %vm2954, %v2931, %v1245
  %v2997 = vsel %vm2954, %v2932, %v1247
  %v2998 = vsel %vm2954, %v2933, %v1249
  %v2999 = vsel %vm2954, %v2934, %v1251
  %v3000 = vsel %vm2954, %v2935, %v1253
  %v3001 = vsel %vm2954, %v2936, %v1255
  %v3002 = vsel %vm2954, %v2937, %v1257
  %v3003 = vsel %vm2954, %v2938, %v1259
  %v3004 = vsel %vm2954, %v2939, %v1261
  %v3005 = vsel %vm2954, %v2940, %v1263
  %v3006 = vsel %vm2954, %v2941, %v1265
  %v3007 = vsel %vm2954, %v2942, %v1267
  %v3008 = vsel %vm2954, %v2943, %v1269
  %v3009 = vsel %vm2954, %v2944, %v1271
  %v3010 = vsel %vm2954, %v2945, %v1273
  %v3011 = vsel %vm2954, %v2946, %v1275
  %v3012 = vsel %vm2954, %v2947, %v1277
  %v3013 = vsel %vm2954, %v2948, %v1279
  %v3014 = vsel %vm2954, %v2949, %v1281
  %v3015 = vsel %vm2954, %v2950, %v1283
  %v3016 = vsel %vm2954, %v2951, %v1285
  %v3017 = vsel %vm2954, %v2952, %v1287
  %v3018 = vsel %vm2954, %v2953, %v1289
  %vm3019 = vcmask 97280
  %v3020 = vsel %vm3019, %v2955, %v1419
  %v3021 = vsel %vm3019, %v2956, %v1421
  %v3022 = vsel %vm3019, %v2957, %v1423
  %v3023 = vsel %vm3019, %v2958, %v1425
  %v3024 = vsel %vm3019, %v2959, %v1427
  %v3025 = vsel %vm3019, %v2960, %v1429
  %v3026 = vsel %vm3019, %v2961, %v1431
  %v3027 = vsel %vm3019, %v2962, %v1433
  %v3028 = vsel %vm3019, %v2963, %v1435
  %v3029 = vsel %vm3019, %v2964, %v1437
  %v3030 = vsel %vm3019, %v2965, %v1439
  %v3031 = vsel %vm3019, %v2966, %v1441
  %v3032 = vsel %vm3019, %v2967, %v1443
  %v3033 = vsel %vm3019, %v2968, %v1445
  %v3034 = vsel %vm3019, %v2969, %v1447
  %v3035 = vsel %vm3019, %v2970, %v1449
  %v3036 = vsel %vm3019, %v2971, %v1451
  %v3037 = vsel %vm3019, %v2972, %v1453
  %v3038 = vsel %vm3019, %v2973, %v1455
  %v3039 = vsel %vm3019, %v2974, %v1457
  %v3040 = vsel %vm3019, %v2975, %v1459
  %v3041 = vsel %vm3019, %v2976, %v1461
  %v3042 = vsel %vm3019, %v2977, %v1463
  %v3043 = vsel %vm3019, %v2978, %v1465
  %v3044 = vsel %vm3019, %v2979, %v1467
  %v3045 = vsel %vm3019, %v2980, %v1469
  %v3046 = vsel %vm3019, %v2981, %v1471
  %v3047 = vsel %vm3019, %v2982, %v1473
  %v3048 = vsel %vm3019, %v2983, %v1475
  %v3049 = vsel %vm3019, %v2984, %v1477
  %v3050 = vsel %vm3019, %v2985, %v1479
  %v3051 = vsel %vm3019, %v2986, %v1481
  %v3052 = vsel %vm3019, %v2987, %v1483
  %v3053 = vsel %vm3019, %v2988, %v1485
  %v3054 = vsel %vm3019, %v2989, %v1487
  %v3055 = vsel %vm3019, %v2990, %v1489
  %v3056 = vsel %vm3019, %v2991, %v1491
  %v3057 = vsel %vm3019, %v2992, %v1493
  %v3058 = vsel %vm3019, %v2993, %v1495
  %v3059 = vsel %vm3019, %v2994, %v1497
  %v3060 = vsel %vm3019, %v2995, %v1499
  %v3061 = vsel %vm3019, %v2996, %v1501
  %v3062 = vsel %vm3019, %v2997, %v1503
  %v3063 = vsel %vm3019, %v2998, %v1505
  %v3064 = vsel %vm3019, %v2999, %v1507
  %v3065 = vsel %vm3019, %v3000, %v1509
  %v3066 = vsel %vm3019, %v3001, %v1511
  %v3067 = vsel %vm3019, %v3002, %v1513
  %v3068 = vsel %vm3019, %v3003, %v1515
  %v3069 = vsel %vm3019, %v3004, %v1517
  %v3070 = vsel %vm3019, %v3005, %v1519
  %v3071 = vsel %vm3019, %v3006, %v1521
  %v3072 = vsel %vm3019, %v3007, %v1523
  %v3073 = vsel %vm3019, %v3008, %v1525
  %v3074 = vsel %vm3019, %v3009, %v1527
  %v3075 = vsel %vm3019, %v3010, %v1529
  %v3076 = vsel %vm3019, %v3011, %v1531
  %v3077 = vsel %vm3019, %v3012, %v1533
  %v3078 = vsel %vm3019, %v3013, %v1535
  %v3079 = vsel %vm3019, %v3014, %v1537
  %v3080 = vsel %vm3019, %v3015, %v1539
  %v3081 = vsel %vm3019, %v3016, %v1541
  %v3082 = vsel %vm3019, %v3017, %v1543
  %v3083 = vsel %vm3019, %v3018, %v1545
  %vm3084 = vcmask 130048
  %v3085 = vsel %vm3084, %v3020, %v1675
  %v3086 = vsel %vm3084, %v3021, %v1677
  %v3087 = vsel %vm3084, %v3022, %v1679
  %v3088 = vsel %vm3084, %v3023, %v1681
  %v3089 = vsel %vm3084, %v3024, %v1683
  %v3090 = vsel %vm3084, %v3025, %v1685
  %v3091 = vsel %vm3084, %v3026, %v1687
  %v3092 = vsel %vm3084, %v3027, %v1689
  %v3093 = vsel %vm3084, %v3028, %v1691
  %v3094 = vsel %vm3084, %v3029, %v1693
  %v3095 = vsel %vm3084, %v3030, %v1695
  %v3096 = vsel %vm3084, %v3031, %v1697
  %v3097 = vsel %vm3084, %v3032, %v1699
  %v3098 = vsel %vm3084, %v3033, %v1701
  %v3099 = vsel %vm3084, %v3034, %v1703
  %v3100 = vsel %vm3084, %v3035, %v1705
  %v3101 = vsel %vm3084, %v3036, %v1707
  %v3102 = vsel %vm3084, %v3037, %v1709
  %v3103 = vsel %vm3084, %v3038, %v1711
  %v3104 = vsel %vm3084, %v3039, %v1713
  %v3105 = vsel %vm3084, %v3040, %v1715
  %v3106 = vsel %vm3084, %v3041, %v1717
  %v3107 = vsel %vm3084, %v3042, %v1719
  %v3108 = vsel %vm3084, %v3043, %v1721
  %v3109 = vsel %vm3084, %v3044, %v1723
  %v3110 = vsel %vm3084, %v3045, %v1725
  %v3111 = vsel %vm3084, %v3046, %v1727
  %v3112 = vsel %vm3084, %v3047, %v1729
  %v3113 = vsel %vm3084, %v3048, %v1731
  %v3114 = vsel %vm3084, %v3049, %v1733
  %v3115 = vsel %vm3084, %v3050, %v1735
  %v3116 = vsel %vm3084, %v3051, %v1737
  %v3117 = vsel %vm3084, %v3052, %v1739
  %v3118 = vsel %vm3084, %v3053, %v1741
  %v3119 = vsel %vm3084, %v3054, %v1743
  %v3120 = vsel %vm3084, %v3055, %v1745
  %v3121 = vsel %vm3084, %v3056, %v1747
  %v3122 = vsel %vm3084, %v3057, %v1749
  %v3123 = vsel %vm3084, %v3058, %v1751
  %v3124 = vsel %vm3084, %v3059, %v1753
  %v3125 = vsel %vm3084, %v3060, %v1755
  %v3126 = vsel %vm3084, %v3061, %v1757
  %v3127 = vsel %vm3084, %v3062, %v1759
  %v3128 = vsel %vm3084, %v3063, %v1761
  %v3129 = vsel %vm3084, %v3064, %v1763
  %v3130 = vsel %vm3084, %v3065, %v1765
  %v3131 = vsel %vm3084, %v3066, %v1767
  %v3132 = vsel %vm3084, %v3067, %v1769
  %v3133 = vsel %vm3084, %v3068, %v1771
  %v3134 = vsel %vm3084, %v3069, %v1773
  %v3135 = vsel %vm3084, %v3070, %v1775
  %v3136 = vsel %vm3084, %v3071, %v1777
  %v3137 = vsel %vm3084, %v3072, %v1779
  %v3138 = vsel %vm3084, %v3073, %v1781
  %v3139 = vsel %vm3084, %v3074, %v1783
  %v3140 = vsel %vm3084, %v3075, %v1785
  %v3141 = vsel %vm3084, %v3076, %v1787
  %v3142 = vsel %vm3084, %v3077, %v1789
  %v3143 = vsel %vm3084, %v3078, %v1791
  %v3144 = vsel %vm3084, %v3079, %v1793
  %v3145 = vsel %vm3084, %v3080, %v1795
  %v3146 = vsel %vm3084, %v3081, %v1797
  %v3147 = vsel %vm3084, %v3082, %v1799
  %v3148 = vsel %vm3084, %v3083, %v1801
  %vm3149 = vcmask 162816
  %v3150 = vsel %vm3149, %v3085, %v1931
  %v3151 = vsel %vm3149, %v3086, %v1933
  %v3152 = vsel %vm3149, %v3087, %v1935
  %v3153 = vsel %vm3149, %v3088, %v1937
  %v3154 = vsel %vm3149, %v3089, %v1939
  %v3155 = vsel %vm3149, %v3090, %v1941
  %v3156 = vsel %vm3149, %v3091, %v1943
  %v3157 = vsel %vm3149, %v3092, %v1945
  %v3158 = vsel %vm3149, %v3093, %v1947
  %v3159 = vsel %vm3149, %v3094, %v1949
  %v3160 = vsel %vm3149, %v3095, %v1951
  %v3161 = vsel %vm3149, %v3096, %v1953
  %v3162 = vsel %vm3149, %v3097, %v1955
  %v3163 = vsel %vm3149, %v3098, %v1957
  %v3164 = vsel %vm3149, %v3099, %v1959
  %v3165 = vsel %vm3149, %v3100, %v1961
  %v3166 = vsel %vm3149, %v3101, %v1963
  %v3167 = vsel %vm3149, %v3102, %v1965
  %v3168 = vsel %vm3149, %v3103, %v1967
  %v3169 = vsel %vm3149, %v3104, %v1969
  %v3170 = vsel %vm3149, %v3105, %v1971
  %v3171 = vsel %vm3149, %v3106, %v1973
  %v3172 = vsel %vm3149, %v3107, %v1975
  %v3173 = vsel %vm3149, %v3108, %v1977
  %v3174 = vsel %vm3149, %v3109, %v1979
  %v3175 = vsel %vm3149, %v3110, %v1981
  %v3176 = vsel %vm3149, %v3111, %v1983
  %v3177 = vsel %vm3149, %v3112, %v1985
  %v3178 = vsel %vm3149, %v3113, %v1987
  %v3179 = vsel %vm3149, %v3114, %v1989
  %v3180 = vsel %vm3149, %v3115, %v1991
  %v3181 = vsel %vm3149, %v3116, %v1993
  %v3182 = vsel %vm3149, %v3117, %v1995
  %v3183 = vsel %vm3149, %v3118, %v1997
  %v3184 = vsel %vm3149, %v3119, %v1999
  %v3185 = vsel %vm3149, %v3120, %v2001
  %v3186 = vsel %vm3149, %v3121, %v2003
  %v3187 = vsel %vm3149, %v3122, %v2005
  %v3188 = vsel %vm3149, %v3123, %v2007
  %v3189 = vsel %vm3149, %v3124, %v2009
  %v3190 = vsel %vm3149, %v3125, %v2011
  %v3191 = vsel %vm3149, %v3126, %v2013
  %v3192 = vsel %vm3149, %v3127, %v2015
  %v3193 = vsel %vm3149, %v3128, %v2017
  %v3194 = vsel %vm3149, %v3129, %v2019
  %v3195 = vsel %vm3149, %v3130, %v2021
  %v3196 = vsel %vm3149, %v3131, %v2023
  %v3197 = vsel %vm3149, %v3132, %v2025
  %v3198 = vsel %vm3149, %v3133, %v2027
  %v3199 = vsel %vm3149, %v3134, %v2029
  %v3200 = vsel %vm3149, %v3135, %v2031
  %v3201 = vsel %vm3149, %v3136, %v2033
  %v3202 = vsel %vm3149, %v3137, %v2035
  %v3203 = vsel %vm3149, %v3138, %v2037
  %v3204 = vsel %vm3149, %v3139, %v2039
  %v3205 = vsel %vm3149, %v3140, %v2041
  %v3206 = vsel %vm3149, %v3141, %v2043
  %v3207 = vsel %vm3149, %v3142, %v2045
  %v3208 = vsel %vm3149, %v3143, %v2047
  %v3209 = vsel %vm3149, %v3144, %v2049
  %v3210 = vsel %vm3149, %v3145, %v2051
  %v3211 = vsel %vm3149, %v3146, %v2053
  %v3212 = vsel %vm3149, %v3147, %v2055
  %v3213 = vsel %vm3149, %v3148, %v2057
  %vm3214 = vcmask 195584
  %v3215 = vsel %vm3214, %v3150, %v2187
  %v3216 = vsel %vm3214, %v3151, %v2189
  %v3217 = vsel %vm3214, %v3152, %v2191
  %v3218 = vsel %vm3214, %v3153, %v2193
  %v3219 = vsel %vm3214, %v3154, %v2195
  %v3220 = vsel %vm3214, %v3155, %v2197
  %v3221 = vsel %vm3214, %v3156, %v2199
  %v3222 = vsel %vm3214, %v3157, %v2201
  %v3223 = vsel %vm3214, %v3158, %v2203
  %v3224 = vsel %vm3214, %v3159, %v2205
  %v3225 = vsel %vm3214, %v3160, %v2207
  %v3226 = vsel %vm3214, %v3161, %v2209
  %v3227 = vsel %vm3214, %v3162, %v2211
  %v3228 = vsel %vm3214, %v3163, %v2213
  %v3229 = vsel %vm3214, %v3164, %v2215
  %v3230 = vsel %vm3214, %v3165, %v2217
  %v3231 = vsel %vm3214, %v3166, %v2219
  %v3232 = vsel %vm3214, %v3167, %v2221
  %v3233 = vsel %vm3214, %v3168, %v2223
  %v3234 = vsel %vm3214, %v3169, %v2225
  %v3235 = vsel %vm3214, %v3170, %v2227
  %v3236 = vsel %vm3214, %v3171, %v2229
  %v3237 = vsel %vm3214, %v3172, %v2231
  %v3238 = vsel %vm3214, %v3173, %v2233
  %v3239 = vsel %vm3214, %v3174, %v2235
  %v3240 = vsel %vm3214, %v3175, %v2237
  %v3241 = vsel %vm3214, %v3176, %v2239
  %v3242 = vsel %vm3214, %v3177, %v2241
  %v3243 = vsel %vm3214, %v3178, %v2243
  %v3244 = vsel %vm3214, %v3179, %v2245
  %v3245 = vsel %vm3214, %v3180, %v2247
  %v3246 = vsel %vm3214, %v3181, %v2249
  %v3247 = vsel %vm3214, %v3182, %v2251
  %v3248 = vsel %vm3214, %v3183, %v2253
  %v3249 = vsel %vm3214, %v3184, %v2255
  %v3250 = vsel %vm3214, %v3185, %v2257
  %v3251 = vsel %vm3214, %v3186, %v2259
  %v3252 = vsel %vm3214, %v3187, %v2261
  %v3253 = vsel %vm3214, %v3188, %v2263
  %v3254 = vsel %vm3214, %v3189, %v2265
  %v3255 = vsel %vm3214, %v3190, %v2267
  %v3256 = vsel %vm3214, %v3191, %v2269
  %v3257 = vsel %vm3214, %v3192, %v2271
  %v3258 = vsel %vm3214, %v3193, %v2273
  %v3259 = vsel %vm3214, %v3194, %v2275
  %v3260 = vsel %vm3214, %v3195, %v2277
  %v3261 = vsel %vm3214, %v3196, %v2279
  %v3262 = vsel %vm3214, %v3197, %v2281
  %v3263 = vsel %vm3214, %v3198, %v2283
  %v3264 = vsel %vm3214, %v3199, %v2285
  %v3265 = vsel %vm3214, %v3200, %v2287
  %v3266 = vsel %vm3214, %v3201, %v2289
  %v3267 = vsel %vm3214, %v3202, %v2291
  %v3268 = vsel %vm3214, %v3203, %v2293
  %v3269 = vsel %vm3214, %v3204, %v2295
  %v3270 = vsel %vm3214, %v3205, %v2297
  %v3271 = vsel %vm3214, %v3206, %v2299
  %v3272 = vsel %vm3214, %v3207, %v2301
  %v3273 = vsel %vm3214, %v3208, %v2303
  %v3274 = vsel %vm3214, %v3209, %v2305
  %v3275 = vsel %vm3214, %v3210, %v2307
  %v3276 = vsel %vm3214, %v3211, %v2309
  %v3277 = vsel %vm3214, %v3212, %v2311
  %v3278 = vsel %vm3214, %v3213, %v2313
  %vm3279 = vcmask 228352
  %v3280 = vsel %vm3279, %v3215, %v2443
  %v3281 = vsel %vm3279, %v3216, %v2445
  %v3282 = vsel %vm3279, %v3217, %v2447
  %v3283 = vsel %vm3279, %v3218, %v2449
  %v3284 = vsel %vm3279, %v3219, %v2451
  %v3285 = vsel %vm3279, %v3220, %v2453
  %v3286 = vsel %vm3279, %v3221, %v2455
  %v3287 = vsel %vm3279, %v3222, %v2457
  %v3288 = vsel %vm3279, %v3223, %v2459
  %v3289 = vsel %vm3279, %v3224, %v2461
  %v3290 = vsel %vm3279, %v3225, %v2463
  %v3291 = vsel %vm3279, %v3226, %v2465
  %v3292 = vsel %vm3279, %v3227, %v2467
  %v3293 = vsel %vm3279, %v3228, %v2469
  %v3294 = vsel %vm3279, %v3229, %v2471
  %v3295 = vsel %vm3279, %v3230, %v2473
  %v3296 = vsel %vm3279, %v3231, %v2475
  %v3297 = vsel %vm3279, %v3232, %v2477
  %v3298 = vsel %vm3279, %v3233, %v2479
  %v3299 = vsel %vm3279, %v3234, %v2481
  %v3300 = vsel %vm3279, %v3235, %v2483
  %v3301 = vsel %vm3279, %v3236, %v2485
  %v3302 = vsel %vm3279, %v3237, %v2487
  %v3303 = vsel %vm3279, %v3238, %v2489
  %v3304 = vsel %vm3279, %v3239, %v2491
  %v3305 = vsel %vm3279, %v3240, %v2493
  %v3306 = vsel %vm3279, %v3241, %v2495
  %v3307 = vsel %vm3279, %v3242, %v2497
  %v3308 = vsel %vm3279, %v3243, %v2499
  %v3309 = vsel %vm3279, %v3244, %v2501
  %v3310 = vsel %vm3279, %v3245, %v2503
  %v3311 = vsel %vm3279, %v3246, %v2505
  %v3312 = vsel %vm3279, %v3247, %v2507
  %v3313 = vsel %vm3279, %v3248, %v2509
  %v3314 = vsel %vm3279, %v3249, %v2511
  %v3315 = vsel %vm3279, %v3250, %v2513
  %v3316 = vsel %vm3279, %v3251, %v2515
  %v3317 = vsel %vm3279, %v3252, %v2517
  %v3318 = vsel %vm3279, %v3253, %v2519
  %v3319 = vsel %vm3279, %v3254, %v2521
  %v3320 = vsel %vm3279, %v3255, %v2523
  %v3321 = vsel %vm3279, %v3256, %v2525
  %v3322 = vsel %vm3279, %v3257, %v2527
  %v3323 = vsel %vm3279, %v3258, %v2529
  %v3324 = vsel %vm3279, %v3259, %v2531
  %v3325 = vsel %vm3279, %v3260, %v2533
  %v3326 = vsel %vm3279, %v3261, %v2535
  %v3327 = vsel %vm3279, %v3262, %v2537
  %v3328 = vsel %vm3279, %v3263, %v2539
  %v3329 = vsel %vm3279, %v3264, %v2541
  %v3330 = vsel %vm3279, %v3265, %v2543
  %v3331 = vsel %vm3279, %v3266, %v2545
  %v3332 = vsel %vm3279, %v3267, %v2547
  %v3333 = vsel %vm3279, %v3268, %v2549
  %v3334 = vsel %vm3279, %v3269, %v2551
  %v3335 = vsel %vm3279, %v3270, %v2553
  %v3336 = vsel %vm3279, %v3271, %v2555
  %v3337 = vsel %vm3279, %v3272, %v2557
  %v3338 = vsel %vm3279, %v3273, %v2559
  %v3339 = vsel %vm3279, %v3274, %v2561
  %v3340 = vsel %vm3279, %v3275, %v2563
  %v3341 = vsel %vm3279, %v3276, %v2565
  %v3342 = vsel %vm3279, %v3277, %v2567
  %v3343 = vsel %vm3279, %v3278, %v2569
  %vm3344 = vcmask 261120
  %v3345 = vsel %vm3344, %v3280, %v2699
  %v3346 = vsel %vm3344, %v3281, %v2701
  %v3347 = vsel %vm3344, %v3282, %v2703
  %v3348 = vsel %vm3344, %v3283, %v2705
  %v3349 = vsel %vm3344, %v3284, %v2707
  %v3350 = vsel %vm3344, %v3285, %v2709
  %v3351 = vsel %vm3344, %v3286, %v2711
  %v3352 = vsel %vm3344, %v3287, %v2713
  %v3353 = vsel %vm3344, %v3288, %v2715
  %v3354 = vsel %vm3344, %v3289, %v2717
  %v3355 = vsel %vm3344, %v3290, %v2719
  %v3356 = vsel %vm3344, %v3291, %v2721
  %v3357 = vsel %vm3344, %v3292, %v2723
  %v3358 = vsel %vm3344, %v3293, %v2725
  %v3359 = vsel %vm3344, %v3294, %v2727
  %v3360 = vsel %vm3344, %v3295, %v2729
  %v3361 = vsel %vm3344, %v3296, %v2731
  %v3362 = vsel %vm3344, %v3297, %v2733
  %v3363 = vsel %vm3344, %v3298, %v2735
  %v3364 = vsel %vm3344, %v3299, %v2737
  %v3365 = vsel %vm3344, %v3300, %v2739
  %v3366 = vsel %vm3344, %v3301, %v2741
  %v3367 = vsel %vm3344, %v3302, %v2743
  %v3368 = vsel %vm3344, %v3303, %v2745
  %v3369 = vsel %vm3344, %v3304, %v2747
  %v3370 = vsel %vm3344, %v3305, %v2749
  %v3371 = vsel %vm3344, %v3306, %v2751
  %v3372 = vsel %vm3344, %v3307, %v2753
  %v3373 = vsel %vm3344, %v3308, %v2755
  %v3374 = vsel %vm3344, %v3309, %v2757
  %v3375 = vsel %vm3344, %v3310, %v2759
  %v3376 = vsel %vm3344, %v3311, %v2761
  %v3377 = vsel %vm3344, %v3312, %v2763
  %v3378 = vsel %vm3344, %v3313, %v2765
  %v3379 = vsel %vm3344, %v3314, %v2767
  %v3380 = vsel %vm3344, %v3315, %v2769
  %v3381 = vsel %vm3344, %v3316, %v2771
  %v3382 = vsel %vm3344, %v3317, %v2773
  %v3383 = vsel %vm3344, %v3318, %v2775
  %v3384 = vsel %vm3344, %v3319, %v2777
  %v3385 = vsel %vm3344, %v3320, %v2779
  %v3386 = vsel %vm3344, %v3321, %v2781
  %v3387 = vsel %vm3344, %v3322, %v2783
  %v3388 = vsel %vm3344, %v3323, %v2785
  %v3389 = vsel %vm3344, %v3324, %v2787
  %v3390 = vsel %vm3344, %v3325, %v2789
  %v3391 = vsel %vm3344, %v3326, %v2791
  %v3392 = vsel %vm3344, %v3327, %v2793
  %v3393 = vsel %vm3344, %v3328, %v2795
  %v3394 = vsel %vm3344, %v3329, %v2797
  %v3395 = vsel %vm3344, %v3330, %v2799
  %v3396 = vsel %vm3344, %v3331, %v2801
  %v3397 = vsel %vm3344, %v3332, %v2803
  %v3398 = vsel %vm3344, %v3333, %v2805
  %v3399 = vsel %vm3344, %v3334, %v2807
  %v3400 = vsel %vm3344, %v3335, %v2809
  %v3401 = vsel %vm3344, %v3336, %v2811
  %v3402 = vsel %vm3344, %v3337, %v2813
  %v3403 = vsel %vm3344, %v3338, %v2815
  %v3404 = vsel %vm3344, %v3339, %v2817
  %v3405 = vsel %vm3344, %v3340, %v2819
  %v3406 = vsel %vm3344, %v3341, %v2821
  %v3407 = vsel %vm3344, %v3342, %v2823
  %v3408 = vsel %vm3344, %v3343, %v2825
  %v3409 = vld [vmem:[%s1] sm:$0xff]
  %v3410 = vld [vmem:[%s1 + $0x8] sm:$0xff]
  %v3411 = vld [vmem:[%s1 + $0x10] sm:$0xff]
  %v3412 = vld [vmem:[%s1 + $0x18] sm:$0xff]
  %v3413 = vld [vmem:[%s1 + $0x20] sm:$0xf]
  %vm3414 = vcmask 293888
  %v3416 = vsel %vm3414, %v3345, 0
  %v3419 = vsel %vm3414, %v3346, 0
  %v3422 = vsel %vm3414, %v3347, 0
  %v3425 = vsel %vm3414, %v3348, 0
  %v3428 = vsel %vm3414, %v3349, 0
  %v3431 = vsel %vm3414, %v3350, 0
  %v3434 = vsel %vm3414, %v3351, 0
  %v3437 = vsel %vm3414, %v3352, 0
  %v3440 = vsel %vm3414, %v3353, 0
  %v3443 = vsel %vm3414, %v3354, 0
  %v3446 = vsel %vm3414, %v3355, 0
  %v3449 = vsel %vm3414, %v3356, 0
  %v3452 = vsel %vm3414, %v3357, 0
  %v3455 = vsel %vm3414, %v3358, 0
  %v3458 = vsel %vm3414, %v3359, 0
  %v3461 = vsel %vm3414, %v3360, 0
  %v3464 = vsel %vm3414, %v3361, 0
  %v3467 = vsel %vm3414, %v3362, 0
  %v3470 = vsel %vm3414, %v3363, 0
  %v3473 = vsel %vm3414, %v3364, 0
  %v3476 = vsel %vm3414, %v3365, 0
  %v3479 = vsel %vm3414, %v3366, 0
  %v3482 = vsel %vm3414, %v3367, 0
  %v3485 = vsel %vm3414, %v3368, 0
  %v3488 = vsel %vm3414, %v3369, 0
  %v3491 = vsel %vm3414, %v3370, 0
  %v3494 = vsel %vm3414, %v3371, 0
  %v3497 = vsel %vm3414, %v3372, 0
  %v3500 = vsel %vm3414, %v3373, 0
  %v3503 = vsel %vm3414, %v3374, 0
  %v3506 = vsel %vm3414, %v3375, 0
  %v3509 = vsel %vm3414, %v3376, 0
  %v3512 = vsel %vm3414, %v3377, 0
  %v3515 = vsel %vm3414, %v3378, 0
  %v3518 = vsel %vm3414, %v3379, 0
  %v3521 = vsel %vm3414, %v3380, 0
  %v3524 = vsel %vm3414, %v3381, 0
  %v3527 = vsel %vm3414, %v3382, 0
  %v3530 = vsel %vm3414, %v3383, 0
  %v3533 = vsel %vm3414, %v3384, 0
  %v3536 = vsel %vm3414, %v3385, 0
  %v3539 = vsel %vm3414, %v3386, 0
  %v3542 = vsel %vm3414, %v3387, 0
  %v3545 = vsel %vm3414, %v3388, 0
  %v3548 = vsel %vm3414, %v3389, 0
  %v3551 = vsel %vm3414, %v3390, 0
  %v3554 = vsel %vm3414, %v3391, 0
  %v3557 = vsel %vm3414, %v3392, 0
  %v3560 = vsel %vm3414, %v3393, 0
  %v3563 = vsel %vm3414, %v3394, 0
  %v3566 = vsel %vm3414, %v3395, 0
  %v3569 = vsel %vm3414, %v3396, 0
  %v3572 = vsel %vm3414, %v3397, 0
  %v3575 = vsel %vm3414, %v3398, 0
  %v3578 = vsel %vm3414, %v3399, 0
  %v3581 = vsel %vm3414, %v3400, 0
  %v3584 = vsel %vm3414, %v3401, 0
  %v3587 = vsel %vm3414, %v3402, 0
  %v3590 = vsel %vm3414, %v3403, 0
  %v3593 = vsel %vm3414, %v3404, 0
  %v3596 = vsel %vm3414, %v3405, 0
  %v3599 = vsel %vm3414, %v3406, 0
  %v3602 = vsel %vm3414, %v3407, 0
  %v3605 = vsel %vm3414, %v3408, 0
  %vm3607 = vcmask 1043456
  %v3609 = vsel %vm3607, %v3413, 0
  %3611 = vmatprep.subr.mxu0 0.0
  %3612 = vmatpush1.msra.mxu0 %v3409
  %3613 = vmatprep.subr.mxu0 0.0
  %3614 = vmatpush1.msra.mxu0 %v3410
  %3615 = vmatprep.subr.mxu0 0.0
  %3616 = vmatpush1.msra.mxu0 %v3411
  %3617 = vmatprep.subr.mxu0 0.0
  %3618 = vmatpush1.msra.mxu0 %v3412
  %3619 = vmatprep.subr.mxu0 0.0
  %3620 = vmatpush1.msra.mxu0 %v3609
  %3621 = vmatprep.subr.mxu0 0.0
  %3622 = vmatpush1.msra.mxu0 0.0
  %3623 = vmatprep.subr.mxu0 0.0
  %3624 = vmatpush1.msra.mxu0 0.0
  %3625 = vmatprep.subr.mxu0 0.0
  %3626 = vmatpush1.msra.mxu0 0.0
  %3627 = vmatprep.subr.mxu0 0.0
  %3628 = vmatpush1.msra.mxu0 0.0
  %3629 = vmatprep.subr.mxu0 0.0
  %3630 = vmatpush1.msra.mxu0 0.0
  %3631 = vmatprep.subr.mxu0 0.0
  %3632 = vmatpush1.msra.mxu0 0.0
  %3633 = vmatprep.subr.mxu0 0.0
  %3634 = vmatpush1.msra.mxu0 0.0
  %3635 = vmatprep.subr.mxu0 0.0
  %3636 = vmatpush1.msra.mxu0 0.0
  %3637 = vmatprep.subr.mxu0 0.0
  %3638 = vmatpush1.msra.mxu0 0.0
  %3639 = vmatprep.subr.mxu0 0.0
  %3640 = vmatpush1.msra.mxu0 0.0
  %3641 = vmatprep.subr.mxu0 0.0
  %3642 = vmatpush1.msra.mxu0 0.0
  %3643 = vmatprep.subr.mxu0 0.0
  %3644 = vmatpush1.msra.mxu0 0.0
  %3645 = vmatprep.subr.mxu0 0.0
  %3646 = vmatpush1.msra.mxu0 0.0
  %3647 = vmatprep.subr.mxu0 0.0
  %3648 = vmatpush1.msra.mxu0 0.0
  %3649 = vmatprep.subr.mxu0 0.0
  %3650 = vmatpush1.msra.mxu0 0.0
  %3651 = vmatprep.subr.mxu0 0.0
  %3652 = vmatpush1.msra.mxu0 0.0
  %3653 = vmatprep.subr.mxu0 0.0
  %3654 = vmatpush1.msra.mxu0 0.0
  %3655 = vmatprep.subr.mxu0 0.0
  %3656 = vmatpush1.msra.mxu0 0.0
  %3657 = vmatprep.subr.mxu0 0.0
  %3658 = vmatpush1.msra.mxu0 0.0
  %3659 = vmatprep.subr.mxu0 0.0
  %3660 = vmatpush1.msra.mxu0 0.0
  %3661 = vmatprep.subr.mxu0 0.0
  %3662 = vmatpush1.msra.mxu0 0.0
  %3663 = vmatprep.subr.mxu0 0.0
  %3664 = vmatpush1.msra.mxu0 0.0
  %3665 = vmatprep.subr.mxu0 0.0
  %3666 = vmatpush1.msra.mxu0 0.0
  %3667 = vmatprep.subr.mxu0 0.0
  %3668 = vmatpush1.msra.mxu0 0.0
  %3669 = vmatprep.subr.mxu0 0.0
  %3670 = vmatpush1.msra.mxu0 0.0
  %3671 = vmatprep.subr.mxu0 0.0
  %3672 = vmatpush1.msra.mxu0 0.0
  %3673 = vmatprep.subr.mxu0 0.0
  %3674 = vmatpush1.msra.mxu0 0.0
  %3675 = vmatprep.mubr.f32.mxu0 0.0
  %3676 = vmatmul.mubr.f32.gmra.mrb[0].mxu0 %v3416
  %v3677 = vpop.f32.mrb[0].mxu0
  %v3678 = vadd.f32 0.0, %v3677
  %v3679 = vpop.f32.mrb[0].mxu0
  %3680 = vmatprep.mubr.f32.mxu0 0.0
  %3681 = vmatmul.mubr.f32.gmra.mrb[0].mxu0 %v3419
  %v3682 = vpop.f32.mrb[0].mxu0
  %v3683 = vadd.f32 0.0, %v3682
  %v3684 = vpop.f32.mrb[0].mxu0
  %3685 = vmatprep.mubr.f32.mxu0 0.0
  %3686 = vmatmul.mubr.f32.gmra.mrb[0].mxu0 %v3422
  %v3687 = vpop.f32.mrb[0].mxu0
  %v3688 = vadd.f32 0.0, %v3687
  %v3689 = vpop.f32.mrb[0].mxu0
  %3690 = vmatprep.mubr.f32.mxu0 0.0
  %3691 = vmatmul.mubr.f32.gmra.mrb[0].mxu0 %v3425
  %v3692 = vpop.f32.mrb[0].mxu0
  %v3693 = vadd.f32 0.0, %v3692
  %v3694 = vpop.f32.mrb[0].mxu0
  %3695 = vmatprep.mubr.f32.mxu0 0.0
  %3696 = vmatmul.mubr.f32.gmra.mrb[0].mxu0 %v3428
  %v3697 = vpop.f32.mrb[0].mxu0
  %v3698 = vadd.f32 0.0, %v3697
  %v3699 = vpop.f32.mrb[0].mxu0
  %3700 = vmatprep.mubr.f32.mxu0 0.0
  %3701 = vmatmul.mubr.f32.gmra.mrb[0].mxu0 %v3431
  %v3702 = vpop.f32.mrb[0].mxu0
  %v3703 = vadd.f32 0.0, %v3702
  %v3704 = vpop.f32.mrb[0].mxu0
  %3705 = vmatprep.mubr.f32.mxu0 0.0
  %3706 = vmatmul.mubr.f32.gmra.mrb[0].mxu0 %v3434
  %v3707 = vpop.f32.mrb[0].mxu0
  %v3708 = vadd.f32 0.0, %v3707
  %v3709 = vpop.f32.mrb[0].mxu0
  %3710 = vmatprep.mubr.f32.mxu0 0.0
  %3711 = vmatmul.mubr.f32.gmra.mrb[0].mxu0 %v3437
  %v3712 = vpop.f32.mrb[0].mxu0
  %v3713 = vadd.f32 0.0, %v3712
  %v3714 = vpop.f32.mrb[0].mxu0
  %3715 = vmatprep.mubr.f32.mxu0 0.0
  %3716 = vmatmul.mubr.f32.gmra.mrb[0].mxu0 %v3440
  %v3717 = vpop.f32.mrb[0].mxu0
  %v3718 = vadd.f32 0.0, %v3717
  %v3719 = vpop.f32.mrb[0].mxu0
  %3720 = vmatprep.mubr.f32.mxu0 0.0
  %3721 = vmatmul.mubr.f32.gmra.mrb[0].mxu0 %v3443
  %v3722 = vpop.f32.mrb[0].mxu0
  %v3723 = vadd.f32 0.0, %v3722
  %v3724 = vpop.f32.mrb[0].mxu0
  %3725 = vmatprep.mubr.f32.mxu0 0.0
  %3726 = vmatmul.mubr.f32.gmra.mrb[0].mxu0 %v3446
  %v3727 = vpop.f32.mrb[0].mxu0
  %v3728 = vadd.f32 0.0, %v3727
  %v3729 = vpop.f32.mrb[0].mxu0
  %3730 = vmatprep.mubr.f32.mxu0 0.0
  %3731 = vmatmul.mubr.f32.gmra.mrb[0].mxu0 %v3449
  %v3732 = vpop.f32.mrb[0].mxu0
  %v3733 = vadd.f32 0.0, %v3732
  %v3734 = vpop.f32.mrb[0].mxu0
  %3735 = vmatprep.mubr.f32.mxu0 0.0
  %3736 = vmatmul.mubr.f32.gmra.mrb[0].mxu0 %v3452
  %v3737 = vpop.f32.mrb[0].mxu0
  %v3738 = vadd.f32 0.0, %v3737
  %v3739 = vpop.f32.mrb[0].mxu0
  %3740 = vmatprep.mubr.f32.mxu0 0.0
  %3741 = vmatmul.mubr.f32.gmra.mrb[0].mxu0 %v3455
  %v3742 = vpop.f32.mrb[0].mxu0
  %v3743 = vadd.f32 0.0, %v3742
  %v3744 = vpop.f32.mrb[0].mxu0
  %3745 = vmatprep.mubr.f32.mxu0 0.0
  %3746 = vmatmul.mubr.f32.gmra.mrb[0].mxu0 %v3458
  %v3747 = vpop.f32.mrb[0].mxu0
  %v3748 = vadd.f32 0.0, %v3747
  %v3749 = vpop.f32.mrb[0].mxu0
  %3750 = vmatprep.mubr.f32.mxu0 0.0
  %3751 = vmatmul.mubr.f32.gmra.mrb[0].mxu0 %v3461
  %v3752 = vpop.f32.mrb[0].mxu0
  %v3753 = vadd.f32 0.0, %v3752
  %v3754 = vpop.f32.mrb[0].mxu0
  %3755 = vmatprep.mubr.f32.mxu0 0.0
  %3756 = vmatmul.mubr.f32.gmra.mrb[0].mxu0 %v3464
  %v3757 = vpop.f32.mrb[0].mxu0
  %v3758 = vadd.f32 0.0, %v3757
  %v3759 = vpop.f32.mrb[0].mxu0
  %3760 = vmatprep.mubr.f32.mxu0 0.0
  %3761 = vmatmul.mubr.f32.gmra.mrb[0].mxu0 %v3467
  %v3762 = vpop.f32.mrb[0].mxu0
  %v3763 = vadd.f32 0.0, %v3762
  %v3764 = vpop.f32.mrb[0].mxu0
  %3765 = vmatprep.mubr.f32.mxu0 0.0
  %3766 = vmatmul.mubr.f32.gmra.mrb[0].mxu0 %v3470
  %v3767 = vpop.f32.mrb[0].mxu0
  %v3768 = vadd.f32 0.0, %v3767
  %v3769 = vpop.f32.mrb[0].mxu0
  %3770 = vmatprep.mubr.f32.mxu0 0.0
  %3771 = vmatmul.mubr.f32.gmra.mrb[0].mxu0 %v3473
  %v3772 = vpop.f32.mrb[0].mxu0
  %v3773 = vadd.f32 0.0, %v3772
  %v3774 = vpop.f32.mrb[0].mxu0
  %3775 = vmatprep.mubr.f32.mxu0 0.0
  %3776 = vmatmul.mubr.f32.gmra.mrb[0].mxu0 %v3476
  %v3777 = vpop.f32.mrb[0].mxu0
  %v3778 = vadd.f32 0.0, %v3777
  %v3779 = vpop.f32.mrb[0].mxu0
  %3780 = vmatprep.mubr.f32.mxu0 0.0
  %3781 = vmatmul.mubr.f32.gmra.mrb[0].mxu0 %v3479
  %v3782 = vpop.f32.mrb[0].mxu0
  %v3783 = vadd.f32 0.0, %v3782
  %v3784 = vpop.f32.mrb[0].mxu0
  %3785 = vmatprep.mubr.f32.mxu0 0.0
  %3786 = vmatmul.mubr.f32.gmra.mrb[0].mxu0 %v3482
  %v3787 = vpop.f32.mrb[0].mxu0
  %v3788 = vadd.f32 0.0, %v3787
  %v3789 = vpop.f32.mrb[0].mxu0
  %3790 = vmatprep.mubr.f32.mxu0 0.0
  %3791 = vmatmul.mubr.f32.gmra.mrb[0].mxu0 %v3485
  %v3792 = vpop.f32.mrb[0].mxu0
  %v3793 = vadd.f32 0.0, %v3792
  %v3794 = vpop.f32.mrb[0].mxu0
  %3795 = vmatprep.mubr.f32.mxu0 0.0
  %3796 = vmatmul.mubr.f32.gmra.mrb[0].mxu0 %v3488
  %v3797 = vpop.f32.mrb[0].mxu0
  %v3798 = vadd.f32 0.0, %v3797
  %v3799 = vpop.f32.mrb[0].mxu0
  %3800 = vmatprep.mubr.f32.mxu0 0.0
  %3801 = vmatmul.mubr.f32.gmra.mrb[0].mxu0 %v3491
  %v3802 = vpop.f32.mrb[0].mxu0
  %v3803 = vadd.f32 0.0, %v3802
  %v3804 = vpop.f32.mrb[0].mxu0
  %3805 = vmatprep.mubr.f32.mxu0 0.0
  %3806 = vmatmul.mubr.f32.gmra.mrb[0].mxu0 %v3494
  %v3807 = vpop.f32.mrb[0].mxu0
  %v3808 = vadd.f32 0.0, %v3807
  %v3809 = vpop.f32.mrb[0].mxu0
  %3810 = vmatprep.mubr.f32.mxu0 0.0
  %3811 = vmatmul.mubr.f32.gmra.mrb[0].mxu0 %v3497
  %v3812 = vpop.f32.mrb[0].mxu0
  %v3813 = vadd.f32 0.0, %v3812
  %v3814 = vpop.f32.mrb[0].mxu0
  %3815 = vmatprep.mubr.f32.mxu0 0.0
  %3816 = vmatmul.mubr.f32.gmra.mrb[0].mxu0 %v3500
  %v3817 = vpop.f32.mrb[0].mxu0
  %v3818 = vadd.f32 0.0, %v3817
  %v3819 = vpop.f32.mrb[0].mxu0
  %3820 = vmatprep.mubr.f32.mxu0 0.0
  %3821 = vmatmul.mubr.f32.gmra.mrb[0].mxu0 %v3503
  %v3822 = vpop.f32.mrb[0].mxu0
  %v3823 = vadd.f32 0.0, %v3822
  %v3824 = vpop.f32.mrb[0].mxu0
  %3825 = vmatprep.mubr.f32.mxu0 0.0
  %3826 = vmatmul.mubr.f32.gmra.mrb[0].mxu0 %v3506
  %v3827 = vpop.f32.mrb[0].mxu0
  %v3828 = vadd.f32 0.0, %v3827
  %v3829 = vpop.f32.mrb[0].mxu0
  %3830 = vmatprep.mubr.f32.mxu0 0.0
  %3831 = vmatmul.mubr.f32.gmra.mrb[0].mxu0 %v3509
  %v3832 = vpop.f32.mrb[0].mxu0
  %v3833 = vadd.f32 0.0, %v3832
  %v3834 = vpop.f32.mrb[0].mxu0
  %3835 = vmatprep.mubr.f32.mxu0 0.0
  %3836 = vmatmul.mubr.f32.gmra.mrb[0].mxu0 %v3512
  %v3837 = vpop.f32.mrb[0].mxu0
  %v3838 = vadd.f32 0.0, %v3837
  %v3839 = vpop.f32.mrb[0].mxu0
  %3840 = vmatprep.mubr.f32.mxu0 0.0
  %3841 = vmatmul.mubr.f32.gmra.mrb[0].mxu0 %v3515
  %v3842 = vpop.f32.mrb[0].mxu0
  %v3843 = vadd.f32 0.0, %v3842
  %v3844 = vpop.f32.mrb[0].mxu0
  %3845 = vmatprep.mubr.f32.mxu0 0.0
  %3846 = vmatmul.mubr.f32.gmra.mrb[0].mxu0 %v3518
  %v3847 = vpop.f32.mrb[0].mxu0
  %v3848 = vadd.f32 0.0, %v3847
  %v3849 = vpop.f32.mrb[0].mxu0
  %3850 = vmatprep.mubr.f32.mxu0 0.0
  %3851 = vmatmul.mubr.f32.gmra.mrb[0].mxu0 %v3521
  %v3852 = vpop.f32.mrb[0].mxu0
  %v3853 = vadd.f32 0.0, %v3852
  %v3854 = vpop.f32.mrb[0].mxu0
  %3855 = vmatprep.mubr.f32.mxu0 0.0
  %3856 = vmatmul.mubr.f32.gmra.mrb[0].mxu0 %v3524
  %v3857 = vpop.f32.mrb[0].mxu0
  %v3858 = vadd.f32 0.0, %v3857
  %v3859 = vpop.f32.mrb[0].mxu0
  %3860 = vmatprep.mubr.f32.mxu0 0.0
  %3861 = vmatmul.mubr.f32.gmra.mrb[0].mxu0 %v3527
  %v3862 = vpop.f32.mrb[0].mxu0
  %v3863 = vadd.f32 0.0, %v3862
  %v3864 = vpop.f32.mrb[0].mxu0
  %3865 = vmatprep.mubr.f32.mxu0 0.0
  %3866 = vmatmul.mubr.f32.gmra.mrb[0].mxu0 %v3530
  %v3867 = vpop.f32.mrb[0].mxu0
  %v3868 = vadd.f32 0.0, %v3867
  %v3869 = vpop.f32.mrb[0].mxu0
  %3870 = vmatprep.mubr.f32.mxu0 0.0
  %3871 = vmatmul.mubr.f32.gmra.mrb[0].mxu0 %v3533
  %v3872 = vpop.f32.mrb[0].mxu0
  %v3873 = vadd.f32 0.0, %v3872
  %v3874 = vpop.f32.mrb[0].mxu0
  %3875 = vmatprep.mubr.f32.mxu0 0.0
  %3876 = vmatmul.mubr.f32.gmra.mrb[0].mxu0 %v3536
  %v3877 = vpop.f32.mrb[0].mxu0
  %v3878 = vadd.f32 0.0, %v3877
  %v3879 = vpop.f32.mrb[0].mxu0
  %3880 = vmatprep.mubr.f32.mxu0 0.0
  %3881 = vmatmul.mubr.f32.gmra.mrb[0].mxu0 %v3539
  %v3882 = vpop.f32.mrb[0].mxu0
  %v3883 = vadd.f32 0.0, %v3882
  %v3884 = vpop.f32.mrb[0].mxu0
  %3885 = vmatprep.mubr.f32.mxu0 0.0
  %3886 = vmatmul.mubr.f32.gmra.mrb[0].mxu0 %v3542
  %v3887 = vpop.f32.mrb[0].mxu0
  %v3888 = vadd.f32 0.0, %v3887
  %v3889 = vpop.f32.mrb[0].mxu0
  %3890 = vmatprep.mubr.f32.mxu0 0.0
  %3891 = vmatmul.mubr.f32.gmra.mrb[0].mxu0 %v3545
  %v3892 = vpop.f32.mrb[0].mxu0
  %v3893 = vadd.f32 0.0, %v3892
  %v3894 = vpop.f32.mrb[0].mxu0
  %3895 = vmatprep.mubr.f32.mxu0 0.0
  %3896 = vmatmul.mubr.f32.gmra.mrb[0].mxu0 %v3548
  %v3897 = vpop.f32.mrb[0].mxu0
  %v3898 = vadd.f32 0.0, %v3897
  %v3899 = vpop.f32.mrb[0].mxu0
  %3900 = vmatprep.mubr.f32.mxu0 0.0
  %3901 = vmatmul.mubr.f32.gmra.mrb[0].mxu0 %v3551
  %v3902 = vpop.f32.mrb[0].mxu0
  %v3903 = vadd.f32 0.0, %v3902
  %v3904 = vpop.f32.mrb[0].mxu0
  %3905 = vmatprep.mubr.f32.mxu0 0.0
  %3906 = vmatmul.mubr.f32.gmra.mrb[0].mxu0 %v3554
  %v3907 = vpop.f32.mrb[0].mxu0
  %v3908 = vadd.f32 0.0, %v3907
  %v3909 = vpop.f32.mrb[0].mxu0
  %3910 = vmatprep.mubr.f32.mxu0 0.0
  %3911 = vmatmul.mubr.f32.gmra.mrb[0].mxu0 %v3557
  %v3912 = vpop.f32.mrb[0].mxu0
  %v3913 = vadd.f32 0.0, %v3912
  %v3914 = vpop.f32.mrb[0].mxu0
  %3915 = vmatprep.mubr.f32.mxu0 0.0
  %3916 = vmatmul.mubr.f32.gmra.mrb[0].mxu0 %v3560
  %v3917 = vpop.f32.mrb[0].mxu0
  %v3918 = vadd.f32 0.0, %v3917
  %v3919 = vpop.f32.mrb[0].mxu0
  %3920 = vmatprep.mubr.f32.mxu0 0.0
  %3921 = vmatmul.mubr.f32.gmra.mrb[0].mxu0 %v3563
  %v3922 = vpop.f32.mrb[0].mxu0
  %v3923 = vadd.f32 0.0, %v3922
  %v3924 = vpop.f32.mrb[0].mxu0
  %3925 = vmatprep.mubr.f32.mxu0 0.0
  %3926 = vmatmul.mubr.f32.gmra.mrb[0].mxu0 %v3566
  %v3927 = vpop.f32.mrb[0].mxu0
  %v3928 = vadd.f32 0.0, %v3927
  %v3929 = vpop.f32.mrb[0].mxu0
  %3930 = vmatprep.mubr.f32.mxu0 0.0
  %3931 = vmatmul.mubr.f32.gmra.mrb[0].mxu0 %v3569
  %v3932 = vpop.f32.mrb[0].mxu0
  %v3933 = vadd.f32 0.0, %v3932
  %v3934 = vpop.f32.mrb[0].mxu0
  %3935 = vmatprep.mubr.f32.mxu0 0.0
  %3936 = vmatmul.mubr.f32.gmra.mrb[0].mxu0 %v3572
  %v3937 = vpop.f32.mrb[0].mxu0
  %v3938 = vadd.f32 0.0, %v3937
  %v3939 = vpop.f32.mrb[0].mxu0
  %3940 = vmatprep.mubr.f32.mxu0 0.0
  %3941 = vmatmul.mubr.f32.gmra.mrb[0].mxu0 %v3575
  %v3942 = vpop.f32.mrb[0].mxu0
  %v3943 = vadd.f32 0.0, %v3942
  %v3944 = vpop.f32.mrb[0].mxu0
  %3945 = vmatprep.mubr.f32.mxu0 0.0
  %3946 = vmatmul.mubr.f32.gmra.mrb[0].mxu0 %v3578
  %v3947 = vpop.f32.mrb[0].mxu0
  %v3948 = vadd.f32 0.0, %v3947
  %v3949 = vpop.f32.mrb[0].mxu0
  %3950 = vmatprep.mubr.f32.mxu0 0.0
  %3951 = vmatmul.mubr.f32.gmra.mrb[0].mxu0 %v3581
  %v3952 = vpop.f32.mrb[0].mxu0
  %v3953 = vadd.f32 0.0, %v3952
  %v3954 = vpop.f32.mrb[0].mxu0
  %3955 = vmatprep.mubr.f32.mxu0 0.0
  %3956 = vmatmul.mubr.f32.gmra.mrb[0].mxu0 %v3584
  %v3957 = vpop.f32.mrb[0].mxu0
  %v3958 = vadd.f32 0.0, %v3957
  %v3959 = vpop.f32.mrb[0].mxu0
  %3960 = vmatprep.mubr.f32.mxu0 0.0
  %3961 = vmatmul.mubr.f32.gmra.mrb[0].mxu0 %v3587
  %v3962 = vpop.f32.mrb[0].mxu0
  %v3963 = vadd.f32 0.0, %v3962
  %v3964 = vpop.f32.mrb[0].mxu0
  %3965 = vmatprep.mubr.f32.mxu0 0.0
  %3966 = vmatmul.mubr.f32.gmra.mrb[0].mxu0 %v3590
  %v3967 = vpop.f32.mrb[0].mxu0
  %v3968 = vadd.f32 0.0, %v3967
  %v3969 = vpop.f32.mrb[0].mxu0
  %3970 = vmatprep.mubr.f32.mxu0 0.0
  %3971 = vmatmul.mubr.f32.gmra.mrb[0].mxu0 %v3593
  %v3972 = vpop.f32.mrb[0].mxu0
  %v3973 = vadd.f32 0.0, %v3972
  %v3974 = vpop.f32.mrb[0].mxu0
  %3975 = vmatprep.mubr.f32.mxu0 0.0
  %3976 = vmatmul.mubr.f32.gmra.mrb[0].mxu0 %v3596
  %v3977 = vpop.f32.mrb[0].mxu0
  %v3978 = vadd.f32 0.0, %v3977
  %v3979 = vpop.f32.mrb[0].mxu0
  %3980 = vmatprep.mubr.f32.mxu0 0.0
  %3981 = vmatmul.mubr.f32.gmra.mrb[0].mxu0 %v3599
  %v3982 = vpop.f32.mrb[0].mxu0
  %v3983 = vadd.f32 0.0, %v3982
  %v3984 = vpop.f32.mrb[0].mxu0
  %3985 = vmatprep.mubr.f32.mxu0 0.0
  %3986 = vmatmul.mubr.f32.gmra.mrb[0].mxu0 %v3602
  %v3987 = vpop.f32.mrb[0].mxu0
  %v3988 = vadd.f32 0.0, %v3987
  %v3989 = vpop.f32.mrb[0].mxu0
  %3990 = vmatprep.mubr.f32.mxu0 0.0
  %3991 = vmatmul.mubr.f32.gmra.mrb[0].mxu0 %v3605
  %v3992 = vpop.f32.mrb[0].mxu0
  %v3993 = vadd.f32 0.0, %v3992
  %v3994 = vpop.f32.mrb[0].mxu0
  %3995 = vdwg.mxu0
  %v3996 = vld [vmem:[%s3] sm:$0x1]
  %v3998 = vlaneseq
  %v3999 = vshrl.u32 %v3998, 7
  %v4000 = vsub.s32 0, %v3999
  %v4001 = vrot.slane %v3996, %v4000
  %v4003 = vmul.f32 %v3678, %v4001
  %v4004 = vmul.f32 %v3683, %v4001
  %v4005 = vmul.f32 %v3688, %v4001
  %v4006 = vmul.f32 %v3693, %v4001
  %v4007 = vmul.f32 %v3698, %v4001
  %v4008 = vmul.f32 %v3703, %v4001
  %v4009 = vmul.f32 %v3708, %v4001
  %v4010 = vmul.f32 %v3713, %v4001
  %v4011 = vmul.f32 %v3718, %v4001
  %v4012 = vmul.f32 %v3723, %v4001
  %v4013 = vmul.f32 %v3728, %v4001
  %v4014 = vmul.f32 %v3733, %v4001
  %v4015 = vmul.f32 %v3738, %v4001
  %v4016 = vmul.f32 %v3743, %v4001
  %v4017 = vmul.f32 %v3748, %v4001
  %v4018 = vmul.f32 %v3753, %v4001
  %v4019 = vmul.f32 %v3758, %v4001
  %v4020 = vmul.f32 %v3763, %v4001
  %v4021 = vmul.f32 %v3768, %v4001
  %v4022 = vmul.f32 %v3773, %v4001
  %v4023 = vmul.f32 %v3778, %v4001
  %v4024 = vmul.f32 %v3783, %v4001
  %v4025 = vmul.f32 %v3788, %v4001
  %v4026 = vmul.f32 %v3793, %v4001
  %v4027 = vmul.f32 %v3798, %v4001
  %v4028 = vmul.f32 %v3803, %v4001
  %v4029 = vmul.f32 %v3808, %v4001
  %v4030 = vmul.f32 %v3813, %v4001
  %v4031 = vmul.f32 %v3818, %v4001
  %v4032 = vmul.f32 %v3823, %v4001
  %v4033 = vmul.f32 %v3828, %v4001
  %v4034 = vmul.f32 %v3833, %v4001
  %v4035 = vmul.f32 %v3838, %v4001
  %v4036 = vmul.f32 %v3843, %v4001
  %v4037 = vmul.f32 %v3848, %v4001
  %v4038 = vmul.f32 %v3853, %v4001
  %v4039 = vmul.f32 %v3858, %v4001
  %v4040 = vmul.f32 %v3863, %v4001
  %v4041 = vmul.f32 %v3868, %v4001
  %v4042 = vmul.f32 %v3873, %v4001
  %v4043 = vmul.f32 %v3878, %v4001
  %v4044 = vmul.f32 %v3883, %v4001
  %v4045 = vmul.f32 %v3888, %v4001
  %v4046 = vmul.f32 %v3893, %v4001
  %v4047 = vmul.f32 %v3898, %v4001
  %v4048 = vmul.f32 %v3903, %v4001
  %v4049 = vmul.f32 %v3908, %v4001
  %v4050 = vmul.f32 %v3913, %v4001
  %v4051 = vmul.f32 %v3918, %v4001
  %v4052 = vmul.f32 %v3923, %v4001
  %v4053 = vmul.f32 %v3928, %v4001
  %v4054 = vmul.f32 %v3933, %v4001
  %v4055 = vmul.f32 %v3938, %v4001
  %v4056 = vmul.f32 %v3943, %v4001
  %v4057 = vmul.f32 %v3948, %v4001
  %v4058 = vmul.f32 %v3953, %v4001
  %v4059 = vmul.f32 %v3958, %v4001
  %v4060 = vmul.f32 %v3963, %v4001
  %v4061 = vmul.f32 %v3968, %v4001
  %v4062 = vmul.f32 %v3973, %v4001
  %v4063 = vmul.f32 %v3978, %v4001
  %v4064 = vmul.f32 %v3983, %v4001
  %v4065 = vmul.f32 %v3988, %v4001
  %v4066 = vmul.f32 %v3993, %v4001
  %v4067 = vld [vmem:[%s4] sm:$0x1]
  %v4069 = vlaneseq
  %v4070 = vshrl.u32 %v4069, 7
  %v4071 = vsub.s32 0, %v4070
  %v4072 = vrot.slane %v4067, %v4071
  %v4074 = vadd.f32 %v4003, %v4072
  %v4075 = vadd.f32 %v4004, %v4072
  %v4076 = vadd.f32 %v4005, %v4072
  %v4077 = vadd.f32 %v4006, %v4072
  %v4078 = vadd.f32 %v4007, %v4072
  %v4079 = vadd.f32 %v4008, %v4072
  %v4080 = vadd.f32 %v4009, %v4072
  %v4081 = vadd.f32 %v4010, %v4072
  %v4082 = vadd.f32 %v4011, %v4072
  %v4083 = vadd.f32 %v4012, %v4072
  %v4084 = vadd.f32 %v4013, %v4072
  %v4085 = vadd.f32 %v4014, %v4072
  %v4086 = vadd.f32 %v4015, %v4072
  %v4087 = vadd.f32 %v4016, %v4072
  %v4088 = vadd.f32 %v4017, %v4072
  %v4089 = vadd.f32 %v4018, %v4072
  %v4090 = vadd.f32 %v4019, %v4072
  %v4091 = vadd.f32 %v4020, %v4072
  %v4092 = vadd.f32 %v4021, %v4072
  %v4093 = vadd.f32 %v4022, %v4072
  %v4094 = vadd.f32 %v4023, %v4072
  %v4095 = vadd.f32 %v4024, %v4072
  %v4096 = vadd.f32 %v4025, %v4072
  %v4097 = vadd.f32 %v4026, %v4072
  %v4098 = vadd.f32 %v4027, %v4072
  %v4099 = vadd.f32 %v4028, %v4072
  %v4100 = vadd.f32 %v4029, %v4072
  %v4101 = vadd.f32 %v4030, %v4072
  %v4102 = vadd.f32 %v4031, %v4072
  %v4103 = vadd.f32 %v4032, %v4072
  %v4104 = vadd.f32 %v4033, %v4072
  %v4105 = vadd.f32 %v4034, %v4072
  %v4106 = vadd.f32 %v4035, %v4072
  %v4107 = vadd.f32 %v4036, %v4072
  %v4108 = vadd.f32 %v4037, %v4072
  %v4109 = vadd.f32 %v4038, %v4072
  %v4110 = vadd.f32 %v4039, %v4072
  %v4111 = vadd.f32 %v4040, %v4072
  %v4112 = vadd.f32 %v4041, %v4072
  %v4113 = vadd.f32 %v4042, %v4072
  %v4114 = vadd.f32 %v4043, %v4072
  %v4115 = vadd.f32 %v4044, %v4072
  %v4116 = vadd.f32 %v4045, %v4072
  %v4117 = vadd.f32 %v4046, %v4072
  %v4118 = vadd.f32 %v4047, %v4072
  %v4119 = vadd.f32 %v4048, %v4072
  %v4120 = vadd.f32 %v4049, %v4072
  %v4121 = vadd.f32 %v4050, %v4072
  %v4122 = vadd.f32 %v4051, %v4072
  %v4123 = vadd.f32 %v4052, %v4072
  %v4124 = vadd.f32 %v4053, %v4072
  %v4125 = vadd.f32 %v4054, %v4072
  %v4126 = vadd.f32 %v4055, %v4072
  %v4127 = vadd.f32 %v4056, %v4072
  %v4128 = vadd.f32 %v4057, %v4072
  %v4129 = vadd.f32 %v4058, %v4072
  %v4130 = vadd.f32 %v4059, %v4072
  %v4131 = vadd.f32 %v4060, %v4072
  %v4132 = vadd.f32 %v4061, %v4072
  %v4133 = vadd.f32 %v4062, %v4072
  %v4134 = vadd.f32 %v4063, %v4072
  %v4135 = vadd.f32 %v4064, %v4072
  %v4136 = vadd.f32 %v4065, %v4072
  %v4137 = vadd.f32 %v4066, %v4072
  %v4138 = vmax.f32 %v4074, 0.0
  %v4139 = vmax.f32 %v4075, 0.0
  %v4140 = vmax.f32 %v4076, 0.0
  %v4141 = vmax.f32 %v4077, 0.0
  %v4142 = vmax.f32 %v4078, 0.0
  %v4143 = vmax.f32 %v4079, 0.0
  %v4144 = vmax.f32 %v4080, 0.0
  %v4145 = vmax.f32 %v4081, 0.0
  %v4146 = vmax.f32 %v4082, 0.0
  %v4147 = vmax.f32 %v4083, 0.0
  %v4148 = vmax.f32 %v4084, 0.0
  %v4149 = vmax.f32 %v4085, 0.0
  %v4150 = vmax.f32 %v4086, 0.0
  %v4151 = vmax.f32 %v4087, 0.0
  %v4152 = vmax.f32 %v4088, 0.0
  %v4153 = vmax.f32 %v4089, 0.0
  %v4154 = vmax.f32 %v4090, 0.0
  %v4155 = vmax.f32 %v4091, 0.0
  %v4156 = vmax.f32 %v4092, 0.0
  %v4157 = vmax.f32 %v4093, 0.0
  %v4158 = vmax.f32 %v4094, 0.0
  %v4159 = vmax.f32 %v4095, 0.0
  %v4160 = vmax.f32 %v4096, 0.0
  %v4161 = vmax.f32 %v4097, 0.0
  %v4162 = vmax.f32 %v4098, 0.0
  %v4163 = vmax.f32 %v4099, 0.0
  %v4164 = vmax.f32 %v4100, 0.0
  %v4165 = vmax.f32 %v4101, 0.0
  %v4166 = vmax.f32 %v4102, 0.0
  %v4167 = vmax.f32 %v4103, 0.0
  %v4168 = vmax.f32 %v4104, 0.0
  %v4169 = vmax.f32 %v4105, 0.0
  %v4170 = vmax.f32 %v4106, 0.0
  %v4171 = vmax.f32 %v4107, 0.0
  %v4172 = vmax.f32 %v4108, 0.0
  %v4173 = vmax.f32 %v4109, 0.0
  %v4174 = vmax.f32 %v4110, 0.0
  %v4175 = vmax.f32 %v4111, 0.0
  %v4176 = vmax.f32 %v4112, 0.0
  %v4177 = vmax.f32 %v4113, 0.0
  %v4178 = vmax.f32 %v4114, 0.0
  %v4179 = vmax.f32 %v4115, 0.0
  %v4180 = vmax.f32 %v4116, 0.0
  %v4181 = vmax.f32 %v4117, 0.0
  %v4182 = vmax.f32 %v4118, 0.0
  %v4183 = vmax.f32 %v4119, 0.0
  %v4184 = vmax.f32 %v4120, 0.0
  %v4185 = vmax.f32 %v4121, 0.0
  %v4186 = vmax.f32 %v4122, 0.0
  %v4187 = vmax.f32 %v4123, 0.0
  %v4188 = vmax.f32 %v4124, 0.0
  %v4189 = vmax.f32 %v4125, 0.0
  %v4190 = vmax.f32 %v4126, 0.0
  %v4191 = vmax.f32 %v4127, 0.0
  %v4192 = vmax.f32 %v4128, 0.0
  %v4193 = vmax.f32 %v4129, 0.0
  %v4194 = vmax.f32 %v4130, 0.0
  %v4195 = vmax.f32 %v4131, 0.0
  %v4196 = vmax.f32 %v4132, 0.0
  %v4197 = vmax.f32 %v4133, 0.0
  %v4198 = vmax.f32 %v4134, 0.0
  %v4199 = vmax.f32 %v4135, 0.0
  %v4200 = vmax.f32 %v4136, 0.0
  %v4201 = vmax.f32 %v4137, 0.0
  %4202 = vst.msk [vmem:[%s200 + $0x1] sm:$0xff] %vm26, %v4138
  %4203 = vst.msk [vmem:[%s200 + $0x9] sm:$0xff] %vm26, %v4139
  %4204 = vst.msk [vmem:[%s200 + $0x19] sm:$0xff] %vm26, %v4140
  %4205 = vst.msk [vmem:[%s200 + $0x21] sm:$0xff] %vm26, %v4141
  %4206 = vst.msk [vmem:[%s200 + $0x31] sm:$0xff] %vm26, %v4142
  %4207 = vst.msk [vmem:[%s200 + $0x39] sm:$0xff] %vm26, %v4143
  %4208 = vst.msk [vmem:[%s200 + $0x49] sm:$0xff] %vm26, %v4144
  %4209 = vst.msk [vmem:[%s200 + $0x51] sm:$0xff] %vm26, %v4145
  %4210 = vst.msk [vmem:[%s200 + $0x61] sm:$0xff] %vm26, %v4146
  %4211 = vst.msk [vmem:[%s200 + $0x69] sm:$0xff] %vm26, %v4147
  %4212 = vst.msk [vmem:[%s200 + $0x79] sm:$0xff] %vm26, %v4148
  %4213 = vst.msk [vmem:[%s200 + $0x81] sm:$0xff] %vm26, %v4149
  %4214 = vst.msk [vmem:[%s200 + $0x91] sm:$0xff] %vm26, %v4150
  %4215 = vst.msk [vmem:[%s200 + $0x99] sm:$0xff] %vm26, %v4151
  %4216 = vst.msk [vmem:[%s200 + $0xa9] sm:$0xff] %vm26, %v4152
  %4217 = vst.msk [vmem:[%s200 + $0xb1] sm:$0xff] %vm26, %v4153
  %4218 = vst.msk [vmem:[%s200 + $0xc1] sm:$0xff] %vm26, %v4154
  %4219 = vst.msk [vmem:[%s200 + $0xc9] sm:$0xff] %vm26, %v4155
  %4220 = vst.msk [vmem:[%s200 + $0xd9] sm:$0xff] %vm26, %v4156
  %4221 = vst.msk [vmem:[%s200 + $0xe1] sm:$0xff] %vm26, %v4157
  %4222 = vst.msk [vmem:[%s200 + $0xf1] sm:$0xff] %vm26, %v4158
  %4223 = vst.msk [vmem:[%s200 + $0xf9] sm:$0xff] %vm26, %v4159
  %4224 = vst.msk [vmem:[%s200 + $0x109] sm:$0xff] %vm26, %v4160
  %4225 = vst.msk [vmem:[%s200 + $0x111] sm:$0xff] %vm26, %v4161
  %4226 = vst.msk [vmem:[%s200 + $0x121] sm:$0xff] %vm26, %v4162
  %4227 = vst.msk [vmem:[%s200 + $0x129] sm:$0xff] %vm26, %v4163
  %4228 = vst.msk [vmem:[%s200 + $0x139] sm:$0xff] %vm26, %v4164
  %4229 = vst.msk [vmem:[%s200 + $0x141] sm:$0xff] %vm26, %v4165
  %4230 = vst.msk [vmem:[%s200 + $0x151] sm:$0xff] %vm26, %v4166
  %4231 = vst.msk [vmem:[%s200 + $0x159] sm:$0xff] %vm26, %v4167
  %4232 = vst.msk [vmem:[%s200 + $0x169] sm:$0xff] %vm26, %v4168
  %4233 = vst.msk [vmem:[%s200 + $0x171] sm:$0xff] %vm26, %v4169
  %4234 = vst.msk [vmem:[%s200 + $0x1b1] sm:$0xff] %vm26, %v4170
  %4235 = vst.msk [vmem:[%s200 + $0x1b9] sm:$0xff] %vm26, %v4171
  %4236 = vst.msk [vmem:[%s200 + $0x1c9] sm:$0xff] %vm26, %v4172
  %4237 = vst.msk [vmem:[%s200 + $0x1d1] sm:$0xff] %vm26, %v4173
  %4238 = vst.msk [vmem:[%s200 + $0x1e1] sm:$0xff] %vm26, %v4174
  %4239 = vst.msk [vmem:[%s200 + $0x1e9] sm:$0xff] %vm26, %v4175
  %4240 = vst.msk [vmem:[%s200 + $0x1f9] sm:$0xff] %vm26, %v4176
  %4241 = vst.msk [vmem:[%s200 + $0x201] sm:$0xff] %vm26, %v4177
  %4242 = vst.msk [vmem:[%s200 + $0x211] sm:$0xff] %vm26, %v4178
  %4243 = vst.msk [vmem:[%s200 + $0x219] sm:$0xff] %vm26, %v4179
  %4244 = vst.msk [vmem:[%s200 + $0x229] sm:$0xff] %vm26, %v4180
  %4245 = vst.msk [vmem:[%s200 + $0x231] sm:$0xff] %vm26, %v4181
  %4246 = vst.msk [vmem:[%s200 + $0x241] sm:$0xff] %vm26, %v4182
  %4247 = vst.msk [vmem:[%s200 + $0x249] sm:$0xff] %vm26, %v4183
  %4248 = vst.msk [vmem:[%s200 + $0x259] sm:$0xff] %vm26, %v4184
  %4249 = vst.msk [vmem:[%s200 + $0x261] sm:$0xff] %vm26, %v4185
  %4250 = vst.msk [vmem:[%s200 + $0x271] sm:$0xff] %vm26, %v4186
  %4251 = vst.msk [vmem:[%s200 + $0x279] sm:$0xff] %vm26, %v4187
  %4252 = vst.msk [vmem:[%s200 + $0x289] sm:$0xff] %vm26, %v4188
  %4253 = vst.msk [vmem:[%s200 + $0x291] sm:$0xff] %vm26, %v4189
  %4254 = vst.msk [vmem:[%s200 + $0x2a1] sm:$0xff] %vm26, %v4190
  %4255 = vst.msk [vmem:[%s200 + $0x2a9] sm:$0xff] %vm26, %v4191
  %4256 = vst.msk [vmem:[%s200 + $0x2b9] sm:$0xff] %vm26, %v4192
  %4257 = vst.msk [vmem:[%s200 + $0x2c1] sm:$0xff] %vm26, %v4193
  %4258 = vst.msk [vmem:[%s200 + $0x2d1] sm:$0xff] %vm26, %v4194
  %4259 = vst.msk [vmem:[%s200 + $0x2d9] sm:$0xff] %vm26, %v4195
  %4260 = vst.msk [vmem:[%s200 + $0x2e9] sm:$0xff] %vm26, %v4196
  %4261 = vst.msk [vmem:[%s200 + $0x2f1] sm:$0xff] %vm26, %v4197
  %4262 = vst.msk [vmem:[%s200 + $0x301] sm:$0xff] %vm26, %v4198
  %4263 = vst.msk [vmem:[%s200 + $0x309] sm:$0xff] %vm26, %v4199
  %4264 = vst.msk [vmem:[%s200 + $0x319] sm:$0xff] %vm26, %v4200
  %4265 = vst.msk [vmem:[%s200 + $0x321] sm:$0xff] %vm26, %v4201
  %v4266 = vld [vmem:[#allocation2] sm:$0xff]
  %v4267 = vld [vmem:[#allocation2 + $0x8] sm:$0xff]
  %v4268 = vld [vmem:[#allocation2 + $0x18] sm:$0xff]
  %v4269 = vld [vmem:[#allocation2 + $0x20] sm:$0xff]
  %v4270 = vld [vmem:[#allocation2 + $0x30] sm:$0xff]
  %v4271 = vld [vmem:[#allocation2 + $0x38] sm:$0xff]
  %v4272 = vld [vmem:[#allocation2 + $0x48] sm:$0xff]
  %v4273 = vld [vmem:[#allocation2 + $0x50] sm:$0xff]
  %v4274 = vld [vmem:[#allocation2 + $0x60] sm:$0xff]
  %v4275 = vld [vmem:[#allocation2 + $0x68] sm:$0xff]
  %v4276 = vld [vmem:[#allocation2 + $0x78] sm:$0xff]
  %v4277 = vld [vmem:[#allocation2 + $0x80] sm:$0xff]
  %v4278 = vld [vmem:[#allocation2 + $0x90] sm:$0xff]
  %v4279 = vld [vmem:[#allocation2 + $0x98] sm:$0xff]
  %v4280 = vld [vmem:[#allocation2 + $0xa8] sm:$0xff]
  %v4281 = vld [vmem:[#allocation2 + $0xb0] sm:$0xff]
  %v4282 = vld [vmem:[#allocation2 + $0xc0] sm:$0xff]
  %v4283 = vld [vmem:[#allocation2 + $0xc8] sm:$0xff]
  %v4284 = vld [vmem:[#allocation2 + $0xd8] sm:$0xff]
  %v4285 = vld [vmem:[#allocation2 + $0xe0] sm:$0xff]
  %v4286 = vld [vmem:[#allocation2 + $0xf0] sm:$0xff]
  %v4287 = vld [vmem:[#allocation2 + $0xf8] sm:$0xff]
  %v4288 = vld [vmem:[#allocation2 + $0x108] sm:$0xff]
  %v4289 = vld [vmem:[#allocation2 + $0x110] sm:$0xff]
  %v4290 = vld [vmem:[#allocation2 + $0x120] sm:$0xff]
  %v4291 = vld [vmem:[#allocation2 + $0x128] sm:$0xff]
  %v4292 = vld [vmem:[#allocation2 + $0x138] sm:$0xff]
  %v4293 = vld [vmem:[#allocation2 + $0x140] sm:$0xff]
  %v4294 = vld [vmem:[#allocation2 + $0x150] sm:$0xff]
  %v4295 = vld [vmem:[#allocation2 + $0x158] sm:$0xff]
  %v4296 = vld [vmem:[#allocation2 + $0x168] sm:$0xff]
  %v4297 = vld [vmem:[#allocation2 + $0x170] sm:$0xff]
  %v4298 = vld [vmem:[#allocation2 + $0x1b0] sm:$0xff]
  %v4299 = vld [vmem:[#allocation2 + $0x1b8] sm:$0xff]
  %v4300 = vld [vmem:[#allocation2 + $0x1c8] sm:$0xff]
  %v4301 = vld [vmem:[#allocation2 + $0x1d0] sm:$0xff]
  %v4302 = vld [vmem:[#allocation2 + $0x1e0] sm:$0xff]
  %v4303 = vld [vmem:[#allocation2 + $0x1e8] sm:$0xff]
  %v4304 = vld [vmem:[#allocation2 + $0x1f8] sm:$0xff]
  %v4305 = vld [vmem:[#allocation2 + $0x200] sm:$0xff]
  %v4306 = vld [vmem:[#allocation2 + $0x210] sm:$0xff]
  %v4307 = vld [vmem:[#allocation2 + $0x218] sm:$0xff]
  %v4308 = vld [vmem:[#allocation2 + $0x228] sm:$0xff]
  %v4309 = vld [vmem:[#allocation2 + $0x230] sm:$0xff]
  %v4310 = vld [vmem:[#allocation2 + $0x240] sm:$0xff]
  %v4311 = vld [vmem:[#allocation2 + $0x248] sm:$0xff]
  %v4312 = vld [vmem:[#allocation2 + $0x258] sm:$0xff]
  %v4313 = vld [vmem:[#allocation2 + $0x260] sm:$0xff]
  %v4314 = vld [vmem:[#allocation2 + $0x270] sm:$0xff]
  %v4315 = vld [vmem:[#allocation2 + $0x278] sm:$0xff]
  %v4316 = vld [vmem:[#allocation2 + $0x288] sm:$0xff]
  %v4317 = vld [vmem:[#allocation2 + $0x290] sm:$0xff]
  %v4318 = vld [vmem:[#allocation2 + $0x2a0] sm:$0xff]
  %v4319 = vld [vmem:[#allocation2 + $0x2a8] sm:$0xff]
  %v4320 = vld [vmem:[#allocation2 + $0x2b8] sm:$0xff]
  %v4321 = vld [vmem:[#allocation2 + $0x2c0] sm:$0xff]
  %v4322 = vld [vmem:[#allocation2 + $0x2d0] sm:$0xff]
  %v4323 = vld [vmem:[#allocation2 + $0x2d8] sm:$0xff]
  %v4324 = vld [vmem:[#allocation2 + $0x2e8] sm:$0xff]
  %v4325 = vld [vmem:[#allocation2 + $0x2f0] sm:$0xff]
  %v4326 = vld [vmem:[#allocation2 + $0x300] sm:$0xff]
  %v4327 = vld [vmem:[#allocation2 + $0x308] sm:$0xff]
  %v4328 = vld [vmem:[#allocation2 + $0x318] sm:$0xff]
  %v4329 = vld [vmem:[#allocation2 + $0x320] sm:$0xff]
  %v4330 = vld [vmem:[#allocation2 + $0x1] sm:$0xff]
  %v4331 = vld [vmem:[#allocation2 + $0x9] sm:$0xff]
  %v4332 = vld [vmem:[#allocation2 + $0x19] sm:$0xff]
  %v4333 = vld [vmem:[#allocation2 + $0x21] sm:$0xff]
  %v4334 = vld [vmem:[#allocation2 + $0x31] sm:$0xff]
  %v4335 = vld [vmem:[#allocation2 + $0x39] sm:$0xff]
  %v4336 = vld [vmem:[#allocation2 + $0x49] sm:$0xff]
  %v4337 = vld [vmem:[#allocation2 + $0x51] sm:$0xff]
  %v4338 = vld [vmem:[#allocation2 + $0x61] sm:$0xff]
  %v4339 = vld [vmem:[#allocation2 + $0x69] sm:$0xff]
  %v4340 = vld [vmem:[#allocation2 + $0x79] sm:$0xff]
  %v4341 = vld [vmem:[#allocation2 + $0x81] sm:$0xff]
  %v4342 = vld [vmem:[#allocation2 + $0x91] sm:$0xff]
  %v4343 = vld [vmem:[#allocation2 + $0x99] sm:$0xff]
  %v4344 = vld [vmem:[#allocation2 + $0xa9] sm:$0xff]
  %v4345 = vld [vmem:[#allocation2 + $0xb1] sm:$0xff]
  %v4346 = vld [vmem:[#allocation2 + $0xc1] sm:$0xff]
  %v4347 = vld [vmem:[#allocation2 + $0xc9] sm:$0xff]
  %v4348 = vld [vmem:[#allocation2 + $0xd9] sm:$0xff]
  %v4349 = vld [vmem:[#allocation2 + $0xe1] sm:$0xff]
  %v4350 = vld [vmem:[#allocation2 + $0xf1] sm:$0xff]
  %v4351 = vld [vmem:[#allocation2 + $0xf9] sm:$0xff]
  %v4352 = vld [vmem:[#allocation2 + $0x109] sm:$0xff]
  %v4353 = vld [vmem:[#allocation2 + $0x111] sm:$0xff]
  %v4354 = vld [vmem:[#allocation2 + $0x121] sm:$0xff]
  %v4355 = vld [vmem:[#allocation2 + $0x129] sm:$0xff]
  %v4356 = vld [vmem:[#allocation2 + $0x139] sm:$0xff]
  %v4357 = vld [vmem:[#allocation2 + $0x141] sm:$0xff]
  %v4358 = vld [vmem:[#allocation2 + $0x151] sm:$0xff]
  %v4359 = vld [vmem:[#allocation2 + $0x159] sm:$0xff]
  %v4360 = vld [vmem:[#allocation2 + $0x169] sm:$0xff]
  %v4361 = vld [vmem:[#allocation2 + $0x171] sm:$0xff]
  %v4362 = vld [vmem:[#allocation2 + $0x1b1] sm:$0xff]
  %v4363 = vld [vmem:[#allocation2 + $0x1b9] sm:$0xff]
  %v4364 = vld [vmem:[#allocation2 + $0x1c9] sm:$0xff]
  %v4365 = vld [vmem:[#allocation2 + $0x1d1] sm:$0xff]
  %v4366 = vld [vmem:[#allocation2 + $0x1e1] sm:$0xff]
  %v4367 = vld [vmem:[#allocation2 + $0x1e9] sm:$0xff]
  %v4368 = vld [vmem:[#allocation2 + $0x1f9] sm:$0xff]
  %v4369 = vld [vmem:[#allocation2 + $0x201] sm:$0xff]
  %v4370 = vld [vmem:[#allocation2 + $0x211] sm:$0xff]
  %v4371 = vld [vmem:[#allocation2 + $0x219] sm:$0xff]
  %v4372 = vld [vmem:[#allocation2 + $0x229] sm:$0xff]
  %v4373 = vld [vmem:[#allocation2 + $0x231] sm:$0xff]
  %v4374 = vld [vmem:[#allocation2 + $0x241] sm:$0xff]
  %v4375 = vld [vmem:[#allocation2 + $0x249] sm:$0xff]
  %v4376 = vld [vmem:[#allocation2 + $0x259] sm:$0xff]
  %v4377 = vld [vmem:[#allocation2 + $0x261] sm:$0xff]
  %v4378 = vld [vmem:[#allocation2 + $0x271] sm:$0xff]
  %v4379 = vld [vmem:[#allocation2 + $0x279] sm:$0xff]
  %v4380 = vld [vmem:[#allocation2 + $0x289] sm:$0xff]
  %v4381 = vld [vmem:[#allocation2 + $0x291] sm:$0xff]
  %v4382 = vld [vmem:[#allocation2 + $0x2a1] sm:$0xff]
  %v4383 = vld [vmem:[#allocation2 + $0x2a9] sm:$0xff]
  %v4384 = vld [vmem:[#allocation2 + $0x2b9] sm:$0xff]
  %v4385 = vld [vmem:[#allocation2 + $0x2c1] sm:$0xff]
  %v4386 = vld [vmem:[#allocation2 + $0x2d1] sm:$0xff]
  %v4387 = vld [vmem:[#allocation2 + $0x2d9] sm:$0xff]
  %v4388 = vld [vmem:[#allocation2 + $0x2e9] sm:$0xff]
  %v4389 = vld [vmem:[#allocation2 + $0x2f1] sm:$0xff]
  %v4390 = vld [vmem:[#allocation2 + $0x301] sm:$0xff]
  %v4391 = vld [vmem:[#allocation2 + $0x309] sm:$0xff]
  %v4392 = vld [vmem:[#allocation2 + $0x319] sm:$0xff]
  %v4393 = vld [vmem:[#allocation2 + $0x321] sm:$0xff]
  %v4394 = vld [vmem:[#allocation2 + $0x2] sm:$0xff]
  %v4395 = vld [vmem:[#allocation2 + $0xa] sm:$0xff]
  %v4396 = vld [vmem:[#allocation2 + $0x1a] sm:$0xff]
  %v4397 = vld [vmem:[#allocation2 + $0x22] sm:$0xff]
  %v4398 = vld [vmem:[#allocation2 + $0x32] sm:$0xff]
  %v4399 = vld [vmem:[#allocation2 + $0x3a] sm:$0xff]
  %v4400 = vld [vmem:[#allocation2 + $0x4a] sm:$0xff]
  %v4401 = vld [vmem:[#allocation2 + $0x52] sm:$0xff]
  %v4402 = vld [vmem:[#allocation2 + $0x62] sm:$0xff]
  %v4403 = vld [vmem:[#allocation2 + $0x6a] sm:$0xff]
  %v4404 = vld [vmem:[#allocation2 + $0x7a] sm:$0xff]
  %v4405 = vld [vmem:[#allocation2 + $0x82] sm:$0xff]
  %v4406 = vld [vmem:[#allocation2 + $0x92] sm:$0xff]
  %v4407 = vld [vmem:[#allocation2 + $0x9a] sm:$0xff]
  %v4408 = vld [vmem:[#allocation2 + $0xaa] sm:$0xff]
  %v4409 = vld [vmem:[#allocation2 + $0xb2] sm:$0xff]
  %v4410 = vld [vmem:[#allocation2 + $0xc2] sm:$0xff]
  %v4411 = vld [vmem:[#allocation2 + $0xca] sm:$0xff]
  %v4412 = vld [vmem:[#allocation2 + $0xda] sm:$0xff]
  %v4413 = vld [vmem:[#allocation2 + $0xe2] sm:$0xff]
  %v4414 = vld [vmem:[#allocation2 + $0xf2] sm:$0xff]
  %v4415 = vld [vmem:[#allocation2 + $0xfa] sm:$0xff]
  %v4416 = vld [vmem:[#allocation2 + $0x10a] sm:$0xff]
  %v4417 = vld [vmem:[#allocation2 + $0x112] sm:$0xff]
  %v4418 = vld [vmem:[#allocation2 + $0x122] sm:$0xff]
  %v4419 = vld [vmem:[#allocation2 + $0x12a] sm:$0xff]
  %v4420 = vld [vmem:[#allocation2 + $0x13a] sm:$0xff]
  %v4421 = vld [vmem:[#allocation2 + $0x142] sm:$0xff]
  %v4422 = vld [vmem:[#allocation2 + $0x152] sm:$0xff]
  %v4423 = vld [vmem:[#allocation2 + $0x15a] sm:$0xff]
  %v4424 = vld [vmem:[#allocation2 + $0x16a] sm:$0xff]
  %v4425 = vld [vmem:[#allocation2 + $0x172] sm:$0xff]
  %v4426 = vld [vmem:[#allocation2 + $0x1b2] sm:$0xff]
  %v4427 = vld [vmem:[#allocation2 + $0x1ba] sm:$0xff]
  %v4428 = vld [vmem:[#allocation2 + $0x1ca] sm:$0xff]
  %v4429 = vld [vmem:[#allocation2 + $0x1d2] sm:$0xff]
  %v4430 = vld [vmem:[#allocation2 + $0x1e2] sm:$0xff]
  %v4431 = vld [vmem:[#allocation2 + $0x1ea] sm:$0xff]
  %v4432 = vld [vmem:[#allocation2 + $0x1fa] sm:$0xff]
  %v4433 = vld [vmem:[#allocation2 + $0x202] sm:$0xff]
  %v4434 = vld [vmem:[#allocation2 + $0x212] sm:$0xff]
  %v4435 = vld [vmem:[#allocation2 + $0x21a] sm:$0xff]
  %v4436 = vld [vmem:[#allocation2 + $0x22a] sm:$0xff]
  %v4437 = vld [vmem:[#allocation2 + $0x232] sm:$0xff]
  %v4438 = vld [vmem:[#allocation2 + $0x242] sm:$0xff]
  %v4439 = vld [vmem:[#allocation2 + $0x24a] sm:$0xff]
  %v4440 = vld [vmem:[#allocation2 + $0x25a] sm:$0xff]
  %v4441 = vld [vmem:[#allocation2 + $0x262] sm:$0xff]
  %v4442 = vld [vmem:[#allocation2 + $0x272] sm:$0xff]
  %v4443 = vld [vmem:[#allocation2 + $0x27a] sm:$0xff]
  %v4444 = vld [vmem:[#allocation2 + $0x28a] sm:$0xff]
  %v4445 = vld [vmem:[#allocation2 + $0x292] sm:$0xff]
  %v4446 = vld [vmem:[#allocation2 + $0x2a2] sm:$0xff]
  %v4447 = vld [vmem:[#allocation2 + $0x2aa] sm:$0xff]
  %v4448 = vld [vmem:[#allocation2 + $0x2ba] sm:$0xff]
  %v4449 = vld [vmem:[#allocation2 + $0x2c2] sm:$0xff]
  %v4450 = vld [vmem:[#allocation2 + $0x2d2] sm:$0xff]
  %v4451 = vld [vmem:[#allocation2 + $0x2da] sm:$0xff]
  %v4452 = vld [vmem:[#allocation2 + $0x2ea] sm:$0xff]
  %v4453 = vld [vmem:[#allocation2 + $0x2f2] sm:$0xff]
  %v4454 = vld [vmem:[#allocation2 + $0x302] sm:$0xff]
  %v4455 = vld [vmem:[#allocation2 + $0x30a] sm:$0xff]
  %v4456 = vld [vmem:[#allocation2 + $0x31a] sm:$0xff]
  %v4457 = vld [vmem:[#allocation2 + $0x322] sm:$0xff]
  %v4458 = vld [vmem:[%s200] sm:$0xff]
  %v4459 = vld [vmem:[%s200 + $0x8] sm:$0xff]
  %v4460 = vld [vmem:[%s200 + $0x18] sm:$0xff]
  %v4461 = vld [vmem:[%s200 + $0x20] sm:$0xff]
  %v4462 = vld [vmem:[%s200 + $0x30] sm:$0xff]
  %v4463 = vld [vmem:[%s200 + $0x38] sm:$0xff]
  %v4464 = vld [vmem:[%s200 + $0x48] sm:$0xff]
  %v4465 = vld [vmem:[%s200 + $0x50] sm:$0xff]
  %v4466 = vld [vmem:[%s200 + $0x60] sm:$0xff]
  %v4467 = vld [vmem:[%s200 + $0x68] sm:$0xff]
  %v4468 = vld [vmem:[%s200 + $0x78] sm:$0xff]
  %v4469 = vld [vmem:[%s200 + $0x80] sm:$0xff]
  %v4470 = vld [vmem:[%s200 + $0x90] sm:$0xff]
  %v4471 = vld [vmem:[%s200 + $0x98] sm:$0xff]
  %v4472 = vld [vmem:[%s200 + $0xa8] sm:$0xff]
  %v4473 = vld [vmem:[%s200 + $0xb0] sm:$0xff]
  %v4474 = vld [vmem:[%s200 + $0xc0] sm:$0xff]
  %v4475 = vld [vmem:[%s200 + $0xc8] sm:$0xff]
  %v4476 = vld [vmem:[%s200 + $0xd8] sm:$0xff]
  %v4477 = vld [vmem:[%s200 + $0xe0] sm:$0xff]
  %v4478 = vld [vmem:[%s200 + $0xf0] sm:$0xff]
  %v4479 = vld [vmem:[%s200 + $0xf8] sm:$0xff]
  %v4480 = vld [vmem:[%s200 + $0x108] sm:$0xff]
  %v4481 = vld [vmem:[%s200 + $0x110] sm:$0xff]
  %v4482 = vld [vmem:[%s200 + $0x120] sm:$0xff]
  %v4483 = vld [vmem:[%s200 + $0x128] sm:$0xff]
  %v4484 = vld [vmem:[%s200 + $0x138] sm:$0xff]
  %v4485 = vld [vmem:[%s200 + $0x140] sm:$0xff]
  %v4486 = vld [vmem:[%s200 + $0x150] sm:$0xff]
  %v4487 = vld [vmem:[%s200 + $0x158] sm:$0xff]
  %v4488 = vld [vmem:[%s200 + $0x168] sm:$0xff]
  %v4489 = vld [vmem:[%s200 + $0x170] sm:$0xff]
  %v4490 = vld [vmem:[%s200 + $0x1b0] sm:$0xff]
  %v4491 = vld [vmem:[%s200 + $0x1b8] sm:$0xff]
  %v4492 = vld [vmem:[%s200 + $0x1c8] sm:$0xff]
  %v4493 = vld [vmem:[%s200 + $0x1d0] sm:$0xff]
  %v4494 = vld [vmem:[%s200 + $0x1e0] sm:$0xff]
  %v4495 = vld [vmem:[%s200 + $0x1e8] sm:$0xff]
  %v4496 = vld [vmem:[%s200 + $0x1f8] sm:$0xff]
  %v4497 = vld [vmem:[%s200 + $0x200] sm:$0xff]
  %v4498 = vld [vmem:[%s200 + $0x210] sm:$0xff]
  %v4499 = vld [vmem:[%s200 + $0x218] sm:$0xff]
  %v4500 = vld [vmem:[%s200 + $0x228] sm:$0xff]
  %v4501 = vld [vmem:[%s200 + $0x230] sm:$0xff]
  %v4502 = vld [vmem:[%s200 + $0x240] sm:$0xff]
  %v4503 = vld [vmem:[%s200 + $0x248] sm:$0xff]
  %v4504 = vld [vmem:[%s200 + $0x258] sm:$0xff]
  %v4505 = vld [vmem:[%s200 + $0x260] sm:$0xff]
  %v4506 = vld [vmem:[%s200 + $0x270] sm:$0xff]
  %v4507 = vld [vmem:[%s200 + $0x278] sm:$0xff]
  %v4508 = vld [vmem:[%s200 + $0x288] sm:$0xff]
  %v4509 = vld [vmem:[%s200 + $0x290] sm:$0xff]
  %v4510 = vld [vmem:[%s200 + $0x2a0] sm:$0xff]
  %v4511 = vld [vmem:[%s200 + $0x2a8] sm:$0xff]
  %v4512 = vld [vmem:[%s200 + $0x2b8] sm:$0xff]
  %v4513 = vld [vmem:[%s200 + $0x2c0] sm:$0xff]
  %v4514 = vld [vmem:[%s200 + $0x2d0] sm:$0xff]
  %v4515 = vld [vmem:[%s200 + $0x2d8] sm:$0xff]
  %v4516 = vld [vmem:[%s200 + $0x2e8] sm:$0xff]
  %v4517 = vld [vmem:[%s200 + $0x2f0] sm:$0xff]
  %v4518 = vld [vmem:[%s200 + $0x300] sm:$0xff]
  %v4519 = vld [vmem:[%s200 + $0x308] sm:$0xff]
  %v4520 = vld [vmem:[%s200 + $0x318] sm:$0xff]
  %v4521 = vld [vmem:[%s200 + $0x320] sm:$0xff]
  %v4522 = vld [vmem:[%s200 + $0x1] sm:$0xff]
  %v4523 = vld [vmem:[%s200 + $0x9] sm:$0xff]
  %v4524 = vld [vmem:[%s200 + $0x19] sm:$0xff]
  %v4525 = vld [vmem:[%s200 + $0x21] sm:$0xff]
  %v4526 = vld [vmem:[%s200 + $0x31] sm:$0xff]
  %v4527 = vld [vmem:[%s200 + $0x39] sm:$0xff]
  %v4528 = vld [vmem:[%s200 + $0x49] sm:$0xff]
  %v4529 = vld [vmem:[%s200 + $0x51] sm:$0xff]
  %v4530 = vld [vmem:[%s200 + $0x61] sm:$0xff]
  %v4531 = vld [vmem:[%s200 + $0x69] sm:$0xff]
  %v4532 = vld [vmem:[%s200 + $0x79] sm:$0xff]
  %v4533 = vld [vmem:[%s200 + $0x81] sm:$0xff]
  %v4534 = vld [vmem:[%s200 + $0x91] sm:$0xff]
  %v4535 = vld [vmem:[%s200 + $0x99] sm:$0xff]
  %v4536 = vld [vmem:[%s200 + $0xa9] sm:$0xff]
  %v4537 = vld [vmem:[%s200 + $0xb1] sm:$0xff]
  %v4538 = vld [vmem:[%s200 + $0xc1] sm:$0xff]
  %v4539 = vld [vmem:[%s200 + $0xc9] sm:$0xff]
  %v4540 = vld [vmem:[%s200 + $0xd9] sm:$0xff]
  %v4541 = vld [vmem:[%s200 + $0xe1] sm:$0xff]
  %v4542 = vld [vmem:[%s200 + $0xf1] sm:$0xff]
  %v4543 = vld [vmem:[%s200 + $0xf9] sm:$0xff]
  %v4544 = vld [vmem:[%s200 + $0x109] sm:$0xff]
  %v4545 = vld [vmem:[%s200 + $0x111] sm:$0xff]
  %v4546 = vld [vmem:[%s200 + $0x121] sm:$0xff]
  %v4547 = vld [vmem:[%s200 + $0x129] sm:$0xff]
  %v4548 = vld [vmem:[%s200 + $0x139] sm:$0xff]
  %v4549 = vld [vmem:[%s200 + $0x141] sm:$0xff]
  %v4550 = vld [vmem:[%s200 + $0x151] sm:$0xff]
  %v4551 = vld [vmem:[%s200 + $0x159] sm:$0xff]
  %v4552 = vld [vmem:[%s200 + $0x169] sm:$0xff]
  %v4553 = vld [vmem:[%s200 + $0x171] sm:$0xff]
  %v4554 = vld [vmem:[%s200 + $0x1b1] sm:$0xff]
  %v4555 = vld [vmem:[%s200 + $0x1b9] sm:$0xff]
  %v4556 = vld [vmem:[%s200 + $0x1c9] sm:$0xff]
  %v4557 = vld [vmem:[%s200 + $0x1d1] sm:$0xff]
  %v4558 = vld [vmem:[%s200 + $0x1e1] sm:$0xff]
  %v4559 = vld [vmem:[%s200 + $0x1e9] sm:$0xff]
  %v4560 = vld [vmem:[%s200 + $0x1f9] sm:$0xff]
  %v4561 = vld [vmem:[%s200 + $0x201] sm:$0xff]
  %v4562 = vld [vmem:[%s200 + $0x211] sm:$0xff]
  %v4563 = vld [vmem:[%s200 + $0x219] sm:$0xff]
  %v4564 = vld [vmem:[%s200 + $0x229] sm:$0xff]
  %v4565 = vld [vmem:[%s200 + $0x231] sm:$0xff]
  %v4566 = vld [vmem:[%s200 + $0x241] sm:$0xff]
  %v4567 = vld [vmem:[%s200 + $0x249] sm:$0xff]
  %v4568 = vld [vmem:[%s200 + $0x259] sm:$0xff]
  %v4569 = vld [vmem:[%s200 + $0x261] sm:$0xff]
  %v4570 = vld [vmem:[%s200 + $0x271] sm:$0xff]
  %v4571 = vld [vmem:[%s200 + $0x279] sm:$0xff]
  %v4572 = vld [vmem:[%s200 + $0x289] sm:$0xff]
  %v4573 = vld [vmem:[%s200 + $0x291] sm:$0xff]
  %v4574 = vld [vmem:[%s200 + $0x2a1] sm:$0xff]
  %v4575 = vld [vmem:[%s200 + $0x2a9] sm:$0xff]
  %v4576 = vld [vmem:[%s200 + $0x2b9] sm:$0xff]
  %v4577 = vld [vmem:[%s200 + $0x2c1] sm:$0xff]
  %v4578 = vld [vmem:[%s200 + $0x2d1] sm:$0xff]
  %v4579 = vld [vmem:[%s200 + $0x2d9] sm:$0xff]
  %v4580 = vld [vmem:[%s200 + $0x2e9] sm:$0xff]
  %v4581 = vld [vmem:[%s200 + $0x2f1] sm:$0xff]
  %v4582 = vld [vmem:[%s200 + $0x301] sm:$0xff]
  %v4583 = vld [vmem:[%s200 + $0x309] sm:$0xff]
  %v4584 = vld [vmem:[%s200 + $0x319] sm:$0xff]
  %v4585 = vld [vmem:[%s200 + $0x321] sm:$0xff]
  %v4586 = vld [vmem:[%s200 + $0x2] sm:$0xff]
  %v4587 = vld [vmem:[%s200 + $0xa] sm:$0xff]
  %v4588 = vld [vmem:[%s200 + $0x1a] sm:$0xff]
  %v4589 = vld [vmem:[%s200 + $0x22] sm:$0xff]
  %v4590 = vld [vmem:[%s200 + $0x32] sm:$0xff]
  %v4591 = vld [vmem:[%s200 + $0x3a] sm:$0xff]
  %v4592 = vld [vmem:[%s200 + $0x4a] sm:$0xff]
  %v4593 = vld [vmem:[%s200 + $0x52] sm:$0xff]
  %v4594 = vld [vmem:[%s200 + $0x62] sm:$0xff]
  %v4595 = vld [vmem:[%s200 + $0x6a] sm:$0xff]
  %v4596 = vld [vmem:[%s200 + $0x7a] sm:$0xff]
  %v4597 = vld [vmem:[%s200 + $0x82] sm:$0xff]
  %v4598 = vld [vmem:[%s200 + $0x92] sm:$0xff]
  %v4599 = vld [vmem:[%s200 + $0x9a] sm:$0xff]
  %v4600 = vld [vmem:[%s200 + $0xaa] sm:$0xff]
  %v4601 = vld [vmem:[%s200 + $0xb2] sm:$0xff]
  %v4602 = vld [vmem:[%s200 + $0xc2] sm:$0xff]
  %v4603 = vld [vmem:[%s200 + $0xca] sm:$0xff]
  %v4604 = vld [vmem:[%s200 + $0xda] sm:$0xff]
  %v4605 = vld [vmem:[%s200 + $0xe2] sm:$0xff]
  %v4606 = vld [vmem:[%s200 + $0xf2] sm:$0xff]
  %v4607 = vld [vmem:[%s200 + $0xfa] sm:$0xff]
  %v4608 = vld [vmem:[%s200 + $0x10a] sm:$0xff]
  %v4609 = vld [vmem:[%s200 + $0x112] sm:$0xff]
  %v4610 = vld [vmem:[%s200 + $0x122] sm:$0xff]
  %v4611 = vld [vmem:[%s200 + $0x12a] sm:$0xff]
  %v4612 = vld [vmem:[%s200 + $0x13a] sm:$0xff]
  %v4613 = vld [vmem:[%s200 + $0x142] sm:$0xff]
  %v4614 = vld [vmem:[%s200 + $0x152] sm:$0xff]
  %v4615 = vld [vmem:[%s200 + $0x15a] sm:$0xff]
  %v4616 = vld [vmem:[%s200 + $0x16a] sm:$0xff]
  %v4617 = vld [vmem:[%s200 + $0x172] sm:$0xff]
  %v4618 = vld [vmem:[%s200 + $0x1b2] sm:$0xff]
  %v4619 = vld [vmem:[%s200 + $0x1ba] sm:$0xff]
  %v4620 = vld [vmem:[%s200 + $0x1ca] sm:$0xff]
  %v4621 = vld [vmem:[%s200 + $0x1d2] sm:$0xff]
  %v4622 = vld [vmem:[%s200 + $0x1e2] sm:$0xff]
  %v4623 = vld [vmem:[%s200 + $0x1ea] sm:$0xff]
  %v4624 = vld [vmem:[%s200 + $0x1fa] sm:$0xff]
  %v4625 = vld [vmem:[%s200 + $0x202] sm:$0xff]
  %v4626 = vld [vmem:[%s200 + $0x212] sm:$0xff]
  %v4627 = vld [vmem:[%s200 + $0x21a] sm:$0xff]
  %v4628 = vld [vmem:[%s200 + $0x22a] sm:$0xff]
  %v4629 = vld [vmem:[%s200 + $0x232] sm:$0xff]
  %v4630 = vld [vmem:[%s200 + $0x242] sm:$0xff]
  %v4631 = vld [vmem:[%s200 + $0x24a] sm:$0xff]
  %v4632 = vld [vmem:[%s200 + $0x25a] sm:$0xff]
  %v4633 = vld [vmem:[%s200 + $0x262] sm:$0xff]
  %v4634 = vld [vmem:[%s200 + $0x272] sm:$0xff]
  %v4635 = vld [vmem:[%s200 + $0x27a] sm:$0xff]
  %v4636 = vld [vmem:[%s200 + $0x28a] sm:$0xff]
  %v4637 = vld [vmem:[%s200 + $0x292] sm:$0xff]
  %v4638 = vld [vmem:[%s200 + $0x2a2] sm:$0xff]
  %v4639 = vld [vmem:[%s200 + $0x2aa] sm:$0xff]
  %v4640 = vld [vmem:[%s200 + $0x2ba] sm:$0xff]
  %v4641 = vld [vmem:[%s200 + $0x2c2] sm:$0xff]
  %v4642 = vld [vmem:[%s200 + $0x2d2] sm:$0xff]
  %v4643 = vld [vmem:[%s200 + $0x2da] sm:$0xff]
  %v4644 = vld [vmem:[%s200 + $0x2ea] sm:$0xff]
  %v4645 = vld [vmem:[%s200 + $0x2f2] sm:$0xff]
  %v4646 = vld [vmem:[%s200 + $0x302] sm:$0xff]
  %v4647 = vld [vmem:[%s200 + $0x30a] sm:$0xff]
  %v4648 = vld [vmem:[%s200 + $0x31a] sm:$0xff]
  %v4649 = vld [vmem:[%s200 + $0x322] sm:$0xff]
  %v4650 = vld [vmem:[%s649] sm:$0xff]
  %v4651 = vld [vmem:[%s649 + $0x8] sm:$0xff]
  %v4652 = vld [vmem:[%s649 + $0x18] sm:$0xff]
  %v4653 = vld [vmem:[%s649 + $0x20] sm:$0xff]
  %v4654 = vld [vmem:[%s649 + $0x30] sm:$0xff]
  %v4655 = vld [vmem:[%s649 + $0x38] sm:$0xff]
  %v4656 = vld [vmem:[%s649 + $0x48] sm:$0xff]
  %v4657 = vld [vmem:[%s649 + $0x50] sm:$0xff]
  %v4658 = vld [vmem:[%s649 + $0x60] sm:$0xff]
  %v4659 = vld [vmem:[%s649 + $0x68] sm:$0xff]
  %v4660 = vld [vmem:[%s649 + $0x78] sm:$0xff]
  %v4661 = vld [vmem:[%s649 + $0x80] sm:$0xff]
  %v4662 = vld [vmem:[%s649 + $0x90] sm:$0xff]
  %v4663 = vld [vmem:[%s649 + $0x98] sm:$0xff]
  %v4664 = vld [vmem:[%s649 + $0xa8] sm:$0xff]
  %v4665 = vld [vmem:[%s649 + $0xb0] sm:$0xff]
  %v4666 = vld [vmem:[%s649 + $0xc0] sm:$0xff]
  %v4667 = vld [vmem:[%s649 + $0xc8] sm:$0xff]
  %v4668 = vld [vmem:[%s649 + $0xd8] sm:$0xff]
  %v4669 = vld [vmem:[%s649 + $0xe0] sm:$0xff]
  %v4670 = vld [vmem:[%s649 + $0xf0] sm:$0xff]
  %v4671 = vld [vmem:[%s649 + $0xf8] sm:$0xff]
  %v4672 = vld [vmem:[%s649 + $0x108] sm:$0xff]
  %v4673 = vld [vmem:[%s649 + $0x110] sm:$0xff]
  %v4674 = vld [vmem:[%s649 + $0x120] sm:$0xff]
  %v4675 = vld [vmem:[%s649 + $0x128] sm:$0xff]
  %v4676 = vld [vmem:[%s649 + $0x138] sm:$0xff]
  %v4677 = vld [vmem:[%s649 + $0x140] sm:$0xff]
  %v4678 = vld [vmem:[%s649 + $0x150] sm:$0xff]
  %v4679 = vld [vmem:[%s649 + $0x158] sm:$0xff]
  %v4680 = vld [vmem:[%s649 + $0x168] sm:$0xff]
  %v4681 = vld [vmem:[%s649 + $0x170] sm:$0xff]
  %v4682 = vld [vmem:[%s649 + $0x1b0] sm:$0xff]
  %v4683 = vld [vmem:[%s649 + $0x1b8] sm:$0xff]
  %v4684 = vld [vmem:[%s649 + $0x1c8] sm:$0xff]
  %v4685 = vld [vmem:[%s649 + $0x1d0] sm:$0xff]
  %v4686 = vld [vmem:[%s649 + $0x1e0] sm:$0xff]
  %v4687 = vld [vmem:[%s649 + $0x1e8] sm:$0xff]
  %v4688 = vld [vmem:[%s649 + $0x1f8] sm:$0xff]
  %v4689 = vld [vmem:[%s649 + $0x200] sm:$0xff]
  %v4690 = vld [vmem:[%s649 + $0x210] sm:$0xff]
  %v4691 = vld [vmem:[%s649 + $0x218] sm:$0xff]
  %v4692 = vld [vmem:[%s649 + $0x228] sm:$0xff]
  %v4693 = vld [vmem:[%s649 + $0x230] sm:$0xff]
  %v4694 = vld [vmem:[%s649 + $0x240] sm:$0xff]
  %v4695 = vld [vmem:[%s649 + $0x248] sm:$0xff]
  %v4696 = vld [vmem:[%s649 + $0x258] sm:$0xff]
  %v4697 = vld [vmem:[%s649 + $0x260] sm:$0xff]
  %v4698 = vld [vmem:[%s649 + $0x270] sm:$0xff]
  %v4699 = vld [vmem:[%s649 + $0x278] sm:$0xff]
  %v4700 = vld [vmem:[%s649 + $0x288] sm:$0xff]
  %v4701 = vld [vmem:[%s649 + $0x290] sm:$0xff]
  %v4702 = vld [vmem:[%s649 + $0x2a0] sm:$0xff]
  %v4703 = vld [vmem:[%s649 + $0x2a8] sm:$0xff]
  %v4704 = vld [vmem:[%s649 + $0x2b8] sm:$0xff]
  %v4705 = vld [vmem:[%s649 + $0x2c0] sm:$0xff]
  %v4706 = vld [vmem:[%s649 + $0x2d0] sm:$0xff]
  %v4707 = vld [vmem:[%s649 + $0x2d8] sm:$0xff]
  %v4708 = vld [vmem:[%s649 + $0x2e8] sm:$0xff]
  %v4709 = vld [vmem:[%s649 + $0x2f0] sm:$0xff]
  %v4710 = vld [vmem:[%s649 + $0x300] sm:$0xff]
  %v4711 = vld [vmem:[%s649 + $0x308] sm:$0xff]
  %v4712 = vld [vmem:[%s649 + $0x318] sm:$0xff]
  %v4713 = vld [vmem:[%s649 + $0x320] sm:$0xff]
  %v4714 = vld [vmem:[%s649 + $0x1] sm:$0xff]
  %v4715 = vld [vmem:[%s649 + $0x9] sm:$0xff]
  %v4716 = vld [vmem:[%s649 + $0x19] sm:$0xff]
  %v4717 = vld [vmem:[%s649 + $0x21] sm:$0xff]
  %v4718 = vld [vmem:[%s649 + $0x31] sm:$0xff]
  %v4719 = vld [vmem:[%s649 + $0x39] sm:$0xff]
  %v4720 = vld [vmem:[%s649 + $0x49] sm:$0xff]
  %v4721 = vld [vmem:[%s649 + $0x51] sm:$0xff]
  %v4722 = vld [vmem:[%s649 + $0x61] sm:$0xff]
  %v4723 = vld [vmem:[%s649 + $0x69] sm:$0xff]
  %v4724 = vld [vmem:[%s649 + $0x79] sm:$0xff]
  %v4725 = vld [vmem:[%s649 + $0x81] sm:$0xff]
  %v4726 = vld [vmem:[%s649 + $0x91] sm:$0xff]
  %v4727 = vld [vmem:[%s649 + $0x99] sm:$0xff]
  %v4728 = vld [vmem:[%s649 + $0xa9] sm:$0xff]
  %v4729 = vld [vmem:[%s649 + $0xb1] sm:$0xff]
  %v4730 = vld [vmem:[%s649 + $0xc1] sm:$0xff]
  %v4731 = vld [vmem:[%s649 + $0xc9] sm:$0xff]
  %v4732 = vld [vmem:[%s649 + $0xd9] sm:$0xff]
  %v4733 = vld [vmem:[%s649 + $0xe1] sm:$0xff]
  %v4734 = vld [vmem:[%s649 + $0xf1] sm:$0xff]
  %v4735 = vld [vmem:[%s649 + $0xf9] sm:$0xff]
  %v4736 = vld [vmem:[%s649 + $0x109] sm:$0xff]
  %v4737 = vld [vmem:[%s649 + $0x111] sm:$0xff]
  %v4738 = vld [vmem:[%s649 + $0x121] sm:$0xff]
  %v4739 = vld [vmem:[%s649 + $0x129] sm:$0xff]
  %v4740 = vld [vmem:[%s649 + $0x139] sm:$0xff]
  %v4741 = vld [vmem:[%s649 + $0x141] sm:$0xff]
  %v4742 = vld [vmem:[%s649 + $0x151] sm:$0xff]
  %v4743 = vld [vmem:[%s649 + $0x159] sm:$0xff]
  %v4744 = vld [vmem:[%s649 + $0x169] sm:$0xff]
  %v4745 = vld [vmem:[%s649 + $0x171] sm:$0xff]
  %v4746 = vld [vmem:[%s649 + $0x1b1] sm:$0xff]
  %v4747 = vld [vmem:[%s649 + $0x1b9] sm:$0xff]
  %v4748 = vld [vmem:[%s649 + $0x1c9] sm:$0xff]
  %v4749 = vld [vmem:[%s649 + $0x1d1] sm:$0xff]
  %v4750 = vld [vmem:[%s649 + $0x1e1] sm:$0xff]
  %v4751 = vld [vmem:[%s649 + $0x1e9] sm:$0xff]
  %v4752 = vld [vmem:[%s649 + $0x1f9] sm:$0xff]
  %v4753 = vld [vmem:[%s649 + $0x201] sm:$0xff]
  %v4754 = vld [vmem:[%s649 + $0x211] sm:$0xff]
  %v4755 = vld [vmem:[%s649 + $0x219] sm:$0xff]
  %v4756 = vld [vmem:[%s649 + $0x229] sm:$0xff]
  %v4757 = vld [vmem:[%s649 + $0x231] sm:$0xff]
  %v4758 = vld [vmem:[%s649 + $0x241] sm:$0xff]
  %v4759 = vld [vmem:[%s649 + $0x249] sm:$0xff]
  %v4760 = vld [vmem:[%s649 + $0x259] sm:$0xff]
  %v4761 = vld [vmem:[%s649 + $0x261] sm:$0xff]
  %v4762 = vld [vmem:[%s649 + $0x271] sm:$0xff]
  %v4763 = vld [vmem:[%s649 + $0x279] sm:$0xff]
  %v4764 = vld [vmem:[%s649 + $0x289] sm:$0xff]
  %v4765 = vld [vmem:[%s649 + $0x291] sm:$0xff]
  %v4766 = vld [vmem:[%s649 + $0x2a1] sm:$0xff]
  %v4767 = vld [vmem:[%s649 + $0x2a9] sm:$0xff]
  %v4768 = vld [vmem:[%s649 + $0x2b9] sm:$0xff]
  %v4769 = vld [vmem:[%s649 + $0x2c1] sm:$0xff]
  %v4770 = vld [vmem:[%s649 + $0x2d1] sm:$0xff]
  %v4771 = vld [vmem:[%s649 + $0x2d9] sm:$0xff]
  %v4772 = vld [vmem:[%s649 + $0x2e9] sm:$0xff]
  %v4773 = vld [vmem:[%s649 + $0x2f1] sm:$0xff]
  %v4774 = vld [vmem:[%s649 + $0x301] sm:$0xff]
  %v4775 = vld [vmem:[%s649 + $0x309] sm:$0xff]
  %v4776 = vld [vmem:[%s649 + $0x319] sm:$0xff]
  %v4777 = vld [vmem:[%s649 + $0x321] sm:$0xff]
  %v4778 = vld [vmem:[%s649 + $0x2] sm:$0xff]
  %v4779 = vld [vmem:[%s649 + $0xa] sm:$0xff]
  %v4780 = vld [vmem:[%s649 + $0x1a] sm:$0xff]
  %v4781 = vld [vmem:[%s649 + $0x22] sm:$0xff]
  %v4782 = vld [vmem:[%s649 + $0x32] sm:$0xff]
  %v4783 = vld [vmem:[%s649 + $0x3a] sm:$0xff]
  %v4784 = vld [vmem:[%s649 + $0x4a] sm:$0xff]
  %v4785 = vld [vmem:[%s649 + $0x52] sm:$0xff]
  %v4786 = vld [vmem:[%s649 + $0x62] sm:$0xff]
  %v4787 = vld [vmem:[%s649 + $0x6a] sm:$0xff]
  %v4788 = vld [vmem:[%s649 + $0x7a] sm:$0xff]
  %v4789 = vld [vmem:[%s649 + $0x82] sm:$0xff]
  %v4790 = vld [vmem:[%s649 + $0x92] sm:$0xff]
  %v4791 = vld [vmem:[%s649 + $0x9a] sm:$0xff]
  %v4792 = vld [vmem:[%s649 + $0xaa] sm:$0xff]
  %v4793 = vld [vmem:[%s649 + $0xb2] sm:$0xff]
  %v4794 = vld [vmem:[%s649 + $0xc2] sm:$0xff]
  %v4795 = vld [vmem:[%s649 + $0xca] sm:$0xff]
  %v4796 = vld [vmem:[%s649 + $0xda] sm:$0xff]
  %v4797 = vld [vmem:[%s649 + $0xe2] sm:$0xff]
  %v4798 = vld [vmem:[%s649 + $0xf2] sm:$0xff]
  %v4799 = vld [vmem:[%s649 + $0xfa] sm:$0xff]
  %v4800 = vld [vmem:[%s649 + $0x10a] sm:$0xff]
  %v4801 = vld [vmem:[%s649 + $0x112] sm:$0xff]
  %v4802 = vld [vmem:[%s649 + $0x122] sm:$0xff]
  %v4803 = vld [vmem:[%s649 + $0x12a] sm:$0xff]
  %v4804 = vld [vmem:[%s649 + $0x13a] sm:$0xff]
  %v4805 = vld [vmem:[%s649 + $0x142] sm:$0xff]
  %v4806 = vld [vmem:[%s649 + $0x152] sm:$0xff]
  %v4807 = vld [vmem:[%s649 + $0x15a] sm:$0xff]
  %v4808 = vld [vmem:[%s649 + $0x16a] sm:$0xff]
  %v4809 = vld [vmem:[%s649 + $0x172] sm:$0xff]
  %v4810 = vld [vmem:[%s649 + $0x1b2] sm:$0xff]
  %v4811 = vld [vmem:[%s649 + $0x1ba] sm:$0xff]
  %v4812 = vld [vmem:[%s649 + $0x1ca] sm:$0xff]
  %v4813 = vld [vmem:[%s649 + $0x1d2] sm:$0xff]
  %v4814 = vld [vmem:[%s649 + $0x1e2] sm:$0xff]
  %v4815 = vld [vmem:[%s649 + $0x1ea] sm:$0xff]
  %v4816 = vld [vmem:[%s649 + $0x1fa] sm:$0xff]
  %v4817 = vld [vmem:[%s649 + $0x202] sm:$0xff]
  %v4818 = vld [vmem:[%s649 + $0x212] sm:$0xff]
  %v4819 = vld [vmem:[%s649 + $0x21a] sm:$0xff]
  %v4820 = vld [vmem:[%s649 + $0x22a] sm:$0xff]
  %v4821 = vld [vmem:[%s649 + $0x232] sm:$0xff]
  %v4822 = vld [vmem:[%s649 + $0x242] sm:$0xff]
  %v4823 = vld [vmem:[%s649 + $0x24a] sm:$0xff]
  %v4824 = vld [vmem:[%s649 + $0x25a] sm:$0xff]
  %v4825 = vld [vmem:[%s649 + $0x262] sm:$0xff]
  %v4826 = vld [vmem:[%s649 + $0x272] sm:$0xff]
  %v4827 = vld [vmem:[%s649 + $0x27a] sm:$0xff]
  %v4828 = vld [vmem:[%s649 + $0x28a] sm:$0xff]
  %v4829 = vld [vmem:[%s649 + $0x292] sm:$0xff]
  %v4830 = vld [vmem:[%s649 + $0x2a2] sm:$0xff]
  %v4831 = vld [vmem:[%s649 + $0x2aa] sm:$0xff]
  %v4832 = vld [vmem:[%s649 + $0x2ba] sm:$0xff]
  %v4833 = vld [vmem:[%s649 + $0x2c2] sm:$0xff]
  %v4834 = vld [vmem:[%s649 + $0x2d2] sm:$0xff]
  %v4835 = vld [vmem:[%s649 + $0x2da] sm:$0xff]
  %v4836 = vld [vmem:[%s649 + $0x2ea] sm:$0xff]
  %v4837 = vld [vmem:[%s649 + $0x2f2] sm:$0xff]
  %v4838 = vld [vmem:[%s649 + $0x302] sm:$0xff]
  %v4839 = vld [vmem:[%s649 + $0x30a] sm:$0xff]
  %v4840 = vld [vmem:[%s649 + $0x31a] sm:$0xff]
  %v4841 = vld [vmem:[%s649 + $0x322] sm:$0xff]
  %4906 = vrot.lane.b32.xlu0 %v4330, 4
  %v4907 = vpop.permute.xlu0 %4906
  %4908 = vrot.lane.b32.xlu0 %v4331, 4
  %v4909 = vpop.permute.xlu0 %4908
  %4910 = vrot.lane.b32.xlu0 %v4332, 4
  %v4911 = vpop.permute.xlu0 %4910
  %4912 = vrot.lane.b32.xlu0 %v4333, 4
  %v4913 = vpop.permute.xlu0 %4912
  %4914 = vrot.lane.b32.xlu0 %v4334, 4
  %v4915 = vpop.permute.xlu0 %4914
  %4916 = vrot.lane.b32.xlu0 %v4335, 4
  %v4917 = vpop.permute.xlu0 %4916
  %4918 = vrot.lane.b32.xlu0 %v4336, 4
  %v4919 = vpop.permute.xlu0 %4918
  %4920 = vrot.lane.b32.xlu0 %v4337, 4
  %v4921 = vpop.permute.xlu0 %4920
  %4922 = vrot.lane.b32.xlu0 %v4338, 4
  %v4923 = vpop.permute.xlu0 %4922
  %4924 = vrot.lane.b32.xlu0 %v4339, 4
  %v4925 = vpop.permute.xlu0 %4924
  %4926 = vrot.lane.b32.xlu0 %v4340, 4
  %v4927 = vpop.permute.xlu0 %4926
  %4928 = vrot.lane.b32.xlu0 %v4341, 4
  %v4929 = vpop.permute.xlu0 %4928
  %4930 = vrot.lane.b32.xlu0 %v4342, 4
  %v4931 = vpop.permute.xlu0 %4930
  %4932 = vrot.lane.b32.xlu0 %v4343, 4
  %v4933 = vpop.permute.xlu0 %4932
  %4934 = vrot.lane.b32.xlu0 %v4344, 4
  %v4935 = vpop.permute.xlu0 %4934
  %4936 = vrot.lane.b32.xlu0 %v4345, 4
  %v4937 = vpop.permute.xlu0 %4936
  %4938 = vrot.lane.b32.xlu0 %v4346, 4
  %v4939 = vpop.permute.xlu0 %4938
  %4940 = vrot.lane.b32.xlu0 %v4347, 4
  %v4941 = vpop.permute.xlu0 %4940
  %4942 = vrot.lane.b32.xlu0 %v4348, 4
  %v4943 = vpop.permute.xlu0 %4942
  %4944 = vrot.lane.b32.xlu0 %v4349, 4
  %v4945 = vpop.permute.xlu0 %4944
  %4946 = vrot.lane.b32.xlu0 %v4350, 4
  %v4947 = vpop.permute.xlu0 %4946
  %4948 = vrot.lane.b32.xlu0 %v4351, 4
  %v4949 = vpop.permute.xlu0 %4948
  %4950 = vrot.lane.b32.xlu0 %v4352, 4
  %v4951 = vpop.permute.xlu0 %4950
  %4952 = vrot.lane.b32.xlu0 %v4353, 4
  %v4953 = vpop.permute.xlu0 %4952
  %4954 = vrot.lane.b32.xlu0 %v4354, 4
  %v4955 = vpop.permute.xlu0 %4954
  %4956 = vrot.lane.b32.xlu0 %v4355, 4
  %v4957 = vpop.permute.xlu0 %4956
  %4958 = vrot.lane.b32.xlu0 %v4356, 4
  %v4959 = vpop.permute.xlu0 %4958
  %4960 = vrot.lane.b32.xlu0 %v4357, 4
  %v4961 = vpop.permute.xlu0 %4960
  %4962 = vrot.lane.b32.xlu0 %v4358, 4
  %v4963 = vpop.permute.xlu0 %4962
  %4964 = vrot.lane.b32.xlu0 %v4359, 4
  %v4965 = vpop.permute.xlu0 %4964
  %4966 = vrot.lane.b32.xlu0 %v4360, 4
  %v4967 = vpop.permute.xlu0 %4966
  %4968 = vrot.lane.b32.xlu0 %v4361, 4
  %v4969 = vpop.permute.xlu0 %4968
  %4970 = vrot.lane.b32.xlu0 %v4362, 4
  %v4971 = vpop.permute.xlu0 %4970
  %4972 = vrot.lane.b32.xlu0 %v4363, 4
  %v4973 = vpop.permute.xlu0 %4972
  %4974 = vrot.lane.b32.xlu0 %v4364, 4
  %v4975 = vpop.permute.xlu0 %4974
  %4976 = vrot.lane.b32.xlu0 %v4365, 4
  %v4977 = vpop.permute.xlu0 %4976
  %4978 = vrot.lane.b32.xlu0 %v4366, 4
  %v4979 = vpop.permute.xlu0 %4978
  %4980 = vrot.lane.b32.xlu0 %v4367, 4
  %v4981 = vpop.permute.xlu0 %4980
  %4982 = vrot.lane.b32.xlu0 %v4368, 4
  %v4983 = vpop.permute.xlu0 %4982
  %4984 = vrot.lane.b32.xlu0 %v4369, 4
  %v4985 = vpop.permute.xlu0 %4984
  %4986 = vrot.lane.b32.xlu0 %v4370, 4
  %v4987 = vpop.permute.xlu0 %4986
  %4988 = vrot.lane.b32.xlu0 %v4371, 4
  %v4989 = vpop.permute.xlu0 %4988
  %4990 = vrot.lane.b32.xlu0 %v4372, 4
  %v4991 = vpop.permute.xlu0 %4990
  %4992 = vrot.lane.b32.xlu0 %v4373, 4
  %v4993 = vpop.permute.xlu0 %4992
  %4994 = vrot.lane.b32.xlu0 %v4374, 4
  %v4995 = vpop.permute.xlu0 %4994
  %4996 = vrot.lane.b32.xlu0 %v4375, 4
  %v4997 = vpop.permute.xlu0 %4996
  %4998 = vrot.lane.b32.xlu0 %v4376, 4
  %v4999 = vpop.permute.xlu0 %4998
  %5000 = vrot.lane.b32.xlu0 %v4377, 4
  %v5001 = vpop.permute.xlu0 %5000
  %5002 = vrot.lane.b32.xlu0 %v4378, 4
  %v5003 = vpop.permute.xlu0 %5002
  %5004 = vrot.lane.b32.xlu0 %v4379, 4
  %v5005 = vpop.permute.xlu0 %5004
  %5006 = vrot.lane.b32.xlu0 %v4380, 4
  %v5007 = vpop.permute.xlu0 %5006
  %5008 = vrot.lane.b32.xlu0 %v4381, 4
  %v5009 = vpop.permute.xlu0 %5008
  %5010 = vrot.lane.b32.xlu0 %v4382, 4
  %v5011 = vpop.permute.xlu0 %5010
  %5012 = vrot.lane.b32.xlu0 %v4383, 4
  %v5013 = vpop.permute.xlu0 %5012
  %5014 = vrot.lane.b32.xlu0 %v4384, 4
  %v5015 = vpop.permute.xlu0 %5014
  %5016 = vrot.lane.b32.xlu0 %v4385, 4
  %v5017 = vpop.permute.xlu0 %5016
  %5018 = vrot.lane.b32.xlu0 %v4386, 4
  %v5019 = vpop.permute.xlu0 %5018
  %5020 = vrot.lane.b32.xlu0 %v4387, 4
  %v5021 = vpop.permute.xlu0 %5020
  %5022 = vrot.lane.b32.xlu0 %v4388, 4
  %v5023 = vpop.permute.xlu0 %5022
  %5024 = vrot.lane.b32.xlu0 %v4389, 4
  %v5025 = vpop.permute.xlu0 %5024
  %5026 = vrot.lane.b32.xlu0 %v4390, 4
  %v5027 = vpop.permute.xlu0 %5026
  %5028 = vrot.lane.b32.xlu0 %v4391, 4
  %v5029 = vpop.permute.xlu0 %5028
  %5030 = vrot.lane.b32.xlu0 %v4392, 4
  %v5031 = vpop.permute.xlu0 %5030
  %5032 = vrot.lane.b32.xlu0 %v4393, 4
  %v5033 = vpop.permute.xlu0 %5032
  %5162 = vrot.lane.b32.xlu0 %v4394, 8
  %v5163 = vpop.permute.xlu0 %5162
  %5164 = vrot.lane.b32.xlu0 %v4395, 8
  %v5165 = vpop.permute.xlu0 %5164
  %5166 = vrot.lane.b32.xlu0 %v4396, 8
  %v5167 = vpop.permute.xlu0 %5166
  %5168 = vrot.lane.b32.xlu0 %v4397, 8
  %v5169 = vpop.permute.xlu0 %5168
  %5170 = vrot.lane.b32.xlu0 %v4398, 8
  %v5171 = vpop.permute.xlu0 %5170
  %5172 = vrot.lane.b32.xlu0 %v4399, 8
  %v5173 = vpop.permute.xlu0 %5172
  %5174 = vrot.lane.b32.xlu0 %v4400, 8
  %v5175 = vpop.permute.xlu0 %5174
  %5176 = vrot.lane.b32.xlu0 %v4401, 8
  %v5177 = vpop.permute.xlu0 %5176
  %5178 = vrot.lane.b32.xlu0 %v4402, 8
  %v5179 = vpop.permute.xlu0 %5178
  %5180 = vrot.lane.b32.xlu0 %v4403, 8
  %v5181 = vpop.permute.xlu0 %5180
  %5182 = vrot.lane.b32.xlu0 %v4404, 8
  %v5183 = vpop.permute.xlu0 %5182
  %5184 = vrot.lane.b32.xlu0 %v4405, 8
  %v5185 = vpop.permute.xlu0 %5184
  %5186 = vrot.lane.b32.xlu0 %v4406, 8
  %v5187 = vpop.permute.xlu0 %5186
  %5188 = vrot.lane.b32.xlu0 %v4407, 8
  %v5189 = vpop.permute.xlu0 %5188
  %5190 = vrot.lane.b32.xlu0 %v4408, 8
  %v5191 = vpop.permute.xlu0 %5190
  %5192 = vrot.lane.b32.xlu0 %v4409, 8
  %v5193 = vpop.permute.xlu0 %5192
  %5194 = vrot.lane.b32.xlu0 %v4410, 8
  %v5195 = vpop.permute.xlu0 %5194
  %5196 = vrot.lane.b32.xlu0 %v4411, 8
  %v5197 = vpop.permute.xlu0 %5196
  %5198 = vrot.lane.b32.xlu0 %v4412, 8
  %v5199 = vpop.permute.xlu0 %5198
  %5200 = vrot.lane.b32.xlu0 %v4413, 8
  %v5201 = vpop.permute.xlu0 %5200
  %5202 = vrot.lane.b32.xlu0 %v4414, 8
  %v5203 = vpop.permute.xlu0 %5202
  %5204 = vrot.lane.b32.xlu0 %v4415, 8
  %v5205 = vpop.permute.xlu0 %5204
  %5206 = vrot.lane.b32.xlu0 %v4416, 8
  %v5207 = vpop.permute.xlu0 %5206
  %5208 = vrot.lane.b32.xlu0 %v4417, 8
  %v5209 = vpop.permute.xlu0 %5208
  %5210 = vrot.lane.b32.xlu0 %v4418, 8
  %v5211 = vpop.permute.xlu0 %5210
  %5212 = vrot.lane.b32.xlu0 %v4419, 8
  %v5213 = vpop.permute.xlu0 %5212
  %5214 = vrot.lane.b32.xlu0 %v4420, 8
  %v5215 = vpop.permute.xlu0 %5214
  %5216 = vrot.lane.b32.xlu0 %v4421, 8
  %v5217 = vpop.permute.xlu0 %5216
  %5218 = vrot.lane.b32.xlu0 %v4422, 8
  %v5219 = vpop.permute.xlu0 %5218
  %5220 = vrot.lane.b32.xlu0 %v4423, 8
  %v5221 = vpop.permute.xlu0 %5220
  %5222 = vrot.lane.b32.xlu0 %v4424, 8
  %v5223 = vpop.permute.xlu0 %5222
  %5224 = vrot.lane.b32.xlu0 %v4425, 8
  %v5225 = vpop.permute.xlu0 %5224
  %5226 = vrot.lane.b32.xlu0 %v4426, 8
  %v5227 = vpop.permute.xlu0 %5226
  %5228 = vrot.lane.b32.xlu0 %v4427, 8
  %v5229 = vpop.permute.xlu0 %5228
  %5230 = vrot.lane.b32.xlu0 %v4428, 8
  %v5231 = vpop.permute.xlu0 %5230
  %5232 = vrot.lane.b32.xlu0 %v4429, 8
  %v5233 = vpop.permute.xlu0 %5232
  %5234 = vrot.lane.b32.xlu0 %v4430, 8
  %v5235 = vpop.permute.xlu0 %5234
  %5236 = vrot.lane.b32.xlu0 %v4431, 8
  %v5237 = vpop.permute.xlu0 %5236
  %5238 = vrot.lane.b32.xlu0 %v4432, 8
  %v5239 = vpop.permute.xlu0 %5238
  %5240 = vrot.lane.b32.xlu0 %v4433, 8
  %v5241 = vpop.permute.xlu0 %5240
  %5242 = vrot.lane.b32.xlu0 %v4434, 8
  %v5243 = vpop.permute.xlu0 %5242
  %5244 = vrot.lane.b32.xlu0 %v4435, 8
  %v5245 = vpop.permute.xlu0 %5244
  %5246 = vrot.lane.b32.xlu0 %v4436, 8
  %v5247 = vpop.permute.xlu0 %5246
  %5248 = vrot.lane.b32.xlu0 %v4437, 8
  %v5249 = vpop.permute.xlu0 %5248
  %5250 = vrot.lane.b32.xlu0 %v4438, 8
  %v5251 = vpop.permute.xlu0 %5250
  %5252 = vrot.lane.b32.xlu0 %v4439, 8
  %v5253 = vpop.permute.xlu0 %5252
  %5254 = vrot.lane.b32.xlu0 %v4440, 8
  %v5255 = vpop.permute.xlu0 %5254
  %5256 = vrot.lane.b32.xlu0 %v4441, 8
  %v5257 = vpop.permute.xlu0 %5256
  %5258 = vrot.lane.b32.xlu0 %v4442, 8
  %v5259 = vpop.permute.xlu0 %5258
  %5260 = vrot.lane.b32.xlu0 %v4443, 8
  %v5261 = vpop.permute.xlu0 %5260
  %5262 = vrot.lane.b32.xlu0 %v4444, 8
  %v5263 = vpop.permute.xlu0 %5262
  %5264 = vrot.lane.b32.xlu0 %v4445, 8
  %v5265 = vpop.permute.xlu0 %5264
  %5266 = vrot.lane.b32.xlu0 %v4446, 8
  %v5267 = vpop.permute.xlu0 %5266
  %5268 = vrot.lane.b32.xlu0 %v4447, 8
  %v5269 = vpop.permute.xlu0 %5268
  %5270 = vrot.lane.b32.xlu0 %v4448, 8
  %v5271 = vpop.permute.xlu0 %5270
  %5272 = vrot.lane.b32.xlu0 %v4449, 8
  %v5273 = vpop.permute.xlu0 %5272
  %5274 = vrot.lane.b32.xlu0 %v4450, 8
  %v5275 = vpop.permute.xlu0 %5274
  %5276 = vrot.lane.b32.xlu0 %v4451, 8
  %v5277 = vpop.permute.xlu0 %5276
  %5278 = vrot.lane.b32.xlu0 %v4452, 8
  %v5279 = vpop.permute.xlu0 %5278
  %5280 = vrot.lane.b32.xlu0 %v4453, 8
  %v5281 = vpop.permute.xlu0 %5280
  %5282 = vrot.lane.b32.xlu0 %v4454, 8
  %v5283 = vpop.permute.xlu0 %5282
  %5284 = vrot.lane.b32.xlu0 %v4455, 8
  %v5285 = vpop.permute.xlu0 %5284
  %5286 = vrot.lane.b32.xlu0 %v4456, 8
  %v5287 = vpop.permute.xlu0 %5286
  %5288 = vrot.lane.b32.xlu0 %v4457, 8
  %v5289 = vpop.permute.xlu0 %5288
  %5418 = vrot.lane.b32.xlu0 %v4458, 12
  %v5419 = vpop.permute.xlu0 %5418
  %5420 = vrot.lane.b32.xlu0 %v4459, 12
  %v5421 = vpop.permute.xlu0 %5420
  %5422 = vrot.lane.b32.xlu0 %v4460, 12
  %v5423 = vpop.permute.xlu0 %5422
  %5424 = vrot.lane.b32.xlu0 %v4461, 12
  %v5425 = vpop.permute.xlu0 %5424
  %5426 = vrot.lane.b32.xlu0 %v4462, 12
  %v5427 = vpop.permute.xlu0 %5426
  %5428 = vrot.lane.b32.xlu0 %v4463, 12
  %v5429 = vpop.permute.xlu0 %5428
  %5430 = vrot.lane.b32.xlu0 %v4464, 12
  %v5431 = vpop.permute.xlu0 %5430
  %5432 = vrot.lane.b32.xlu0 %v4465, 12
  %v5433 = vpop.permute.xlu0 %5432
  %5434 = vrot.lane.b32.xlu0 %v4466, 12
  %v5435 = vpop.permute.xlu0 %5434
  %5436 = vrot.lane.b32.xlu0 %v4467, 12
  %v5437 = vpop.permute.xlu0 %5436
  %5438 = vrot.lane.b32.xlu0 %v4468, 12
  %v5439 = vpop.permute.xlu0 %5438
  %5440 = vrot.lane.b32.xlu0 %v4469, 12
  %v5441 = vpop.permute.xlu0 %5440
  %5442 = vrot.lane.b32.xlu0 %v4470, 12
  %v5443 = vpop.permute.xlu0 %5442
  %5444 = vrot.lane.b32.xlu0 %v4471, 12
  %v5445 = vpop.permute.xlu0 %5444
  %5446 = vrot.lane.b32.xlu0 %v4472, 12
  %v5447 = vpop.permute.xlu0 %5446
  %5448 = vrot.lane.b32.xlu0 %v4473, 12
  %v5449 = vpop.permute.xlu0 %5448
  %5450 = vrot.lane.b32.xlu0 %v4474, 12
  %v5451 = vpop.permute.xlu0 %5450
  %5452 = vrot.lane.b32.xlu0 %v4475, 12
  %v5453 = vpop.permute.xlu0 %5452
  %5454 = vrot.lane.b32.xlu0 %v4476, 12
  %v5455 = vpop.permute.xlu0 %5454
  %5456 = vrot.lane.b32.xlu0 %v4477, 12
  %v5457 = vpop.permute.xlu0 %5456
  %5458 = vrot.lane.b32.xlu0 %v4478, 12
  %v5459 = vpop.permute.xlu0 %5458
  %5460 = vrot.lane.b32.xlu0 %v4479, 12
  %v5461 = vpop.permute.xlu0 %5460
  %5462 = vrot.lane.b32.xlu0 %v4480, 12
  %v5463 = vpop.permute.xlu0 %5462
  %5464 = vrot.lane.b32.xlu0 %v4481, 12
  %v5465 = vpop.permute.xlu0 %5464
  %5466 = vrot.lane.b32.xlu0 %v4482, 12
  %v5467 = vpop.permute.xlu0 %5466
  %5468 = vrot.lane.b32.xlu0 %v4483, 12
  %v5469 = vpop.permute.xlu0 %5468
  %5470 = vrot.lane.b32.xlu0 %v4484, 12
  %v5471 = vpop.permute.xlu0 %5470
  %5472 = vrot.lane.b32.xlu0 %v4485, 12
  %v5473 = vpop.permute.xlu0 %5472
  %5474 = vrot.lane.b32.xlu0 %v4486, 12
  %v5475 = vpop.permute.xlu0 %5474
  %5476 = vrot.lane.b32.xlu0 %v4487, 12
  %v5477 = vpop.permute.xlu0 %5476
  %5478 = vrot.lane.b32.xlu0 %v4488, 12
  %v5479 = vpop.permute.xlu0 %5478
  %5480 = vrot.lane.b32.xlu0 %v4489, 12
  %v5481 = vpop.permute.xlu0 %5480
  %5482 = vrot.lane.b32.xlu0 %v4490, 12
  %v5483 = vpop.permute.xlu0 %5482
  %5484 = vrot.lane.b32.xlu0 %v4491, 12
  %v5485 = vpop.permute.xlu0 %5484
  %5486 = vrot.lane.b32.xlu0 %v4492, 12
  %v5487 = vpop.permute.xlu0 %5486
  %5488 = vrot.lane.b32.xlu0 %v4493, 12
  %v5489 = vpop.permute.xlu0 %5488
  %5490 = vrot.lane.b32.xlu0 %v4494, 12
  %v5491 = vpop.permute.xlu0 %5490
  %5492 = vrot.lane.b32.xlu0 %v4495, 12
  %v5493 = vpop.permute.xlu0 %5492
  %5494 = vrot.lane.b32.xlu0 %v4496, 12
  %v5495 = vpop.permute.xlu0 %5494
  %5496 = vrot.lane.b32.xlu0 %v4497, 12
  %v5497 = vpop.permute.xlu0 %5496
  %5498 = vrot.lane.b32.xlu0 %v4498, 12
  %v5499 = vpop.permute.xlu0 %5498
  %5500 = vrot.lane.b32.xlu0 %v4499, 12
  %v5501 = vpop.permute.xlu0 %5500
  %5502 = vrot.lane.b32.xlu0 %v4500, 12
  %v5503 = vpop.permute.xlu0 %5502
  %5504 = vrot.lane.b32.xlu0 %v4501, 12
  %v5505 = vpop.permute.xlu0 %5504
  %5506 = vrot.lane.b32.xlu0 %v4502, 12
  %v5507 = vpop.permute.xlu0 %5506
  %5508 = vrot.lane.b32.xlu0 %v4503, 12
  %v5509 = vpop.permute.xlu0 %5508
  %5510 = vrot.lane.b32.xlu0 %v4504, 12
  %v5511 = vpop.permute.xlu0 %5510
  %5512 = vrot.lane.b32.xlu0 %v4505, 12
  %v5513 = vpop.permute.xlu0 %5512
  %5514 = vrot.lane.b32.xlu0 %v4506, 12
  %v5515 = vpop.permute.xlu0 %5514
  %5516 = vrot.lane.b32.xlu0 %v4507, 12
  %v5517 = vpop.permute.xlu0 %5516
  %5518 = vrot.lane.b32.xlu0 %v4508, 12
  %v5519 = vpop.permute.xlu0 %5518
  %5520 = vrot.lane.b32.xlu0 %v4509, 12
  %v5521 = vpop.permute.xlu0 %5520
  %5522 = vrot.lane.b32.xlu0 %v4510, 12
  %v5523 = vpop.permute.xlu0 %5522
  %5524 = vrot.lane.b32.xlu0 %v4511, 12
  %v5525 = vpop.permute.xlu0 %5524
  %5526 = vrot.lane.b32.xlu0 %v4512, 12
  %v5527 = vpop.permute.xlu0 %5526
  %5528 = vrot.lane.b32.xlu0 %v4513, 12
  %v5529 = vpop.permute.xlu0 %5528
  %5530 = vrot.lane.b32.xlu0 %v4514, 12
  %v5531 = vpop.permute.xlu0 %5530
  %5532 = vrot.lane.b32.xlu0 %v4515, 12
  %v5533 = vpop.permute.xlu0 %5532
  %5534 = vrot.lane.b32.xlu0 %v4516, 12
  %v5535 = vpop.permute.xlu0 %5534
  %5536 = vrot.lane.b32.xlu0 %v4517, 12
  %v5537 = vpop.permute.xlu0 %5536
  %5538 = vrot.lane.b32.xlu0 %v4518, 12
  %v5539 = vpop.permute.xlu0 %5538
  %5540 = vrot.lane.b32.xlu0 %v4519, 12
  %v5541 = vpop.permute.xlu0 %5540
  %5542 = vrot.lane.b32.xlu0 %v4520, 12
  %v5543 = vpop.permute.xlu0 %5542
  %5544 = vrot.lane.b32.xlu0 %v4521, 12
  %v5545 = vpop.permute.xlu0 %5544
  %5674 = vrot.lane.b32.xlu0 %v4522, 16
  %v5675 = vpop.permute.xlu0 %5674
  %5676 = vrot.lane.b32.xlu0 %v4523, 16
  %v5677 = vpop.permute.xlu0 %5676
  %5678 = vrot.lane.b32.xlu0 %v4524, 16
  %v5679 = vpop.permute.xlu0 %5678
  %5680 = vrot.lane.b32.xlu0 %v4525, 16
  %v5681 = vpop.permute.xlu0 %5680
  %5682 = vrot.lane.b32.xlu0 %v4526, 16
  %v5683 = vpop.permute.xlu0 %5682
  %5684 = vrot.lane.b32.xlu0 %v4527, 16
  %v5685 = vpop.permute.xlu0 %5684
  %5686 = vrot.lane.b32.xlu0 %v4528, 16
  %v5687 = vpop.permute.xlu0 %5686
  %5688 = vrot.lane.b32.xlu0 %v4529, 16
  %v5689 = vpop.permute.xlu0 %5688
  %5690 = vrot.lane.b32.xlu0 %v4530, 16
  %v5691 = vpop.permute.xlu0 %5690
  %5692 = vrot.lane.b32.xlu0 %v4531, 16
  %v5693 = vpop.permute.xlu0 %5692
  %5694 = vrot.lane.b32.xlu0 %v4532, 16
  %v5695 = vpop.permute.xlu0 %5694
  %5696 = vrot.lane.b32.xlu0 %v4533, 16
  %v5697 = vpop.permute.xlu0 %5696
  %5698 = vrot.lane.b32.xlu0 %v4534, 16
  %v5699 = vpop.permute.xlu0 %5698
  %5700 = vrot.lane.b32.xlu0 %v4535, 16
  %v5701 = vpop.permute.xlu0 %5700
  %5702 = vrot.lane.b32.xlu0 %v4536, 16
  %v5703 = vpop.permute.xlu0 %5702
  %5704 = vrot.lane.b32.xlu0 %v4537, 16
  %v5705 = vpop.permute.xlu0 %5704
  %5706 = vrot.lane.b32.xlu0 %v4538, 16
  %v5707 = vpop.permute.xlu0 %5706
  %5708 = vrot.lane.b32.xlu0 %v4539, 16
  %v5709 = vpop.permute.xlu0 %5708
  %5710 = vrot.lane.b32.xlu0 %v4540, 16
  %v5711 = vpop.permute.xlu0 %5710
  %5712 = vrot.lane.b32.xlu0 %v4541, 16
  %v5713 = vpop.permute.xlu0 %5712
  %5714 = vrot.lane.b32.xlu0 %v4542, 16
  %v5715 = vpop.permute.xlu0 %5714
  %5716 = vrot.lane.b32.xlu0 %v4543, 16
  %v5717 = vpop.permute.xlu0 %5716
  %5718 = vrot.lane.b32.xlu0 %v4544, 16
  %v5719 = vpop.permute.xlu0 %5718
  %5720 = vrot.lane.b32.xlu0 %v4545, 16
  %v5721 = vpop.permute.xlu0 %5720
  %5722 = vrot.lane.b32.xlu0 %v4546, 16
  %v5723 = vpop.permute.xlu0 %5722
  %5724 = vrot.lane.b32.xlu0 %v4547, 16
  %v5725 = vpop.permute.xlu0 %5724
  %5726 = vrot.lane.b32.xlu0 %v4548, 16
  %v5727 = vpop.permute.xlu0 %5726
  %5728 = vrot.lane.b32.xlu0 %v4549, 16
  %v5729 = vpop.permute.xlu0 %5728
  %5730 = vrot.lane.b32.xlu0 %v4550, 16
  %v5731 = vpop.permute.xlu0 %5730
  %5732 = vrot.lane.b32.xlu0 %v4551, 16
  %v5733 = vpop.permute.xlu0 %5732
  %5734 = vrot.lane.b32.xlu0 %v4552, 16
  %v5735 = vpop.permute.xlu0 %5734
  %5736 = vrot.lane.b32.xlu0 %v4553, 16
  %v5737 = vpop.permute.xlu0 %5736
  %5738 = vrot.lane.b32.xlu0 %v4554, 16
  %v5739 = vpop.permute.xlu0 %5738
  %5740 = vrot.lane.b32.xlu0 %v4555, 16
  %v5741 = vpop.permute.xlu0 %5740
  %5742 = vrot.lane.b32.xlu0 %v4556, 16
  %v5743 = vpop.permute.xlu0 %5742
  %5744 = vrot.lane.b32.xlu0 %v4557, 16
  %v5745 = vpop.permute.xlu0 %5744
  %5746 = vrot.lane.b32.xlu0 %v4558, 16
  %v5747 = vpop.permute.xlu0 %5746
  %5748 = vrot.lane.b32.xlu0 %v4559, 16
  %v5749 = vpop.permute.xlu0 %5748
  %5750 = vrot.lane.b32.xlu0 %v4560, 16
  %v5751 = vpop.permute.xlu0 %5750
  %5752 = vrot.lane.b32.xlu0 %v4561, 16
  %v5753 = vpop.permute.xlu0 %5752
  %5754 = vrot.lane.b32.xlu0 %v4562, 16
  %v5755 = vpop.permute.xlu0 %5754
  %5756 = vrot.lane.b32.xlu0 %v4563, 16
  %v5757 = vpop.permute.xlu0 %5756
  %5758 = vrot.lane.b32.xlu0 %v4564, 16
  %v5759 = vpop.permute.xlu0 %5758
  %5760 = vrot.lane.b32.xlu0 %v4565, 16
  %v5761 = vpop.permute.xlu0 %5760
  %5762 = vrot.lane.b32.xlu0 %v4566, 16
  %v5763 = vpop.permute.xlu0 %5762
  %5764 = vrot.lane.b32.xlu0 %v4567, 16
  %v5765 = vpop.permute.xlu0 %5764
  %5766 = vrot.lane.b32.xlu0 %v4568, 16
  %v5767 = vpop.permute.xlu0 %5766
  %5768 = vrot.lane.b32.xlu0 %v4569, 16
  %v5769 = vpop.permute.xlu0 %5768
  %5770 = vrot.lane.b32.xlu0 %v4570, 16
  %v5771 = vpop.permute.xlu0 %5770
  %5772 = vrot.lane.b32.xlu0 %v4571, 16
  %v5773 = vpop.permute.xlu0 %5772
  %5774 = vrot.lane.b32.xlu0 %v4572, 16
  %v5775 = vpop.permute.xlu0 %5774
  %5776 = vrot.lane.b32.xlu0 %v4573, 16
  %v5777 = vpop.permute.xlu0 %5776
  %5778 = vrot.lane.b32.xlu0 %v4574, 16
  %v5779 = vpop.permute.xlu0 %5778
  %5780 = vrot.lane.b32.xlu0 %v4575, 16
  %v5781 = vpop.permute.xlu0 %5780
  %5782 = vrot.lane.b32.xlu0 %v4576, 16
  %v5783 = vpop.permute.xlu0 %5782
  %5784 = vrot.lane.b32.xlu0 %v4577, 16
  %v5785 = vpop.permute.xlu0 %5784
  %5786 = vrot.lane.b32.xlu0 %v4578, 16
  %v5787 = vpop.permute.xlu0 %5786
  %5788 = vrot.lane.b32.xlu0 %v4579, 16
  %v5789 = vpop.permute.xlu0 %5788
  %5790 = vrot.lane.b32.xlu0 %v4580, 16
  %v5791 = vpop.permute.xlu0 %5790
  %5792 = vrot.lane.b32.xlu0 %v4581, 16
  %v5793 = vpop.permute.xlu0 %5792
  %5794 = vrot.lane.b32.xlu0 %v4582, 16
  %v5795 = vpop.permute.xlu0 %5794
  %5796 = vrot.lane.b32.xlu0 %v4583, 16
  %v5797 = vpop.permute.xlu0 %5796
  %5798 = vrot.lane.b32.xlu0 %v4584, 16
  %v5799 = vpop.permute.xlu0 %5798
  %5800 = vrot.lane.b32.xlu0 %v4585, 16
  %v5801 = vpop.permute.xlu0 %5800
  %5930 = vrot.lane.b32.xlu0 %v4586, 20
  %v5931 = vpop.permute.xlu0 %5930
  %5932 = vrot.lane.b32.xlu0 %v4587, 20
  %v5933 = vpop.permute.xlu0 %5932
  %5934 = vrot.lane.b32.xlu0 %v4588, 20
  %v5935 = vpop.permute.xlu0 %5934
  %5936 = vrot.lane.b32.xlu0 %v4589, 20
  %v5937 = vpop.permute.xlu0 %5936
  %5938 = vrot.lane.b32.xlu0 %v4590, 20
  %v5939 = vpop.permute.xlu0 %5938
  %5940 = vrot.lane.b32.xlu0 %v4591, 20
  %v5941 = vpop.permute.xlu0 %5940
  %5942 = vrot.lane.b32.xlu0 %v4592, 20
  %v5943 = vpop.permute.xlu0 %5942
  %5944 = vrot.lane.b32.xlu0 %v4593, 20
  %v5945 = vpop.permute.xlu0 %5944
  %5946 = vrot.lane.b32.xlu0 %v4594, 20
  %v5947 = vpop.permute.xlu0 %5946
  %5948 = vrot.lane.b32.xlu0 %v4595, 20
  %v5949 = vpop.permute.xlu0 %5948
  %5950 = vrot.lane.b32.xlu0 %v4596, 20
  %v5951 = vpop.permute.xlu0 %5950
  %5952 = vrot.lane.b32.xlu0 %v4597, 20
  %v5953 = vpop.permute.xlu0 %5952
  %5954 = vrot.lane.b32.xlu0 %v4598, 20
  %v5955 = vpop.permute.xlu0 %5954
  %5956 = vrot.lane.b32.xlu0 %v4599, 20
  %v5957 = vpop.permute.xlu0 %5956
  %5958 = vrot.lane.b32.xlu0 %v4600, 20
  %v5959 = vpop.permute.xlu0 %5958
  %5960 = vrot.lane.b32.xlu0 %v4601, 20
  %v5961 = vpop.permute.xlu0 %5960
  %5962 = vrot.lane.b32.xlu0 %v4602, 20
  %v5963 = vpop.permute.xlu0 %5962
  %5964 = vrot.lane.b32.xlu0 %v4603, 20
  %v5965 = vpop.permute.xlu0 %5964
  %5966 = vrot.lane.b32.xlu0 %v4604, 20
  %v5967 = vpop.permute.xlu0 %5966
  %5968 = vrot.lane.b32.xlu0 %v4605, 20
  %v5969 = vpop.permute.xlu0 %5968
  %5970 = vrot.lane.b32.xlu0 %v4606, 20
  %v5971 = vpop.permute.xlu0 %5970
  %5972 = vrot.lane.b32.xlu0 %v4607, 20
  %v5973 = vpop.permute.xlu0 %5972
  %5974 = vrot.lane.b32.xlu0 %v4608, 20
  %v5975 = vpop.permute.xlu0 %5974
  %5976 = vrot.lane.b32.xlu0 %v4609, 20
  %v5977 = vpop.permute.xlu0 %5976
  %5978 = vrot.lane.b32.xlu0 %v4610, 20
  %v5979 = vpop.permute.xlu0 %5978
  %5980 = vrot.lane.b32.xlu0 %v4611, 20
  %v5981 = vpop.permute.xlu0 %5980
  %5982 = vrot.lane.b32.xlu0 %v4612, 20
  %v5983 = vpop.permute.xlu0 %5982
  %5984 = vrot.lane.b32.xlu0 %v4613, 20
  %v5985 = vpop.permute.xlu0 %5984
  %5986 = vrot.lane.b32.xlu0 %v4614, 20
  %v5987 = vpop.permute.xlu0 %5986
  %5988 = vrot.lane.b32.xlu0 %v4615, 20
  %v5989 = vpop.permute.xlu0 %5988
  %5990 = vrot.lane.b32.xlu0 %v4616, 20
  %v5991 = vpop.permute.xlu0 %5990
  %5992 = vrot.lane.b32.xlu0 %v4617, 20
  %v5993 = vpop.permute.xlu0 %5992
  %5994 = vrot.lane.b32.xlu0 %v4618, 20
  %v5995 = vpop.permute.xlu0 %5994
  %5996 = vrot.lane.b32.xlu0 %v4619, 20
  %v5997 = vpop.permute.xlu0 %5996
  %5998 = vrot.lane.b32.xlu0 %v4620, 20
  %v5999 = vpop.permute.xlu0 %5998
  %6000 = vrot.lane.b32.xlu0 %v4621, 20
  %v6001 = vpop.permute.xlu0 %6000
  %6002 = vrot.lane.b32.xlu0 %v4622, 20
  %v6003 = vpop.permute.xlu0 %6002
  %6004 = vrot.lane.b32.xlu0 %v4623, 20
  %v6005 = vpop.permute.xlu0 %6004
  %6006 = vrot.lane.b32.xlu0 %v4624, 20
  %v6007 = vpop.permute.xlu0 %6006
  %6008 = vrot.lane.b32.xlu0 %v4625, 20
  %v6009 = vpop.permute.xlu0 %6008
  %6010 = vrot.lane.b32.xlu0 %v4626, 20
  %v6011 = vpop.permute.xlu0 %6010
  %6012 = vrot.lane.b32.xlu0 %v4627, 20
  %v6013 = vpop.permute.xlu0 %6012
  %6014 = vrot.lane.b32.xlu0 %v4628, 20
  %v6015 = vpop.permute.xlu0 %6014
  %6016 = vrot.lane.b32.xlu0 %v4629, 20
  %v6017 = vpop.permute.xlu0 %6016
  %6018 = vrot.lane.b32.xlu0 %v4630, 20
  %v6019 = vpop.permute.xlu0 %6018
  %6020 = vrot.lane.b32.xlu0 %v4631, 20
  %v6021 = vpop.permute.xlu0 %6020
  %6022 = vrot.lane.b32.xlu0 %v4632, 20
  %v6023 = vpop.permute.xlu0 %6022
  %6024 = vrot.lane.b32.xlu0 %v4633, 20
  %v6025 = vpop.permute.xlu0 %6024
  %6026 = vrot.lane.b32.xlu0 %v4634, 20
  %v6027 = vpop.permute.xlu0 %6026
  %6028 = vrot.lane.b32.xlu0 %v4635, 20
  %v6029 = vpop.permute.xlu0 %6028
  %6030 = vrot.lane.b32.xlu0 %v4636, 20
  %v6031 = vpop.permute.xlu0 %6030
  %6032 = vrot.lane.b32.xlu0 %v4637, 20
  %v6033 = vpop.permute.xlu0 %6032
  %6034 = vrot.lane.b32.xlu0 %v4638, 20
  %v6035 = vpop.permute.xlu0 %6034
  %6036 = vrot.lane.b32.xlu0 %v4639, 20
  %v6037 = vpop.permute.xlu0 %6036
  %6038 = vrot.lane.b32.xlu0 %v4640, 20
  %v6039 = vpop.permute.xlu0 %6038
  %6040 = vrot.lane.b32.xlu0 %v4641, 20
  %v6041 = vpop.permute.xlu0 %6040
  %6042 = vrot.lane.b32.xlu0 %v4642, 20
  %v6043 = vpop.permute.xlu0 %6042
  %6044 = vrot.lane.b32.xlu0 %v4643, 20
  %v6045 = vpop.permute.xlu0 %6044
  %6046 = vrot.lane.b32.xlu0 %v4644, 20
  %v6047 = vpop.permute.xlu0 %6046
  %6048 = vrot.lane.b32.xlu0 %v4645, 20
  %v6049 = vpop.permute.xlu0 %6048
  %6050 = vrot.lane.b32.xlu0 %v4646, 20
  %v6051 = vpop.permute.xlu0 %6050
  %6052 = vrot.lane.b32.xlu0 %v4647, 20
  %v6053 = vpop.permute.xlu0 %6052
  %6054 = vrot.lane.b32.xlu0 %v4648, 20
  %v6055 = vpop.permute.xlu0 %6054
  %6056 = vrot.lane.b32.xlu0 %v4649, 20
  %v6057 = vpop.permute.xlu0 %6056
  %6186 = vrot.lane.b32.xlu0 %v4650, 24
  %v6187 = vpop.permute.xlu0 %6186
  %6188 = vrot.lane.b32.xlu0 %v4651, 24
  %v6189 = vpop.permute.xlu0 %6188
  %6190 = vrot.lane.b32.xlu0 %v4652, 24
  %v6191 = vpop.permute.xlu0 %6190
  %6192 = vrot.lane.b32.xlu0 %v4653, 24
  %v6193 = vpop.permute.xlu0 %6192
  %6194 = vrot.lane.b32.xlu0 %v4654, 24
  %v6195 = vpop.permute.xlu0 %6194
  %6196 = vrot.lane.b32.xlu0 %v4655, 24
  %v6197 = vpop.permute.xlu0 %6196
  %6198 = vrot.lane.b32.xlu0 %v4656, 24
  %v6199 = vpop.permute.xlu0 %6198
  %6200 = vrot.lane.b32.xlu0 %v4657, 24
  %v6201 = vpop.permute.xlu0 %6200
  %6202 = vrot.lane.b32.xlu0 %v4658, 24
  %v6203 = vpop.permute.xlu0 %6202
  %6204 = vrot.lane.b32.xlu0 %v4659, 24
  %v6205 = vpop.permute.xlu0 %6204
  %6206 = vrot.lane.b32.xlu0 %v4660, 24
  %v6207 = vpop.permute.xlu0 %6206
  %6208 = vrot.lane.b32.xlu0 %v4661, 24
  %v6209 = vpop.permute.xlu0 %6208
  %6210 = vrot.lane.b32.xlu0 %v4662, 24
  %v6211 = vpop.permute.xlu0 %6210
  %6212 = vrot.lane.b32.xlu0 %v4663, 24
  %v6213 = vpop.permute.xlu0 %6212
  %6214 = vrot.lane.b32.xlu0 %v4664, 24
  %v6215 = vpop.permute.xlu0 %6214
  %6216 = vrot.lane.b32.xlu0 %v4665, 24
  %v6217 = vpop.permute.xlu0 %6216
  %6218 = vrot.lane.b32.xlu0 %v4666, 24
  %v6219 = vpop.permute.xlu0 %6218
  %6220 = vrot.lane.b32.xlu0 %v4667, 24
  %v6221 = vpop.permute.xlu0 %6220
  %6222 = vrot.lane.b32.xlu0 %v4668, 24
  %v6223 = vpop.permute.xlu0 %6222
  %6224 = vrot.lane.b32.xlu0 %v4669, 24
  %v6225 = vpop.permute.xlu0 %6224
  %6226 = vrot.lane.b32.xlu0 %v4670, 24
  %v6227 = vpop.permute.xlu0 %6226
  %6228 = vrot.lane.b32.xlu0 %v4671, 24
  %v6229 = vpop.permute.xlu0 %6228
  %6230 = vrot.lane.b32.xlu0 %v4672, 24
  %v6231 = vpop.permute.xlu0 %6230
  %6232 = vrot.lane.b32.xlu0 %v4673, 24
  %v6233 = vpop.permute.xlu0 %6232
  %6234 = vrot.lane.b32.xlu0 %v4674, 24
  %v6235 = vpop.permute.xlu0 %6234
  %6236 = vrot.lane.b32.xlu0 %v4675, 24
  %v6237 = vpop.permute.xlu0 %6236
  %6238 = vrot.lane.b32.xlu0 %v4676, 24
  %v6239 = vpop.permute.xlu0 %6238
  %6240 = vrot.lane.b32.xlu0 %v4677, 24
  %v6241 = vpop.permute.xlu0 %6240
  %6242 = vrot.lane.b32.xlu0 %v4678, 24
  %v6243 = vpop.permute.xlu0 %6242
  %6244 = vrot.lane.b32.xlu0 %v4679, 24
  %v6245 = vpop.permute.xlu0 %6244
  %6246 = vrot.lane.b32.xlu0 %v4680, 24
  %v6247 = vpop.permute.xlu0 %6246
  %6248 = vrot.lane.b32.xlu0 %v4681, 24
  %v6249 = vpop.permute.xlu0 %6248
  %6250 = vrot.lane.b32.xlu0 %v4682, 24
  %v6251 = vpop.permute.xlu0 %6250
  %6252 = vrot.lane.b32.xlu0 %v4683, 24
  %v6253 = vpop.permute.xlu0 %6252
  %6254 = vrot.lane.b32.xlu0 %v4684, 24
  %v6255 = vpop.permute.xlu0 %6254
  %6256 = vrot.lane.b32.xlu0 %v4685, 24
  %v6257 = vpop.permute.xlu0 %6256
  %6258 = vrot.lane.b32.xlu0 %v4686, 24
  %v6259 = vpop.permute.xlu0 %6258
  %6260 = vrot.lane.b32.xlu0 %v4687, 24
  %v6261 = vpop.permute.xlu0 %6260
  %6262 = vrot.lane.b32.xlu0 %v4688, 24
  %v6263 = vpop.permute.xlu0 %6262
  %6264 = vrot.lane.b32.xlu0 %v4689, 24
  %v6265 = vpop.permute.xlu0 %6264
  %6266 = vrot.lane.b32.xlu0 %v4690, 24
  %v6267 = vpop.permute.xlu0 %6266
  %6268 = vrot.lane.b32.xlu0 %v4691, 24
  %v6269 = vpop.permute.xlu0 %6268
  %6270 = vrot.lane.b32.xlu0 %v4692, 24
  %v6271 = vpop.permute.xlu0 %6270
  %6272 = vrot.lane.b32.xlu0 %v4693, 24
  %v6273 = vpop.permute.xlu0 %6272
  %6274 = vrot.lane.b32.xlu0 %v4694, 24
  %v6275 = vpop.permute.xlu0 %6274
  %6276 = vrot.lane.b32.xlu0 %v4695, 24
  %v6277 = vpop.permute.xlu0 %6276
  %6278 = vrot.lane.b32.xlu0 %v4696, 24
  %v6279 = vpop.permute.xlu0 %6278
  %6280 = vrot.lane.b32.xlu0 %v4697, 24
  %v6281 = vpop.permute.xlu0 %6280
  %6282 = vrot.lane.b32.xlu0 %v4698, 24
  %v6283 = vpop.permute.xlu0 %6282
  %6284 = vrot.lane.b32.xlu0 %v4699, 24
  %v6285 = vpop.permute.xlu0 %6284
  %6286 = vrot.lane.b32.xlu0 %v4700, 24
  %v6287 = vpop.permute.xlu0 %6286
  %6288 = vrot.lane.b32.xlu0 %v4701, 24
  %v6289 = vpop.permute.xlu0 %6288
  %6290 = vrot.lane.b32.xlu0 %v4702, 24
  %v6291 = vpop.permute.xlu0 %6290
  %6292 = vrot.lane.b32.xlu0 %v4703, 24
  %v6293 = vpop.permute.xlu0 %6292
  %6294 = vrot.lane.b32.xlu0 %v4704, 24
  %v6295 = vpop.permute.xlu0 %6294
  %6296 = vrot.lane.b32.xlu0 %v4705, 24
  %v6297 = vpop.permute.xlu0 %6296
  %6298 = vrot.lane.b32.xlu0 %v4706, 24
  %v6299 = vpop.permute.xlu0 %6298
  %6300 = vrot.lane.b32.xlu0 %v4707, 24
  %v6301 = vpop.permute.xlu0 %6300
  %6302 = vrot.lane.b32.xlu0 %v4708, 24
  %v6303 = vpop.permute.xlu0 %6302
  %6304 = vrot.lane.b32.xlu0 %v4709, 24
  %v6305 = vpop.permute.xlu0 %6304
  %6306 = vrot.lane.b32.xlu0 %v4710, 24
  %v6307 = vpop.permute.xlu0 %6306
  %6308 = vrot.lane.b32.xlu0 %v4711, 24
  %v6309 = vpop.permute.xlu0 %6308
  %6310 = vrot.lane.b32.xlu0 %v4712, 24
  %v6311 = vpop.permute.xlu0 %6310
  %6312 = vrot.lane.b32.xlu0 %v4713, 24
  %v6313 = vpop.permute.xlu0 %6312
  %6442 = vrot.lane.b32.xlu0 %v4714, 28
  %v6443 = vpop.permute.xlu0 %6442
  %6444 = vrot.lane.b32.xlu0 %v4715, 28
  %v6445 = vpop.permute.xlu0 %6444
  %6446 = vrot.lane.b32.xlu0 %v4716, 28
  %v6447 = vpop.permute.xlu0 %6446
  %6448 = vrot.lane.b32.xlu0 %v4717, 28
  %v6449 = vpop.permute.xlu0 %6448
  %6450 = vrot.lane.b32.xlu0 %v4718, 28
  %v6451 = vpop.permute.xlu0 %6450
  %6452 = vrot.lane.b32.xlu0 %v4719, 28
  %v6453 = vpop.permute.xlu0 %6452
  %6454 = vrot.lane.b32.xlu0 %v4720, 28
  %v6455 = vpop.permute.xlu0 %6454
  %6456 = vrot.lane.b32.xlu0 %v4721, 28
  %v6457 = vpop.permute.xlu0 %6456
  %6458 = vrot.lane.b32.xlu0 %v4722, 28
  %v6459 = vpop.permute.xlu0 %6458
  %6460 = vrot.lane.b32.xlu0 %v4723, 28
  %v6461 = vpop.permute.xlu0 %6460
  %6462 = vrot.lane.b32.xlu0 %v4724, 28
  %v6463 = vpop.permute.xlu0 %6462
  %6464 = vrot.lane.b32.xlu0 %v4725, 28
  %v6465 = vpop.permute.xlu0 %6464
  %6466 = vrot.lane.b32.xlu0 %v4726, 28
  %v6467 = vpop.permute.xlu0 %6466
  %6468 = vrot.lane.b32.xlu0 %v4727, 28
  %v6469 = vpop.permute.xlu0 %6468
  %6470 = vrot.lane.b32.xlu0 %v4728, 28
  %v6471 = vpop.permute.xlu0 %6470
  %6472 = vrot.lane.b32.xlu0 %v4729, 28
  %v6473 = vpop.permute.xlu0 %6472
  %6474 = vrot.lane.b32.xlu0 %v4730, 28
  %v6475 = vpop.permute.xlu0 %6474
  %6476 = vrot.lane.b32.xlu0 %v4731, 28
  %v6477 = vpop.permute.xlu0 %6476
  %6478 = vrot.lane.b32.xlu0 %v4732, 28
  %v6479 = vpop.permute.xlu0 %6478
  %6480 = vrot.lane.b32.xlu0 %v4733, 28
  %v6481 = vpop.permute.xlu0 %6480
  %6482 = vrot.lane.b32.xlu0 %v4734, 28
  %v6483 = vpop.permute.xlu0 %6482
  %6484 = vrot.lane.b32.xlu0 %v4735, 28
  %v6485 = vpop.permute.xlu0 %6484
  %6486 = vrot.lane.b32.xlu0 %v4736, 28
  %v6487 = vpop.permute.xlu0 %6486
  %6488 = vrot.lane.b32.xlu0 %v4737, 28
  %v6489 = vpop.permute.xlu0 %6488
  %6490 = vrot.lane.b32.xlu0 %v4738, 28
  %v6491 = vpop.permute.xlu0 %6490
  %6492 = vrot.lane.b32.xlu0 %v4739, 28
  %v6493 = vpop.permute.xlu0 %6492
  %6494 = vrot.lane.b32.xlu0 %v4740, 28
  %v6495 = vpop.permute.xlu0 %6494
  %6496 = vrot.lane.b32.xlu0 %v4741, 28
  %v6497 = vpop.permute.xlu0 %6496
  %6498 = vrot.lane.b32.xlu0 %v4742, 28
  %v6499 = vpop.permute.xlu0 %6498
  %6500 = vrot.lane.b32.xlu0 %v4743, 28
  %v6501 = vpop.permute.xlu0 %6500
  %6502 = vrot.lane.b32.xlu0 %v4744, 28
  %v6503 = vpop.permute.xlu0 %6502
  %6504 = vrot.lane.b32.xlu0 %v4745, 28
  %v6505 = vpop.permute.xlu0 %6504
  %6506 = vrot.lane.b32.xlu0 %v4746, 28
  %v6507 = vpop.permute.xlu0 %6506
  %6508 = vrot.lane.b32.xlu0 %v4747, 28
  %v6509 = vpop.permute.xlu0 %6508
  %6510 = vrot.lane.b32.xlu0 %v4748, 28
  %v6511 = vpop.permute.xlu0 %6510
  %6512 = vrot.lane.b32.xlu0 %v4749, 28
  %v6513 = vpop.permute.xlu0 %6512
  %6514 = vrot.lane.b32.xlu0 %v4750, 28
  %v6515 = vpop.permute.xlu0 %6514
  %6516 = vrot.lane.b32.xlu0 %v4751, 28
  %v6517 = vpop.permute.xlu0 %6516
  %6518 = vrot.lane.b32.xlu0 %v4752, 28
  %v6519 = vpop.permute.xlu0 %6518
  %6520 = vrot.lane.b32.xlu0 %v4753, 28
  %v6521 = vpop.permute.xlu0 %6520
  %6522 = vrot.lane.b32.xlu0 %v4754, 28
  %v6523 = vpop.permute.xlu0 %6522
  %6524 = vrot.lane.b32.xlu0 %v4755, 28
  %v6525 = vpop.permute.xlu0 %6524
  %6526 = vrot.lane.b32.xlu0 %v4756, 28
  %v6527 = vpop.permute.xlu0 %6526
  %6528 = vrot.lane.b32.xlu0 %v4757, 28
  %v6529 = vpop.permute.xlu0 %6528
  %6530 = vrot.lane.b32.xlu0 %v4758, 28
  %v6531 = vpop.permute.xlu0 %6530
  %6532 = vrot.lane.b32.xlu0 %v4759, 28
  %v6533 = vpop.permute.xlu0 %6532
  %6534 = vrot.lane.b32.xlu0 %v4760, 28
  %v6535 = vpop.permute.xlu0 %6534
  %6536 = vrot.lane.b32.xlu0 %v4761, 28
  %v6537 = vpop.permute.xlu0 %6536
  %6538 = vrot.lane.b32.xlu0 %v4762, 28
  %v6539 = vpop.permute.xlu0 %6538
  %6540 = vrot.lane.b32.xlu0 %v4763, 28
  %v6541 = vpop.permute.xlu0 %6540
  %6542 = vrot.lane.b32.xlu0 %v4764, 28
  %v6543 = vpop.permute.xlu0 %6542
  %6544 = vrot.lane.b32.xlu0 %v4765, 28
  %v6545 = vpop.permute.xlu0 %6544
  %6546 = vrot.lane.b32.xlu0 %v4766, 28
  %v6547 = vpop.permute.xlu0 %6546
  %6548 = vrot.lane.b32.xlu0 %v4767, 28
  %v6549 = vpop.permute.xlu0 %6548
  %6550 = vrot.lane.b32.xlu0 %v4768, 28
  %v6551 = vpop.permute.xlu0 %6550
  %6552 = vrot.lane.b32.xlu0 %v4769, 28
  %v6553 = vpop.permute.xlu0 %6552
  %6554 = vrot.lane.b32.xlu0 %v4770, 28
  %v6555 = vpop.permute.xlu0 %6554
  %6556 = vrot.lane.b32.xlu0 %v4771, 28
  %v6557 = vpop.permute.xlu0 %6556
  %6558 = vrot.lane.b32.xlu0 %v4772, 28
  %v6559 = vpop.permute.xlu0 %6558
  %6560 = vrot.lane.b32.xlu0 %v4773, 28
  %v6561 = vpop.permute.xlu0 %6560
  %6562 = vrot.lane.b32.xlu0 %v4774, 28
  %v6563 = vpop.permute.xlu0 %6562
  %6564 = vrot.lane.b32.xlu0 %v4775, 28
  %v6565 = vpop.permute.xlu0 %6564
  %6566 = vrot.lane.b32.xlu0 %v4776, 28
  %v6567 = vpop.permute.xlu0 %6566
  %6568 = vrot.lane.b32.xlu0 %v4777, 28
  %v6569 = vpop.permute.xlu0 %6568
  %6698 = vrot.lane.b32.xlu0 %v4778, 32
  %v6699 = vpop.permute.xlu0 %6698
  %6700 = vrot.lane.b32.xlu0 %v4779, 32
  %v6701 = vpop.permute.xlu0 %6700
  %6702 = vrot.lane.b32.xlu0 %v4780, 32
  %v6703 = vpop.permute.xlu0 %6702
  %6704 = vrot.lane.b32.xlu0 %v4781, 32
  %v6705 = vpop.permute.xlu0 %6704
  %6706 = vrot.lane.b32.xlu0 %v4782, 32
  %v6707 = vpop.permute.xlu0 %6706
  %6708 = vrot.lane.b32.xlu0 %v4783, 32
  %v6709 = vpop.permute.xlu0 %6708
  %6710 = vrot.lane.b32.xlu0 %v4784, 32
  %v6711 = vpop.permute.xlu0 %6710
  %6712 = vrot.lane.b32.xlu0 %v4785, 32
  %v6713 = vpop.permute.xlu0 %6712
  %6714 = vrot.lane.b32.xlu0 %v4786, 32
  %v6715 = vpop.permute.xlu0 %6714
  %6716 = vrot.lane.b32.xlu0 %v4787, 32
  %v6717 = vpop.permute.xlu0 %6716
  %6718 = vrot.lane.b32.xlu0 %v4788, 32
  %v6719 = vpop.permute.xlu0 %6718
  %6720 = vrot.lane.b32.xlu0 %v4789, 32
  %v6721 = vpop.permute.xlu0 %6720
  %6722 = vrot.lane.b32.xlu0 %v4790, 32
  %v6723 = vpop.permute.xlu0 %6722
  %6724 = vrot.lane.b32.xlu0 %v4791, 32
  %v6725 = vpop.permute.xlu0 %6724
  %6726 = vrot.lane.b32.xlu0 %v4792, 32
  %v6727 = vpop.permute.xlu0 %6726
  %6728 = vrot.lane.b32.xlu0 %v4793, 32
  %v6729 = vpop.permute.xlu0 %6728
  %6730 = vrot.lane.b32.xlu0 %v4794, 32
  %v6731 = vpop.permute.xlu0 %6730
  %6732 = vrot.lane.b32.xlu0 %v4795, 32
  %v6733 = vpop.permute.xlu0 %6732
  %6734 = vrot.lane.b32.xlu0 %v4796, 32
  %v6735 = vpop.permute.xlu0 %6734
  %6736 = vrot.lane.b32.xlu0 %v4797, 32
  %v6737 = vpop.permute.xlu0 %6736
  %6738 = vrot.lane.b32.xlu0 %v4798, 32
  %v6739 = vpop.permute.xlu0 %6738
  %6740 = vrot.lane.b32.xlu0 %v4799, 32
  %v6741 = vpop.permute.xlu0 %6740
  %6742 = vrot.lane.b32.xlu0 %v4800, 32
  %v6743 = vpop.permute.xlu0 %6742
  %6744 = vrot.lane.b32.xlu0 %v4801, 32
  %v6745 = vpop.permute.xlu0 %6744
  %6746 = vrot.lane.b32.xlu0 %v4802, 32
  %v6747 = vpop.permute.xlu0 %6746
  %6748 = vrot.lane.b32.xlu0 %v4803, 32
  %v6749 = vpop.permute.xlu0 %6748
  %6750 = vrot.lane.b32.xlu0 %v4804, 32
  %v6751 = vpop.permute.xlu0 %6750
  %6752 = vrot.lane.b32.xlu0 %v4805, 32
  %v6753 = vpop.permute.xlu0 %6752
  %6754 = vrot.lane.b32.xlu0 %v4806, 32
  %v6755 = vpop.permute.xlu0 %6754
  %6756 = vrot.lane.b32.xlu0 %v4807, 32
  %v6757 = vpop.permute.xlu0 %6756
  %6758 = vrot.lane.b32.xlu0 %v4808, 32
  %v6759 = vpop.permute.xlu0 %6758
  %6760 = vrot.lane.b32.xlu0 %v4809, 32
  %v6761 = vpop.permute.xlu0 %6760
  %6762 = vrot.lane.b32.xlu0 %v4810, 32
  %v6763 = vpop.permute.xlu0 %6762
  %6764 = vrot.lane.b32.xlu0 %v4811, 32
  %v6765 = vpop.permute.xlu0 %6764
  %6766 = vrot.lane.b32.xlu0 %v4812, 32
  %v6767 = vpop.permute.xlu0 %6766
  %6768 = vrot.lane.b32.xlu0 %v4813, 32
  %v6769 = vpop.permute.xlu0 %6768
  %6770 = vrot.lane.b32.xlu0 %v4814, 32
  %v6771 = vpop.permute.xlu0 %6770
  %6772 = vrot.lane.b32.xlu0 %v4815, 32
  %v6773 = vpop.permute.xlu0 %6772
  %6774 = vrot.lane.b32.xlu0 %v4816, 32
  %v6775 = vpop.permute.xlu0 %6774
  %6776 = vrot.lane.b32.xlu0 %v4817, 32
  %v6777 = vpop.permute.xlu0 %6776
  %6778 = vrot.lane.b32.xlu0 %v4818, 32
  %v6779 = vpop.permute.xlu0 %6778
  %6780 = vrot.lane.b32.xlu0 %v4819, 32
  %v6781 = vpop.permute.xlu0 %6780
  %6782 = vrot.lane.b32.xlu0 %v4820, 32
  %v6783 = vpop.permute.xlu0 %6782
  %6784 = vrot.lane.b32.xlu0 %v4821, 32
  %v6785 = vpop.permute.xlu0 %6784
  %6786 = vrot.lane.b32.xlu0 %v4822, 32
  %v6787 = vpop.permute.xlu0 %6786
  %6788 = vrot.lane.b32.xlu0 %v4823, 32
  %v6789 = vpop.permute.xlu0 %6788
  %6790 = vrot.lane.b32.xlu0 %v4824, 32
  %v6791 = vpop.permute.xlu0 %6790
  %6792 = vrot.lane.b32.xlu0 %v4825, 32
  %v6793 = vpop.permute.xlu0 %6792
  %6794 = vrot.lane.b32.xlu0 %v4826, 32
  %v6795 = vpop.permute.xlu0 %6794
  %6796 = vrot.lane.b32.xlu0 %v4827, 32
  %v6797 = vpop.permute.xlu0 %6796
  %6798 = vrot.lane.b32.xlu0 %v4828, 32
  %v6799 = vpop.permute.xlu0 %6798
  %6800 = vrot.lane.b32.xlu0 %v4829, 32
  %v6801 = vpop.permute.xlu0 %6800
  %6802 = vrot.lane.b32.xlu0 %v4830, 32
  %v6803 = vpop.permute.xlu0 %6802
  %6804 = vrot.lane.b32.xlu0 %v4831, 32
  %v6805 = vpop.permute.xlu0 %6804
  %6806 = vrot.lane.b32.xlu0 %v4832, 32
  %v6807 = vpop.permute.xlu0 %6806
  %6808 = vrot.lane.b32.xlu0 %v4833, 32
  %v6809 = vpop.permute.xlu0 %6808
  %6810 = vrot.lane.b32.xlu0 %v4834, 32
  %v6811 = vpop.permute.xlu0 %6810
  %6812 = vrot.lane.b32.xlu0 %v4835, 32
  %v6813 = vpop.permute.xlu0 %6812
  %6814 = vrot.lane.b32.xlu0 %v4836, 32
  %v6815 = vpop.permute.xlu0 %6814
  %6816 = vrot.lane.b32.xlu0 %v4837, 32
  %v6817 = vpop.permute.xlu0 %6816
  %6818 = vrot.lane.b32.xlu0 %v4838, 32
  %v6819 = vpop.permute.xlu0 %6818
  %6820 = vrot.lane.b32.xlu0 %v4839, 32
  %v6821 = vpop.permute.xlu0 %6820
  %6822 = vrot.lane.b32.xlu0 %v4840, 32
  %v6823 = vpop.permute.xlu0 %6822
  %6824 = vrot.lane.b32.xlu0 %v4841, 32
  %v6825 = vpop.permute.xlu0 %6824
  %v6890 = vsel %vm26, %v4266, %v4907
  %v6891 = vsel %vm26, %v4267, %v4909
  %v6892 = vsel %vm26, %v4268, %v4911
  %v6893 = vsel %vm26, %v4269, %v4913
  %v6894 = vsel %vm26, %v4270, %v4915
  %v6895 = vsel %vm26, %v4271, %v4917
  %v6896 = vsel %vm26, %v4272, %v4919
  %v6897 = vsel %vm26, %v4273, %v4921
  %v6898 = vsel %vm26, %v4274, %v4923
  %v6899 = vsel %vm26, %v4275, %v4925
  %v6900 = vsel %vm26, %v4276, %v4927
  %v6901 = vsel %vm26, %v4277, %v4929
  %v6902 = vsel %vm26, %v4278, %v4931
  %v6903 = vsel %vm26, %v4279, %v4933
  %v6904 = vsel %vm26, %v4280, %v4935
  %v6905 = vsel %vm26, %v4281, %v4937
  %v6906 = vsel %vm26, %v4282, %v4939
  %v6907 = vsel %vm26, %v4283, %v4941
  %v6908 = vsel %vm26, %v4284, %v4943
  %v6909 = vsel %vm26, %v4285, %v4945
  %v6910 = vsel %vm26, %v4286, %v4947
  %v6911 = vsel %vm26, %v4287, %v4949
  %v6912 = vsel %vm26, %v4288, %v4951
  %v6913 = vsel %vm26, %v4289, %v4953
  %v6914 = vsel %vm26, %v4290, %v4955
  %v6915 = vsel %vm26, %v4291, %v4957
  %v6916 = vsel %vm26, %v4292, %v4959
  %v6917 = vsel %vm26, %v4293, %v4961
  %v6918 = vsel %vm26, %v4294, %v4963
  %v6919 = vsel %vm26, %v4295, %v4965
  %v6920 = vsel %vm26, %v4296, %v4967
  %v6921 = vsel %vm26, %v4297, %v4969
  %v6922 = vsel %vm26, %v4298, %v4971
  %v6923 = vsel %vm26, %v4299, %v4973
  %v6924 = vsel %vm26, %v4300, %v4975
  %v6925 = vsel %vm26, %v4301, %v4977
  %v6926 = vsel %vm26, %v4302, %v4979
  %v6927 = vsel %vm26, %v4303, %v4981
  %v6928 = vsel %vm26, %v4304, %v4983
  %v6929 = vsel %vm26, %v4305, %v4985
  %v6930 = vsel %vm26, %v4306, %v4987
  %v6931 = vsel %vm26, %v4307, %v4989
  %v6932 = vsel %vm26, %v4308, %v4991
  %v6933 = vsel %vm26, %v4309, %v4993
  %v6934 = vsel %vm26, %v4310, %v4995
  %v6935 = vsel %vm26, %v4311, %v4997
  %v6936 = vsel %vm26, %v4312, %v4999
  %v6937 = vsel %vm26, %v4313, %v5001
  %v6938 = vsel %vm26, %v4314, %v5003
  %v6939 = vsel %vm26, %v4315, %v5005
  %v6940 = vsel %vm26, %v4316, %v5007
  %v6941 = vsel %vm26, %v4317, %v5009
  %v6942 = vsel %vm26, %v4318, %v5011
  %v6943 = vsel %vm26, %v4319, %v5013
  %v6944 = vsel %vm26, %v4320, %v5015
  %v6945 = vsel %vm26, %v4321, %v5017
  %v6946 = vsel %vm26, %v4322, %v5019
  %v6947 = vsel %vm26, %v4323, %v5021
  %v6948 = vsel %vm26, %v4324, %v5023
  %v6949 = vsel %vm26, %v4325, %v5025
  %v6950 = vsel %vm26, %v4326, %v5027
  %v6951 = vsel %vm26, %v4327, %v5029
  %v6952 = vsel %vm26, %v4328, %v5031
  %v6953 = vsel %vm26, %v4329, %v5033
  %v6954 = vsel %vm2954, %v6890, %v5163
  %v6955 = vsel %vm2954, %v6891, %v5165
  %v6956 = vsel %vm2954, %v6892, %v5167
  %v6957 = vsel %vm2954, %v6893, %v5169
  %v6958 = vsel %vm2954, %v6894, %v5171
  %v6959 = vsel %vm2954, %v6895, %v5173
  %v6960 = vsel %vm2954, %v6896, %v5175
  %v6961 = vsel %vm2954, %v6897, %v5177
  %v6962 = vsel %vm2954, %v6898, %v5179
  %v6963 = vsel %vm2954, %v6899, %v5181
  %v6964 = vsel %vm2954, %v6900, %v5183
  %v6965 = vsel %vm2954, %v6901, %v5185
  %v6966 = vsel %vm2954, %v6902, %v5187
  %v6967 = vsel %vm2954, %v6903, %v5189
  %v6968 = vsel %vm2954, %v6904, %v5191
  %v6969 = vsel %vm2954, %v6905, %v5193
  %v6970 = vsel %vm2954, %v6906, %v5195
  %v6971 = vsel %vm2954, %v6907, %v5197
  %v6972 = vsel %vm2954, %v6908, %v5199
  %v6973 = vsel %vm2954, %v6909, %v5201
  %v6974 = vsel %vm2954, %v6910, %v5203
  %v6975 = vsel %vm2954, %v6911, %v5205
  %v6976 = vsel %vm2954, %v6912, %v5207
  %v6977 = vsel %vm2954, %v6913, %v5209
  %v6978 = vsel %vm2954, %v6914, %v5211
  %v6979 = vsel %vm2954, %v6915, %v5213
  %v6980 = vsel %vm2954, %v6916, %v5215
  %v6981 = vsel %vm2954, %v6917, %v5217
  %v6982 = vsel %vm2954, %v6918, %v5219
  %v6983 = vsel %vm2954, %v6919, %v5221
  %v6984 = vsel %vm2954, %v6920, %v5223
  %v6985 = vsel %vm2954, %v6921, %v5225
  %v6986 = vsel %vm2954, %v6922, %v5227
  %v6987 = vsel %vm2954, %v6923, %v5229
  %v6988 = vsel %vm2954, %v6924, %v5231
  %v6989 = vsel %vm2954, %v6925, %v5233
  %v6990 = vsel %vm2954, %v6926, %v5235
  %v6991 = vsel %vm2954, %v6927, %v5237
  %v6992 = vsel %vm2954, %v6928, %v5239
  %v6993 = vsel %vm2954, %v6929, %v5241
  %v6994 = vsel %vm2954, %v6930, %v5243
  %v6995 = vsel %vm2954, %v6931, %v5245
  %v6996 = vsel %vm2954, %v6932, %v5247
  %v6997 = vsel %vm2954, %v6933, %v5249
  %v6998 = vsel %vm2954, %v6934, %v5251
  %v6999 = vsel %vm2954, %v6935, %v5253
  %v7000 = vsel %vm2954, %v6936, %v5255
  %v7001 = vsel %vm2954, %v6937, %v5257
  %v7002 = vsel %vm2954, %v6938, %v5259
  %v7003 = vsel %vm2954, %v6939, %v5261
  %v7004 = vsel %vm2954, %v6940, %v5263
  %v7005 = vsel %vm2954, %v6941, %v5265
  %v7006 = vsel %vm2954, %v6942, %v5267
  %v7007 = vsel %vm2954, %v6943, %v5269
  %v7008 = vsel %vm2954, %v6944, %v5271
  %v7009 = vsel %vm2954, %v6945, %v5273
  %v7010 = vsel %vm2954, %v6946, %v5275
  %v7011 = vsel %vm2954, %v6947, %v5277
  %v7012 = vsel %vm2954, %v6948, %v5279
  %v7013 = vsel %vm2954, %v6949, %v5281
  %v7014 = vsel %vm2954, %v6950, %v5283
  %v7015 = vsel %vm2954, %v6951, %v5285
  %v7016 = vsel %vm2954, %v6952, %v5287
  %v7017 = vsel %vm2954, %v6953, %v5289
  %v7018 = vsel %vm3019, %v6954, %v5419
  %v7019 = vsel %vm3019, %v6955, %v5421
  %v7020 = vsel %vm3019, %v6956, %v5423
  %v7021 = vsel %vm3019, %v6957, %v5425
  %v7022 = vsel %vm3019, %v6958, %v5427
  %v7023 = vsel %vm3019, %v6959, %v5429
  %v7024 = vsel %vm3019, %v6960, %v5431
  %v7025 = vsel %vm3019, %v6961, %v5433
  %v7026 = vsel %vm3019, %v6962, %v5435
  %v7027 = vsel %vm3019, %v6963, %v5437
  %v7028 = vsel %vm3019, %v6964, %v5439
  %v7029 = vsel %vm3019, %v6965, %v5441
  %v7030 = vsel %vm3019, %v6966, %v5443
  %v7031 = vsel %vm3019, %v6967, %v5445
  %v7032 = vsel %vm3019, %v6968, %v5447
  %v7033 = vsel %vm3019, %v6969, %v5449
  %v7034 = vsel %vm3019, %v6970, %v5451
  %v7035 = vsel %vm3019, %v6971, %v5453
  %v7036 = vsel %vm3019, %v6972, %v5455
  %v7037 = vsel %vm3019, %v6973, %v5457
  %v7038 = vsel %vm3019, %v6974, %v5459
  %v7039 = vsel %vm3019, %v6975, %v5461
  %v7040 = vsel %vm3019, %v6976, %v5463
  %v7041 = vsel %vm3019, %v6977, %v5465
  %v7042 = vsel %vm3019, %v6978, %v5467
  %v7043 = vsel %vm3019, %v6979, %v5469
  %v7044 = vsel %vm3019, %v6980, %v5471
  %v7045 = vsel %vm3019, %v6981, %v5473
  %v7046 = vsel %vm3019, %v6982, %v5475
  %v7047 = vsel %vm3019, %v6983, %v5477
  %v7048 = vsel %vm3019, %v6984, %v5479
  %v7049 = vsel %vm3019, %v6985, %v5481
  %v7050 = vsel %vm3019, %v6986, %v5483
  %v7051 = vsel %vm3019, %v6987, %v5485
  %v7052 = vsel %vm3019, %v6988, %v5487
  %v7053 = vsel %vm3019, %v6989, %v5489
  %v7054 = vsel %vm3019, %v6990, %v5491
  %v7055 = vsel %vm3019, %v6991, %v5493
  %v7056 = vsel %vm3019, %v6992, %v5495
  %v7057 = vsel %vm3019, %v6993, %v5497
  %v7058 = vsel %vm3019, %v6994, %v5499
  %v7059 = vsel %vm3019, %v6995, %v5501
  %v7060 = vsel %vm3019, %v6996, %v5503
  %v7061 = vsel %vm3019, %v6997, %v5505
  %v7062 = vsel %vm3019, %v6998, %v5507
  %v7063 = vsel %vm3019, %v6999, %v5509
  %v7064 = vsel %vm3019, %v7000, %v5511
  %v7065 = vsel %vm3019, %v7001, %v5513
  %v7066 = vsel %vm3019, %v7002, %v5515
  %v7067 = vsel %vm3019, %v7003, %v5517
  %v7068 = vsel %vm3019, %v7004, %v5519
  %v7069 = vsel %vm3019, %v7005, %v5521
  %v7070 = vsel %vm3019, %v7006, %v5523
  %v7071 = vsel %vm3019, %v7007, %v5525
  %v7072 = vsel %vm3019, %v7008, %v5527
  %v7073 = vsel %vm3019, %v7009, %v5529
  %v7074 = vsel %vm3019, %v7010, %v5531
  %v7075 = vsel %vm3019, %v7011, %v5533
  %v7076 = vsel %vm3019, %v7012, %v5535
  %v7077 = vsel %vm3019, %v7013, %v5537
  %v7078 = vsel %vm3019, %v7014, %v5539
  %v7079 = vsel %vm3019, %v7015, %v5541
  %v7080 = vsel %vm3019, %v7016, %v5543
  %v7081 = vsel %vm3019, %v7017, %v5545
  %v7082 = vsel %vm3084, %v7018, %v5675
  %v7083 = vsel %vm3084, %v7019, %v5677
  %v7084 = vsel %vm3084, %v7020, %v5679
  %v7085 = vsel %vm3084, %v7021, %v5681
  %v7086 = vsel %vm3084, %v7022, %v5683
  %v7087 = vsel %vm3084, %v7023, %v5685
  %v7088 = vsel %vm3084, %v7024, %v5687
  %v7089 = vsel %vm3084, %v7025, %v5689
  %v7090 = vsel %vm3084, %v7026, %v5691
  %v7091 = vsel %vm3084, %v7027, %v5693
  %v7092 = vsel %vm3084, %v7028, %v5695
  %v7093 = vsel %vm3084, %v7029, %v5697
  %v7094 = vsel %vm3084, %v7030, %v5699
  %v7095 = vsel %vm3084, %v7031, %v5701
  %v7096 = vsel %vm3084, %v7032, %v5703
  %v7097 = vsel %vm3084, %v7033, %v5705
  %v7098 = vsel %vm3084, %v7034, %v5707
  %v7099 = vsel %vm3084, %v7035, %v5709
  %v7100 = vsel %vm3084, %v7036, %v5711
  %v7101 = vsel %vm3084, %v7037, %v5713
  %v7102 = vsel %vm3084, %v7038, %v5715
  %v7103 = vsel %vm3084, %v7039, %v5717
  %v7104 = vsel %vm3084, %v7040, %v5719
  %v7105 = vsel %vm3084, %v7041, %v5721
  %v7106 = vsel %vm3084, %v7042, %v5723
  %v7107 = vsel %vm3084, %v7043, %v5725
  %v7108 = vsel %vm3084, %v7044, %v5727
  %v7109 = vsel %vm3084, %v7045, %v5729
  %v7110 = vsel %vm3084, %v7046, %v5731
  %v7111 = vsel %vm3084, %v7047, %v5733
  %v7112 = vsel %vm3084, %v7048, %v5735
  %v7113 = vsel %vm3084, %v7049, %v5737
  %v7114 = vsel %vm3084, %v7050, %v5739
  %v7115 = vsel %vm3084, %v7051, %v5741
  %v7116 = vsel %vm3084, %v7052, %v5743
  %v7117 = vsel %vm3084, %v7053, %v5745
  %v7118 = vsel %vm3084, %v7054, %v5747
  %v7119 = vsel %vm3084, %v7055, %v5749
  %v7120 = vsel %vm3084, %v7056, %v5751
  %v7121 = vsel %vm3084, %v7057, %v5753
  %v7122 = vsel %vm3084, %v7058, %v5755
  %v7123 = vsel %vm3084, %v7059, %v5757
  %v7124 = vsel %vm3084, %v7060, %v5759
  %v7125 = vsel %vm3084, %v7061, %v5761
  %v7126 = vsel %vm3084, %v7062, %v5763
  %v7127 = vsel %vm3084, %v7063, %v5765
  %v7128 = vsel %vm3084, %v7064, %v5767
  %v7129 = vsel %vm3084, %v7065, %v5769
  %v7130 = vsel %vm3084, %v7066, %v5771
  %v7131 = vsel %vm3084, %v7067, %v5773
  %v7132 = vsel %vm3084, %v7068, %v5775
  %v7133 = vsel %vm3084, %v7069, %v5777
  %v7134 = vsel %vm3084, %v7070, %v5779
  %v7135 = vsel %vm3084, %v7071, %v5781
  %v7136 = vsel %vm3084, %v7072, %v5783
  %v7137 = vsel %vm3084, %v7073, %v5785
  %v7138 = vsel %vm3084, %v7074, %v5787
  %v7139 = vsel %vm3084, %v7075, %v5789
  %v7140 = vsel %vm3084, %v7076, %v5791
  %v7141 = vsel %vm3084, %v7077, %v5793
  %v7142 = vsel %vm3084, %v7078, %v5795
  %v7143 = vsel %vm3084, %v7079, %v5797
  %v7144 = vsel %vm3084, %v7080, %v5799
  %v7145 = vsel %vm3084, %v7081, %v5801
  %v7146 = vsel %vm3149, %v7082, %v5931
  %v7147 = vsel %vm3149, %v7083, %v5933
  %v7148 = vsel %vm3149, %v7084, %v5935
  %v7149 = vsel %vm3149, %v7085, %v5937
  %v7150 = vsel %vm3149, %v7086, %v5939
  %v7151 = vsel %vm3149, %v7087, %v5941
  %v7152 = vsel %vm3149, %v7088, %v5943
  %v7153 = vsel %vm3149, %v7089, %v5945
  %v7154 = vsel %vm3149, %v7090, %v5947
  %v7155 = vsel %vm3149, %v7091, %v5949
  %v7156 = vsel %vm3149, %v7092, %v5951
  %v7157 = vsel %vm3149, %v7093, %v5953
  %v7158 = vsel %vm3149, %v7094, %v5955
  %v7159 = vsel %vm3149, %v7095, %v5957
  %v7160 = vsel %vm3149, %v7096, %v5959
  %v7161 = vsel %vm3149, %v7097, %v5961
  %v7162 = vsel %vm3149, %v7098, %v5963
  %v7163 = vsel %vm3149, %v7099, %v5965
  %v7164 = vsel %vm3149, %v7100, %v5967
  %v7165 = vsel %vm3149, %v7101, %v5969
  %v7166 = vsel %vm3149, %v7102, %v5971
  %v7167 = vsel %vm3149, %v7103, %v5973
  %v7168 = vsel %vm3149, %v7104, %v5975
  %v7169 = vsel %vm3149, %v7105, %v5977
  %v7170 = vsel %vm3149, %v7106, %v5979
  %v7171 = vsel %vm3149, %v7107, %v5981
  %v7172 = vsel %vm3149, %v7108, %v5983
  %v7173 = vsel %vm3149, %v7109, %v5985
  %v7174 = vsel %vm3149, %v7110, %v5987
  %v7175 = vsel %vm3149, %v7111, %v5989
  %v7176 = vsel %vm3149, %v7112, %v5991
  %v7177 = vsel %vm3149, %v7113, %v5993
  %v7178 = vsel %vm3149, %v7114, %v5995
  %v7179 = vsel %vm3149, %v7115, %v5997
  %v7180 = vsel %vm3149, %v7116, %v5999
  %v7181 = vsel %vm3149, %v7117, %v6001
  %v7182 = vsel %vm3149, %v7118, %v6003
  %v7183 = vsel %vm3149, %v7119, %v6005
  %v7184 = vsel %vm3149, %v7120, %v6007
  %v7185 = vsel %vm3149, %v7121, %v6009
  %v7186 = vsel %vm3149, %v7122, %v6011
  %v7187 = vsel %vm3149, %v7123, %v6013
  %v7188 = vsel %vm3149, %v7124, %v6015
  %v7189 = vsel %vm3149, %v7125, %v6017
  %v7190 = vsel %vm3149, %v7126, %v6019
  %v7191 = vsel %vm3149, %v7127, %v6021
  %v7192 = vsel %vm3149, %v7128, %v6023
  %v7193 = vsel %vm3149, %v7129, %v6025
  %v7194 = vsel %vm3149, %v7130, %v6027
  %v7195 = vsel %vm3149, %v7131, %v6029
  %v7196 = vsel %vm3149, %v7132, %v6031
  %v7197 = vsel %vm3149, %v7133, %v6033
  %v7198 = vsel %vm3149, %v7134, %v6035
  %v7199 = vsel %vm3149, %v7135, %v6037
  %v7200 = vsel %vm3149, %v7136, %v6039
  %v7201 = vsel %vm3149, %v7137, %v6041
  %v7202 = vsel %vm3149, %v7138, %v6043
  %v7203 = vsel %vm3149, %v7139, %v6045
  %v7204 = vsel %vm3149, %v7140, %v6047
  %v7205 = vsel %vm3149, %v7141, %v6049
  %v7206 = vsel %vm3149, %v7142, %v6051
  %v7207 = vsel %vm3149, %v7143, %v6053
  %v7208 = vsel %vm3149, %v7144, %v6055
  %v7209 = vsel %vm3149, %v7145, %v6057
  %v7210 = vsel %vm3214, %v7146, %v6187
  %v7211 = vsel %vm3214, %v7147, %v6189
  %v7212 = vsel %vm3214, %v7148, %v6191
  %v7213 = vsel %vm3214, %v7149, %v6193
  %v7214 = vsel %vm3214, %v7150, %v6195
  %v7215 = vsel %vm3214, %v7151, %v6197
  %v7216 = vsel %vm3214, %v7152, %v6199
  %v7217 = vsel %vm3214, %v7153, %v6201
  %v7218 = vsel %vm3214, %v7154, %v6203
  %v7219 = vsel %vm3214, %v7155, %v6205
  %v7220 = vsel %vm3214, %v7156, %v6207
  %v7221 = vsel %vm3214, %v7157, %v6209
  %v7222 = vsel %vm3214, %v7158, %v6211
  %v7223 = vsel %vm3214, %v7159, %v6213
  %v7224 = vsel %vm3214, %v7160, %v6215
  %v7225 = vsel %vm3214, %v7161, %v6217
  %v7226 = vsel %vm3214, %v7162, %v6219
  %v7227 = vsel %vm3214, %v7163, %v6221
  %v7228 = vsel %vm3214, %v7164, %v6223
  %v7229 = vsel %vm3214, %v7165, %v6225
  %v7230 = vsel %vm3214, %v7166, %v6227
  %v7231 = vsel %vm3214, %v7167, %v6229
  %v7232 = vsel %vm3214, %v7168, %v6231
  %v7233 = vsel %vm3214, %v7169, %v6233
  %v7234 = vsel %vm3214, %v7170, %v6235
  %v7235 = vsel %vm3214, %v7171, %v6237
  %v7236 = vsel %vm3214, %v7172, %v6239
  %v7237 = vsel %vm3214, %v7173, %v6241
  %v7238 = vsel %vm3214, %v7174, %v6243
  %v7239 = vsel %vm3214, %v7175, %v6245
  %v7240 = vsel %vm3214, %v7176, %v6247
  %v7241 = vsel %vm3214, %v7177, %v6249
  %v7242 = vsel %vm3214, %v7178, %v6251
  %v7243 = vsel %vm3214, %v7179, %v6253
  %v7244 = vsel %vm3214, %v7180, %v6255
  %v7245 = vsel %vm3214, %v7181, %v6257
  %v7246 = vsel %vm3214, %v7182, %v6259
  %v7247 = vsel %vm3214, %v7183, %v6261
  %v7248 = vsel %vm3214, %v7184, %v6263
  %v7249 = vsel %vm3214, %v7185, %v6265
  %v7250 = vsel %vm3214, %v7186, %v6267
  %v7251 = vsel %vm3214, %v7187, %v6269
  %v7252 = vsel %vm3214, %v7188, %v6271
  %v7253 = vsel %vm3214, %v7189, %v6273
  %v7254 = vsel %vm3214, %v7190, %v6275
  %v7255 = vsel %vm3214, %v7191, %v6277
  %v7256 = vsel %vm3214, %v7192, %v6279
  %v7257 = vsel %vm3214, %v7193, %v6281
  %v7258 = vsel %vm3214, %v7194, %v6283
  %v7259 = vsel %vm3214, %v7195, %v6285
  %v7260 = vsel %vm3214, %v7196, %v6287
  %v7261 = vsel %vm3214, %v7197, %v6289
  %v7262 = vsel %vm3214, %v7198, %v6291
  %v7263 = vsel %vm3214, %v7199, %v6293
  %v7264 = vsel %vm3214, %v7200, %v6295
  %v7265 = vsel %vm3214, %v7201, %v6297
  %v7266 = vsel %vm3214, %v7202, %v6299
  %v7267 = vsel %vm3214, %v7203, %v6301
  %v7268 = vsel %vm3214, %v7204, %v6303
  %v7269 = vsel %vm3214, %v7205, %v6305
  %v7270 = vsel %vm3214, %v7206, %v6307
  %v7271 = vsel %vm3214, %v7207, %v6309
  %v7272 = vsel %vm3214, %v7208, %v6311
  %v7273 = vsel %vm3214, %v7209, %v6313
  %v7274 = vsel %vm3279, %v7210, %v6443
  %v7275 = vsel %vm3279, %v7211, %v6445
  %v7276 = vsel %vm3279, %v7212, %v6447
  %v7277 = vsel %vm3279, %v7213, %v6449
  %v7278 = vsel %vm3279, %v7214, %v6451
  %v7279 = vsel %vm3279, %v7215, %v6453
  %v7280 = vsel %vm3279, %v7216, %v6455
  %v7281 = vsel %vm3279, %v7217, %v6457
  %v7282 = vsel %vm3279, %v7218, %v6459
  %v7283 = vsel %vm3279, %v7219, %v6461
  %v7284 = vsel %vm3279, %v7220, %v6463
  %v7285 = vsel %vm3279, %v7221, %v6465
  %v7286 = vsel %vm3279, %v7222, %v6467
  %v7287 = vsel %vm3279, %v7223, %v6469
  %v7288 = vsel %vm3279, %v7224, %v6471
  %v7289 = vsel %vm3279, %v7225, %v6473
  %v7290 = vsel %vm3279, %v7226, %v6475
  %v7291 = vsel %vm3279, %v7227, %v6477
  %v7292 = vsel %vm3279, %v7228, %v6479
  %v7293 = vsel %vm3279, %v7229, %v6481
  %v7294 = vsel %vm3279, %v7230, %v6483
  %v7295 = vsel %vm3279, %v7231, %v6485
  %v7296 = vsel %vm3279, %v7232, %v6487
  %v7297 = vsel %vm3279, %v7233, %v6489
  %v7298 = vsel %vm3279, %v7234, %v6491
  %v7299 = vsel %vm3279, %v7235, %v6493
  %v7300 = vsel %vm3279, %v7236, %v6495
  %v7301 = vsel %vm3279, %v7237, %v6497
  %v7302 = vsel %vm3279, %v7238, %v6499
  %v7303 = vsel %vm3279, %v7239, %v6501
  %v7304 = vsel %vm3279, %v7240, %v6503
  %v7305 = vsel %vm3279, %v7241, %v6505
  %v7306 = vsel %vm3279, %v7242, %v6507
  %v7307 = vsel %vm3279, %v7243, %v6509
  %v7308 = vsel %vm3279, %v7244, %v6511
  %v7309 = vsel %vm3279, %v7245, %v6513
  %v7310 = vsel %vm3279, %v7246, %v6515
  %v7311 = vsel %vm3279, %v7247, %v6517
  %v7312 = vsel %vm3279, %v7248, %v6519
  %v7313 = vsel %vm3279, %v7249, %v6521
  %v7314 = vsel %vm3279, %v7250, %v6523
  %v7315 = vsel %vm3279, %v7251, %v6525
  %v7316 = vsel %vm3279, %v7252, %v6527
  %v7317 = vsel %vm3279, %v7253, %v6529
  %v7318 = vsel %vm3279, %v7254, %v6531
  %v7319 = vsel %vm3279, %v7255, %v6533
  %v7320 = vsel %vm3279, %v7256, %v6535
  %v7321 = vsel %vm3279, %v7257, %v6537
  %v7322 = vsel %vm3279, %v7258, %v6539
  %v7323 = vsel %vm3279, %v7259, %v6541
  %v7324 = vsel %vm3279, %v7260, %v6543
  %v7325 = vsel %vm3279, %v7261, %v6545
  %v7326 = vsel %vm3279, %v7262, %v6547
  %v7327 = vsel %vm3279, %v7263, %v6549
  %v7328 = vsel %vm3279, %v7264, %v6551
  %v7329 = vsel %vm3279, %v7265, %v6553
  %v7330 = vsel %vm3279, %v7266, %v6555
  %v7331 = vsel %vm3279, %v7267, %v6557
  %v7332 = vsel %vm3279, %v7268, %v6559
  %v7333 = vsel %vm3279, %v7269, %v6561
  %v7334 = vsel %vm3279, %v7270, %v6563
  %v7335 = vsel %vm3279, %v7271, %v6565
  %v7336 = vsel %vm3279, %v7272, %v6567
  %v7337 = vsel %vm3279, %v7273, %v6569
  %v7338 = vsel %vm3344, %v7274, %v6699
  %v7339 = vsel %vm3344, %v7275, %v6701
  %v7340 = vsel %vm3344, %v7276, %v6703
  %v7341 = vsel %vm3344, %v7277, %v6705
  %v7342 = vsel %vm3344, %v7278, %v6707
  %v7343 = vsel %vm3344, %v7279, %v6709
  %v7344 = vsel %vm3344, %v7280, %v6711
  %v7345 = vsel %vm3344, %v7281, %v6713
  %v7346 = vsel %vm3344, %v7282, %v6715
  %v7347 = vsel %vm3344, %v7283, %v6717
  %v7348 = vsel %vm3344, %v7284, %v6719
  %v7349 = vsel %vm3344, %v7285, %v6721
  %v7350 = vsel %vm3344, %v7286, %v6723
  %v7351 = vsel %vm3344, %v7287, %v6725
  %v7352 = vsel %vm3344, %v7288, %v6727
  %v7353 = vsel %vm3344, %v7289, %v6729
  %v7354 = vsel %vm3344, %v7290, %v6731
  %v7355 = vsel %vm3344, %v7291, %v6733
  %v7356 = vsel %vm3344, %v7292, %v6735
  %v7357 = vsel %vm3344, %v7293, %v6737
  %v7358 = vsel %vm3344, %v7294, %v6739
  %v7359 = vsel %vm3344, %v7295, %v6741
  %v7360 = vsel %vm3344, %v7296, %v6743
  %v7361 = vsel %vm3344, %v7297, %v6745
  %v7362 = vsel %vm3344, %v7298, %v6747
  %v7363 = vsel %vm3344, %v7299, %v6749
  %v7364 = vsel %vm3344, %v7300, %v6751
  %v7365 = vsel %vm3344, %v7301, %v6753
  %v7366 = vsel %vm3344, %v7302, %v6755
  %v7367 = vsel %vm3344, %v7303, %v6757
  %v7368 = vsel %vm3344, %v7304, %v6759
  %v7369 = vsel %vm3344, %v7305, %v6761
  %v7370 = vsel %vm3344, %v7306, %v6763
  %v7371 = vsel %vm3344, %v7307, %v6765
  %v7372 = vsel %vm3344, %v7308, %v6767
  %v7373 = vsel %vm3344, %v7309, %v6769
  %v7374 = vsel %vm3344, %v7310, %v6771
  %v7375 = vsel %vm3344, %v7311, %v6773
  %v7376 = vsel %vm3344, %v7312, %v6775
  %v7377 = vsel %vm3344, %v7313, %v6777
  %v7378 = vsel %vm3344, %v7314, %v6779
  %v7379 = vsel %vm3344, %v7315, %v6781
  %v7380 = vsel %vm3344, %v7316, %v6783
  %v7381 = vsel %vm3344, %v7317, %v6785
  %v7382 = vsel %vm3344, %v7318, %v6787
  %v7383 = vsel %vm3344, %v7319, %v6789
  %v7384 = vsel %vm3344, %v7320, %v6791
  %v7385 = vsel %vm3344, %v7321, %v6793
  %v7386 = vsel %vm3344, %v7322, %v6795
  %v7387 = vsel %vm3344, %v7323, %v6797
  %v7388 = vsel %vm3344, %v7324, %v6799
  %v7389 = vsel %vm3344, %v7325, %v6801
  %v7390 = vsel %vm3344, %v7326, %v6803
  %v7391 = vsel %vm3344, %v7327, %v6805
  %v7392 = vsel %vm3344, %v7328, %v6807
  %v7393 = vsel %vm3344, %v7329, %v6809
  %v7394 = vsel %vm3344, %v7330, %v6811
  %v7395 = vsel %vm3344, %v7331, %v6813
  %v7396 = vsel %vm3344, %v7332, %v6815
  %v7397 = vsel %vm3344, %v7333, %v6817
  %v7398 = vsel %vm3344, %v7334, %v6819
  %v7399 = vsel %vm3344, %v7335, %v6821
  %v7400 = vsel %vm3344, %v7336, %v6823
  %v7401 = vsel %vm3344, %v7337, %v6825
  %v7402 = vld [vmem:[%s2] sm:$0xff]
  %v7403 = vld [vmem:[%s2 + $0x8] sm:$0xff]
  %v7404 = vld [vmem:[%s2 + $0x10] sm:$0xff]
  %v7405 = vld [vmem:[%s2 + $0x18] sm:$0xff]
  %v7406 = vld [vmem:[%s2 + $0x20] sm:$0xf]
  %v7408 = vsel %vm3414, %v7338, 0
  %v7411 = vsel %vm3414, %v7339, 0
  %v7414 = vsel %vm3414, %v7340, 0
  %v7417 = vsel %vm3414, %v7341, 0
  %v7420 = vsel %vm3414, %v7342, 0
  %v7423 = vsel %vm3414, %v7343, 0
  %v7426 = vsel %vm3414, %v7344, 0
  %v7429 = vsel %vm3414, %v7345, 0
  %v7432 = vsel %vm3414, %v7346, 0
  %v7435 = vsel %vm3414, %v7347, 0
  %v7438 = vsel %vm3414, %v7348, 0
  %v7441 = vsel %vm3414, %v7349, 0
  %v7444 = vsel %vm3414, %v7350, 0
  %v7447 = vsel %vm3414, %v7351, 0
  %v7450 = vsel %vm3414, %v7352, 0
  %v7453 = vsel %vm3414, %v7353, 0
  %v7456 = vsel %vm3414, %v7354, 0
  %v7459 = vsel %vm3414, %v7355, 0
  %v7462 = vsel %vm3414, %v7356, 0
  %v7465 = vsel %vm3414, %v7357, 0
  %v7468 = vsel %vm3414, %v7358, 0
  %v7471 = vsel %vm3414, %v7359, 0
  %v7474 = vsel %vm3414, %v7360, 0
  %v7477 = vsel %vm3414, %v7361, 0
  %v7480 = vsel %vm3414, %v7362, 0
  %v7483 = vsel %vm3414, %v7363, 0
  %v7486 = vsel %vm3414, %v7364, 0
  %v7489 = vsel %vm3414, %v7365, 0
  %v7492 = vsel %vm3414, %v7366, 0
  %v7495 = vsel %vm3414, %v7367, 0
  %v7498 = vsel %vm3414, %v7368, 0
  %v7501 = vsel %vm3414, %v7369, 0
  %v7504 = vsel %vm3414, %v7370, 0
  %v7507 = vsel %vm3414, %v7371, 0
  %v7510 = vsel %vm3414, %v7372, 0
  %v7513 = vsel %vm3414, %v7373, 0
  %v7516 = vsel %vm3414, %v7374, 0
  %v7519 = vsel %vm3414, %v7375, 0
  %v7522 = vsel %vm3414, %v7376, 0
  %v7525 = vsel %vm3414, %v7377, 0
  %v7528 = vsel %vm3414, %v7378, 0
  %v7531 = vsel %vm3414, %v7379, 0
  %v7534 = vsel %vm3414, %v7380, 0
  %v7537 = vsel %vm3414, %v7381, 0
  %v7540 = vsel %vm3414, %v7382, 0
  %v7543 = vsel %vm3414, %v7383, 0
  %v7546 = vsel %vm3414, %v7384, 0
  %v7549 = vsel %vm3414, %v7385, 0
  %v7552 = vsel %vm3414, %v7386, 0
  %v7555 = vsel %vm3414, %v7387, 0
  %v7558 = vsel %vm3414, %v7388, 0
  %v7561 = vsel %vm3414, %v7389, 0
  %v7564 = vsel %vm3414, %v7390, 0
  %v7567 = vsel %vm3414, %v7391, 0
  %v7570 = vsel %vm3414, %v7392, 0
  %v7573 = vsel %vm3414, %v7393, 0
  %v7576 = vsel %vm3414, %v7394, 0
  %v7579 = vsel %vm3414, %v7395, 0
  %v7582 = vsel %vm3414, %v7396, 0
  %v7585 = vsel %vm3414, %v7397, 0
  %v7588 = vsel %vm3414, %v7398, 0
  %v7591 = vsel %vm3414, %v7399, 0
  %v7594 = vsel %vm3414, %v7400, 0
  %v7597 = vsel %vm3414, %v7401, 0
  %v7600 = vsel %vm3607, %v7406, 0
  %7602 = vmatprep.subr.mxu0 0.0
  %7603 = vmatpush1.msra.mxu0 %v7402
  %7604 = vmatprep.subr.mxu0 0.0
  %7605 = vmatpush1.msra.mxu0 %v7403
  %7606 = vmatprep.subr.mxu0 0.0
  %7607 = vmatpush1.msra.mxu0 %v7404
  %7608 = vmatprep.subr.mxu0 0.0
  %7609 = vmatpush1.msra.mxu0 %v7405
  %7610 = vmatprep.subr.mxu0 0.0
  %7611 = vmatpush1.msra.mxu0 %v7600
  %7612 = vmatprep.subr.mxu0 0.0
  %7613 = vmatpush1.msra.mxu0 0.0
  %7614 = vmatprep.subr.mxu0 0.0
  %7615 = vmatpush1.msra.mxu0 0.0
  %7616 = vmatprep.subr.mxu0 0.0
  %7617 = vmatpush1.msra.mxu0 0.0
  %7618 = vmatprep.subr.mxu0 0.0
  %7619 = vmatpush1.msra.mxu0 0.0
  %7620 = vmatprep.subr.mxu0 0.0
  %7621 = vmatpush1.msra.mxu0 0.0
  %7622 = vmatprep.subr.mxu0 0.0
  %7623 = vmatpush1.msra.mxu0 0.0
  %7624 = vmatprep.subr.mxu0 0.0
  %7625 = vmatpush1.msra.mxu0 0.0
  %7626 = vmatprep.subr.mxu0 0.0
  %7627 = vmatpush1.msra.mxu0 0.0
  %7628 = vmatprep.subr.mxu0 0.0
  %7629 = vmatpush1.msra.mxu0 0.0
  %7630 = vmatprep.subr.mxu0 0.0
  %7631 = vmatpush1.msra.mxu0 0.0
  %7632 = vmatprep.subr.mxu0 0.0
  %7633 = vmatpush1.msra.mxu0 0.0
  %7634 = vmatprep.subr.mxu0 0.0
  %7635 = vmatpush1.msra.mxu0 0.0
  %7636 = vmatprep.subr.mxu0 0.0
  %7637 = vmatpush1.msra.mxu0 0.0
  %7638 = vmatprep.subr.mxu0 0.0
  %7639 = vmatpush1.msra.mxu0 0.0
  %7640 = vmatprep.subr.mxu0 0.0
  %7641 = vmatpush1.msra.mxu0 0.0
  %7642 = vmatprep.subr.mxu0 0.0
  %7643 = vmatpush1.msra.mxu0 0.0
  %7644 = vmatprep.subr.mxu0 0.0
  %7645 = vmatpush1.msra.mxu0 0.0
  %7646 = vmatprep.subr.mxu0 0.0
  %7647 = vmatpush1.msra.mxu0 0.0
  %7648 = vmatprep.subr.mxu0 0.0
  %7649 = vmatpush1.msra.mxu0 0.0
  %7650 = vmatprep.subr.mxu0 0.0
  %7651 = vmatpush1.msra.mxu0 0.0
  %7652 = vmatprep.subr.mxu0 0.0
  %7653 = vmatpush1.msra.mxu0 0.0
  %7654 = vmatprep.subr.mxu0 0.0
  %7655 = vmatpush1.msra.mxu0 0.0
  %7656 = vmatprep.subr.mxu0 0.0
  %7657 = vmatpush1.msra.mxu0 0.0
  %7658 = vmatprep.subr.mxu0 0.0
  %7659 = vmatpush1.msra.mxu0 0.0
  %7660 = vmatprep.subr.mxu0 0.0
  %7661 = vmatpush1.msra.mxu0 0.0
  %7662 = vmatprep.subr.mxu0 0.0
  %7663 = vmatpush1.msra.mxu0 0.0
  %7664 = vmatprep.subr.mxu0 0.0
  %7665 = vmatpush1.msra.mxu0 0.0
  %7666 = vmatprep.mubr.f32.mxu0 0.0
  %7667 = vmatmul.mubr.f32.gmra.mrb[0].mxu0 %v7408
  %v7668 = vpop.f32.mrb[0].mxu0
  %v7669 = vadd.f32 0.0, %v7668
  %v7670 = vpop.f32.mrb[0].mxu0
  %7671 = vmatprep.mubr.f32.mxu0 0.0
  %7672 = vmatmul.mubr.f32.gmra.mrb[0].mxu0 %v7411
  %v7673 = vpop.f32.mrb[0].mxu0
  %v7674 = vadd.f32 0.0, %v7673
  %v7675 = vpop.f32.mrb[0].mxu0
  %7676 = vmatprep.mubr.f32.mxu0 0.0
  %7677 = vmatmul.mubr.f32.gmra.mrb[0].mxu0 %v7414
  %v7678 = vpop.f32.mrb[0].mxu0
  %v7679 = vadd.f32 0.0, %v7678
  %v7680 = vpop.f32.mrb[0].mxu0
  %7681 = vmatprep.mubr.f32.mxu0 0.0
  %7682 = vmatmul.mubr.f32.gmra.mrb[0].mxu0 %v7417
  %v7683 = vpop.f32.mrb[0].mxu0
  %v7684 = vadd.f32 0.0, %v7683
  %v7685 = vpop.f32.mrb[0].mxu0
  %7686 = vmatprep.mubr.f32.mxu0 0.0
  %7687 = vmatmul.mubr.f32.gmra.mrb[0].mxu0 %v7420
  %v7688 = vpop.f32.mrb[0].mxu0
  %v7689 = vadd.f32 0.0, %v7688
  %v7690 = vpop.f32.mrb[0].mxu0
  %7691 = vmatprep.mubr.f32.mxu0 0.0
  %7692 = vmatmul.mubr.f32.gmra.mrb[0].mxu0 %v7423
  %v7693 = vpop.f32.mrb[0].mxu0
  %v7694 = vadd.f32 0.0, %v7693
  %v7695 = vpop.f32.mrb[0].mxu0
  %7696 = vmatprep.mubr.f32.mxu0 0.0
  %7697 = vmatmul.mubr.f32.gmra.mrb[0].mxu0 %v7426
  %v7698 = vpop.f32.mrb[0].mxu0
  %v7699 = vadd.f32 0.0, %v7698
  %v7700 = vpop.f32.mrb[0].mxu0
  %7701 = vmatprep.mubr.f32.mxu0 0.0
  %7702 = vmatmul.mubr.f32.gmra.mrb[0].mxu0 %v7429
  %v7703 = vpop.f32.mrb[0].mxu0
  %v7704 = vadd.f32 0.0, %v7703
  %v7705 = vpop.f32.mrb[0].mxu0
  %7706 = vmatprep.mubr.f32.mxu0 0.0
  %7707 = vmatmul.mubr.f32.gmra.mrb[0].mxu0 %v7432
  %v7708 = vpop.f32.mrb[0].mxu0
  %v7709 = vadd.f32 0.0, %v7708
  %v7710 = vpop.f32.mrb[0].mxu0
  %7711 = vmatprep.mubr.f32.mxu0 0.0
  %7712 = vmatmul.mubr.f32.gmra.mrb[0].mxu0 %v7435
  %v7713 = vpop.f32.mrb[0].mxu0
  %v7714 = vadd.f32 0.0, %v7713
  %v7715 = vpop.f32.mrb[0].mxu0
  %7716 = vmatprep.mubr.f32.mxu0 0.0
  %7717 = vmatmul.mubr.f32.gmra.mrb[0].mxu0 %v7438
  %v7718 = vpop.f32.mrb[0].mxu0
  %v7719 = vadd.f32 0.0, %v7718
  %v7720 = vpop.f32.mrb[0].mxu0
  %7721 = vmatprep.mubr.f32.mxu0 0.0
  %7722 = vmatmul.mubr.f32.gmra.mrb[0].mxu0 %v7441
  %v7723 = vpop.f32.mrb[0].mxu0
  %v7724 = vadd.f32 0.0, %v7723
  %v7725 = vpop.f32.mrb[0].mxu0
  %7726 = vmatprep.mubr.f32.mxu0 0.0
  %7727 = vmatmul.mubr.f32.gmra.mrb[0].mxu0 %v7444
  %v7728 = vpop.f32.mrb[0].mxu0
  %v7729 = vadd.f32 0.0, %v7728
  %v7730 = vpop.f32.mrb[0].mxu0
  %7731 = vmatprep.mubr.f32.mxu0 0.0
  %7732 = vmatmul.mubr.f32.gmra.mrb[0].mxu0 %v7447
  %v7733 = vpop.f32.mrb[0].mxu0
  %v7734 = vadd.f32 0.0, %v7733
  %v7735 = vpop.f32.mrb[0].mxu0
  %7736 = vmatprep.mubr.f32.mxu0 0.0
  %7737 = vmatmul.mubr.f32.gmra.mrb[0].mxu0 %v7450
  %v7738 = vpop.f32.mrb[0].mxu0
  %v7739 = vadd.f32 0.0, %v7738
  %v7740 = vpop.f32.mrb[0].mxu0
  %7741 = vmatprep.mubr.f32.mxu0 0.0
  %7742 = vmatmul.mubr.f32.gmra.mrb[0].mxu0 %v7453
  %v7743 = vpop.f32.mrb[0].mxu0
  %v7744 = vadd.f32 0.0, %v7743
  %v7745 = vpop.f32.mrb[0].mxu0
  %7746 = vmatprep.mubr.f32.mxu0 0.0
  %7747 = vmatmul.mubr.f32.gmra.mrb[0].mxu0 %v7456
  %v7748 = vpop.f32.mrb[0].mxu0
  %v7749 = vadd.f32 0.0, %v7748
  %v7750 = vpop.f32.mrb[0].mxu0
  %7751 = vmatprep.mubr.f32.mxu0 0.0
  %7752 = vmatmul.mubr.f32.gmra.mrb[0].mxu0 %v7459
  %v7753 = vpop.f32.mrb[0].mxu0
  %v7754 = vadd.f32 0.0, %v7753
  %v7755 = vpop.f32.mrb[0].mxu0
  %7756 = vmatprep.mubr.f32.mxu0 0.0
  %7757 = vmatmul.mubr.f32.gmra.mrb[0].mxu0 %v7462
  %v7758 = vpop.f32.mrb[0].mxu0
  %v7759 = vadd.f32 0.0, %v7758
  %v7760 = vpop.f32.mrb[0].mxu0
  %7761 = vmatprep.mubr.f32.mxu0 0.0
  %7762 = vmatmul.mubr.f32.gmra.mrb[0].mxu0 %v7465
  %v7763 = vpop.f32.mrb[0].mxu0
  %v7764 = vadd.f32 0.0, %v7763
  %v7765 = vpop.f32.mrb[0].mxu0
  %7766 = vmatprep.mubr.f32.mxu0 0.0
  %7767 = vmatmul.mubr.f32.gmra.mrb[0].mxu0 %v7468
  %v7768 = vpop.f32.mrb[0].mxu0
  %v7769 = vadd.f32 0.0, %v7768
  %v7770 = vpop.f32.mrb[0].mxu0
  %7771 = vmatprep.mubr.f32.mxu0 0.0
  %7772 = vmatmul.mubr.f32.gmra.mrb[0].mxu0 %v7471
  %v7773 = vpop.f32.mrb[0].mxu0
  %v7774 = vadd.f32 0.0, %v7773
  %v7775 = vpop.f32.mrb[0].mxu0
  %7776 = vmatprep.mubr.f32.mxu0 0.0
  %7777 = vmatmul.mubr.f32.gmra.mrb[0].mxu0 %v7474
  %v7778 = vpop.f32.mrb[0].mxu0
  %v7779 = vadd.f32 0.0, %v7778
  %v7780 = vpop.f32.mrb[0].mxu0
  %7781 = vmatprep.mubr.f32.mxu0 0.0
  %7782 = vmatmul.mubr.f32.gmra.mrb[0].mxu0 %v7477
  %v7783 = vpop.f32.mrb[0].mxu0
  %v7784 = vadd.f32 0.0, %v7783
  %v7785 = vpop.f32.mrb[0].mxu0
  %7786 = vmatprep.mubr.f32.mxu0 0.0
  %7787 = vmatmul.mubr.f32.gmra.mrb[0].mxu0 %v7480
  %v7788 = vpop.f32.mrb[0].mxu0
  %v7789 = vadd.f32 0.0, %v7788
  %v7790 = vpop.f32.mrb[0].mxu0
  %7791 = vmatprep.mubr.f32.mxu0 0.0
  %7792 = vmatmul.mubr.f32.gmra.mrb[0].mxu0 %v7483
  %v7793 = vpop.f32.mrb[0].mxu0
  %v7794 = vadd.f32 0.0, %v7793
  %v7795 = vpop.f32.mrb[0].mxu0
  %7796 = vmatprep.mubr.f32.mxu0 0.0
  %7797 = vmatmul.mubr.f32.gmra.mrb[0].mxu0 %v7486
  %v7798 = vpop.f32.mrb[0].mxu0
  %v7799 = vadd.f32 0.0, %v7798
  %v7800 = vpop.f32.mrb[0].mxu0
  %7801 = vmatprep.mubr.f32.mxu0 0.0
  %7802 = vmatmul.mubr.f32.gmra.mrb[0].mxu0 %v7489
  %v7803 = vpop.f32.mrb[0].mxu0
  %v7804 = vadd.f32 0.0, %v7803
  %v7805 = vpop.f32.mrb[0].mxu0
  %7806 = vmatprep.mubr.f32.mxu0 0.0
  %7807 = vmatmul.mubr.f32.gmra.mrb[0].mxu0 %v7492
  %v7808 = vpop.f32.mrb[0].mxu0
  %v7809 = vadd.f32 0.0, %v7808
  %v7810 = vpop.f32.mrb[0].mxu0
  %7811 = vmatprep.mubr.f32.mxu0 0.0
  %7812 = vmatmul.mubr.f32.gmra.mrb[0].mxu0 %v7495
  %v7813 = vpop.f32.mrb[0].mxu0
  %v7814 = vadd.f32 0.0, %v7813
  %v7815 = vpop.f32.mrb[0].mxu0
  %7816 = vmatprep.mubr.f32.mxu0 0.0
  %7817 = vmatmul.mubr.f32.gmra.mrb[0].mxu0 %v7498
  %v7818 = vpop.f32.mrb[0].mxu0
  %v7819 = vadd.f32 0.0, %v7818
  %v7820 = vpop.f32.mrb[0].mxu0
  %7821 = vmatprep.mubr.f32.mxu0 0.0
  %7822 = vmatmul.mubr.f32.gmra.mrb[0].mxu0 %v7501
  %v7823 = vpop.f32.mrb[0].mxu0
  %v7824 = vadd.f32 0.0, %v7823
  %v7825 = vpop.f32.mrb[0].mxu0
  %7826 = vmatprep.mubr.f32.mxu0 0.0
  %7827 = vmatmul.mubr.f32.gmra.mrb[0].mxu0 %v7504
  %v7828 = vpop.f32.mrb[0].mxu0
  %v7829 = vadd.f32 0.0, %v7828
  %v7830 = vpop.f32.mrb[0].mxu0
  %7831 = vmatprep.mubr.f32.mxu0 0.0
  %7832 = vmatmul.mubr.f32.gmra.mrb[0].mxu0 %v7507
  %v7833 = vpop.f32.mrb[0].mxu0
  %v7834 = vadd.f32 0.0, %v7833
  %v7835 = vpop.f32.mrb[0].mxu0
  %7836 = vmatprep.mubr.f32.mxu0 0.0
  %7837 = vmatmul.mubr.f32.gmra.mrb[0].mxu0 %v7510
  %v7838 = vpop.f32.mrb[0].mxu0
  %v7839 = vadd.f32 0.0, %v7838
  %v7840 = vpop.f32.mrb[0].mxu0
  %7841 = vmatprep.mubr.f32.mxu0 0.0
  %7842 = vmatmul.mubr.f32.gmra.mrb[0].mxu0 %v7513
  %v7843 = vpop.f32.mrb[0].mxu0
  %v7844 = vadd.f32 0.0, %v7843
  %v7845 = vpop.f32.mrb[0].mxu0
  %7846 = vmatprep.mubr.f32.mxu0 0.0
  %7847 = vmatmul.mubr.f32.gmra.mrb[0].mxu0 %v7516
  %v7848 = vpop.f32.mrb[0].mxu0
  %v7849 = vadd.f32 0.0, %v7848
  %v7850 = vpop.f32.mrb[0].mxu0
  %7851 = vmatprep.mubr.f32.mxu0 0.0
  %7852 = vmatmul.mubr.f32.gmra.mrb[0].mxu0 %v7519
  %v7853 = vpop.f32.mrb[0].mxu0
  %v7854 = vadd.f32 0.0, %v7853
  %v7855 = vpop.f32.mrb[0].mxu0
  %7856 = vmatprep.mubr.f32.mxu0 0.0
  %7857 = vmatmul.mubr.f32.gmra.mrb[0].mxu0 %v7522
  %v7858 = vpop.f32.mrb[0].mxu0
  %v7859 = vadd.f32 0.0, %v7858
  %v7860 = vpop.f32.mrb[0].mxu0
  %7861 = vmatprep.mubr.f32.mxu0 0.0
  %7862 = vmatmul.mubr.f32.gmra.mrb[0].mxu0 %v7525
  %v7863 = vpop.f32.mrb[0].mxu0
  %v7864 = vadd.f32 0.0, %v7863
  %v7865 = vpop.f32.mrb[0].mxu0
  %7866 = vmatprep.mubr.f32.mxu0 0.0
  %7867 = vmatmul.mubr.f32.gmra.mrb[0].mxu0 %v7528
  %v7868 = vpop.f32.mrb[0].mxu0
  %v7869 = vadd.f32 0.0, %v7868
  %v7870 = vpop.f32.mrb[0].mxu0
  %7871 = vmatprep.mubr.f32.mxu0 0.0
  %7872 = vmatmul.mubr.f32.gmra.mrb[0].mxu0 %v7531
  %v7873 = vpop.f32.mrb[0].mxu0
  %v7874 = vadd.f32 0.0, %v7873
  %v7875 = vpop.f32.mrb[0].mxu0
  %7876 = vmatprep.mubr.f32.mxu0 0.0
  %7877 = vmatmul.mubr.f32.gmra.mrb[0].mxu0 %v7534
  %v7878 = vpop.f32.mrb[0].mxu0
  %v7879 = vadd.f32 0.0, %v7878
  %v7880 = vpop.f32.mrb[0].mxu0
  %7881 = vmatprep.mubr.f32.mxu0 0.0
  %7882 = vmatmul.mubr.f32.gmra.mrb[0].mxu0 %v7537
  %v7883 = vpop.f32.mrb[0].mxu0
  %v7884 = vadd.f32 0.0, %v7883
  %v7885 = vpop.f32.mrb[0].mxu0
  %7886 = vmatprep.mubr.f32.mxu0 0.0
  %7887 = vmatmul.mubr.f32.gmra.mrb[0].mxu0 %v7540
  %v7888 = vpop.f32.mrb[0].mxu0
  %v7889 = vadd.f32 0.0, %v7888
  %v7890 = vpop.f32.mrb[0].mxu0
  %7891 = vmatprep.mubr.f32.mxu0 0.0
  %7892 = vmatmul.mubr.f32.gmra.mrb[0].mxu0 %v7543
  %v7893 = vpop.f32.mrb[0].mxu0
  %v7894 = vadd.f32 0.0, %v7893
  %v7895 = vpop.f32.mrb[0].mxu0
  %7896 = vmatprep.mubr.f32.mxu0 0.0
  %7897 = vmatmul.mubr.f32.gmra.mrb[0].mxu0 %v7546
  %v7898 = vpop.f32.mrb[0].mxu0
  %v7899 = vadd.f32 0.0, %v7898
  %v7900 = vpop.f32.mrb[0].mxu0
  %7901 = vmatprep.mubr.f32.mxu0 0.0
  %7902 = vmatmul.mubr.f32.gmra.mrb[0].mxu0 %v7549
  %v7903 = vpop.f32.mrb[0].mxu0
  %v7904 = vadd.f32 0.0, %v7903
  %v7905 = vpop.f32.mrb[0].mxu0
  %7906 = vmatprep.mubr.f32.mxu0 0.0
  %7907 = vmatmul.mubr.f32.gmra.mrb[0].mxu0 %v7552
  %v7908 = vpop.f32.mrb[0].mxu0
  %v7909 = vadd.f32 0.0, %v7908
  %v7910 = vpop.f32.mrb[0].mxu0
  %7911 = vmatprep.mubr.f32.mxu0 0.0
  %7912 = vmatmul.mubr.f32.gmra.mrb[0].mxu0 %v7555
  %v7913 = vpop.f32.mrb[0].mxu0
  %v7914 = vadd.f32 0.0, %v7913
  %v7915 = vpop.f32.mrb[0].mxu0
  %7916 = vmatprep.mubr.f32.mxu0 0.0
  %7917 = vmatmul.mubr.f32.gmra.mrb[0].mxu0 %v7558
  %v7918 = vpop.f32.mrb[0].mxu0
  %v7919 = vadd.f32 0.0, %v7918
  %v7920 = vpop.f32.mrb[0].mxu0
  %7921 = vmatprep.mubr.f32.mxu0 0.0
  %7922 = vmatmul.mubr.f32.gmra.mrb[0].mxu0 %v7561
  %v7923 = vpop.f32.mrb[0].mxu0
  %v7924 = vadd.f32 0.0, %v7923
  %v7925 = vpop.f32.mrb[0].mxu0
  %7926 = vmatprep.mubr.f32.mxu0 0.0
  %7927 = vmatmul.mubr.f32.gmra.mrb[0].mxu0 %v7564
  %v7928 = vpop.f32.mrb[0].mxu0
  %v7929 = vadd.f32 0.0, %v7928
  %v7930 = vpop.f32.mrb[0].mxu0
  %7931 = vmatprep.mubr.f32.mxu0 0.0
  %7932 = vmatmul.mubr.f32.gmra.mrb[0].mxu0 %v7567
  %v7933 = vpop.f32.mrb[0].mxu0
  %v7934 = vadd.f32 0.0, %v7933
  %v7935 = vpop.f32.mrb[0].mxu0
  %7936 = vmatprep.mubr.f32.mxu0 0.0
  %7937 = vmatmul.mubr.f32.gmra.mrb[0].mxu0 %v7570
  %v7938 = vpop.f32.mrb[0].mxu0
  %v7939 = vadd.f32 0.0, %v7938
  %v7940 = vpop.f32.mrb[0].mxu0
  %7941 = vmatprep.mubr.f32.mxu0 0.0
  %7942 = vmatmul.mubr.f32.gmra.mrb[0].mxu0 %v7573
  %v7943 = vpop.f32.mrb[0].mxu0
  %v7944 = vadd.f32 0.0, %v7943
  %v7945 = vpop.f32.mrb[0].mxu0
  %7946 = vmatprep.mubr.f32.mxu0 0.0
  %7947 = vmatmul.mubr.f32.gmra.mrb[0].mxu0 %v7576
  %v7948 = vpop.f32.mrb[0].mxu0
  %v7949 = vadd.f32 0.0, %v7948
  %v7950 = vpop.f32.mrb[0].mxu0
  %7951 = vmatprep.mubr.f32.mxu0 0.0
  %7952 = vmatmul.mubr.f32.gmra.mrb[0].mxu0 %v7579
  %v7953 = vpop.f32.mrb[0].mxu0
  %v7954 = vadd.f32 0.0, %v7953
  %v7955 = vpop.f32.mrb[0].mxu0
  %7956 = vmatprep.mubr.f32.mxu0 0.0
  %7957 = vmatmul.mubr.f32.gmra.mrb[0].mxu0 %v7582
  %v7958 = vpop.f32.mrb[0].mxu0
  %v7959 = vadd.f32 0.0, %v7958
  %v7960 = vpop.f32.mrb[0].mxu0
  %7961 = vmatprep.mubr.f32.mxu0 0.0
  %7962 = vmatmul.mubr.f32.gmra.mrb[0].mxu0 %v7585
  %v7963 = vpop.f32.mrb[0].mxu0
  %v7964 = vadd.f32 0.0, %v7963
  %v7965 = vpop.f32.mrb[0].mxu0
  %7966 = vmatprep.mubr.f32.mxu0 0.0
  %7967 = vmatmul.mubr.f32.gmra.mrb[0].mxu0 %v7588
  %v7968 = vpop.f32.mrb[0].mxu0
  %v7969 = vadd.f32 0.0, %v7968
  %v7970 = vpop.f32.mrb[0].mxu0
  %7971 = vmatprep.mubr.f32.mxu0 0.0
  %7972 = vmatmul.mubr.f32.gmra.mrb[0].mxu0 %v7591
  %v7973 = vpop.f32.mrb[0].mxu0
  %v7974 = vadd.f32 0.0, %v7973
  %v7975 = vpop.f32.mrb[0].mxu0
  %7976 = vmatprep.mubr.f32.mxu0 0.0
  %7977 = vmatmul.mubr.f32.gmra.mrb[0].mxu0 %v7594
  %v7978 = vpop.f32.mrb[0].mxu0
  %v7979 = vadd.f32 0.0, %v7978
  %v7980 = vpop.f32.mrb[0].mxu0
  %7981 = vmatprep.mubr.f32.mxu0 0.0
  %7982 = vmatmul.mubr.f32.gmra.mrb[0].mxu0 %v7597
  %v7983 = vpop.f32.mrb[0].mxu0
  %v7984 = vadd.f32 0.0, %v7983
  %v7985 = vpop.f32.mrb[0].mxu0
  %7986 = vdwg.mxu0
  %v7987 = vld [vmem:[%s5] sm:$0x1]
  %v7989 = vlaneseq
  %v7990 = vshrl.u32 %v7989, 7
  %v7991 = vsub.s32 0, %v7990
  %v7992 = vrot.slane %v7987, %v7991
  %v7994 = vmul.f32 %v7669, %v7992
  %v7995 = vmul.f32 %v7674, %v7992
  %v7996 = vmul.f32 %v7679, %v7992
  %v7997 = vmul.f32 %v7684, %v7992
  %v7998 = vmul.f32 %v7689, %v7992
  %v7999 = vmul.f32 %v7694, %v7992
  %v8000 = vmul.f32 %v7699, %v7992
  %v8001 = vmul.f32 %v7704, %v7992
  %v8002 = vmul.f32 %v7709, %v7992
  %v8003 = vmul.f32 %v7714, %v7992
  %v8004 = vmul.f32 %v7719, %v7992
  %v8005 = vmul.f32 %v7724, %v7992
  %v8006 = vmul.f32 %v7729, %v7992
  %v8007 = vmul.f32 %v7734, %v7992
  %v8008 = vmul.f32 %v7739, %v7992
  %v8009 = vmul.f32 %v7744, %v7992
  %v8010 = vmul.f32 %v7749, %v7992
  %v8011 = vmul.f32 %v7754, %v7992
  %v8012 = vmul.f32 %v7759, %v7992
  %v8013 = vmul.f32 %v7764, %v7992
  %v8014 = vmul.f32 %v7769, %v7992
  %v8015 = vmul.f32 %v7774, %v7992
  %v8016 = vmul.f32 %v7779, %v7992
  %v8017 = vmul.f32 %v7784, %v7992
  %v8018 = vmul.f32 %v7789, %v7992
  %v8019 = vmul.f32 %v7794, %v7992
  %v8020 = vmul.f32 %v7799, %v7992
  %v8021 = vmul.f32 %v7804, %v7992
  %v8022 = vmul.f32 %v7809, %v7992
  %v8023 = vmul.f32 %v7814, %v7992
  %v8024 = vmul.f32 %v7819, %v7992
  %v8025 = vmul.f32 %v7824, %v7992
  %v8026 = vmul.f32 %v7829, %v7992
  %v8027 = vmul.f32 %v7834, %v7992
  %v8028 = vmul.f32 %v7839, %v7992
  %v8029 = vmul.f32 %v7844, %v7992
  %v8030 = vmul.f32 %v7849, %v7992
  %v8031 = vmul.f32 %v7854, %v7992
  %v8032 = vmul.f32 %v7859, %v7992
  %v8033 = vmul.f32 %v7864, %v7992
  %v8034 = vmul.f32 %v7869, %v7992
  %v8035 = vmul.f32 %v7874, %v7992
  %v8036 = vmul.f32 %v7879, %v7992
  %v8037 = vmul.f32 %v7884, %v7992
  %v8038 = vmul.f32 %v7889, %v7992
  %v8039 = vmul.f32 %v7894, %v7992
  %v8040 = vmul.f32 %v7899, %v7992
  %v8041 = vmul.f32 %v7904, %v7992
  %v8042 = vmul.f32 %v7909, %v7992
  %v8043 = vmul.f32 %v7914, %v7992
  %v8044 = vmul.f32 %v7919, %v7992
  %v8045 = vmul.f32 %v7924, %v7992
  %v8046 = vmul.f32 %v7929, %v7992
  %v8047 = vmul.f32 %v7934, %v7992
  %v8048 = vmul.f32 %v7939, %v7992
  %v8049 = vmul.f32 %v7944, %v7992
  %v8050 = vmul.f32 %v7949, %v7992
  %v8051 = vmul.f32 %v7954, %v7992
  %v8052 = vmul.f32 %v7959, %v7992
  %v8053 = vmul.f32 %v7964, %v7992
  %v8054 = vmul.f32 %v7969, %v7992
  %v8055 = vmul.f32 %v7974, %v7992
  %v8056 = vmul.f32 %v7979, %v7992
  %v8057 = vmul.f32 %v7984, %v7992
  %v8058 = vld [vmem:[%s6] sm:$0x1]
  %v8060 = vlaneseq
  %v8061 = vshrl.u32 %v8060, 7
  %v8062 = vsub.s32 0, %v8061
  %v8063 = vrot.slane %v8058, %v8062
  %v8065 = vadd.f32 %v7994, %v8063
  %v8066 = vadd.f32 %v7995, %v8063
  %v8067 = vadd.f32 %v7996, %v8063
  %v8068 = vadd.f32 %v7997, %v8063
  %v8069 = vadd.f32 %v7998, %v8063
  %v8070 = vadd.f32 %v7999, %v8063
  %v8071 = vadd.f32 %v8000, %v8063
  %v8072 = vadd.f32 %v8001, %v8063
  %v8073 = vadd.f32 %v8002, %v8063
  %v8074 = vadd.f32 %v8003, %v8063
  %v8075 = vadd.f32 %v8004, %v8063
  %v8076 = vadd.f32 %v8005, %v8063
  %v8077 = vadd.f32 %v8006, %v8063
  %v8078 = vadd.f32 %v8007, %v8063
  %v8079 = vadd.f32 %v8008, %v8063
  %v8080 = vadd.f32 %v8009, %v8063
  %v8081 = vadd.f32 %v8010, %v8063
  %v8082 = vadd.f32 %v8011, %v8063
  %v8083 = vadd.f32 %v8012, %v8063
  %v8084 = vadd.f32 %v8013, %v8063
  %v8085 = vadd.f32 %v8014, %v8063
  %v8086 = vadd.f32 %v8015, %v8063
  %v8087 = vadd.f32 %v8016, %v8063
  %v8088 = vadd.f32 %v8017, %v8063
  %v8089 = vadd.f32 %v8018, %v8063
  %v8090 = vadd.f32 %v8019, %v8063
  %v8091 = vadd.f32 %v8020, %v8063
  %v8092 = vadd.f32 %v8021, %v8063
  %v8093 = vadd.f32 %v8022, %v8063
  %v8094 = vadd.f32 %v8023, %v8063
  %v8095 = vadd.f32 %v8024, %v8063
  %v8096 = vadd.f32 %v8025, %v8063
  %v8097 = vadd.f32 %v8026, %v8063
  %v8098 = vadd.f32 %v8027, %v8063
  %v8099 = vadd.f32 %v8028, %v8063
  %v8100 = vadd.f32 %v8029, %v8063
  %v8101 = vadd.f32 %v8030, %v8063
  %v8102 = vadd.f32 %v8031, %v8063
  %v8103 = vadd.f32 %v8032, %v8063
  %v8104 = vadd.f32 %v8033, %v8063
  %v8105 = vadd.f32 %v8034, %v8063
  %v8106 = vadd.f32 %v8035, %v8063
  %v8107 = vadd.f32 %v8036, %v8063
  %v8108 = vadd.f32 %v8037, %v8063
  %v8109 = vadd.f32 %v8038, %v8063
  %v8110 = vadd.f32 %v8039, %v8063
  %v8111 = vadd.f32 %v8040, %v8063
  %v8112 = vadd.f32 %v8041, %v8063
  %v8113 = vadd.f32 %v8042, %v8063
  %v8114 = vadd.f32 %v8043, %v8063
  %v8115 = vadd.f32 %v8044, %v8063
  %v8116 = vadd.f32 %v8045, %v8063
  %v8117 = vadd.f32 %v8046, %v8063
  %v8118 = vadd.f32 %v8047, %v8063
  %v8119 = vadd.f32 %v8048, %v8063
  %v8120 = vadd.f32 %v8049, %v8063
  %v8121 = vadd.f32 %v8050, %v8063
  %v8122 = vadd.f32 %v8051, %v8063
  %v8123 = vadd.f32 %v8052, %v8063
  %v8124 = vadd.f32 %v8053, %v8063
  %v8125 = vadd.f32 %v8054, %v8063
  %v8126 = vadd.f32 %v8055, %v8063
  %v8127 = vadd.f32 %v8056, %v8063
  %v8128 = vadd.f32 %v8057, %v8063
  %v8129 = vld [vmem:[%s0] sm:$0xff]
  %v8130 = vld [vmem:[%s0 + $0x8] sm:$0xff]
  %v8131 = vld [vmem:[%s0 + $0x10] sm:$0xff]
  %v8132 = vld [vmem:[%s0 + $0x18] sm:$0xff]
  %v8133 = vld [vmem:[%s0 + $0x20] sm:$0xff]
  %v8134 = vld [vmem:[%s0 + $0x28] sm:$0xff]
  %v8135 = vld [vmem:[%s0 + $0x30] sm:$0xff]
  %v8136 = vld [vmem:[%s0 + $0x38] sm:$0xff]
  %v8137 = vld [vmem:[%s0 + $0x40] sm:$0xff]
  %v8138 = vld [vmem:[%s0 + $0x48] sm:$0xff]
  %v8139 = vld [vmem:[%s0 + $0x50] sm:$0xff]
  %v8140 = vld [vmem:[%s0 + $0x58] sm:$0xff]
  %v8141 = vld [vmem:[%s0 + $0x60] sm:$0xff]
  %v8142 = vld [vmem:[%s0 + $0x68] sm:$0xff]
  %v8143 = vld [vmem:[%s0 + $0x70] sm:$0xff]
  %v8144 = vld [vmem:[%s0 + $0x78] sm:$0xff]
  %v8145 = vld [vmem:[%s0 + $0x80] sm:$0xff]
  %v8146 = vld [vmem:[%s0 + $0x88] sm:$0xff]
  %v8147 = vld [vmem:[%s0 + $0x90] sm:$0xff]
  %v8148 = vld [vmem:[%s0 + $0x98] sm:$0xff]
  %v8149 = vld [vmem:[%s0 + $0xa0] sm:$0xff]
  %v8150 = vld [vmem:[%s0 + $0xa8] sm:$0xff]
  %v8151 = vld [vmem:[%s0 + $0xb0] sm:$0xff]
  %v8152 = vld [vmem:[%s0 + $0xb8] sm:$0xff]
  %v8153 = vld [vmem:[%s0 + $0xc0] sm:$0xff]
  %v8154 = vld [vmem:[%s0 + $0xc8] sm:$0xff]
  %v8155 = vld [vmem:[%s0 + $0xd0] sm:$0xff]
  %v8156 = vld [vmem:[%s0 + $0xd8] sm:$0xff]
  %v8157 = vld [vmem:[%s0 + $0xe0] sm:$0xff]
  %v8158 = vld [vmem:[%s0 + $0xe8] sm:$0xff]
  %v8159 = vld [vmem:[%s0 + $0xf0] sm:$0xff]
  %v8160 = vld [vmem:[%s0 + $0xf8] sm:$0xff]
  %v8161 = vld [vmem:[%s0 + $0x100] sm:$0xff]
  %v8162 = vld [vmem:[%s0 + $0x108] sm:$0xff]
  %v8163 = vld [vmem:[%s0 + $0x110] sm:$0xff]
  %v8164 = vld [vmem:[%s0 + $0x118] sm:$0xff]
  %v8165 = vld [vmem:[%s0 + $0x120] sm:$0xff]
  %v8166 = vld [vmem:[%s0 + $0x128] sm:$0xff]
  %v8167 = vld [vmem:[%s0 + $0x130] sm:$0xff]
  %v8168 = vld [vmem:[%s0 + $0x138] sm:$0xff]
  %v8169 = vld [vmem:[%s0 + $0x140] sm:$0xff]
  %v8170 = vld [vmem:[%s0 + $0x148] sm:$0xff]
  %v8171 = vld [vmem:[%s0 + $0x150] sm:$0xff]
  %v8172 = vld [vmem:[%s0 + $0x158] sm:$0xff]
  %v8173 = vld [vmem:[%s0 + $0x160] sm:$0xff]
  %v8174 = vld [vmem:[%s0 + $0x168] sm:$0xff]
  %v8175 = vld [vmem:[%s0 + $0x170] sm:$0xff]
  %v8176 = vld [vmem:[%s0 + $0x178] sm:$0xff]
  %v8177 = vld [vmem:[%s0 + $0x180] sm:$0xff]
  %v8178 = vld [vmem:[%s0 + $0x188] sm:$0xff]
  %v8179 = vld [vmem:[%s0 + $0x190] sm:$0xff]
  %v8180 = vld [vmem:[%s0 + $0x198] sm:$0xff]
  %v8181 = vld [vmem:[%s0 + $0x1a0] sm:$0xff]
  %v8182 = vld [vmem:[%s0 + $0x1a8] sm:$0xff]
  %v8183 = vld [vmem:[%s0 + $0x1b0] sm:$0xff]
  %v8184 = vld [vmem:[%s0 + $0x1b8] sm:$0xff]
  %v8185 = vld [vmem:[%s0 + $0x1c0] sm:$0xff]
  %v8186 = vld [vmem:[%s0 + $0x1c8] sm:$0xff]
  %v8187 = vld [vmem:[%s0 + $0x1d0] sm:$0xff]
  %v8188 = vld [vmem:[%s0 + $0x1d8] sm:$0xff]
  %v8189 = vld [vmem:[%s0 + $0x1e0] sm:$0xff]
  %v8190 = vld [vmem:[%s0 + $0x1e8] sm:$0xff]
  %v8191 = vld [vmem:[%s0 + $0x1f0] sm:$0xff]
  %v8192 = vld [vmem:[%s0 + $0x1f8] sm:$0xff]
  %v8193 = vadd.f32 %v8065, %v8129
  %v8194 = vadd.f32 %v8066, %v8130
  %v8195 = vadd.f32 %v8067, %v8131
  %v8196 = vadd.f32 %v8068, %v8132
  %v8197 = vadd.f32 %v8069, %v8133
  %v8198 = vadd.f32 %v8070, %v8134
  %v8199 = vadd.f32 %v8071, %v8135
  %v8200 = vadd.f32 %v8072, %v8136
  %v8201 = vadd.f32 %v8073, %v8137
  %v8202 = vadd.f32 %v8074, %v8138
  %v8203 = vadd.f32 %v8075, %v8139
  %v8204 = vadd.f32 %v8076, %v8140
  %v8205 = vadd.f32 %v8077, %v8141
  %v8206 = vadd.f32 %v8078, %v8142
  %v8207 = vadd.f32 %v8079, %v8143
  %v8208 = vadd.f32 %v8080, %v8144
  %v8209 = vadd.f32 %v8081, %v8145
  %v8210 = vadd.f32 %v8082, %v8146
  %v8211 = vadd.f32 %v8083, %v8147
  %v8212 = vadd.f32 %v8084, %v8148
  %v8213 = vadd.f32 %v8085, %v8149
  %v8214 = vadd.f32 %v8086, %v8150
  %v8215 = vadd.f32 %v8087, %v8151
  %v8216 = vadd.f32 %v8088, %v8152
  %v8217 = vadd.f32 %v8089, %v8153
  %v8218 = vadd.f32 %v8090, %v8154
  %v8219 = vadd.f32 %v8091, %v8155
  %v8220 = vadd.f32 %v8092, %v8156
  %v8221 = vadd.f32 %v8093, %v8157
  %v8222 = vadd.f32 %v8094, %v8158
  %v8223 = vadd.f32 %v8095, %v8159
  %v8224 = vadd.f32 %v8096, %v8160
  %v8225 = vadd.f32 %v8097, %v8161
  %v8226 = vadd.f32 %v8098, %v8162
  %v8227 = vadd.f32 %v8099, %v8163
  %v8228 = vadd.f32 %v8100, %v8164
  %v8229 = vadd.f32 %v8101, %v8165
  %v8230 = vadd.f32 %v8102, %v8166
  %v8231 = vadd.f32 %v8103, %v8167
  %v8232 = vadd.f32 %v8104, %v8168
  %v8233 = vadd.f32 %v8105, %v8169
  %v8234 = vadd.f32 %v8106, %v8170
  %v8235 = vadd.f32 %v8107, %v8171
  %v8236 = vadd.f32 %v8108, %v8172
  %v8237 = vadd.f32 %v8109, %v8173
  %v8238 = vadd.f32 %v8110, %v8174
  %v8239 = vadd.f32 %v8111, %v8175
  %v8240 = vadd.f32 %v8112, %v8176
  %v8241 = vadd.f32 %v8113, %v8177
  %v8242 = vadd.f32 %v8114, %v8178
  %v8243 = vadd.f32 %v8115, %v8179
  %v8244 = vadd.f32 %v8116, %v8180
  %v8245 = vadd.f32 %v8117, %v8181
  %v8246 = vadd.f32 %v8118, %v8182
  %v8247 = vadd.f32 %v8119, %v8183
  %v8248 = vadd.f32 %v8120, %v8184
  %v8249 = vadd.f32 %v8121, %v8185
  %v8250 = vadd.f32 %v8122, %v8186
  %v8251 = vadd.f32 %v8123, %v8187
  %v8252 = vadd.f32 %v8124, %v8188
  %v8253 = vadd.f32 %v8125, %v8189
  %v8254 = vadd.f32 %v8126, %v8190
  %v8255 = vadd.f32 %v8127, %v8191
  %v8256 = vadd.f32 %v8128, %v8192
  %v8257 = vmax.f32 %v8193, 0.0
  %v8258 = vmax.f32 %v8194, 0.0
  %v8259 = vmax.f32 %v8195, 0.0
  %v8260 = vmax.f32 %v8196, 0.0
  %v8261 = vmax.f32 %v8197, 0.0
  %v8262 = vmax.f32 %v8198, 0.0
  %v8263 = vmax.f32 %v8199, 0.0
  %v8264 = vmax.f32 %v8200, 0.0
  %v8265 = vmax.f32 %v8201, 0.0
  %v8266 = vmax.f32 %v8202, 0.0
  %v8267 = vmax.f32 %v8203, 0.0
  %v8268 = vmax.f32 %v8204, 0.0
  %v8269 = vmax.f32 %v8205, 0.0
  %v8270 = vmax.f32 %v8206, 0.0
  %v8271 = vmax.f32 %v8207, 0.0
  %v8272 = vmax.f32 %v8208, 0.0
  %v8273 = vmax.f32 %v8209, 0.0
  %v8274 = vmax.f32 %v8210, 0.0
  %v8275 = vmax.f32 %v8211, 0.0
  %v8276 = vmax.f32 %v8212, 0.0
  %v8277 = vmax.f32 %v8213, 0.0
  %v8278 = vmax.f32 %v8214, 0.0
  %v8279 = vmax.f32 %v8215, 0.0
  %v8280 = vmax.f32 %v8216, 0.0
  %v8281 = vmax.f32 %v8217, 0.0
  %v8282 = vmax.f32 %v8218, 0.0
  %v8283 = vmax.f32 %v8219, 0.0
  %v8284 = vmax.f32 %v8220, 0.0
  %v8285 = vmax.f32 %v8221, 0.0
  %v8286 = vmax.f32 %v8222, 0.0
  %v8287 = vmax.f32 %v8223, 0.0
  %v8288 = vmax.f32 %v8224, 0.0
  %v8289 = vmax.f32 %v8225, 0.0
  %v8290 = vmax.f32 %v8226, 0.0
  %v8291 = vmax.f32 %v8227, 0.0
  %v8292 = vmax.f32 %v8228, 0.0
  %v8293 = vmax.f32 %v8229, 0.0
  %v8294 = vmax.f32 %v8230, 0.0
  %v8295 = vmax.f32 %v8231, 0.0
  %v8296 = vmax.f32 %v8232, 0.0
  %v8297 = vmax.f32 %v8233, 0.0
  %v8298 = vmax.f32 %v8234, 0.0
  %v8299 = vmax.f32 %v8235, 0.0
  %v8300 = vmax.f32 %v8236, 0.0
  %v8301 = vmax.f32 %v8237, 0.0
  %v8302 = vmax.f32 %v8238, 0.0
  %v8303 = vmax.f32 %v8239, 0.0
  %v8304 = vmax.f32 %v8240, 0.0
  %v8305 = vmax.f32 %v8241, 0.0
  %v8306 = vmax.f32 %v8242, 0.0
  %v8307 = vmax.f32 %v8243, 0.0
  %v8308 = vmax.f32 %v8244, 0.0
  %v8309 = vmax.f32 %v8245, 0.0
  %v8310 = vmax.f32 %v8246, 0.0
  %v8311 = vmax.f32 %v8247, 0.0
  %v8312 = vmax.f32 %v8248, 0.0
  %v8313 = vmax.f32 %v8249, 0.0
  %v8314 = vmax.f32 %v8250, 0.0
  %v8315 = vmax.f32 %v8251, 0.0
  %v8316 = vmax.f32 %v8252, 0.0
  %v8317 = vmax.f32 %v8253, 0.0
  %v8318 = vmax.f32 %v8254, 0.0
  %v8319 = vmax.f32 %v8255, 0.0
  %v8320 = vmax.f32 %v8256, 0.0
  %8321 = vst.msk [vmem:[%s7] sm:$0xff] %vm26, %v8257
  %8322 = vst.msk [vmem:[%s7 + $0x8] sm:$0xff] %vm26, %v8258
  %8323 = vst.msk [vmem:[%s7 + $0x10] sm:$0xff] %vm26, %v8259
  %8324 = vst.msk [vmem:[%s7 + $0x18] sm:$0xff] %vm26, %v8260
  %8325 = vst.msk [vmem:[%s7 + $0x20] sm:$0xff] %vm26, %v8261
  %8326 = vst.msk [vmem:[%s7 + $0x28] sm:$0xff] %vm26, %v8262
  %8327 = vst.msk [vmem:[%s7 + $0x30] sm:$0xff] %vm26, %v8263
  %8328 = vst.msk [vmem:[%s7 + $0x38] sm:$0xff] %vm26, %v8264
  %8329 = vst.msk [vmem:[%s7 + $0x40] sm:$0xff] %vm26, %v8265
  %8330 = vst.msk [vmem:[%s7 + $0x48] sm:$0xff] %vm26, %v8266
  %8331 = vst.msk [vmem:[%s7 + $0x50] sm:$0xff] %vm26, %v8267
  %8332 = vst.msk [vmem:[%s7 + $0x58] sm:$0xff] %vm26, %v8268
  %8333 = vst.msk [vmem:[%s7 + $0x60] sm:$0xff] %vm26, %v8269
  %8334 = vst.msk [vmem:[%s7 + $0x68] sm:$0xff] %vm26, %v8270
  %8335 = vst.msk [vmem:[%s7 + $0x70] sm:$0xff] %vm26, %v8271
  %8336 = vst.msk [vmem:[%s7 + $0x78] sm:$0xff] %vm26, %v8272
  %8337 = vst.msk [vmem:[%s7 + $0x80] sm:$0xff] %vm26, %v8273
  %8338 = vst.msk [vmem:[%s7 + $0x88] sm:$0xff] %vm26, %v8274
  %8339 = vst.msk [vmem:[%s7 + $0x90] sm:$0xff] %vm26, %v8275
  %8340 = vst.msk [vmem:[%s7 + $0x98] sm:$0xff] %vm26, %v8276
  %8341 = vst.msk [vmem:[%s7 + $0xa0] sm:$0xff] %vm26, %v8277
  %8342 = vst.msk [vmem:[%s7 + $0xa8] sm:$0xff] %vm26, %v8278
  %8343 = vst.msk [vmem:[%s7 + $0xb0] sm:$0xff] %vm26, %v8279
  %8344 = vst.msk [vmem:[%s7 + $0xb8] sm:$0xff] %vm26, %v8280
  %8345 = vst.msk [vmem:[%s7 + $0xc0] sm:$0xff] %vm26, %v8281
  %8346 = vst.msk [vmem:[%s7 + $0xc8] sm:$0xff] %vm26, %v8282
  %8347 = vst.msk [vmem:[%s7 + $0xd0] sm:$0xff] %vm26, %v8283
  %8348 = vst.msk [vmem:[%s7 + $0xd8] sm:$0xff] %vm26, %v8284
  %8349 = vst.msk [vmem:[%s7 + $0xe0] sm:$0xff] %vm26, %v8285
  %8350 = vst.msk [vmem:[%s7 + $0xe8] sm:$0xff] %vm26, %v8286
  %8351 = vst.msk [vmem:[%s7 + $0xf0] sm:$0xff] %vm26, %v8287
  %8352 = vst.msk [vmem:[%s7 + $0xf8] sm:$0xff] %vm26, %v8288
  %8353 = vst.msk [vmem:[%s7 + $0x100] sm:$0xff] %vm26, %v8289
  %8354 = vst.msk [vmem:[%s7 + $0x108] sm:$0xff] %vm26, %v8290
  %8355 = vst.msk [vmem:[%s7 + $0x110] sm:$0xff] %vm26, %v8291
  %8356 = vst.msk [vmem:[%s7 + $0x118] sm:$0xff] %vm26, %v8292
  %8357 = vst.msk [vmem:[%s7 + $0x120] sm:$0xff] %vm26, %v8293
  %8358 = vst.msk [vmem:[%s7 + $0x128] sm:$0xff] %vm26, %v8294
  %8359 = vst.msk [vmem:[%s7 + $0x130] sm:$0xff] %vm26, %v8295
  %8360 = vst.msk [vmem:[%s7 + $0x138] sm:$0xff] %vm26, %v8296
  %8361 = vst.msk [vmem:[%s7 + $0x140] sm:$0xff] %vm26, %v8297
  %8362 = vst.msk [vmem:[%s7 + $0x148] sm:$0xff] %vm26, %v8298
  %8363 = vst.msk [vmem:[%s7 + $0x150] sm:$0xff] %vm26, %v8299
  %8364 = vst.msk [vmem:[%s7 + $0x158] sm:$0xff] %vm26, %v8300
  %8365 = vst.msk [vmem:[%s7 + $0x160] sm:$0xff] %vm26, %v8301
  %8366 = vst.msk [vmem:[%s7 + $0x168] sm:$0xff] %vm26, %v8302
  %8367 = vst.msk [vmem:[%s7 + $0x170] sm:$0xff] %vm26, %v8303
  %8368 = vst.msk [vmem:[%s7 + $0x178] sm:$0xff] %vm26, %v8304
  %8369 = vst.msk [vmem:[%s7 + $0x180] sm:$0xff] %vm26, %v8305
  %8370 = vst.msk [vmem:[%s7 + $0x188] sm:$0xff] %vm26, %v8306
  %8371 = vst.msk [vmem:[%s7 + $0x190] sm:$0xff] %vm26, %v8307
  %8372 = vst.msk [vmem:[%s7 + $0x198] sm:$0xff] %vm26, %v8308
  %8373 = vst.msk [vmem:[%s7 + $0x1a0] sm:$0xff] %vm26, %v8309
  %8374 = vst.msk [vmem:[%s7 + $0x1a8] sm:$0xff] %vm26, %v8310
  %8375 = vst.msk [vmem:[%s7 + $0x1b0] sm:$0xff] %vm26, %v8311
  %8376 = vst.msk [vmem:[%s7 + $0x1b8] sm:$0xff] %vm26, %v8312
  %8377 = vst.msk [vmem:[%s7 + $0x1c0] sm:$0xff] %vm26, %v8313
  %8378 = vst.msk [vmem:[%s7 + $0x1c8] sm:$0xff] %vm26, %v8314
  %8379 = vst.msk [vmem:[%s7 + $0x1d0] sm:$0xff] %vm26, %v8315
  %8380 = vst.msk [vmem:[%s7 + $0x1d8] sm:$0xff] %vm26, %v8316
  %8381 = vst.msk [vmem:[%s7 + $0x1e0] sm:$0xff] %vm26, %v8317
  %8382 = vst.msk [vmem:[%s7 + $0x1e8] sm:$0xff] %vm26, %v8318
  %8383 = vst.msk [vmem:[%s7 + $0x1f0] sm:$0xff] %vm26, %v8319
  %8384 = vst.msk [vmem:[%s7 + $0x1f8] sm:$0xff] %vm26, %v8320
  // Predicated region
  $region30: #{residual_block.1} parent=0 // pred_check
    _
  $region31: #{residual_block.1} parent=0 // pred_check_branch
    %8386 = sbr.rel (0) target = $region33
  $region32: #{residual_block.1} parent=0 // pred_region
    _
  $region33: #{residual_block.1} parent=0 // pred_fallthru
    _
  // Predicated region
  $region34: #{residual_block.1} parent=0 // pred_check
    _
  $region35: #{residual_block.1} parent=0 // pred_check_branch
    %8388 = sbr.rel (0) target = $region37
  $region36: #{residual_block.1} parent=0 // pred_region
    _
  $region37: #{residual_block.1} parent=0 // pred_fallthru
    _

</llo_original>
